<compile_context>
chip_gen: v7x
topology: tpu7x:2x2x1
jax: 0.10.0
libtpu: 0.0.40
codegen_flags: <defaults>
</compile_context>

<pallas_src>
import functools

import jax
import jax.numpy as jnp
from jax.experimental import pallas as pl
from jax.experimental.pallas import tpu as pltpu

LANE = 128
SUBLANE = 8
COL0 = 16          # interior column offset in the padded scratch (bf16-tile aligned)


def _round_up(n, m):
    return (n + m - 1) // m * m


def _fused_conv_block_kernel(x_ref, w1_ref, s1_ref, t1_ref,
                             w2_ref, s2_ref, t2_ref, o_ref,
                             xpad_ref, hpad_ref, *, H, W):
    """One grid step = one batch element, both conv+BN+ReLU layers fused.

    x_ref    : (1, H, W, Cin)      bf16 input tile (lane-dense, channel-padded)
    w1_ref   : (3, 3, Cin, Mid)    bf16
    s1_ref   : (1, Mid)  f32       folded scale = gamma / sqrt(var + eps)
    t1_ref   : (1, Mid)  f32       folded shift = beta + (bias - mean) * scale
    w2_ref   : (3, 3, Mid, Cout)   bf16
    s2_ref   : (1, Cout) f32
    t2_ref   : (1, Cout) f32
    o_ref    : (1, H, W, Cout)     f32 output tile
    xpad_ref : VMEM (H+2, WP, Cin)  bf16 -- in-kernel SAME padding (zero halo)
    hpad_ref : VMEM (H+2, WP, Mid)  bf16 -- intermediate, never written to HBM
    """
    def zero_halo(buf):
        # Only the halo the taps read needs to be zero; the interior is fully
        # overwritten every step.  (Full-buffer re-zeroing each step was pure
        # wasted vector-store bandwidth.)
        hp, wp, c = buf.shape
        buf[:, 0:COL0, :] = jnp.zeros((hp, COL0, c), buf.dtype)              # left cols
        buf[:, COL0 + W:wp, :] = jnp.zeros((hp, wp - COL0 - W, c), buf.dtype)  # right cols
        buf[0:1, COL0:COL0 + W, :] = jnp.zeros((1, W, c), buf.dtype)         # top row
        buf[hp - 1:hp, COL0:COL0 + W, :] = jnp.zeros((1, W, c), buf.dtype)   # bottom row

    zero_halo(xpad_ref)
    zero_halo(hpad_ref)

    # Stage the bf16 input into the interior (16-aligned columns -> unmasked store).
    xpad_ref[1:H + 1, COL0:COL0 + W, :] = x_ref[0].astype(xpad_ref.dtype)

    def conv3x3_bn_relu(src_ref, w_ref, scale, shift):
        cin = src_ref.shape[-1]
        # 3x3 conv as 9 shifted bf16 (H*W, Cin) x (Cin, Cout) MXU matmuls,
        # accumulated in an SSA f32 value (no VMEM accumulator RMW).  With
        # W % 8 == 0 and Cin % 128 == 0 the (H, W, C) -> (H*W, C) reshape of
        # the loaded value is a layout no-op.
        acc = None
        for kh in range(3):
            for kw in range(3):
                patch = src_ref[kh:kh + H, COL0 - 1 + kw:COL0 - 1 + kw + W, :]
                d = jnp.dot(patch.reshape(H * W, cin), w_ref[kh, kw],
                            preferred_element_type=jnp.float32)
                acc = d if acc is None else acc + d
        y = acc * scale + shift            # folded conv-bias + BN (eval), f32
        return jnp.maximum(y, 0.0)         # ReLU

    # Layer 1: result stays on-chip; interior store into the padded buffer
    # (zero halo == SAME padding for layer 2).
    mid = hpad_ref.shape[-1]
    h = conv3x3_bn_relu(xpad_ref, w1_ref, s1_ref[0], t1_ref[0])
    hpad_ref[1:H + 1, COL0:COL0 + W, :] = (
        h.reshape(H, W, mid).astype(hpad_ref.dtype))

    # Layer 2: single lane-dense output store.
    cout = o_ref.shape[-1]
    y = conv3x3_bn_relu(hpad_ref, w2_ref, s2_ref[0], t2_ref[0])
    o_ref[0] = y.reshape(H, W, cout).astype(o_ref.dtype)


def conv_block_nested(x_nchw, params, eps=1e-5):
    """Forward pass of Conv_Block_Nested. Input/output are NCHW (PyTorch)."""
    N, in_ch, H, W = x_nchw.shape
    mid_ch = params["w1"].shape[-1]
    out_ch = params["w2"].shape[-1]

    cin_p = _round_up(in_ch, LANE)
    mid_p = _round_up(mid_ch, LANE)
    cout_p = _round_up(out_ch, LANE)
    wp = _round_up(COL0 + W + 1, SUBLANE)   # padded-scratch width (halo + align)

    # Fold conv bias + BatchNorm(eval) into one per-channel scale/shift (f32).
    def fold(gamma, beta, mean, var, bias, cpad):
        scale = gamma * jax.lax.rsqrt(var + eps)
        shift = beta + (bias - mean) * scale
        scale = jnp.pad(scale, (0, cpad - scale.shape[0]))
        shift = jnp.pad(shift, (0, cpad - shift.shape[0]))
        return scale.reshape(1, cpad), shift.reshape(1, cpad)

    s1, t1 = fold(params["g1"], params["be1"], params["m1"], params["v1"],
                  params["b1"], mid_p)
    s2, t2 = fold(params["g2"], params["be2"], params["m2"], params["v2"],
                  params["b2"], cout_p)

    # NCHW -> NHWC, lane-dense (zero-padded) channel axes, bf16 MXU operands.
    x = jnp.transpose(x_nchw, (0, 2, 3, 1))
    x = jnp.pad(x, ((0, 0), (0, 0), (0, 0), (0, cin_p - in_ch)))
    x = x.astype(jnp.bfloat16)
    w1 = jnp.pad(params["w1"],
                 ((0, 0), (0, 0), (0, cin_p - in_ch), (0, mid_p - mid_ch)))
    w1 = w1.astype(jnp.bfloat16)
    w2 = jnp.pad(params["w2"],
                 ((0, 0), (0, 0), (0, mid_p - mid_ch), (0, cout_p - out_ch)))
    w2 = w2.astype(jnp.bfloat16)

    flops = 2 * N * H * W * 9 * (cin_p * mid_p + mid_p * cout_p)
    bytes_accessed = (N * H * W * cin_p * 2
                      + 9 * (cin_p * mid_p + mid_p * cout_p) * 2
                      + 2 * (mid_p + cout_p) * 4
                      + N * H * W * cout_p * 4)

    kernel = functools.partial(_fused_conv_block_kernel, H=H, W=W)
    out = pl.pallas_call(
        kernel,
        out_shape=jax.ShapeDtypeStruct((N, H, W, cout_p), jnp.float32),
        grid=(N,),
        in_specs=[
            pl.BlockSpec((1, H, W, cin_p), lambda n: (n, 0, 0, 0)),
            pl.BlockSpec((3, 3, cin_p, mid_p), lambda n: (0, 0, 0, 0)),
            pl.BlockSpec((1, mid_p), lambda n: (0, 0)),
            pl.BlockSpec((1, mid_p), lambda n: (0, 0)),
            pl.BlockSpec((3, 3, mid_p, cout_p), lambda n: (0, 0, 0, 0)),
            pl.BlockSpec((1, cout_p), lambda n: (0, 0)),
            pl.BlockSpec((1, cout_p), lambda n: (0, 0)),
        ],
        out_specs=pl.BlockSpec((1, H, W, cout_p), lambda n: (n, 0, 0, 0)),
        scratch_shapes=[
            pltpu.VMEM((H + 2, wp, cin_p), jnp.bfloat16),   # padded input
            pltpu.VMEM((H + 2, wp, mid_p), jnp.bfloat16),   # padded intermediate
        ],
        compiler_params=pltpu.CompilerParams(
            dimension_semantics=("parallel",)),
        cost_estimate=pl.CostEstimate(flops=flops, transcendentals=0,
                                      bytes_accessed=bytes_accessed),
    )(x, w1, s1, t1, w2, s2, t2)

    # Drop channel padding, back to NCHW.
    return jnp.transpose(out[..., :out_ch], (0, 3, 1, 2))


def make_params(key, in_ch, mid_ch, out_ch):
    """Deterministic synthetic parameters mirroring Conv_Block_Nested.__init__."""
    ks = jax.random.split(key, 8)
    p = {}
    p["w1"] = jax.random.normal(ks[0], (3, 3, in_ch, mid_ch), jnp.float32) * 0.1
    p["b1"] = jax.random.normal(ks[1], (mid_ch,), jnp.float32) * 0.1
    p["g1"] = 1.0 + 0.1 * jax.random.normal(ks[2], (mid_ch,), jnp.float32)
    p["be1"] = 0.1 * jax.random.normal(ks[3], (mid_ch,), jnp.float32)
    p["m1"] = 0.05 * jax.random.normal(ks[4], (mid_ch,), jnp.float32)
    p["v1"] = 1.0 + 0.1 * jnp.abs(jax.random.normal(ks[5], (mid_ch,), jnp.float32))
    p["w2"] = jax.random.normal(ks[6], (3, 3, mid_ch, out_ch), jnp.float32) * 0.1
    p["b2"] = jax.random.normal(ks[7], (out_ch,), jnp.float32) * 0.1
    p["g2"] = jnp.ones((out_ch,), jnp.float32)
    p["be2"] = jnp.zeros((out_ch,), jnp.float32)
    p["m2"] = jnp.zeros((out_ch,), jnp.float32)
    p["v2"] = jnp.ones((out_ch,), jnp.float32)
    return p


def _reference(x_nchw, params, eps=1e-5):
    """Pure-JAX reference mirroring the kernel's numerics:
    bf16-quantized activations/weights, f32 accumulation and epilogue."""
    def bf(a):
        return a.astype(jnp.bfloat16).astype(jnp.float32)

    def step(x, w, b, g, be, m, v):
        y = jax.lax.conv_general_dilated(
            bf(x), bf(w), window_strides=(1, 1), padding="SAME",
            dimension_numbers=("NCHW", "HWIO", "NCHW"),
            precision=jax.lax.Precision.HIGHEST)
        scale = g * jax.lax.rsqrt(v + eps)
        shift = be + (b - m) * scale
        y = y * scale.reshape(1, -1, 1, 1) + shift.reshape(1, -1, 1, 1)
        return jnp.maximum(y, 0.0)

    h = step(x_nchw, params["w1"], params["b1"], params["g1"], params["be1"],
             params["m1"], params["v1"])
    return step(h, params["w2"], params["b2"], params["g2"], params["be2"],
                params["m2"], params["v2"])


if __name__ == "__main__":
    key = jax.random.PRNGKey(0)
    k_x, k_p = jax.random.split(key)

    in_ch, mid_ch, out_ch = 4, 8, 4
    x = jax.random.normal(k_x, (2, in_ch, 16, 16), jnp.float32)  # NCHW
    params = make_params(k_p, in_ch, mid_ch, out_ch)

    out = conv_block_nested(x, params)
    out = jax.block_until_ready(out)

    ref = _reference(x, params)
    assert out.shape == (2, out_ch, 16, 16), out.shape
    assert jnp.allclose(out, ref, rtol=5e-3, atol=5e-3), "mismatch vs reference"

    print("KERNEL_OK")
</pallas_src>

<mosaic_0001>
module attributes {stable_mosaic.version = 11 : i64} {
  func.func @_fused_conv_block_kernel(%arg0: i32, %arg1: memref<1x16x16x128xbf16, #tpu.memory_space<vmem>>, %arg2: memref<3x3x128x128xbf16, #tpu.memory_space<vmem>>, %arg3: memref<1x128xf32, #tpu.memory_space<vmem>>, %arg4: memref<1x128xf32, #tpu.memory_space<vmem>>, %arg5: memref<3x3x128x128xbf16, #tpu.memory_space<vmem>>, %arg6: memref<1x128xf32, #tpu.memory_space<vmem>>, %arg7: memref<1x128xf32, #tpu.memory_space<vmem>>, %arg8: memref<1x16x16x128xf32, #tpu.memory_space<vmem>>, %arg9: memref<18x40x128xbf16, #tpu.memory_space<vmem>>, %arg10: memref<18x40x128xbf16, #tpu.memory_space<vmem>>) attributes {dimension_semantics = [#tpu.dimension_semantics<parallel>], iteration_bounds = array<i64: 2>, scalar_prefetch = 0 : i64, scratch_operands = 2 : i64, tpu.core_type = #tpu.core_type<tc>, window_params = [{transform_indices = @transform_0, window_bounds = array<i64: 1, 16, 16, 128>}, {pipeline_mode = #tpu.pipeline_mode<synchronous>, transform_indices = @transform_1, window_bounds = array<i64: 3, 3, 128, 128>}, {pipeline_mode = #tpu.pipeline_mode<synchronous>, transform_indices = @transform_2, window_bounds = array<i64: 1, 128>}, {pipeline_mode = #tpu.pipeline_mode<synchronous>, transform_indices = @transform_3, window_bounds = array<i64: 1, 128>}, {pipeline_mode = #tpu.pipeline_mode<synchronous>, transform_indices = @transform_4, window_bounds = array<i64: 3, 3, 128, 128>}, {pipeline_mode = #tpu.pipeline_mode<synchronous>, transform_indices = @transform_5, window_bounds = array<i64: 1, 128>}, {pipeline_mode = #tpu.pipeline_mode<synchronous>, transform_indices = @transform_6, window_bounds = array<i64: 1, 128>}, {transform_indices = @transform_7, window_bounds = array<i64: 1, 16, 16, 128>}]} {
    %cst = arith.constant 0.000000e+00 : bf16
    %0 = vector.broadcast %cst : bf16 to vector<18x16x128xbf16>
    %c0 = arith.constant 0 : index
    %c0_0 = arith.constant 0 : index
    %c0_1 = arith.constant 0 : index
    %1 = vector.load %arg9[%c0, %c0_0, %c0_1] : memref<18x40x128xbf16, #tpu.memory_space<vmem>>, vector<18x16x128xbf16>
    tpu.vector_store %arg9[%c0, %c0_0, %c0_1], %0 {strides = array<i32>} : memref<18x40x128xbf16, #tpu.memory_space<vmem>>, vector<18x16x128xbf16>,
    %cst_2 = arith.constant 0.000000e+00 : bf16
    %2 = vector.broadcast %cst_2 : bf16 to vector<18x8x128xbf16>
    %c0_3 = arith.constant 0 : index
    %c32 = arith.constant 32 : index
    %c0_4 = arith.constant 0 : index
    %3 = vector.load %arg9[%c0_3, %c32, %c0_4] : memref<18x40x128xbf16, #tpu.memory_space<vmem>>, vector<18x8x128xbf16>
    tpu.vector_store %arg9[%c0_3, %c32, %c0_4], %2 {strides = array<i32>} : memref<18x40x128xbf16, #tpu.memory_space<vmem>>, vector<18x8x128xbf16>,
    %cst_5 = arith.constant 0.000000e+00 : bf16
    %4 = vector.broadcast %cst_5 : bf16 to vector<1x16x128xbf16>
    %c0_6 = arith.constant 0 : index
    %c16 = arith.constant 16 : index
    %c0_7 = arith.constant 0 : index
    %5 = vector.load %arg9[%c0_6, %c16, %c0_7] : memref<18x40x128xbf16, #tpu.memory_space<vmem>>, vector<1x16x128xbf16>
    tpu.vector_store %arg9[%c0_6, %c16, %c0_7], %4 {strides = array<i32>} : memref<18x40x128xbf16, #tpu.memory_space<vmem>>, vector<1x16x128xbf16>,
    %cst_8 = arith.constant 0.000000e+00 : bf16
    %6 = vector.broadcast %cst_8 : bf16 to vector<1x16x128xbf16>
    %c17 = arith.constant 17 : index
    %c16_9 = arith.constant 16 : index
    %c0_10 = arith.constant 0 : index
    %7 = vector.load %arg9[%c17, %c16_9, %c0_10] : memref<18x40x128xbf16, #tpu.memory_space<vmem>>, vector<1x16x128xbf16>
    tpu.vector_store %arg9[%c17, %c16_9, %c0_10], %6 {strides = array<i32>} : memref<18x40x128xbf16, #tpu.memory_space<vmem>>, vector<1x16x128xbf16>,
    %cst_11 = arith.constant 0.000000e+00 : bf16
    %8 = vector.broadcast %cst_11 : bf16 to vector<18x16x128xbf16>
    %c0_12 = arith.constant 0 : index
    %c0_13 = arith.constant 0 : index
    %c0_14 = arith.constant 0 : index
    %9 = vector.load %arg10[%c0_12, %c0_13, %c0_14] : memref<18x40x128xbf16, #tpu.memory_space<vmem>>, vector<18x16x128xbf16>
    tpu.vector_store %arg10[%c0_12, %c0_13, %c0_14], %8 {strides = array<i32>} : memref<18x40x128xbf16, #tpu.memory_space<vmem>>, vector<18x16x128xbf16>,
    %cst_15 = arith.constant 0.000000e+00 : bf16
    %10 = vector.broadcast %cst_15 : bf16 to vector<18x8x128xbf16>
    %c0_16 = arith.constant 0 : index
    %c32_17 = arith.constant 32 : index
    %c0_18 = arith.constant 0 : index
    %11 = vector.load %arg10[%c0_16, %c32_17, %c0_18] : memref<18x40x128xbf16, #tpu.memory_space<vmem>>, vector<18x8x128xbf16>
    tpu.vector_store %arg10[%c0_16, %c32_17, %c0_18], %10 {strides = array<i32>} : memref<18x40x128xbf16, #tpu.memory_space<vmem>>, vector<18x8x128xbf16>,
    %cst_19 = arith.constant 0.000000e+00 : bf16
    %12 = vector.broadcast %cst_19 : bf16 to vector<1x16x128xbf16>
    %c0_20 = arith.constant 0 : index
    %c16_21 = arith.constant 16 : index
    %c0_22 = arith.constant 0 : index
    %13 = vector.load %arg10[%c0_20, %c16_21, %c0_22] : memref<18x40x128xbf16, #tpu.memory_space<vmem>>, vector<1x16x128xbf16>
    tpu.vector_store %arg10[%c0_20, %c16_21, %c0_22], %12 {strides = array<i32>} : memref<18x40x128xbf16, #tpu.memory_space<vmem>>, vector<1x16x128xbf16>,
    %cst_23 = arith.constant 0.000000e+00 : bf16
    %14 = vector.broadcast %cst_23 : bf16 to vector<1x16x128xbf16>
    %c17_24 = arith.constant 17 : index
    %c16_25 = arith.constant 16 : index
    %c0_26 = arith.constant 0 : index
    %15 = vector.load %arg10[%c17_24, %c16_25, %c0_26] : memref<18x40x128xbf16, #tpu.memory_space<vmem>>, vector<1x16x128xbf16>
    tpu.vector_store %arg10[%c17_24, %c16_25, %c0_26], %14 {strides = array<i32>} : memref<18x40x128xbf16, #tpu.memory_space<vmem>>, vector<1x16x128xbf16>,
    %c0_27 = arith.constant 0 : index
    %c0_28 = arith.constant 0 : index
    %c0_29 = arith.constant 0 : index
    %c0_30 = arith.constant 0 : index
    %16 = vector.load %arg1[%c0_27, %c0_28, %c0_29, %c0_30] : memref<1x16x16x128xbf16, #tpu.memory_space<vmem>>, vector<1x16x16x128xbf16>
    %17 = vector.shape_cast %16 : vector<1x16x16x128xbf16> to vector<16x16x128xbf16>
    %c1 = arith.constant 1 : index
    %c16_31 = arith.constant 16 : index
    %c0_32 = arith.constant 0 : index
    %18 = vector.load %arg9[%c1, %c16_31, %c0_32] : memref<18x40x128xbf16, #tpu.memory_space<vmem>>, vector<16x16x128xbf16>
    tpu.vector_store %arg9[%c1, %c16_31, %c0_32], %17 {strides = array<i32>} : memref<18x40x128xbf16, #tpu.memory_space<vmem>>, vector<16x16x128xbf16>,
    %c0_33 = arith.constant 0 : index
    %c0_34 = arith.constant 0 : index
    %19 = vector.load %arg3[%c0_33, %c0_34] : memref<1x128xf32, #tpu.memory_space<vmem>>, vector<1x128xf32>
    %20 = vector.shape_cast %19 : vector<1x128xf32> to vector<128xf32>
    %c0_35 = arith.constant 0 : index
    %c0_36 = arith.constant 0 : index
    %21 = vector.load %arg4[%c0_35, %c0_36] : memref<1x128xf32, #tpu.memory_space<vmem>>, vector<1x128xf32>
    %22 = vector.shape_cast %21 : vector<1x128xf32> to vector<128xf32>
    %c0_37 = arith.constant 0 : index
    %c15 = arith.constant 15 : index
    %c0_38 = arith.constant 0 : index
    %23 = vector.load %arg9[%c0_37, %c15, %c0_38] : memref<18x40x128xbf16, #tpu.memory_space<vmem>>, vector<16x16x128xbf16>
    %24 = vector.shape_cast %23 : vector<16x16x128xbf16> to vector<256x128xbf16>
    %c0_39 = arith.constant 0 : index
    %c0_40 = arith.constant 0 : index
    %c0_41 = arith.constant 0 : index
    %c0_42 = arith.constant 0 : index
    %25 = vector.load %arg2[%c0_39, %c0_40, %c0_41, %c0_42] : memref<3x3x128x128xbf16, #tpu.memory_space<vmem>>, vector<1x1x128x128xbf16>
    %26 = vector.shape_cast %25 : vector<1x1x128x128xbf16> to vector<128x128xbf16>
    %cst_43 = arith.constant dense<0.000000e+00> : vector<256x128xf32>
    %27 = tpu.matmul %24, %26, %cst_43 {dimension_numbers = #tpu.dot_dimension_numbers<[1], [0], [0], [1], [0, 0, 1, 1], [], []>} : vector<256x128xbf16>, vector<128x128xbf16>, vector<256x128xf32> -> vector<256x128xf32>
    %c0_44 = arith.constant 0 : index
    %c16_45 = arith.constant 16 : index
    %c0_46 = arith.constant 0 : index
    %28 = vector.load %arg9[%c0_44, %c16_45, %c0_46] : memref<18x40x128xbf16, #tpu.memory_space<vmem>>, vector<16x16x128xbf16>
    %29 = vector.shape_cast %28 : vector<16x16x128xbf16> to vector<256x128xbf16>
    %c0_47 = arith.constant 0 : index
    %c1_48 = arith.constant 1 : index
    %c0_49 = arith.constant 0 : index
    %c0_50 = arith.constant 0 : index
    %30 = vector.load %arg2[%c0_47, %c1_48, %c0_49, %c0_50] : memref<3x3x128x128xbf16, #tpu.memory_space<vmem>>, vector<1x1x128x128xbf16>
    %31 = vector.shape_cast %30 : vector<1x1x128x128xbf16> to vector<128x128xbf16>
    %cst_51 = arith.constant dense<0.000000e+00> : vector<256x128xf32>
    %32 = tpu.matmul %29, %31, %cst_51 {dimension_numbers = #tpu.dot_dimension_numbers<[1], [0], [0], [1], [0, 0, 1, 1], [], []>} : vector<256x128xbf16>, vector<128x128xbf16>, vector<256x128xf32> -> vector<256x128xf32>
    %33 = arith.addf %27, %32 : vector<256x128xf32>
    %c0_52 = arith.constant 0 : index
    %c17_53 = arith.constant 17 : index
    %c0_54 = arith.constant 0 : index
    %34 = vector.load %arg9[%c0_52, %c17_53, %c0_54] : memref<18x40x128xbf16, #tpu.memory_space<vmem>>, vector<16x16x128xbf16>
    %35 = vector.shape_cast %34 : vector<16x16x128xbf16> to vector<256x128xbf16>
    %c0_55 = arith.constant 0 : index
    %c2 = arith.constant 2 : index
    %c0_56 = arith.constant 0 : index
    %c0_57 = arith.constant 0 : index
    %36 = vector.load %arg2[%c0_55, %c2, %c0_56, %c0_57] : memref<3x3x128x128xbf16, #tpu.memory_space<vmem>>, vector<1x1x128x128xbf16>
    %37 = vector.shape_cast %36 : vector<1x1x128x128xbf16> to vector<128x128xbf16>
    %cst_58 = arith.constant dense<0.000000e+00> : vector<256x128xf32>
    %38 = tpu.matmul %35, %37, %cst_58 {dimension_numbers = #tpu.dot_dimension_numbers<[1], [0], [0], [1], [0, 0, 1, 1], [], []>} : vector<256x128xbf16>, vector<128x128xbf16>, vector<256x128xf32> -> vector<256x128xf32>
    %39 = arith.addf %33, %38 : vector<256x128xf32>
    %c1_59 = arith.constant 1 : index
    %c15_60 = arith.constant 15 : index
    %c0_61 = arith.constant 0 : index
    %40 = vector.load %arg9[%c1_59, %c15_60, %c0_61] : memref<18x40x128xbf16, #tpu.memory_space<vmem>>, vector<16x16x128xbf16>
    %41 = vector.shape_cast %40 : vector<16x16x128xbf16> to vector<256x128xbf16>
    %c1_62 = arith.constant 1 : index
    %c0_63 = arith.constant 0 : index
    %c0_64 = arith.constant 0 : index
    %c0_65 = arith.constant 0 : index
    %42 = vector.load %arg2[%c1_62, %c0_63, %c0_64, %c0_65] : memref<3x3x128x128xbf16, #tpu.memory_space<vmem>>, vector<1x1x128x128xbf16>
    %43 = vector.shape_cast %42 : vector<1x1x128x128xbf16> to vector<128x128xbf16>
    %cst_66 = arith.constant dense<0.000000e+00> : vector<256x128xf32>
    %44 = tpu.matmul %41, %43, %cst_66 {dimension_numbers = #tpu.dot_dimension_numbers<[1], [0], [0], [1], [0, 0, 1, 1], [], []>} : vector<256x128xbf16>, vector<128x128xbf16>, vector<256x128xf32> -> vector<256x128xf32>
    %45 = arith.addf %39, %44 : vector<256x128xf32>
    %c1_67 = arith.constant 1 : index
    %c16_68 = arith.constant 16 : index
    %c0_69 = arith.constant 0 : index
    %46 = vector.load %arg9[%c1_67, %c16_68, %c0_69] : memref<18x40x128xbf16, #tpu.memory_space<vmem>>, vector<16x16x128xbf16>
    %47 = vector.shape_cast %46 : vector<16x16x128xbf16> to vector<256x128xbf16>
    %c1_70 = arith.constant 1 : index
    %c1_71 = arith.constant 1 : index
    %c0_72 = arith.constant 0 : index
    %c0_73 = arith.constant 0 : index
    %48 = vector.load %arg2[%c1_70, %c1_71, %c0_72, %c0_73] : memref<3x3x128x128xbf16, #tpu.memory_space<vmem>>, vector<1x1x128x128xbf16>
    %49 = vector.shape_cast %48 : vector<1x1x128x128xbf16> to vector<128x128xbf16>
    %cst_74 = arith.constant dense<0.000000e+00> : vector<256x128xf32>
    %50 = tpu.matmul %47, %49, %cst_74 {dimension_numbers = #tpu.dot_dimension_numbers<[1], [0], [0], [1], [0, 0, 1, 1], [], []>} : vector<256x128xbf16>, vector<128x128xbf16>, vector<256x128xf32> -> vector<256x128xf32>
    %51 = arith.addf %45, %50 : vector<256x128xf32>
    %c1_75 = arith.constant 1 : index
    %c17_76 = arith.constant 17 : index
    %c0_77 = arith.constant 0 : index
    %52 = vector.load %arg9[%c1_75, %c17_76, %c0_77] : memref<18x40x128xbf16, #tpu.memory_space<vmem>>, vector<16x16x128xbf16>
    %53 = vector.shape_cast %52 : vector<16x16x128xbf16> to vector<256x128xbf16>
    %c1_78 = arith.constant 1 : index
    %c2_79 = arith.constant 2 : index
    %c0_80 = arith.constant 0 : index
    %c0_81 = arith.constant 0 : index
    %54 = vector.load %arg2[%c1_78, %c2_79, %c0_80, %c0_81] : memref<3x3x128x128xbf16, #tpu.memory_space<vmem>>, vector<1x1x128x128xbf16>
    %55 = vector.shape_cast %54 : vector<1x1x128x128xbf16> to vector<128x128xbf16>
    %cst_82 = arith.constant dense<0.000000e+00> : vector<256x128xf32>
    %56 = tpu.matmul %53, %55, %cst_82 {dimension_numbers = #tpu.dot_dimension_numbers<[1], [0], [0], [1], [0, 0, 1, 1], [], []>} : vector<256x128xbf16>, vector<128x128xbf16>, vector<256x128xf32> -> vector<256x128xf32>
    %57 = arith.addf %51, %56 : vector<256x128xf32>
    %c2_83 = arith.constant 2 : index
    %c15_84 = arith.constant 15 : index
    %c0_85 = arith.constant 0 : index
    %58 = vector.load %arg9[%c2_83, %c15_84, %c0_85] : memref<18x40x128xbf16, #tpu.memory_space<vmem>>, vector<16x16x128xbf16>
    %59 = vector.shape_cast %58 : vector<16x16x128xbf16> to vector<256x128xbf16>
    %c2_86 = arith.constant 2 : index
    %c0_87 = arith.constant 0 : index
    %c0_88 = arith.constant 0 : index
    %c0_89 = arith.constant 0 : index
    %60 = vector.load %arg2[%c2_86, %c0_87, %c0_88, %c0_89] : memref<3x3x128x128xbf16, #tpu.memory_space<vmem>>, vector<1x1x128x128xbf16>
    %61 = vector.shape_cast %60 : vector<1x1x128x128xbf16> to vector<128x128xbf16>
    %cst_90 = arith.constant dense<0.000000e+00> : vector<256x128xf32>
    %62 = tpu.matmul %59, %61, %cst_90 {dimension_numbers = #tpu.dot_dimension_numbers<[1], [0], [0], [1], [0, 0, 1, 1], [], []>} : vector<256x128xbf16>, vector<128x128xbf16>, vector<256x128xf32> -> vector<256x128xf32>
    %63 = arith.addf %57, %62 : vector<256x128xf32>
    %c2_91 = arith.constant 2 : index
    %c16_92 = arith.constant 16 : index
    %c0_93 = arith.constant 0 : index
    %64 = vector.load %arg9[%c2_91, %c16_92, %c0_93] : memref<18x40x128xbf16, #tpu.memory_space<vmem>>, vector<16x16x128xbf16>
    %65 = vector.shape_cast %64 : vector<16x16x128xbf16> to vector<256x128xbf16>
    %c2_94 = arith.constant 2 : index
    %c1_95 = arith.constant 1 : index
    %c0_96 = arith.constant 0 : index
    %c0_97 = arith.constant 0 : index
    %66 = vector.load %arg2[%c2_94, %c1_95, %c0_96, %c0_97] : memref<3x3x128x128xbf16, #tpu.memory_space<vmem>>, vector<1x1x128x128xbf16>
    %67 = vector.shape_cast %66 : vector<1x1x128x128xbf16> to vector<128x128xbf16>
    %cst_98 = arith.constant dense<0.000000e+00> : vector<256x128xf32>
    %68 = tpu.matmul %65, %67, %cst_98 {dimension_numbers = #tpu.dot_dimension_numbers<[1], [0], [0], [1], [0, 0, 1, 1], [], []>} : vector<256x128xbf16>, vector<128x128xbf16>, vector<256x128xf32> -> vector<256x128xf32>
    %69 = arith.addf %63, %68 : vector<256x128xf32>
    %c2_99 = arith.constant 2 : index
    %c17_100 = arith.constant 17 : index
    %c0_101 = arith.constant 0 : index
    %70 = vector.load %arg9[%c2_99, %c17_100, %c0_101] : memref<18x40x128xbf16, #tpu.memory_space<vmem>>, vector<16x16x128xbf16>
    %71 = vector.shape_cast %70 : vector<16x16x128xbf16> to vector<256x128xbf16>
    %c2_102 = arith.constant 2 : index
    %c2_103 = arith.constant 2 : index
    %c0_104 = arith.constant 0 : index
    %c0_105 = arith.constant 0 : index
    %72 = vector.load %arg2[%c2_102, %c2_103, %c0_104, %c0_105] : memref<3x3x128x128xbf16, #tpu.memory_space<vmem>>, vector<1x1x128x128xbf16>
    %73 = vector.shape_cast %72 : vector<1x1x128x128xbf16> to vector<128x128xbf16>
    %cst_106 = arith.constant dense<0.000000e+00> : vector<256x128xf32>
    %74 = tpu.matmul %71, %73, %cst_106 {dimension_numbers = #tpu.dot_dimension_numbers<[1], [0], [0], [1], [0, 0, 1, 1], [], []>} : vector<256x128xbf16>, vector<128x128xbf16>, vector<256x128xf32> -> vector<256x128xf32>
    %75 = arith.addf %69, %74 : vector<256x128xf32>
    %76 = vector.shape_cast %20 : vector<128xf32> to vector<1x128xf32>
    %77 = vector.broadcast %76 : vector<1x128xf32> to vector<256x128xf32>
    %78 = arith.mulf %75, %77 : vector<256x128xf32>
    %79 = vector.shape_cast %22 : vector<128xf32> to vector<1x128xf32>
    %80 = vector.broadcast %79 : vector<1x128xf32> to vector<256x128xf32>
    %81 = arith.addf %78, %80 : vector<256x128xf32>
    %cst_107 = arith.constant 0.000000e+00 : f32
    %82 = vector.broadcast %cst_107 : f32 to vector<256x128xf32>
    %83 = arith.maximumf %81, %82 : vector<256x128xf32>
    %84 = vector.shape_cast %83 : vector<256x128xf32> to vector<16x16x128xf32>
    %85 = arith.truncf %84 : vector<16x16x128xf32> to vector<16x16x128xbf16>
    %c1_108 = arith.constant 1 : index
    %c16_109 = arith.constant 16 : index
    %c0_110 = arith.constant 0 : index
    %86 = vector.load %arg10[%c1_108, %c16_109, %c0_110] : memref<18x40x128xbf16, #tpu.memory_space<vmem>>, vector<16x16x128xbf16>
    tpu.vector_store %arg10[%c1_108, %c16_109, %c0_110], %85 {strides = array<i32>} : memref<18x40x128xbf16, #tpu.memory_space<vmem>>, vector<16x16x128xbf16>,
    %c0_111 = arith.constant 0 : index
    %c0_112 = arith.constant 0 : index
    %87 = vector.load %arg6[%c0_111, %c0_112] : memref<1x128xf32, #tpu.memory_space<vmem>>, vector<1x128xf32>
    %88 = vector.shape_cast %87 : vector<1x128xf32> to vector<128xf32>
    %c0_113 = arith.constant 0 : index
    %c0_114 = arith.constant 0 : index
    %89 = vector.load %arg7[%c0_113, %c0_114] : memref<1x128xf32, #tpu.memory_space<vmem>>, vector<1x128xf32>
    %90 = vector.shape_cast %89 : vector<1x128xf32> to vector<128xf32>
    %c0_115 = arith.constant 0 : index
    %c15_116 = arith.constant 15 : index
    %c0_117 = arith.constant 0 : index
    %91 = vector.load %arg10[%c0_115, %c15_116, %c0_117] : memref<18x40x128xbf16, #tpu.memory_space<vmem>>, vector<16x16x128xbf16>
    %92 = vector.shape_cast %91 : vector<16x16x128xbf16> to vector<256x128xbf16>
    %c0_118 = arith.constant 0 : index
    %c0_119 = arith.constant 0 : index
    %c0_120 = arith.constant 0 : index
    %c0_121 = arith.constant 0 : index
    %93 = vector.load %arg5[%c0_118, %c0_119, %c0_120, %c0_121] : memref<3x3x128x128xbf16, #tpu.memory_space<vmem>>, vector<1x1x128x128xbf16>
    %94 = vector.shape_cast %93 : vector<1x1x128x128xbf16> to vector<128x128xbf16>
    %cst_122 = arith.constant dense<0.000000e+00> : vector<256x128xf32>
    %95 = tpu.matmul %92, %94, %cst_122 {dimension_numbers = #tpu.dot_dimension_numbers<[1], [0], [0], [1], [0, 0, 1, 1], [], []>} : vector<256x128xbf16>, vector<128x128xbf16>, vector<256x128xf32> -> vector<256x128xf32>
    %c0_123 = arith.constant 0 : index
    %c16_124 = arith.constant 16 : index
    %c0_125 = arith.constant 0 : index
    %96 = vector.load %arg10[%c0_123, %c16_124, %c0_125] : memref<18x40x128xbf16, #tpu.memory_space<vmem>>, vector<16x16x128xbf16>
    %97 = vector.shape_cast %96 : vector<16x16x128xbf16> to vector<256x128xbf16>
    %c0_126 = arith.constant 0 : index
    %c1_127 = arith.constant 1 : index
    %c0_128 = arith.constant 0 : index
    %c0_129 = arith.constant 0 : index
    %98 = vector.load %arg5[%c0_126, %c1_127, %c0_128, %c0_129] : memref<3x3x128x128xbf16, #tpu.memory_space<vmem>>, vector<1x1x128x128xbf16>
    %99 = vector.shape_cast %98 : vector<1x1x128x128xbf16> to vector<128x128xbf16>
    %cst_130 = arith.constant dense<0.000000e+00> : vector<256x128xf32>
    %100 = tpu.matmul %97, %99, %cst_130 {dimension_numbers = #tpu.dot_dimension_numbers<[1], [0], [0], [1], [0, 0, 1, 1], [], []>} : vector<256x128xbf16>, vector<128x128xbf16>, vector<256x128xf32> -> vector<256x128xf32>
    %101 = arith.addf %95, %100 : vector<256x128xf32>
    %c0_131 = arith.constant 0 : index
    %c17_132 = arith.constant 17 : index
    %c0_133 = arith.constant 0 : index
    %102 = vector.load %arg10[%c0_131, %c17_132, %c0_133] : memref<18x40x128xbf16, #tpu.memory_space<vmem>>, vector<16x16x128xbf16>
    %103 = vector.shape_cast %102 : vector<16x16x128xbf16> to vector<256x128xbf16>
    %c0_134 = arith.constant 0 : index
    %c2_135 = arith.constant 2 : index
    %c0_136 = arith.constant 0 : index
    %c0_137 = arith.constant 0 : index
    %104 = vector.load %arg5[%c0_134, %c2_135, %c0_136, %c0_137] : memref<3x3x128x128xbf16, #tpu.memory_space<vmem>>, vector<1x1x128x128xbf16>
    %105 = vector.shape_cast %104 : vector<1x1x128x128xbf16> to vector<128x128xbf16>
    %cst_138 = arith.constant dense<0.000000e+00> : vector<256x128xf32>
    %106 = tpu.matmul %103, %105, %cst_138 {dimension_numbers = #tpu.dot_dimension_numbers<[1], [0], [0], [1], [0, 0, 1, 1], [], []>} : vector<256x128xbf16>, vector<128x128xbf16>, vector<256x128xf32> -> vector<256x128xf32>
    %107 = arith.addf %101, %106 : vector<256x128xf32>
    %c1_139 = arith.constant 1 : index
    %c15_140 = arith.constant 15 : index
    %c0_141 = arith.constant 0 : index
    %108 = vector.load %arg10[%c1_139, %c15_140, %c0_141] : memref<18x40x128xbf16, #tpu.memory_space<vmem>>, vector<16x16x128xbf16>
    %109 = vector.shape_cast %108 : vector<16x16x128xbf16> to vector<256x128xbf16>
    %c1_142 = arith.constant 1 : index
    %c0_143 = arith.constant 0 : index
    %c0_144 = arith.constant 0 : index
    %c0_145 = arith.constant 0 : index
    %110 = vector.load %arg5[%c1_142, %c0_143, %c0_144, %c0_145] : memref<3x3x128x128xbf16, #tpu.memory_space<vmem>>, vector<1x1x128x128xbf16>
    %111 = vector.shape_cast %110 : vector<1x1x128x128xbf16> to vector<128x128xbf16>
    %cst_146 = arith.constant dense<0.000000e+00> : vector<256x128xf32>
    %112 = tpu.matmul %109, %111, %cst_146 {dimension_numbers = #tpu.dot_dimension_numbers<[1], [0], [0], [1], [0, 0, 1, 1], [], []>} : vector<256x128xbf16>, vector<128x128xbf16>, vector<256x128xf32> -> vector<256x128xf32>
    %113 = arith.addf %107, %112 : vector<256x128xf32>
    %c1_147 = arith.constant 1 : index
    %c16_148 = arith.constant 16 : index
    %c0_149 = arith.constant 0 : index
    %114 = vector.load %arg10[%c1_147, %c16_148, %c0_149] : memref<18x40x128xbf16, #tpu.memory_space<vmem>>, vector<16x16x128xbf16>
    %115 = vector.shape_cast %114 : vector<16x16x128xbf16> to vector<256x128xbf16>
    %c1_150 = arith.constant 1 : index
    %c1_151 = arith.constant 1 : index
    %c0_152 = arith.constant 0 : index
    %c0_153 = arith.constant 0 : index
    %116 = vector.load %arg5[%c1_150, %c1_151, %c0_152, %c0_153] : memref<3x3x128x128xbf16, #tpu.memory_space<vmem>>, vector<1x1x128x128xbf16>
    %117 = vector.shape_cast %116 : vector<1x1x128x128xbf16> to vector<128x128xbf16>
    %cst_154 = arith.constant dense<0.000000e+00> : vector<256x128xf32>
    %118 = tpu.matmul %115, %117, %cst_154 {dimension_numbers = #tpu.dot_dimension_numbers<[1], [0], [0], [1], [0, 0, 1, 1], [], []>} : vector<256x128xbf16>, vector<128x128xbf16>, vector<256x128xf32> -> vector<256x128xf32>
    %119 = arith.addf %113, %118 : vector<256x128xf32>
    %c1_155 = arith.constant 1 : index
    %c17_156 = arith.constant 17 : index
    %c0_157 = arith.constant 0 : index
    %120 = vector.load %arg10[%c1_155, %c17_156, %c0_157] : memref<18x40x128xbf16, #tpu.memory_space<vmem>>, vector<16x16x128xbf16>
    %121 = vector.shape_cast %120 : vector<16x16x128xbf16> to vector<256x128xbf16>
    %c1_158 = arith.constant 1 : index
    %c2_159 = arith.constant 2 : index
    %c0_160 = arith.constant 0 : index
    %c0_161 = arith.constant 0 : index
    %122 = vector.load %arg5[%c1_158, %c2_159, %c0_160, %c0_161] : memref<3x3x128x128xbf16, #tpu.memory_space<vmem>>, vector<1x1x128x128xbf16>
    %123 = vector.shape_cast %122 : vector<1x1x128x128xbf16> to vector<128x128xbf16>
    %cst_162 = arith.constant dense<0.000000e+00> : vector<256x128xf32>
    %124 = tpu.matmul %121, %123, %cst_162 {dimension_numbers = #tpu.dot_dimension_numbers<[1], [0], [0], [1], [0, 0, 1, 1], [], []>} : vector<256x128xbf16>, vector<128x128xbf16>, vector<256x128xf32> -> vector<256x128xf32>
    %125 = arith.addf %119, %124 : vector<256x128xf32>
    %c2_163 = arith.constant 2 : index
    %c15_164 = arith.constant 15 : index
    %c0_165 = arith.constant 0 : index
    %126 = vector.load %arg10[%c2_163, %c15_164, %c0_165] : memref<18x40x128xbf16, #tpu.memory_space<vmem>>, vector<16x16x128xbf16>
    %127 = vector.shape_cast %126 : vector<16x16x128xbf16> to vector<256x128xbf16>
    %c2_166 = arith.constant 2 : index
    %c0_167 = arith.constant 0 : index
    %c0_168 = arith.constant 0 : index
    %c0_169 = arith.constant 0 : index
    %128 = vector.load %arg5[%c2_166, %c0_167, %c0_168, %c0_169] : memref<3x3x128x128xbf16, #tpu.memory_space<vmem>>, vector<1x1x128x128xbf16>
    %129 = vector.shape_cast %128 : vector<1x1x128x128xbf16> to vector<128x128xbf16>
    %cst_170 = arith.constant dense<0.000000e+00> : vector<256x128xf32>
    %130 = tpu.matmul %127, %129, %cst_170 {dimension_numbers = #tpu.dot_dimension_numbers<[1], [0], [0], [1], [0, 0, 1, 1], [], []>} : vector<256x128xbf16>, vector<128x128xbf16>, vector<256x128xf32> -> vector<256x128xf32>
    %131 = arith.addf %125, %130 : vector<256x128xf32>
    %c2_171 = arith.constant 2 : index
    %c16_172 = arith.constant 16 : index
    %c0_173 = arith.constant 0 : index
    %132 = vector.load %arg10[%c2_171, %c16_172, %c0_173] : memref<18x40x128xbf16, #tpu.memory_space<vmem>>, vector<16x16x128xbf16>
    %133 = vector.shape_cast %132 : vector<16x16x128xbf16> to vector<256x128xbf16>
    %c2_174 = arith.constant 2 : index
    %c1_175 = arith.constant 1 : index
    %c0_176 = arith.constant 0 : index
    %c0_177 = arith.constant 0 : index
    %134 = vector.load %arg5[%c2_174, %c1_175, %c0_176, %c0_177] : memref<3x3x128x128xbf16, #tpu.memory_space<vmem>>, vector<1x1x128x128xbf16>
    %135 = vector.shape_cast %134 : vector<1x1x128x128xbf16> to vector<128x128xbf16>
    %cst_178 = arith.constant dense<0.000000e+00> : vector<256x128xf32>
    %136 = tpu.matmul %133, %135, %cst_178 {dimension_numbers = #tpu.dot_dimension_numbers<[1], [0], [0], [1], [0, 0, 1, 1], [], []>} : vector<256x128xbf16>, vector<128x128xbf16>, vector<256x128xf32> -> vector<256x128xf32>
    %137 = arith.addf %131, %136 : vector<256x128xf32>
    %c2_179 = arith.constant 2 : index
    %c17_180 = arith.constant 17 : index
    %c0_181 = arith.constant 0 : index
    %138 = vector.load %arg10[%c2_179, %c17_180, %c0_181] : memref<18x40x128xbf16, #tpu.memory_space<vmem>>, vector<16x16x128xbf16>
    %139 = vector.shape_cast %138 : vector<16x16x128xbf16> to vector<256x128xbf16>
    %c2_182 = arith.constant 2 : index
    %c2_183 = arith.constant 2 : index
    %c0_184 = arith.constant 0 : index
    %c0_185 = arith.constant 0 : index
    %140 = vector.load %arg5[%c2_182, %c2_183, %c0_184, %c0_185] : memref<3x3x128x128xbf16, #tpu.memory_space<vmem>>, vector<1x1x128x128xbf16>
    %141 = vector.shape_cast %140 : vector<1x1x128x128xbf16> to vector<128x128xbf16>
    %cst_186 = arith.constant dense<0.000000e+00> : vector<256x128xf32>
    %142 = tpu.matmul %139, %141, %cst_186 {dimension_numbers = #tpu.dot_dimension_numbers<[1], [0], [0], [1], [0, 0, 1, 1], [], []>} : vector<256x128xbf16>, vector<128x128xbf16>, vector<256x128xf32> -> vector<256x128xf32>
    %143 = arith.addf %137, %142 : vector<256x128xf32>
    %144 = vector.shape_cast %88 : vector<128xf32> to vector<1x128xf32>
    %145 = vector.broadcast %144 : vector<1x128xf32> to vector<256x128xf32>
    %146 = arith.mulf %143, %145 : vector<256x128xf32>
    %147 = vector.shape_cast %90 : vector<128xf32> to vector<1x128xf32>
    %148 = vector.broadcast %147 : vector<1x128xf32> to vector<256x128xf32>
    %149 = arith.addf %146, %148 : vector<256x128xf32>
    %cst_187 = arith.constant 0.000000e+00 : f32
    %150 = vector.broadcast %cst_187 : f32 to vector<256x128xf32>
    %151 = arith.maximumf %149, %150 : vector<256x128xf32>
    %152 = vector.shape_cast %151 : vector<256x128xf32> to vector<16x16x128xf32>
    %c0_188 = arith.constant 0 : index
    %c0_189 = arith.constant 0 : index
    %c0_190 = arith.constant 0 : index
    %c0_191 = arith.constant 0 : index
    %153 = vector.load %arg8[%c0_188, %c0_189, %c0_190, %c0_191] : memref<1x16x16x128xf32, #tpu.memory_space<vmem>>, vector<1x16x16x128xf32>
    %154 = vector.shape_cast %153 : vector<1x16x16x128xf32> to vector<16x16x128xf32>
    %155 = vector.shape_cast %152 : vector<16x16x128xf32> to vector<1x16x16x128xf32>
    tpu.vector_store %arg8[%c0_188, %c0_189, %c0_190, %c0_191], %155 {strides = array<i32>} : memref<1x16x16x128xf32, #tpu.memory_space<vmem>>, vector<1x16x16x128xf32>,
    return
  }
  func.func @transform_0(%arg0: i32) -> (i32, i32, i32, i32) {
    %c0_i32 = arith.constant 0 : i32
    %c0_i32_0 = arith.constant 0 : i32
    %c0_i32_1 = arith.constant 0 : i32
    %c0_i32_2 = arith.constant 0 : i32
    return %arg0, %c0_i32, %c0_i32_0, %c0_i32_1 : i32, i32, i32, i32
  }
  func.func @transform_1(%arg0: i32) -> (i32, i32, i32, i32) {
    %c0_i32 = arith.constant 0 : i32
    %c0_i32_0 = arith.constant 0 : i32
    %c0_i32_1 = arith.constant 0 : i32
    %c0_i32_2 = arith.constant 0 : i32
    %c0_i32_3 = arith.constant 0 : i32
    return %c0_i32, %c0_i32_0, %c0_i32_1, %c0_i32_2 : i32, i32, i32, i32
  }
  func.func @transform_2(%arg0: i32) -> (i32, i32) {
    %c0_i32 = arith.constant 0 : i32
    %c0_i32_0 = arith.constant 0 : i32
    %c0_i32_1 = arith.constant 0 : i32
    return %c0_i32, %c0_i32_0 : i32, i32
  }
  func.func @transform_3(%arg0: i32) -> (i32, i32) {
    %c0_i32 = arith.constant 0 : i32
    %c0_i32_0 = arith.constant 0 : i32
    %c0_i32_1 = arith.constant 0 : i32
    return %c0_i32, %c0_i32_0 : i32, i32
  }
  func.func @transform_4(%arg0: i32) -> (i32, i32, i32, i32) {
    %c0_i32 = arith.constant 0 : i32
    %c0_i32_0 = arith.constant 0 : i32
    %c0_i32_1 = arith.constant 0 : i32
    %c0_i32_2 = arith.constant 0 : i32
    %c0_i32_3 = arith.constant 0 : i32
    return %c0_i32, %c0_i32_0, %c0_i32_1, %c0_i32_2 : i32, i32, i32, i32
  }
  func.func @transform_5(%arg0: i32) -> (i32, i32) {
    %c0_i32 = arith.constant 0 : i32
    %c0_i32_0 = arith.constant 0 : i32
    %c0_i32_1 = arith.constant 0 : i32
    return %c0_i32, %c0_i32_0 : i32, i32
  }
  func.func @transform_6(%arg0: i32) -> (i32, i32) {
    %c0_i32 = arith.constant 0 : i32
    %c0_i32_0 = arith.constant 0 : i32
    %c0_i32_1 = arith.constant 0 : i32
    return %c0_i32, %c0_i32_0 : i32, i32
  }
  func.func @transform_7(%arg0: i32) -> (i32, i32, i32, i32) {
    %c0_i32 = arith.constant 0 : i32
    %c0_i32_0 = arith.constant 0 : i32
    %c0_i32_1 = arith.constant 0 : i32
    %c0_i32_2 = arith.constant 0 : i32
    return %arg0, %c0_i32, %c0_i32_0, %c0_i32_1 : i32, i32, i32, i32
  }
}

</mosaic_0001>

<llo_original>
// kernel: tpu_custom_call.1
$region0: #{tpu_custom_call.1}
  #allocation0 [shape = 'u32[]', space=smem, size = 0x4, offset = 0x4, fixed_abs, tag = 'smem constant byte address 0x4 - core index']
  #allocation1 [shape = 'u32[144,128]{1,0:T(1,128)}', space=vmem, size = 0x12000, scoped, tag = 'internal scratch']
  #allocation2 [shape = 'bf16[18,40,128]{2,1,0:T(8,128)(2,1)}', space=vmem, size = 0x2d000, scoped, tag = 'scratch operand']
  #allocation3 [shape = 'bf16[18,40,128]{2,1,0:T(8,128)(2,1)}', space=vmem, size = 0x2d000, scoped, tag = 'scratch operand']
  %s0 = inlined_call_operand.hbm [shape: bf16[2,16,16,128], index: 0, kind: input, shape index: {}]
  %s1 = inlined_call_operand.hbm [shape: bf16[3,3,128,128], index: 1, kind: input, shape index: {}]
  %s2 = inlined_call_operand.vmem [shape: f32[1,128], index: 2, kind: input, shape index: {}]
  %s3 = inlined_call_operand.vmem [shape: f32[1,128], index: 3, kind: input, shape index: {}]
  %s4 = inlined_call_operand.hbm [shape: bf16[3,3,128,128], index: 4, kind: input, shape index: {}]
  %s5 = inlined_call_operand.vmem [shape: f32[1,128], index: 5, kind: input, shape index: {}]
  %s6 = inlined_call_operand.vmem [shape: f32[1,128], index: 6, kind: input, shape index: {}]
  %s7 = inlined_call_operand.hbm [shape: f32[2,16,16,128], index: 7, kind: output, shape index: {}]
  %s8 = sld [smem:[#allocation0]]
  $region73: #{tpu_custom_call.1} parent=0
    _
  %s10 = ssub.s32 1, %s8
  %s11 = scalar_select 0, %s10, %s8
  $region1: #{tpu_custom_call.1} parent=0
    #allocation4 [shape = 'u8[131072]{0}', space=vmem, size = 0x20000, scoped, tag = 'input window, operand 0']
    #allocation5 [shape = 's32[2]{0}', space=sflag, size = 0x8, scoped, tag = 'scoped memory for tpu_custom_call.1']
    #allocation6 [shape = 's32[2]{0}', space=sflag, size = 0x8, scoped, tag = 'scoped memory for tpu_custom_call.1']
    #allocation7 [shape = 'u8[294912]{0}', space=vmem, size = 0x48000, scoped, tag = 'input window, operand 1, single buffered']
    #allocation8 [shape = 's32[1]{0}', space=sflag, size = 0x4, scoped, tag = 'scoped memory for tpu_custom_call.1']
    #allocation9 [shape = 'u8[294912]{0}', space=vmem, size = 0x48000, scoped, tag = 'input window, operand 4, single buffered']
    #allocation10 [shape = 'u8[262144]{0}', space=vmem, size = 0x40000, scoped, tag = 'output window, operand 0']
    %12 = vsyncpa [#allocation5], 0
    %s13 = scalar_lea.sflag [#allocation5], 1
    %14 = vsyncpa %s13, 0
    %15 = vsyncpa [#allocation8], 0
    %16 = vsyncpa [#allocation6], 0
    %s17 = scalar_lea.sflag [#allocation6], 1
    %18 = vsyncpa %s17, 0
    loop: start=0, step=1, limit=4
    $region2: #{tpu_custom_call.1} parent=1 // loop_pre_header
      _
    $region3: #{tpu_custom_call.1} parent=1 // loop_header
      %s20 = sphi 0, %s24
      %p21 = scmp.ge.s32.totalorder %s20, 4
      %s30 = sphi 0, %s32
      %s33 = sphi 0, %s30
      %s34 = sphi 0, %s33
      %s50 = sphi 0, %s34
      %s54 = sphi 0, %s54
      %s56 = sphi 0, %s54
      %s57 = sphi 0, %s56
      %s71 = sphi 0, %s57
      %s75 = sphi 0, %s75
      %s77 = sphi 0, %s75
      %s78 = sphi 0, %s77
      %s92 = sphi 0, %s78
      %s96 = sphi 0, %s96
      %s98 = sphi 0, %s96
      %s99 = sphi 0, %s98
      %s113 = sphi 0, %s99
      %s117 = sphi 0, %s117
      %s119 = sphi 0, %s117
      %s120 = sphi 0, %s119
      %s134 = sphi 0, %s120
      %s138 = sphi 0, %s138
      %s140 = sphi 0, %s138
      %s141 = sphi 0, %s140
      %s155 = sphi 0, %s141
      %s159 = sphi 0, %s159
      %s161 = sphi 0, %s159
      %s162 = sphi 0, %s161
      %s176 = sphi 0, %s162
      %s182 = sphi 0, %s184
      %s185 = sphi 0, %s182
      %s186 = sphi 0, %s185
      %s202 = sphi 0, %s186
    $region4: #{tpu_custom_call.1} parent=1 // loop_header_branch
      %23 = sbr.rel (%p21) target = $region8
    $region5: #{tpu_custom_call.1} parent=1 // loop_body
      %s25 = ssub.s32 %s20, 1
      %s26 = ssub.s32 %s20, 2
      %s27 = sadd.s32 %s20, 1
      %s28 = ssub.s32 %s20, %s27
      %p29 = scmp.eq.s32.totalorder %s28, 0
      %s31 = sadd.s32 %s30, 1
      %s32 = scalar_select %p29, %s30, %s31
      %p35 = pneg %p29
      %p36 = scmp.eq.s32.totalorder %s20, 1
      %p37 = por %p35, %p36
      %p38 = scmp.ne.s32.totalorder %s30, %s33
      %p39 = scmp.eq.s32.totalorder %s20, 0
      %p40 = por %p38, %p39
      %p41 = scmp.ne.s32.totalorder %s30, %s33
      %p42 = scmp.eq.s32.totalorder %s25, 1
      %p43 = por %p41, %p42
      %p44 = scmp.ne.s32.totalorder %s33, %s34
      %p45 = scmp.eq.s32.totalorder %s25, 0
      %p46 = por %p44, %p45
      %p47 = scmp.ne.s32.totalorder %s33, %s34
      %p48 = scmp.eq.s32.totalorder %s26, 1
      %p49 = por %p47, %p48
      %p51 = scmp.ne.s32.totalorder %s34, %s50
      %p52 = scmp.eq.s32.totalorder %s26, 0
      %p53 = por %p51, %p52
      %s55 = sadd.s32 %s54, 1
      %p58 = scmp.eq.s32.totalorder %s20, 1
      %p59 = scmp.ne.s32.totalorder %s54, %s56
      %p60 = scmp.eq.s32.totalorder %s20, 0
      %p61 = por %p59, %p60
      %p62 = scmp.ne.s32.totalorder %s54, %s56
      %p63 = scmp.eq.s32.totalorder %s25, 1
      %p64 = por %p62, %p63
      %p65 = scmp.ne.s32.totalorder %s56, %s57
      %p66 = scmp.eq.s32.totalorder %s25, 0
      %p67 = por %p65, %p66
      %p68 = scmp.ne.s32.totalorder %s56, %s57
      %p69 = scmp.eq.s32.totalorder %s26, 1
      %p70 = por %p68, %p69
      %p72 = scmp.ne.s32.totalorder %s57, %s71
      %p73 = scmp.eq.s32.totalorder %s26, 0
      %p74 = por %p72, %p73
      %s76 = sadd.s32 %s75, 1
      %p79 = scmp.eq.s32.totalorder %s20, 1
      %p80 = scmp.ne.s32.totalorder %s75, %s77
      %p81 = scmp.eq.s32.totalorder %s20, 0
      %p82 = por %p80, %p81
      %p83 = scmp.ne.s32.totalorder %s75, %s77
      %p84 = scmp.eq.s32.totalorder %s25, 1
      %p85 = por %p83, %p84
      %p86 = scmp.ne.s32.totalorder %s77, %s78
      %p87 = scmp.eq.s32.totalorder %s25, 0
      %p88 = por %p86, %p87
      %p89 = scmp.ne.s32.totalorder %s77, %s78
      %p90 = scmp.eq.s32.totalorder %s26, 1
      %p91 = por %p89, %p90
      %p93 = scmp.ne.s32.totalorder %s78, %s92
      %p94 = scmp.eq.s32.totalorder %s26, 0
      %p95 = por %p93, %p94
      %s97 = sadd.s32 %s96, 1
      %p100 = scmp.eq.s32.totalorder %s20, 1
      %p101 = scmp.ne.s32.totalorder %s96, %s98
      %p102 = scmp.eq.s32.totalorder %s20, 0
      %p103 = por %p101, %p102
      %p104 = scmp.ne.s32.totalorder %s96, %s98
      %p105 = scmp.eq.s32.totalorder %s25, 1
      %p106 = por %p104, %p105
      %p107 = scmp.ne.s32.totalorder %s98, %s99
      %p108 = scmp.eq.s32.totalorder %s25, 0
      %p109 = por %p107, %p108
      %p110 = scmp.ne.s32.totalorder %s98, %s99
      %p111 = scmp.eq.s32.totalorder %s26, 1
      %p112 = por %p110, %p111
      %p114 = scmp.ne.s32.totalorder %s99, %s113
      %p115 = scmp.eq.s32.totalorder %s26, 0
      %p116 = por %p114, %p115
      %s118 = sadd.s32 %s117, 1
      %p121 = scmp.eq.s32.totalorder %s20, 1
      %p122 = scmp.ne.s32.totalorder %s117, %s119
      %p123 = scmp.eq.s32.totalorder %s20, 0
      %p124 = por %p122, %p123
      %p125 = scmp.ne.s32.totalorder %s117, %s119
      %p126 = scmp.eq.s32.totalorder %s25, 1
      %p127 = por %p125, %p126
      %p128 = scmp.ne.s32.totalorder %s119, %s120
      %p129 = scmp.eq.s32.totalorder %s25, 0
      %p130 = por %p128, %p129
      %p131 = scmp.ne.s32.totalorder %s119, %s120
      %p132 = scmp.eq.s32.totalorder %s26, 1
      %p133 = por %p131, %p132
      %p135 = scmp.ne.s32.totalorder %s120, %s134
      %p136 = scmp.eq.s32.totalorder %s26, 0
      %p137 = por %p135, %p136
      %s139 = sadd.s32 %s138, 1
      %p142 = scmp.eq.s32.totalorder %s20, 1
      %p143 = scmp.ne.s32.totalorder %s138, %s140
      %p144 = scmp.eq.s32.totalorder %s20, 0
      %p145 = por %p143, %p144
      %p146 = scmp.ne.s32.totalorder %s138, %s140
      %p147 = scmp.eq.s32.totalorder %s25, 1
      %p148 = por %p146, %p147
      %p149 = scmp.ne.s32.totalorder %s140, %s141
      %p150 = scmp.eq.s32.totalorder %s25, 0
      %p151 = por %p149, %p150
      %p152 = scmp.ne.s32.totalorder %s140, %s141
      %p153 = scmp.eq.s32.totalorder %s26, 1
      %p154 = por %p152, %p153
      %p156 = scmp.ne.s32.totalorder %s141, %s155
      %p157 = scmp.eq.s32.totalorder %s26, 0
      %p158 = por %p156, %p157
      %s160 = sadd.s32 %s159, 1
      %p163 = scmp.eq.s32.totalorder %s20, 1
      %p164 = scmp.ne.s32.totalorder %s159, %s161
      %p165 = scmp.eq.s32.totalorder %s20, 0
      %p166 = por %p164, %p165
      %p167 = scmp.ne.s32.totalorder %s159, %s161
      %p168 = scmp.eq.s32.totalorder %s25, 1
      %p169 = por %p167, %p168
      %p170 = scmp.ne.s32.totalorder %s161, %s162
      %p171 = scmp.eq.s32.totalorder %s25, 0
      %p172 = por %p170, %p171
      %p173 = scmp.ne.s32.totalorder %s161, %s162
      %p174 = scmp.eq.s32.totalorder %s26, 1
      %p175 = por %p173, %p174
      %p177 = scmp.ne.s32.totalorder %s162, %s176
      %p178 = scmp.eq.s32.totalorder %s26, 0
      %p179 = por %p177, %p178
      %s180 = ssub.s32 %s20, %s27
      %p181 = scmp.eq.s32.totalorder %s180, 0
      %s183 = sadd.s32 %s182, 1
      %s184 = scalar_select %p181, %s182, %s183
      %p187 = pneg %p181
      %p188 = scmp.eq.s32.totalorder %s20, 1
      %p189 = por %p187, %p188
      %p190 = scmp.ne.s32.totalorder %s182, %s185
      %p191 = scmp.eq.s32.totalorder %s20, 0
      %p192 = por %p190, %p191
      %p193 = scmp.ne.s32.totalorder %s182, %s185
      %p194 = scmp.eq.s32.totalorder %s25, 1
      %p195 = por %p193, %p194
      %p196 = scmp.ne.s32.totalorder %s185, %s186
      %p197 = scmp.eq.s32.totalorder %s25, 0
      %p198 = por %p196, %p197
      %p199 = scmp.ne.s32.totalorder %s185, %s186
      %p200 = scmp.eq.s32.totalorder %s26, 1
      %p201 = por %p199, %p200
      %p203 = scmp.ne.s32.totalorder %s186, %s202
      %p204 = scmp.eq.s32.totalorder %s26, 0
      %p205 = por %p203, %p204
      %p206 = scmp.le.s32.totalorder 1, %s20
      %p207 = scmp.lt.s32.totalorder %s20, 3
      %p208 = pnand %p206, %p207
      %p209 = pneg %p208
      // Predicated region
      $region9: #{tpu_custom_call.1} parent=5 // pred_check
        _
      $region10: #{tpu_custom_call.1} parent=5 // pred_check_branch
        %211 = sbr.rel (%p208) target = $region12
      $region11: #{tpu_custom_call.1} parent=5 // pred_region
        %s212 = ssub.s32 %s20, 1
        // Predicated region
        $region13: #{tpu_custom_call.1} parent=11 // pred_check
          %p213 = pneg %p67
        $region14: #{tpu_custom_call.1} parent=11 // pred_check_branch
          %215 = sbr.rel (%p213) target = $region16
        $region15: #{tpu_custom_call.1} parent=11 // pred_region
          %s217 = ssub.s32 9216, 9216
          %218 = vsyncadd [#allocation8], %s217
          %s219 = sshll.u32 [#allocation7], 4
          %s220 = int_to_ptr.vmem [resolvable:$true] %s219
          %225 = dma.hbm_to_vmem [thread:$0]  %s1, 9216, %s220, [#allocation8], 64, 64, 4
        $region16: #{tpu_custom_call.1} parent=11 // pred_fallthru
          _
        // Predicated region
        $region17: #{tpu_custom_call.1} parent=11 // pred_check
          %p226 = pneg %p88
        $region18: #{tpu_custom_call.1} parent=11 // pred_check_branch
          %228 = sbr.rel (%p226) target = $region20
        $region19: #{tpu_custom_call.1} parent=11 // pred_region
          _
        $region20: #{tpu_custom_call.1} parent=11 // pred_fallthru
          _
        // Predicated region
        $region21: #{tpu_custom_call.1} parent=11 // pred_check
          %p229 = pneg %p109
        $region22: #{tpu_custom_call.1} parent=11 // pred_check_branch
          %231 = sbr.rel (%p229) target = $region24
        $region23: #{tpu_custom_call.1} parent=11 // pred_region
          _
        $region24: #{tpu_custom_call.1} parent=11 // pred_fallthru
          _
        // Predicated region
        $region25: #{tpu_custom_call.1} parent=11 // pred_check
          %p232 = pneg %p130
        $region26: #{tpu_custom_call.1} parent=11 // pred_check_branch
          %234 = sbr.rel (%p232) target = $region28
        $region27: #{tpu_custom_call.1} parent=11 // pred_region
          %s236 = ssub.s32 9216, 9216
          %237 = vsyncadd [#allocation8], %s236
          %s238 = sshll.u32 [#allocation9], 4
          %s239 = int_to_ptr.vmem [resolvable:$true] %s238
          %244 = dma.hbm_to_vmem [thread:$0]  %s4, 9216, %s239, [#allocation8], 64, 64, 4
        $region28: #{tpu_custom_call.1} parent=11 // pred_fallthru
          _
        // Predicated region
        $region29: #{tpu_custom_call.1} parent=11 // pred_check
          %p245 = pneg %p151
        $region30: #{tpu_custom_call.1} parent=11 // pred_check_branch
          %247 = sbr.rel (%p245) target = $region32
        $region31: #{tpu_custom_call.1} parent=11 // pred_region
          _
        $region32: #{tpu_custom_call.1} parent=11 // pred_fallthru
          _
        // Predicated region
        $region33: #{tpu_custom_call.1} parent=11 // pred_check
          %p248 = pneg %p172
        $region34: #{tpu_custom_call.1} parent=11 // pred_check_branch
          %250 = sbr.rel (%p248) target = $region36
        $region35: #{tpu_custom_call.1} parent=11 // pred_region
          _
        $region36: #{tpu_custom_call.1} parent=11 // pred_fallthru
          _
      $region12: #{tpu_custom_call.1} parent=5 // pred_fallthru
        _
      %p251 = scmp.lt.s32.totalorder %s20, 2
      // Predicated region
      $region37: #{tpu_custom_call.1} parent=5 // pred_check
        %p252 = pneg %p251
      $region38: #{tpu_custom_call.1} parent=5 // pred_check_branch
        %254 = sbr.rel (%p252) target = $region40
      $region39: #{tpu_custom_call.1} parent=5 // pred_region
        // Predicated region
        $region41: #{tpu_custom_call.1} parent=39 // pred_check
          %p255 = pneg %p40
        $region42: #{tpu_custom_call.1} parent=39 // pred_check_branch
          %257 = sbr.rel (%p255) target = $region44
        $region43: #{tpu_custom_call.1} parent=39 // pred_region
          %s258 = sand.u32 %s30, 1
          %s259 = scalar_lea.sflag [#allocation5], %s258
          %s260 = sand.u32 %s30, 1
          %s261 = smul.addr %s260, 128
          %s262 = scalar_lea.vmem [#allocation4], %s261
          %s264 = ssub.s32 2048, 2048
          %265 = vsyncadd %s259, %s264
          %s266 = smul.addr %s20, 32
          %s267 = smul.addr %s266, 64
          %s268 = scalar_lea.hbm %s0, %s267
          %s269 = sshll.u32 %s262, 4
          %s270 = int_to_ptr.vmem [resolvable:$true] %s269
          %275 = dma.hbm_to_vmem [thread:$0]  %s268, 2048, %s270, %s259, 64, 64, 4
        $region44: #{tpu_custom_call.1} parent=39 // pred_fallthru
          _
      $region40: #{tpu_custom_call.1} parent=5 // pred_fallthru
        _
      %p276 = scmp.le.s32.totalorder 1, %s20
      %p277 = scmp.lt.s32.totalorder %s20, 3
      %p278 = pnand %p276, %p277
      %p279 = pneg %p278
      // Predicated region
      $region45: #{tpu_custom_call.1} parent=5 // pred_check
        _
      $region46: #{tpu_custom_call.1} parent=5 // pred_check_branch
        %281 = sbr.rel (%p278) target = $region48
      $region47: #{tpu_custom_call.1} parent=5 // pred_region
        %s282 = ssub.s32 %s20, 1
        %s283 = sand.u32 %s33, 1
        %s284 = scalar_lea.sflag [#allocation5], %s283
        %s285 = sand.u32 %s33, 1
        %s286 = smul.addr %s285, 128
        %s287 = scalar_lea.vmem [#allocation4], %s286
        // Predicated region
        $region49: #{tpu_custom_call.1} parent=47 // pred_check
          %p288 = pneg %p46
        $region50: #{tpu_custom_call.1} parent=47 // pred_check_branch
          %290 = sbr.rel (%p288) target = $region52
        $region51: #{tpu_custom_call.1} parent=47 // pred_region
          %291 = dma.done %s284, 2048
        $region52: #{tpu_custom_call.1} parent=47 // pred_fallthru
          _
        // Predicated region
        $region53: #{tpu_custom_call.1} parent=47 // pred_check
          %p292 = pneg %p67
        $region54: #{tpu_custom_call.1} parent=47 // pred_check_branch
          %294 = sbr.rel (%p292) target = $region56
        $region55: #{tpu_custom_call.1} parent=47 // pred_region
          %295 = dma.done [#allocation8], 9216
        $region56: #{tpu_custom_call.1} parent=47 // pred_fallthru
          _
        // Predicated region
        $region57: #{tpu_custom_call.1} parent=47 // pred_check
          %p296 = pneg %p130
        $region58: #{tpu_custom_call.1} parent=47 // pred_check_branch
          %298 = sbr.rel (%p296) target = $region60
        $region59: #{tpu_custom_call.1} parent=47 // pred_region
          %299 = dma.done [#allocation8], 9216
        $region60: #{tpu_custom_call.1} parent=47 // pred_fallthru
          _
        %s300 = sand.u32 %s33, 1
        %s301 = scalar_lea.sflag [#allocation5], %s300
        %s302 = sand.u32 %s33, 1
        %s303 = smul.addr %s302, 128
        %s304 = scalar_lea.vmem [#allocation4], %s303
        %p305 = pneg %p46
        %p306 = pneg %p43
        %p307 = pneg %p67
        %p308 = pneg %p64
        %p309 = pneg %p88
        %p310 = pneg %p85
        %p311 = pneg %p109
        %p312 = pneg %p106
        %p313 = pneg %p130
        %p314 = pneg %p127
        %p315 = pneg %p151
        %p316 = pneg %p148
        %p317 = pneg %p172
        %p318 = pneg %p169
        %p319 = pneg %p198
        %p320 = pneg %p195
        %s321 = sand.u32 %s185, 1
        %s322 = scalar_lea.sflag [#allocation6], %s321
        %s323 = sand.u32 %s185, 1
        %s324 = smul.addr %s323, 256
        %s325 = scalar_lea.vmem [#allocation10], %s324
        %327 = vst [vmem:[#allocation2] sm:$0xf] 0
        %328 = vst [vmem:[#allocation2 + $0x4] sm:$0xf] 0
        %329 = vst [vmem:[#allocation2 + $0x14] sm:$0xf] 0
        %330 = vst [vmem:[#allocation2 + $0x18] sm:$0xf] 0
        %331 = vst [vmem:[#allocation2 + $0x28] sm:$0xf] 0
        %332 = vst [vmem:[#allocation2 + $0x2c] sm:$0xf] 0
        %333 = vst [vmem:[#allocation2 + $0x3c] sm:$0xf] 0
        %334 = vst [vmem:[#allocation2 + $0x40] sm:$0xf] 0
        %335 = vst [vmem:[#allocation2 + $0x50] sm:$0xf] 0
        %336 = vst [vmem:[#allocation2 + $0x54] sm:$0xf] 0
        %337 = vst [vmem:[#allocation2 + $0x64] sm:$0xf] 0
        %338 = vst [vmem:[#allocation2 + $0x68] sm:$0xf] 0
        %339 = vst [vmem:[#allocation2 + $0x78] sm:$0xf] 0
        %340 = vst [vmem:[#allocation2 + $0x7c] sm:$0xf] 0
        %341 = vst [vmem:[#allocation2 + $0x8c] sm:$0xf] 0
        %342 = vst [vmem:[#allocation2 + $0x90] sm:$0xf] 0
        %343 = vst [vmem:[#allocation2 + $0xa0] sm:$0xf] 0
        %344 = vst [vmem:[#allocation2 + $0xa4] sm:$0xf] 0
        %345 = vst [vmem:[#allocation2 + $0xb4] sm:$0xf] 0
        %346 = vst [vmem:[#allocation2 + $0xb8] sm:$0xf] 0
        %347 = vst [vmem:[#allocation2 + $0xc8] sm:$0xf] 0
        %348 = vst [vmem:[#allocation2 + $0xcc] sm:$0xf] 0
        %349 = vst [vmem:[#allocation2 + $0xdc] sm:$0xf] 0
        %350 = vst [vmem:[#allocation2 + $0xe0] sm:$0xf] 0
        %351 = vst [vmem:[#allocation2 + $0xf0] sm:$0xf] 0
        %352 = vst [vmem:[#allocation2 + $0xf4] sm:$0xf] 0
        %353 = vst [vmem:[#allocation2 + $0x104] sm:$0xf] 0
        %354 = vst [vmem:[#allocation2 + $0x108] sm:$0xf] 0
        %355 = vst [vmem:[#allocation2 + $0x118] sm:$0xf] 0
        %356 = vst [vmem:[#allocation2 + $0x11c] sm:$0xf] 0
        %357 = vst [vmem:[#allocation2 + $0x12c] sm:$0xf] 0
        %358 = vst [vmem:[#allocation2 + $0x130] sm:$0xf] 0
        %359 = vst [vmem:[#allocation2 + $0x140] sm:$0xf] 0
        %360 = vst [vmem:[#allocation2 + $0x144] sm:$0xf] 0
        %361 = vst [vmem:[#allocation2 + $0x154] sm:$0xf] 0
        %362 = vst [vmem:[#allocation2 + $0x158] sm:$0xf] 0
        %363 = vst [vmem:[#allocation2 + $0x10] sm:$0xf] 0
        %364 = vst [vmem:[#allocation2 + $0x24] sm:$0xf] 0
        %365 = vst [vmem:[#allocation2 + $0x38] sm:$0xf] 0
        %366 = vst [vmem:[#allocation2 + $0x4c] sm:$0xf] 0
        %367 = vst [vmem:[#allocation2 + $0x60] sm:$0xf] 0
        %368 = vst [vmem:[#allocation2 + $0x74] sm:$0xf] 0
        %369 = vst [vmem:[#allocation2 + $0x88] sm:$0xf] 0
        %370 = vst [vmem:[#allocation2 + $0x9c] sm:$0xf] 0
        %371 = vst [vmem:[#allocation2 + $0xb0] sm:$0xf] 0
        %372 = vst [vmem:[#allocation2 + $0xc4] sm:$0xf] 0
        %373 = vst [vmem:[#allocation2 + $0xd8] sm:$0xf] 0
        %374 = vst [vmem:[#allocation2 + $0xec] sm:$0xf] 0
        %375 = vst [vmem:[#allocation2 + $0x100] sm:$0xf] 0
        %376 = vst [vmem:[#allocation2 + $0x114] sm:$0xf] 0
        %377 = vst [vmem:[#allocation2 + $0x128] sm:$0xf] 0
        %378 = vst [vmem:[#allocation2 + $0x13c] sm:$0xf] 0
        %379 = vst [vmem:[#allocation2 + $0x150] sm:$0xf] 0
        %380 = vst [vmem:[#allocation2 + $0x164] sm:$0xf] 0
        %381 = vst [vmem:[#allocation2 + $0x8] sm:$0xf] 0
        %382 = vst [vmem:[#allocation2 + $0xc] sm:$0xf] 0
        %s383 = scalar_lea.vmem [#allocation2], 340
        %384 = vst [vmem:[%s383 + $0x8] sm:$0xf] 0
        %385 = vst [vmem:[%s383 + $0xc] sm:$0xf] 0
        %386 = vst [vmem:[#allocation3] sm:$0xf] 0
        %387 = vst [vmem:[#allocation3 + $0x4] sm:$0xf] 0
        %388 = vst [vmem:[#allocation3 + $0x14] sm:$0xf] 0
        %389 = vst [vmem:[#allocation3 + $0x18] sm:$0xf] 0
        %390 = vst [vmem:[#allocation3 + $0x28] sm:$0xf] 0
        %391 = vst [vmem:[#allocation3 + $0x2c] sm:$0xf] 0
        %392 = vst [vmem:[#allocation3 + $0x3c] sm:$0xf] 0
        %393 = vst [vmem:[#allocation3 + $0x40] sm:$0xf] 0
        %394 = vst [vmem:[#allocation3 + $0x50] sm:$0xf] 0
        %395 = vst [vmem:[#allocation3 + $0x54] sm:$0xf] 0
        %396 = vst [vmem:[#allocation3 + $0x64] sm:$0xf] 0
        %397 = vst [vmem:[#allocation3 + $0x68] sm:$0xf] 0
        %398 = vst [vmem:[#allocation3 + $0x78] sm:$0xf] 0
        %399 = vst [vmem:[#allocation3 + $0x7c] sm:$0xf] 0
        %400 = vst [vmem:[#allocation3 + $0x8c] sm:$0xf] 0
        %401 = vst [vmem:[#allocation3 + $0x90] sm:$0xf] 0
        %402 = vst [vmem:[#allocation3 + $0xa0] sm:$0xf] 0
        %403 = vst [vmem:[#allocation3 + $0xa4] sm:$0xf] 0
        %404 = vst [vmem:[#allocation3 + $0xb4] sm:$0xf] 0
        %405 = vst [vmem:[#allocation3 + $0xb8] sm:$0xf] 0
        %406 = vst [vmem:[#allocation3 + $0xc8] sm:$0xf] 0
        %407 = vst [vmem:[#allocation3 + $0xcc] sm:$0xf] 0
        %408 = vst [vmem:[#allocation3 + $0xdc] sm:$0xf] 0
        %409 = vst [vmem:[#allocation3 + $0xe0] sm:$0xf] 0
        %410 = vst [vmem:[#allocation3 + $0xf0] sm:$0xf] 0
        %411 = vst [vmem:[#allocation3 + $0xf4] sm:$0xf] 0
        %412 = vst [vmem:[#allocation3 + $0x104] sm:$0xf] 0
        %413 = vst [vmem:[#allocation3 + $0x108] sm:$0xf] 0
        %414 = vst [vmem:[#allocation3 + $0x118] sm:$0xf] 0
        %415 = vst [vmem:[#allocation3 + $0x11c] sm:$0xf] 0
        %416 = vst [vmem:[#allocation3 + $0x12c] sm:$0xf] 0
        %417 = vst [vmem:[#allocation3 + $0x130] sm:$0xf] 0
        %418 = vst [vmem:[#allocation3 + $0x140] sm:$0xf] 0
        %419 = vst [vmem:[#allocation3 + $0x144] sm:$0xf] 0
        %420 = vst [vmem:[#allocation3 + $0x154] sm:$0xf] 0
        %421 = vst [vmem:[#allocation3 + $0x158] sm:$0xf] 0
        %422 = vst [vmem:[#allocation3 + $0x10] sm:$0xf] 0
        %423 = vst [vmem:[#allocation3 + $0x24] sm:$0xf] 0
        %424 = vst [vmem:[#allocation3 + $0x38] sm:$0xf] 0
        %425 = vst [vmem:[#allocation3 + $0x4c] sm:$0xf] 0
        %426 = vst [vmem:[#allocation3 + $0x60] sm:$0xf] 0
        %427 = vst [vmem:[#allocation3 + $0x74] sm:$0xf] 0
        %428 = vst [vmem:[#allocation3 + $0x88] sm:$0xf] 0
        %429 = vst [vmem:[#allocation3 + $0x9c] sm:$0xf] 0
        %430 = vst [vmem:[#allocation3 + $0xb0] sm:$0xf] 0
        %431 = vst [vmem:[#allocation3 + $0xc4] sm:$0xf] 0
        %432 = vst [vmem:[#allocation3 + $0xd8] sm:$0xf] 0
        %433 = vst [vmem:[#allocation3 + $0xec] sm:$0xf] 0
        %434 = vst [vmem:[#allocation3 + $0x100] sm:$0xf] 0
        %435 = vst [vmem:[#allocation3 + $0x114] sm:$0xf] 0
        %436 = vst [vmem:[#allocation3 + $0x128] sm:$0xf] 0
        %437 = vst [vmem:[#allocation3 + $0x13c] sm:$0xf] 0
        %438 = vst [vmem:[#allocation3 + $0x150] sm:$0xf] 0
        %439 = vst [vmem:[#allocation3 + $0x164] sm:$0xf] 0
        %440 = vst [vmem:[#allocation3 + $0x8] sm:$0xf] 0
        %441 = vst [vmem:[#allocation3 + $0xc] sm:$0xf] 0
        %s442 = scalar_lea.vmem [#allocation3], 340
        %443 = vst [vmem:[%s442 + $0x8] sm:$0xf] 0
        %444 = vst [vmem:[%s442 + $0xc] sm:$0xf] 0
        %v445 = vld [vmem:[%s287] sm:$0xf]
        %v446 = vld [vmem:[%s287 + $0x4] sm:$0xf]
        %v447 = vld [vmem:[%s287 + $0x8] sm:$0xf]
        %v448 = vld [vmem:[%s287 + $0xc] sm:$0xf]
        %v449 = vld [vmem:[%s287 + $0x10] sm:$0xf]
        %v450 = vld [vmem:[%s287 + $0x14] sm:$0xf]
        %v451 = vld [vmem:[%s287 + $0x18] sm:$0xf]
        %v452 = vld [vmem:[%s287 + $0x1c] sm:$0xf]
        %v453 = vld [vmem:[%s287 + $0x20] sm:$0xf]
        %v454 = vld [vmem:[%s287 + $0x24] sm:$0xf]
        %v455 = vld [vmem:[%s287 + $0x28] sm:$0xf]
        %v456 = vld [vmem:[%s287 + $0x2c] sm:$0xf]
        %v457 = vld [vmem:[%s287 + $0x30] sm:$0xf]
        %v458 = vld [vmem:[%s287 + $0x34] sm:$0xf]
        %v459 = vld [vmem:[%s287 + $0x38] sm:$0xf]
        %v460 = vld [vmem:[%s287 + $0x3c] sm:$0xf]
        %v461 = vld [vmem:[%s287 + $0x40] sm:$0xf]
        %v462 = vld [vmem:[%s287 + $0x44] sm:$0xf]
        %v463 = vld [vmem:[%s287 + $0x48] sm:$0xf]
        %v464 = vld [vmem:[%s287 + $0x4c] sm:$0xf]
        %v465 = vld [vmem:[%s287 + $0x50] sm:$0xf]
        %v466 = vld [vmem:[%s287 + $0x54] sm:$0xf]
        %v467 = vld [vmem:[%s287 + $0x58] sm:$0xf]
        %v468 = vld [vmem:[%s287 + $0x5c] sm:$0xf]
        %v469 = vld [vmem:[%s287 + $0x60] sm:$0xf]
        %v470 = vld [vmem:[%s287 + $0x64] sm:$0xf]
        %v471 = vld [vmem:[%s287 + $0x68] sm:$0xf]
        %v472 = vld [vmem:[%s287 + $0x6c] sm:$0xf]
        %v473 = vld [vmem:[%s287 + $0x70] sm:$0xf]
        %v474 = vld [vmem:[%s287 + $0x74] sm:$0xf]
        %v475 = vld [vmem:[%s287 + $0x78] sm:$0xf]
        %v476 = vld [vmem:[%s287 + $0x7c] sm:$0xf]
        %s477 = scalar_lea.vmem [#allocation2], 20
        %478 = vst [vmem:[%s477 + $0x8] sm:$0xf] %v445
        %479 = vst [vmem:[%s477 + $0xc] sm:$0xf] %v446
        %480 = vst [vmem:[%s477 + $0x1c] sm:$0xf] %v447
        %481 = vst [vmem:[%s477 + $0x20] sm:$0xf] %v448
        %482 = vst [vmem:[%s477 + $0x30] sm:$0xf] %v449
        %483 = vst [vmem:[%s477 + $0x34] sm:$0xf] %v450
        %484 = vst [vmem:[%s477 + $0x44] sm:$0xf] %v451
        %485 = vst [vmem:[%s477 + $0x48] sm:$0xf] %v452
        %486 = vst [vmem:[%s477 + $0x58] sm:$0xf] %v453
        %487 = vst [vmem:[%s477 + $0x5c] sm:$0xf] %v454
        %488 = vst [vmem:[%s477 + $0x6c] sm:$0xf] %v455
        %489 = vst [vmem:[%s477 + $0x70] sm:$0xf] %v456
        %490 = vst [vmem:[%s477 + $0x80] sm:$0xf] %v457
        %491 = vst [vmem:[%s477 + $0x84] sm:$0xf] %v458
        %492 = vst [vmem:[%s477 + $0x94] sm:$0xf] %v459
        %493 = vst [vmem:[%s477 + $0x98] sm:$0xf] %v460
        %494 = vst [vmem:[%s477 + $0xa8] sm:$0xf] %v461
        %495 = vst [vmem:[%s477 + $0xac] sm:$0xf] %v462
        %496 = vst [vmem:[%s477 + $0xbc] sm:$0xf] %v463
        %497 = vst [vmem:[%s477 + $0xc0] sm:$0xf] %v464
        %498 = vst [vmem:[%s477 + $0xd0] sm:$0xf] %v465
        %499 = vst [vmem:[%s477 + $0xd4] sm:$0xf] %v466
        %500 = vst [vmem:[%s477 + $0xe4] sm:$0xf] %v467
        %501 = vst [vmem:[%s477 + $0xe8] sm:$0xf] %v468
        %502 = vst [vmem:[%s477 + $0xf8] sm:$0xf] %v469
        %503 = vst [vmem:[%s477 + $0xfc] sm:$0xf] %v470
        %504 = vst [vmem:[%s477 + $0x10c] sm:$0xf] %v471
        %505 = vst [vmem:[%s477 + $0x110] sm:$0xf] %v472
        %506 = vst [vmem:[%s477 + $0x120] sm:$0xf] %v473
        %507 = vst [vmem:[%s477 + $0x124] sm:$0xf] %v474
        %508 = vst [vmem:[%s477 + $0x134] sm:$0xf] %v475
        %509 = vst [vmem:[%s477 + $0x138] sm:$0xf] %v476
        %v510 = vld [vmem:[%s2] sm:$0x1]
        %v511 = vld [vmem:[%s3] sm:$0x1]
        %v512 = vld [vmem:[#allocation2 + $0x4] sm:$0x8]
        %v513 = vld [vmem:[#allocation2 + $0x8] sm:$0xf]
        %v514 = vld [vmem:[#allocation2 + $0xc] sm:$0xf]
        %v515 = vld [vmem:[#allocation2 + $0x18] sm:$0x8]
        %v516 = vld [vmem:[#allocation2 + $0x1c] sm:$0xf]
        %v517 = vld [vmem:[#allocation2 + $0x20] sm:$0xf]
        %v518 = vld [vmem:[#allocation2 + $0x2c] sm:$0x8]
        %v519 = vld [vmem:[#allocation2 + $0x30] sm:$0xf]
        %v520 = vld [vmem:[#allocation2 + $0x34] sm:$0xf]
        %v521 = vld [vmem:[#allocation2 + $0x40] sm:$0x8]
        %v522 = vld [vmem:[#allocation2 + $0x44] sm:$0xf]
        %v523 = vld [vmem:[#allocation2 + $0x48] sm:$0xf]
        %v524 = vld [vmem:[#allocation2 + $0x54] sm:$0x8]
        %v525 = vld [vmem:[#allocation2 + $0x58] sm:$0xf]
        %v526 = vld [vmem:[#allocation2 + $0x5c] sm:$0xf]
        %v527 = vld [vmem:[#allocation2 + $0x68] sm:$0x8]
        %v528 = vld [vmem:[#allocation2 + $0x6c] sm:$0xf]
        %v529 = vld [vmem:[#allocation2 + $0x70] sm:$0xf]
        %v530 = vld [vmem:[#allocation2 + $0x7c] sm:$0x8]
        %v531 = vld [vmem:[#allocation2 + $0x80] sm:$0xf]
        %v532 = vld [vmem:[#allocation2 + $0x84] sm:$0xf]
        %v533 = vld [vmem:[#allocation2 + $0x90] sm:$0x8]
        %v534 = vld [vmem:[#allocation2 + $0x94] sm:$0xf]
        %v535 = vld [vmem:[#allocation2 + $0x98] sm:$0xf]
        %v536 = vld [vmem:[#allocation2 + $0xa4] sm:$0x8]
        %v537 = vld [vmem:[#allocation2 + $0xa8] sm:$0xf]
        %v538 = vld [vmem:[#allocation2 + $0xac] sm:$0xf]
        %v539 = vld [vmem:[#allocation2 + $0xb8] sm:$0x8]
        %v540 = vld [vmem:[#allocation2 + $0xbc] sm:$0xf]
        %v541 = vld [vmem:[#allocation2 + $0xc0] sm:$0xf]
        %v542 = vld [vmem:[#allocation2 + $0xcc] sm:$0x8]
        %v543 = vld [vmem:[#allocation2 + $0xd0] sm:$0xf]
        %v544 = vld [vmem:[#allocation2 + $0xd4] sm:$0xf]
        %v545 = vld [vmem:[#allocation2 + $0xe0] sm:$0x8]
        %v546 = vld [vmem:[#allocation2 + $0xe4] sm:$0xf]
        %v547 = vld [vmem:[#allocation2 + $0xe8] sm:$0xf]
        %v548 = vld [vmem:[#allocation2 + $0xf4] sm:$0x8]
        %v549 = vld [vmem:[#allocation2 + $0xf8] sm:$0xf]
        %v550 = vld [vmem:[#allocation2 + $0xfc] sm:$0xf]
        %v551 = vld [vmem:[#allocation2 + $0x108] sm:$0x8]
        %v552 = vld [vmem:[#allocation2 + $0x10c] sm:$0xf]
        %v553 = vld [vmem:[#allocation2 + $0x110] sm:$0xf]
        %v554 = vld [vmem:[#allocation2 + $0x11c] sm:$0x8]
        %v555 = vld [vmem:[#allocation2 + $0x120] sm:$0xf]
        %v556 = vld [vmem:[#allocation2 + $0x124] sm:$0xf]
        %v557 = vld [vmem:[#allocation2 + $0x130] sm:$0x8]
        %v558 = vld [vmem:[#allocation2 + $0x134] sm:$0xf]
        %v559 = vld [vmem:[#allocation2 + $0x138] sm:$0xf]
        %vm560 = vsmask.f32 256
        %vm561 = vsmask.f32 4368
        %vm562 = vmor %vm560, %vm561
        %v564 = vshrl.u32 %v512, 16
        %v566 = vrot.slane %v564, 7
        %v567 = vrot.slane %v566, 4
        %v569 = vshrl.u32 %v513, 16
        %v571 = vrot.slane %v569, 7
        %v572 = vshll.u32 %v513, 16
        %v574 = vor.u32 %v571, %v572
        %v575 = vsel %vm562, %v567, %v574
        %v576 = vrot.slane %v571, 4
        %v578 = vshrl.u32 %v514, 16
        %v580 = vrot.slane %v578, 7
        %v581 = vshll.u32 %v514, 16
        %v583 = vor.u32 %v580, %v581
        %v584 = vsel %vm562, %v576, %v583
        %v586 = vshrl.u32 %v515, 16
        %v588 = vrot.slane %v586, 7
        %v589 = vrot.slane %v588, 4
        %v591 = vshrl.u32 %v516, 16
        %v593 = vrot.slane %v591, 7
        %v594 = vshll.u32 %v516, 16
        %v596 = vor.u32 %v593, %v594
        %v597 = vsel %vm562, %v589, %v596
        %v598 = vrot.slane %v593, 4
        %v600 = vshrl.u32 %v517, 16
        %v602 = vrot.slane %v600, 7
        %v603 = vshll.u32 %v517, 16
        %v605 = vor.u32 %v602, %v603
        %v606 = vsel %vm562, %v598, %v605
        %v608 = vshrl.u32 %v518, 16
        %v610 = vrot.slane %v608, 7
        %v611 = vrot.slane %v610, 4
        %v613 = vshrl.u32 %v519, 16
        %v615 = vrot.slane %v613, 7
        %v616 = vshll.u32 %v519, 16
        %v618 = vor.u32 %v615, %v616
        %v619 = vsel %vm562, %v611, %v618
        %v620 = vrot.slane %v615, 4
        %v622 = vshrl.u32 %v520, 16
        %v624 = vrot.slane %v622, 7
        %v625 = vshll.u32 %v520, 16
        %v627 = vor.u32 %v624, %v625
        %v628 = vsel %vm562, %v620, %v627
        %v630 = vshrl.u32 %v521, 16
        %v632 = vrot.slane %v630, 7
        %v633 = vrot.slane %v632, 4
        %v635 = vshrl.u32 %v522, 16
        %v637 = vrot.slane %v635, 7
        %v638 = vshll.u32 %v522, 16
        %v640 = vor.u32 %v637, %v638
        %v641 = vsel %vm562, %v633, %v640
        %v642 = vrot.slane %v637, 4
        %v644 = vshrl.u32 %v523, 16
        %v646 = vrot.slane %v644, 7
        %v647 = vshll.u32 %v523, 16
        %v649 = vor.u32 %v646, %v647
        %v650 = vsel %vm562, %v642, %v649
        %v652 = vshrl.u32 %v524, 16
        %v654 = vrot.slane %v652, 7
        %v655 = vrot.slane %v654, 4
        %v657 = vshrl.u32 %v525, 16
        %v659 = vrot.slane %v657, 7
        %v660 = vshll.u32 %v525, 16
        %v662 = vor.u32 %v659, %v660
        %v663 = vsel %vm562, %v655, %v662
        %v664 = vrot.slane %v659, 4
        %v666 = vshrl.u32 %v526, 16
        %v668 = vrot.slane %v666, 7
        %v669 = vshll.u32 %v526, 16
        %v671 = vor.u32 %v668, %v669
        %v672 = vsel %vm562, %v664, %v671
        %v674 = vshrl.u32 %v527, 16
        %v676 = vrot.slane %v674, 7
        %v677 = vrot.slane %v676, 4
        %v679 = vshrl.u32 %v528, 16
        %v681 = vrot.slane %v679, 7
        %v682 = vshll.u32 %v528, 16
        %v684 = vor.u32 %v681, %v682
        %v685 = vsel %vm562, %v677, %v684
        %v686 = vrot.slane %v681, 4
        %v688 = vshrl.u32 %v529, 16
        %v690 = vrot.slane %v688, 7
        %v691 = vshll.u32 %v529, 16
        %v693 = vor.u32 %v690, %v691
        %v694 = vsel %vm562, %v686, %v693
        %v696 = vshrl.u32 %v530, 16
        %v698 = vrot.slane %v696, 7
        %v699 = vrot.slane %v698, 4
        %v701 = vshrl.u32 %v531, 16
        %v703 = vrot.slane %v701, 7
        %v704 = vshll.u32 %v531, 16
        %v706 = vor.u32 %v703, %v704
        %v707 = vsel %vm562, %v699, %v706
        %v708 = vrot.slane %v703, 4
        %v710 = vshrl.u32 %v532, 16
        %v712 = vrot.slane %v710, 7
        %v713 = vshll.u32 %v532, 16
        %v715 = vor.u32 %v712, %v713
        %v716 = vsel %vm562, %v708, %v715
        %v718 = vshrl.u32 %v533, 16
        %v720 = vrot.slane %v718, 7
        %v721 = vrot.slane %v720, 4
        %v723 = vshrl.u32 %v534, 16
        %v725 = vrot.slane %v723, 7
        %v726 = vshll.u32 %v534, 16
        %v728 = vor.u32 %v725, %v726
        %v729 = vsel %vm562, %v721, %v728
        %v730 = vrot.slane %v725, 4
        %v732 = vshrl.u32 %v535, 16
        %v734 = vrot.slane %v732, 7
        %v735 = vshll.u32 %v535, 16
        %v737 = vor.u32 %v734, %v735
        %v738 = vsel %vm562, %v730, %v737
        %v740 = vshrl.u32 %v536, 16
        %v742 = vrot.slane %v740, 7
        %v743 = vrot.slane %v742, 4
        %v745 = vshrl.u32 %v537, 16
        %v747 = vrot.slane %v745, 7
        %v748 = vshll.u32 %v537, 16
        %v750 = vor.u32 %v747, %v748
        %v751 = vsel %vm562, %v743, %v750
        %v752 = vrot.slane %v747, 4
        %v754 = vshrl.u32 %v538, 16
        %v756 = vrot.slane %v754, 7
        %v757 = vshll.u32 %v538, 16
        %v759 = vor.u32 %v756, %v757
        %v760 = vsel %vm562, %v752, %v759
        %v762 = vshrl.u32 %v539, 16
        %v764 = vrot.slane %v762, 7
        %v765 = vrot.slane %v764, 4
        %v767 = vshrl.u32 %v540, 16
        %v769 = vrot.slane %v767, 7
        %v770 = vshll.u32 %v540, 16
        %v772 = vor.u32 %v769, %v770
        %v773 = vsel %vm562, %v765, %v772
        %v774 = vrot.slane %v769, 4
        %v776 = vshrl.u32 %v541, 16
        %v778 = vrot.slane %v776, 7
        %v779 = vshll.u32 %v541, 16
        %v781 = vor.u32 %v778, %v779
        %v782 = vsel %vm562, %v774, %v781
        %v784 = vshrl.u32 %v542, 16
        %v786 = vrot.slane %v784, 7
        %v787 = vrot.slane %v786, 4
        %v789 = vshrl.u32 %v543, 16
        %v791 = vrot.slane %v789, 7
        %v792 = vshll.u32 %v543, 16
        %v794 = vor.u32 %v791, %v792
        %v795 = vsel %vm562, %v787, %v794
        %v796 = vrot.slane %v791, 4
        %v798 = vshrl.u32 %v544, 16
        %v800 = vrot.slane %v798, 7
        %v801 = vshll.u32 %v544, 16
        %v803 = vor.u32 %v800, %v801
        %v804 = vsel %vm562, %v796, %v803
        %v806 = vshrl.u32 %v545, 16
        %v808 = vrot.slane %v806, 7
        %v809 = vrot.slane %v808, 4
        %v811 = vshrl.u32 %v546, 16
        %v813 = vrot.slane %v811, 7
        %v814 = vshll.u32 %v546, 16
        %v816 = vor.u32 %v813, %v814
        %v817 = vsel %vm562, %v809, %v816
        %v818 = vrot.slane %v813, 4
        %v820 = vshrl.u32 %v547, 16
        %v822 = vrot.slane %v820, 7
        %v823 = vshll.u32 %v547, 16
        %v825 = vor.u32 %v822, %v823
        %v826 = vsel %vm562, %v818, %v825
        %v828 = vshrl.u32 %v548, 16
        %v830 = vrot.slane %v828, 7
        %v831 = vrot.slane %v830, 4
        %v833 = vshrl.u32 %v549, 16
        %v835 = vrot.slane %v833, 7
        %v836 = vshll.u32 %v549, 16
        %v838 = vor.u32 %v835, %v836
        %v839 = vsel %vm562, %v831, %v838
        %v840 = vrot.slane %v835, 4
        %v842 = vshrl.u32 %v550, 16
        %v844 = vrot.slane %v842, 7
        %v845 = vshll.u32 %v550, 16
        %v847 = vor.u32 %v844, %v845
        %v848 = vsel %vm562, %v840, %v847
        %v850 = vshrl.u32 %v551, 16
        %v852 = vrot.slane %v850, 7
        %v853 = vrot.slane %v852, 4
        %v855 = vshrl.u32 %v552, 16
        %v857 = vrot.slane %v855, 7
        %v858 = vshll.u32 %v552, 16
        %v860 = vor.u32 %v857, %v858
        %v861 = vsel %vm562, %v853, %v860
        %v862 = vrot.slane %v857, 4
        %v864 = vshrl.u32 %v553, 16
        %v866 = vrot.slane %v864, 7
        %v867 = vshll.u32 %v553, 16
        %v869 = vor.u32 %v866, %v867
        %v870 = vsel %vm562, %v862, %v869
        %v872 = vshrl.u32 %v554, 16
        %v874 = vrot.slane %v872, 7
        %v875 = vrot.slane %v874, 4
        %v877 = vshrl.u32 %v555, 16
        %v879 = vrot.slane %v877, 7
        %v880 = vshll.u32 %v555, 16
        %v882 = vor.u32 %v879, %v880
        %v883 = vsel %vm562, %v875, %v882
        %v884 = vrot.slane %v879, 4
        %v886 = vshrl.u32 %v556, 16
        %v888 = vrot.slane %v886, 7
        %v889 = vshll.u32 %v556, 16
        %v891 = vor.u32 %v888, %v889
        %v892 = vsel %vm562, %v884, %v891
        %v894 = vshrl.u32 %v557, 16
        %v896 = vrot.slane %v894, 7
        %v897 = vrot.slane %v896, 4
        %v899 = vshrl.u32 %v558, 16
        %v901 = vrot.slane %v899, 7
        %v902 = vshll.u32 %v558, 16
        %v904 = vor.u32 %v901, %v902
        %v905 = vsel %vm562, %v897, %v904
        %v906 = vrot.slane %v901, 4
        %v908 = vshrl.u32 %v559, 16
        %v910 = vrot.slane %v908, 7
        %v911 = vshll.u32 %v559, 16
        %v913 = vor.u32 %v910, %v911
        %v914 = vsel %vm562, %v906, %v913
        %v915 = vld [vmem:[#allocation7] sm:$0xf]
        %v916 = vld [vmem:[#allocation7 + $0x4] sm:$0xf]
        %v917 = vld [vmem:[#allocation7 + $0x8] sm:$0xf]
        %v918 = vld [vmem:[#allocation7 + $0xc] sm:$0xf]
        %v919 = vld [vmem:[#allocation7 + $0x10] sm:$0xf]
        %v920 = vld [vmem:[#allocation7 + $0x14] sm:$0xf]
        %v921 = vld [vmem:[#allocation7 + $0x18] sm:$0xf]
        %v922 = vld [vmem:[#allocation7 + $0x1c] sm:$0xf]
        %v923 = vld [vmem:[#allocation7 + $0x20] sm:$0xf]
        %v924 = vld [vmem:[#allocation7 + $0x24] sm:$0xf]
        %v925 = vld [vmem:[#allocation7 + $0x28] sm:$0xf]
        %v926 = vld [vmem:[#allocation7 + $0x2c] sm:$0xf]
        %v927 = vld [vmem:[#allocation7 + $0x30] sm:$0xf]
        %v928 = vld [vmem:[#allocation7 + $0x34] sm:$0xf]
        %v929 = vld [vmem:[#allocation7 + $0x38] sm:$0xf]
        %v930 = vld [vmem:[#allocation7 + $0x3c] sm:$0xf]
        %s931 = scalar_lea.vmem [#allocation7], 64
        %v932 = vld [vmem:[%s931] sm:$0xf]
        %v933 = vld [vmem:[%s931 + $0x4] sm:$0xf]
        %v934 = vld [vmem:[%s931 + $0x8] sm:$0xf]
        %v935 = vld [vmem:[%s931 + $0xc] sm:$0xf]
        %v936 = vld [vmem:[%s931 + $0x10] sm:$0xf]
        %v937 = vld [vmem:[%s931 + $0x14] sm:$0xf]
        %v938 = vld [vmem:[%s931 + $0x18] sm:$0xf]
        %v939 = vld [vmem:[%s931 + $0x1c] sm:$0xf]
        %v940 = vld [vmem:[%s931 + $0x20] sm:$0xf]
        %v941 = vld [vmem:[%s931 + $0x24] sm:$0xf]
        %v942 = vld [vmem:[%s931 + $0x28] sm:$0xf]
        %v943 = vld [vmem:[%s931 + $0x2c] sm:$0xf]
        %v944 = vld [vmem:[%s931 + $0x30] sm:$0xf]
        %v945 = vld [vmem:[%s931 + $0x34] sm:$0xf]
        %v946 = vld [vmem:[%s931 + $0x38] sm:$0xf]
        %v947 = vld [vmem:[%s931 + $0x3c] sm:$0xf]
        %v980 = vunpack.c.l.b16 %v513
        %v981 = vunpack.c.l.b16 %v514
        %v982 = vunpack.c.l.b16 %v516
        %v983 = vunpack.c.l.b16 %v517
        %v984 = vunpack.c.l.b16 %v519
        %v985 = vunpack.c.l.b16 %v520
        %v986 = vunpack.c.l.b16 %v522
        %v987 = vunpack.c.l.b16 %v523
        %v988 = vunpack.c.l.b16 %v525
        %v989 = vunpack.c.l.b16 %v526
        %v990 = vunpack.c.l.b16 %v528
        %v991 = vunpack.c.l.b16 %v529
        %v992 = vunpack.c.l.b16 %v531
        %v993 = vunpack.c.l.b16 %v532
        %v994 = vunpack.c.l.b16 %v534
        %v995 = vunpack.c.l.b16 %v535
        %v996 = vunpack.c.l.b16 %v537
        %v997 = vunpack.c.l.b16 %v538
        %v998 = vunpack.c.l.b16 %v540
        %v999 = vunpack.c.l.b16 %v541
        %v1000 = vunpack.c.l.b16 %v543
        %v1001 = vunpack.c.l.b16 %v544
        %v1002 = vunpack.c.l.b16 %v546
        %v1003 = vunpack.c.l.b16 %v547
        %v1004 = vunpack.c.l.b16 %v549
        %v1005 = vunpack.c.l.b16 %v550
        %v1006 = vunpack.c.l.b16 %v552
        %v1007 = vunpack.c.l.b16 %v553
        %v1008 = vunpack.c.l.b16 %v555
        %v1009 = vunpack.c.l.b16 %v556
        %v1010 = vunpack.c.l.b16 %v558
        %v1011 = vunpack.c.l.b16 %v559
        %v1012 = vpack.c.b16 %v981, %v980
        %v1013 = vpack.c.b16 %v983, %v982
        %v1014 = vpack.c.b16 %v985, %v984
        %v1015 = vpack.c.b16 %v987, %v986
        %v1016 = vpack.c.b16 %v989, %v988
        %v1017 = vpack.c.b16 %v991, %v990
        %v1018 = vpack.c.b16 %v993, %v992
        %v1019 = vpack.c.b16 %v995, %v994
        %v1020 = vpack.c.b16 %v997, %v996
        %v1021 = vpack.c.b16 %v999, %v998
        %v1022 = vpack.c.b16 %v1001, %v1000
        %v1023 = vpack.c.b16 %v1003, %v1002
        %v1024 = vpack.c.b16 %v1005, %v1004
        %v1025 = vpack.c.b16 %v1007, %v1006
        %v1026 = vpack.c.b16 %v1009, %v1008
        %v1027 = vpack.c.b16 %v1011, %v1010
        %v1060 = vunpack.c.l.b16 %v932
        %v1061 = vunpack.c.l.b16 %v933
        %v1062 = vunpack.c.l.b16 %v934
        %v1063 = vunpack.c.l.b16 %v935
        %v1064 = vunpack.c.l.b16 %v936
        %v1065 = vunpack.c.l.b16 %v937
        %v1066 = vunpack.c.l.b16 %v938
        %v1067 = vunpack.c.l.b16 %v939
        %v1068 = vunpack.c.l.b16 %v940
        %v1069 = vunpack.c.l.b16 %v941
        %v1070 = vunpack.c.l.b16 %v942
        %v1071 = vunpack.c.l.b16 %v943
        %v1072 = vunpack.c.l.b16 %v944
        %v1073 = vunpack.c.l.b16 %v945
        %v1074 = vunpack.c.l.b16 %v946
        %v1075 = vunpack.c.l.b16 %v947
        %v1076 = vpack.c.b16 %v1061, %v1060
        %v1077 = vpack.c.b16 %v1063, %v1062
        %v1078 = vpack.c.b16 %v1065, %v1064
        %v1079 = vpack.c.b16 %v1067, %v1066
        %v1080 = vpack.c.b16 %v1069, %v1068
        %v1081 = vpack.c.b16 %v1071, %v1070
        %v1082 = vpack.c.b16 %v1073, %v1072
        %v1083 = vpack.c.b16 %v1075, %v1074
        %1092 = vmatprep.subr.bf16.mxu0 0
        %1093 = vmatpush1.bf16.msra.mxu0 %v1076
        %1094 = vmatprep.subr.bf16.mxu0 0
        %1095 = vmatpush1.bf16.msra.mxu0 %v1077
        %1096 = vmatprep.subr.bf16.mxu0 0
        %1097 = vmatpush1.bf16.msra.mxu0 %v1078
        %1098 = vmatprep.subr.bf16.mxu0 0
        %1099 = vmatpush1.bf16.msra.mxu0 %v1079
        %1100 = vmatprep.subr.bf16.mxu0 0
        %1101 = vmatpush1.bf16.msra.mxu0 %v1080
        %1102 = vmatprep.subr.bf16.mxu0 0
        %1103 = vmatpush1.bf16.msra.mxu0 %v1081
        %1104 = vmatprep.subr.bf16.mxu0 0
        %1105 = vmatpush1.bf16.msra.mxu0 %v1082
        %1106 = vmatprep.subr.bf16.mxu0 0
        %1107 = vmatpush1.bf16.msra.mxu0 %v1083
        %1108 = vmatprep.subr.bf16.mxu0 0
        %1109 = vmatpush1.bf16.msra.mxu0 0
        %1110 = vmatprep.subr.bf16.mxu0 0
        %1111 = vmatpush1.bf16.msra.mxu0 0
        %1112 = vmatprep.subr.bf16.mxu0 0
        %1113 = vmatpush1.bf16.msra.mxu0 0
        %1114 = vmatprep.subr.bf16.mxu0 0
        %1115 = vmatpush1.bf16.msra.mxu0 0
        %1116 = vmatprep.subr.bf16.mxu0 0
        %1117 = vmatpush1.bf16.msra.mxu0 0
        %1118 = vmatprep.subr.bf16.mxu0 0
        %1119 = vmatpush1.bf16.msra.mxu0 0
        %1120 = vmatprep.subr.bf16.mxu0 0
        %1121 = vmatpush1.bf16.msra.mxu0 0
        %1122 = vmatprep.subr.bf16.mxu0 0
        %1123 = vmatpush1.bf16.msra.mxu0 0
        %1124 = vmatprep.mubr.bf16.mxu0 0
        %1125 = vmatmul.mubr.bf16.gmra.mrb[0].mxu0 %v1012
        %v1126 = vpop.f32.mrb[0].mxu0
        %v1127 = vadd.f32 0.0, %v1126
        %v1128 = vpop.f32.mrb[0].mxu0
        %v1129 = vpop.f32.mrb[0].mxu0
        %v1130 = vadd.f32 0.0, %v1129
        %v1131 = vpop.f32.mrb[0].mxu0
        %1132 = vmatprep.mubr.bf16.mxu0 0
        %1133 = vmatmul.mubr.bf16.gmra.mrb[0].mxu0 %v1013
        %v1134 = vpop.f32.mrb[0].mxu0
        %v1135 = vadd.f32 0.0, %v1134
        %v1136 = vpop.f32.mrb[0].mxu0
        %v1137 = vpop.f32.mrb[0].mxu0
        %v1138 = vadd.f32 0.0, %v1137
        %v1139 = vpop.f32.mrb[0].mxu0
        %1140 = vmatprep.mubr.bf16.mxu0 0
        %1141 = vmatmul.mubr.bf16.gmra.mrb[0].mxu0 %v1014
        %v1142 = vpop.f32.mrb[0].mxu0
        %v1143 = vadd.f32 0.0, %v1142
        %v1144 = vpop.f32.mrb[0].mxu0
        %v1145 = vpop.f32.mrb[0].mxu0
        %v1146 = vadd.f32 0.0, %v1145
        %v1147 = vpop.f32.mrb[0].mxu0
        %1148 = vmatprep.mubr.bf16.mxu0 0
        %1149 = vmatmul.mubr.bf16.gmra.mrb[0].mxu0 %v1015
        %v1150 = vpop.f32.mrb[0].mxu0
        %v1151 = vadd.f32 0.0, %v1150
        %v1152 = vpop.f32.mrb[0].mxu0
        %v1153 = vpop.f32.mrb[0].mxu0
        %v1154 = vadd.f32 0.0, %v1153
        %v1155 = vpop.f32.mrb[0].mxu0
        %1156 = vmatprep.mubr.bf16.mxu0 0
        %1157 = vmatmul.mubr.bf16.gmra.mrb[0].mxu0 %v1016
        %v1158 = vpop.f32.mrb[0].mxu0
        %v1159 = vadd.f32 0.0, %v1158
        %v1160 = vpop.f32.mrb[0].mxu0
        %v1161 = vpop.f32.mrb[0].mxu0
        %v1162 = vadd.f32 0.0, %v1161
        %v1163 = vpop.f32.mrb[0].mxu0
        %1164 = vmatprep.mubr.bf16.mxu0 0
        %1165 = vmatmul.mubr.bf16.gmra.mrb[0].mxu0 %v1017
        %v1166 = vpop.f32.mrb[0].mxu0
        %v1167 = vadd.f32 0.0, %v1166
        %v1168 = vpop.f32.mrb[0].mxu0
        %v1169 = vpop.f32.mrb[0].mxu0
        %v1170 = vadd.f32 0.0, %v1169
        %v1171 = vpop.f32.mrb[0].mxu0
        %1172 = vmatprep.mubr.bf16.mxu0 0
        %1173 = vmatmul.mubr.bf16.gmra.mrb[0].mxu0 %v1018
        %v1174 = vpop.f32.mrb[0].mxu0
        %v1175 = vadd.f32 0.0, %v1174
        %v1176 = vpop.f32.mrb[0].mxu0
        %v1177 = vpop.f32.mrb[0].mxu0
        %v1178 = vadd.f32 0.0, %v1177
        %v1179 = vpop.f32.mrb[0].mxu0
        %1180 = vmatprep.mubr.bf16.mxu0 0
        %1181 = vmatmul.mubr.bf16.gmra.mrb[0].mxu0 %v1019
        %v1182 = vpop.f32.mrb[0].mxu0
        %v1183 = vadd.f32 0.0, %v1182
        %v1184 = vpop.f32.mrb[0].mxu0
        %v1185 = vpop.f32.mrb[0].mxu0
        %v1186 = vadd.f32 0.0, %v1185
        %v1187 = vpop.f32.mrb[0].mxu0
        %1188 = vmatprep.mubr.bf16.mxu0 0
        %1189 = vmatmul.mubr.bf16.gmra.mrb[0].mxu0 %v1020
        %v1190 = vpop.f32.mrb[0].mxu0
        %v1191 = vadd.f32 0.0, %v1190
        %v1192 = vpop.f32.mrb[0].mxu0
        %v1193 = vpop.f32.mrb[0].mxu0
        %v1194 = vadd.f32 0.0, %v1193
        %v1195 = vpop.f32.mrb[0].mxu0
        %1196 = vmatprep.mubr.bf16.mxu0 0
        %1197 = vmatmul.mubr.bf16.gmra.mrb[0].mxu0 %v1021
        %v1198 = vpop.f32.mrb[0].mxu0
        %v1199 = vadd.f32 0.0, %v1198
        %v1200 = vpop.f32.mrb[0].mxu0
        %v1201 = vpop.f32.mrb[0].mxu0
        %v1202 = vadd.f32 0.0, %v1201
        %v1203 = vpop.f32.mrb[0].mxu0
        %1204 = vmatprep.mubr.bf16.mxu0 0
        %1205 = vmatmul.mubr.bf16.gmra.mrb[0].mxu0 %v1022
        %v1206 = vpop.f32.mrb[0].mxu0
        %v1207 = vadd.f32 0.0, %v1206
        %v1208 = vpop.f32.mrb[0].mxu0
        %v1209 = vpop.f32.mrb[0].mxu0
        %v1210 = vadd.f32 0.0, %v1209
        %v1211 = vpop.f32.mrb[0].mxu0
        %1212 = vmatprep.mubr.bf16.mxu0 0
        %1213 = vmatmul.mubr.bf16.gmra.mrb[0].mxu0 %v1023
        %v1214 = vpop.f32.mrb[0].mxu0
        %v1215 = vadd.f32 0.0, %v1214
        %v1216 = vpop.f32.mrb[0].mxu0
        %v1217 = vpop.f32.mrb[0].mxu0
        %v1218 = vadd.f32 0.0, %v1217
        %v1219 = vpop.f32.mrb[0].mxu0
        %1220 = vmatprep.mubr.bf16.mxu0 0
        %1221 = vmatmul.mubr.bf16.gmra.mrb[0].mxu0 %v1024
        %v1222 = vpop.f32.mrb[0].mxu0
        %v1223 = vadd.f32 0.0, %v1222
        %v1224 = vpop.f32.mrb[0].mxu0
        %v1225 = vpop.f32.mrb[0].mxu0
        %v1226 = vadd.f32 0.0, %v1225
        %v1227 = vpop.f32.mrb[0].mxu0
        %1228 = vmatprep.mubr.bf16.mxu0 0
        %1229 = vmatmul.mubr.bf16.gmra.mrb[0].mxu0 %v1025
        %v1230 = vpop.f32.mrb[0].mxu0
        %v1231 = vadd.f32 0.0, %v1230
        %v1232 = vpop.f32.mrb[0].mxu0
        %v1233 = vpop.f32.mrb[0].mxu0
        %v1234 = vadd.f32 0.0, %v1233
        %v1235 = vpop.f32.mrb[0].mxu0
        %1236 = vmatprep.mubr.bf16.mxu0 0
        %1237 = vmatmul.mubr.bf16.gmra.mrb[0].mxu0 %v1026
        %v1238 = vpop.f32.mrb[0].mxu0
        %v1239 = vadd.f32 0.0, %v1238
        %v1240 = vpop.f32.mrb[0].mxu0
        %v1241 = vpop.f32.mrb[0].mxu0
        %v1242 = vadd.f32 0.0, %v1241
        %v1243 = vpop.f32.mrb[0].mxu0
        %1244 = vmatprep.mubr.bf16.mxu0 0
        %1245 = vmatmul.mubr.bf16.gmra.mrb[0].mxu0 %v1027
        %v1246 = vpop.f32.mrb[0].mxu0
        %v1247 = vadd.f32 0.0, %v1246
        %v1248 = vpop.f32.mrb[0].mxu0
        %v1249 = vpop.f32.mrb[0].mxu0
        %v1250 = vadd.f32 0.0, %v1249
        %v1251 = vpop.f32.mrb[0].mxu0
        %1252 = vdwg.mxu0
        %v1253 = vunpack.c.l.b16 %v575
        %v1254 = vunpack.c.l.b16 %v584
        %v1255 = vunpack.c.l.b16 %v597
        %v1256 = vunpack.c.l.b16 %v606
        %v1257 = vunpack.c.l.b16 %v619
        %v1258 = vunpack.c.l.b16 %v628
        %v1259 = vunpack.c.l.b16 %v641
        %v1260 = vunpack.c.l.b16 %v650
        %v1261 = vunpack.c.l.b16 %v663
        %v1262 = vunpack.c.l.b16 %v672
        %v1263 = vunpack.c.l.b16 %v685
        %v1264 = vunpack.c.l.b16 %v694
        %v1265 = vunpack.c.l.b16 %v707
        %v1266 = vunpack.c.l.b16 %v716
        %v1267 = vunpack.c.l.b16 %v729
        %v1268 = vunpack.c.l.b16 %v738
        %v1269 = vunpack.c.l.b16 %v751
        %v1270 = vunpack.c.l.b16 %v760
        %v1271 = vunpack.c.l.b16 %v773
        %v1272 = vunpack.c.l.b16 %v782
        %v1273 = vunpack.c.l.b16 %v795
        %v1274 = vunpack.c.l.b16 %v804
        %v1275 = vunpack.c.l.b16 %v817
        %v1276 = vunpack.c.l.b16 %v826
        %v1277 = vunpack.c.l.b16 %v839
        %v1278 = vunpack.c.l.b16 %v848
        %v1279 = vunpack.c.l.b16 %v861
        %v1280 = vunpack.c.l.b16 %v870
        %v1281 = vunpack.c.l.b16 %v883
        %v1282 = vunpack.c.l.b16 %v892
        %v1283 = vunpack.c.l.b16 %v905
        %v1284 = vunpack.c.l.b16 %v914
        %v1285 = vpack.c.b16 %v1254, %v1253
        %v1286 = vpack.c.b16 %v1256, %v1255
        %v1287 = vpack.c.b16 %v1258, %v1257
        %v1288 = vpack.c.b16 %v1260, %v1259
        %v1289 = vpack.c.b16 %v1262, %v1261
        %v1290 = vpack.c.b16 %v1264, %v1263
        %v1291 = vpack.c.b16 %v1266, %v1265
        %v1292 = vpack.c.b16 %v1268, %v1267
        %v1293 = vpack.c.b16 %v1270, %v1269
        %v1294 = vpack.c.b16 %v1272, %v1271
        %v1295 = vpack.c.b16 %v1274, %v1273
        %v1296 = vpack.c.b16 %v1276, %v1275
        %v1297 = vpack.c.b16 %v1278, %v1277
        %v1298 = vpack.c.b16 %v1280, %v1279
        %v1299 = vpack.c.b16 %v1282, %v1281
        %v1300 = vpack.c.b16 %v1284, %v1283
        %v1333 = vunpack.c.l.b16 %v915
        %v1334 = vunpack.c.l.b16 %v916
        %v1335 = vunpack.c.l.b16 %v917
        %v1336 = vunpack.c.l.b16 %v918
        %v1337 = vunpack.c.l.b16 %v919
        %v1338 = vunpack.c.l.b16 %v920
        %v1339 = vunpack.c.l.b16 %v921
        %v1340 = vunpack.c.l.b16 %v922
        %v1341 = vunpack.c.l.b16 %v923
        %v1342 = vunpack.c.l.b16 %v924
        %v1343 = vunpack.c.l.b16 %v925
        %v1344 = vunpack.c.l.b16 %v926
        %v1345 = vunpack.c.l.b16 %v927
        %v1346 = vunpack.c.l.b16 %v928
        %v1347 = vunpack.c.l.b16 %v929
        %v1348 = vunpack.c.l.b16 %v930
        %v1349 = vpack.c.b16 %v1334, %v1333
        %v1350 = vpack.c.b16 %v1336, %v1335
        %v1351 = vpack.c.b16 %v1338, %v1337
        %v1352 = vpack.c.b16 %v1340, %v1339
        %v1353 = vpack.c.b16 %v1342, %v1341
        %v1354 = vpack.c.b16 %v1344, %v1343
        %v1355 = vpack.c.b16 %v1346, %v1345
        %v1356 = vpack.c.b16 %v1348, %v1347
        %1365 = vmatprep.subr.bf16.mxu0 0
        %1366 = vmatpush1.bf16.msra.mxu0 %v1349
        %1367 = vmatprep.subr.bf16.mxu0 0
        %1368 = vmatpush1.bf16.msra.mxu0 %v1350
        %1369 = vmatprep.subr.bf16.mxu0 0
        %1370 = vmatpush1.bf16.msra.mxu0 %v1351
        %1371 = vmatprep.subr.bf16.mxu0 0
        %1372 = vmatpush1.bf16.msra.mxu0 %v1352
        %1373 = vmatprep.subr.bf16.mxu0 0
        %1374 = vmatpush1.bf16.msra.mxu0 %v1353
        %1375 = vmatprep.subr.bf16.mxu0 0
        %1376 = vmatpush1.bf16.msra.mxu0 %v1354
        %1377 = vmatprep.subr.bf16.mxu0 0
        %1378 = vmatpush1.bf16.msra.mxu0 %v1355
        %1379 = vmatprep.subr.bf16.mxu0 0
        %1380 = vmatpush1.bf16.msra.mxu0 %v1356
        %1381 = vmatprep.subr.bf16.mxu0 0
        %1382 = vmatpush1.bf16.msra.mxu0 0
        %1383 = vmatprep.subr.bf16.mxu0 0
        %1384 = vmatpush1.bf16.msra.mxu0 0
        %1385 = vmatprep.subr.bf16.mxu0 0
        %1386 = vmatpush1.bf16.msra.mxu0 0
        %1387 = vmatprep.subr.bf16.mxu0 0
        %1388 = vmatpush1.bf16.msra.mxu0 0
        %1389 = vmatprep.subr.bf16.mxu0 0
        %1390 = vmatpush1.bf16.msra.mxu0 0
        %1391 = vmatprep.subr.bf16.mxu0 0
        %1392 = vmatpush1.bf16.msra.mxu0 0
        %1393 = vmatprep.subr.bf16.mxu0 0
        %1394 = vmatpush1.bf16.msra.mxu0 0
        %1395 = vmatprep.subr.bf16.mxu0 0
        %1396 = vmatpush1.bf16.msra.mxu0 0
        %1397 = vmatprep.mubr.bf16.mxu0 0
        %1398 = vmatmul.mubr.bf16.gmra.mrb[0].mxu0 %v1285
        %v1399 = vpop.f32.mrb[0].mxu0
        %v1400 = vadd.f32 %v1127, %v1399
        %v1401 = vpop.f32.mrb[0].mxu0
        %v1402 = vpop.f32.mrb[0].mxu0
        %v1403 = vadd.f32 %v1130, %v1402
        %v1404 = vpop.f32.mrb[0].mxu0
        %1405 = vmatprep.mubr.bf16.mxu0 0
        %1406 = vmatmul.mubr.bf16.gmra.mrb[0].mxu0 %v1286
        %v1407 = vpop.f32.mrb[0].mxu0
        %v1408 = vadd.f32 %v1135, %v1407
        %v1409 = vpop.f32.mrb[0].mxu0
        %v1410 = vpop.f32.mrb[0].mxu0
        %v1411 = vadd.f32 %v1138, %v1410
        %v1412 = vpop.f32.mrb[0].mxu0
        %1413 = vmatprep.mubr.bf16.mxu0 0
        %1414 = vmatmul.mubr.bf16.gmra.mrb[0].mxu0 %v1287
        %v1415 = vpop.f32.mrb[0].mxu0
        %v1416 = vadd.f32 %v1143, %v1415
        %v1417 = vpop.f32.mrb[0].mxu0
        %v1418 = vpop.f32.mrb[0].mxu0
        %v1419 = vadd.f32 %v1146, %v1418
        %v1420 = vpop.f32.mrb[0].mxu0
        %1421 = vmatprep.mubr.bf16.mxu0 0
        %1422 = vmatmul.mubr.bf16.gmra.mrb[0].mxu0 %v1288
        %v1423 = vpop.f32.mrb[0].mxu0
        %v1424 = vadd.f32 %v1151, %v1423
        %v1425 = vpop.f32.mrb[0].mxu0
        %v1426 = vpop.f32.mrb[0].mxu0
        %v1427 = vadd.f32 %v1154, %v1426
        %v1428 = vpop.f32.mrb[0].mxu0
        %1429 = vmatprep.mubr.bf16.mxu0 0
        %1430 = vmatmul.mubr.bf16.gmra.mrb[0].mxu0 %v1289
        %v1431 = vpop.f32.mrb[0].mxu0
        %v1432 = vadd.f32 %v1159, %v1431
        %v1433 = vpop.f32.mrb[0].mxu0
        %v1434 = vpop.f32.mrb[0].mxu0
        %v1435 = vadd.f32 %v1162, %v1434
        %v1436 = vpop.f32.mrb[0].mxu0
        %1437 = vmatprep.mubr.bf16.mxu0 0
        %1438 = vmatmul.mubr.bf16.gmra.mrb[0].mxu0 %v1290
        %v1439 = vpop.f32.mrb[0].mxu0
        %v1440 = vadd.f32 %v1167, %v1439
        %v1441 = vpop.f32.mrb[0].mxu0
        %v1442 = vpop.f32.mrb[0].mxu0
        %v1443 = vadd.f32 %v1170, %v1442
        %v1444 = vpop.f32.mrb[0].mxu0
        %1445 = vmatprep.mubr.bf16.mxu0 0
        %1446 = vmatmul.mubr.bf16.gmra.mrb[0].mxu0 %v1291
        %v1447 = vpop.f32.mrb[0].mxu0
        %v1448 = vadd.f32 %v1175, %v1447
        %v1449 = vpop.f32.mrb[0].mxu0
        %v1450 = vpop.f32.mrb[0].mxu0
        %v1451 = vadd.f32 %v1178, %v1450
        %v1452 = vpop.f32.mrb[0].mxu0
        %1453 = vmatprep.mubr.bf16.mxu0 0
        %1454 = vmatmul.mubr.bf16.gmra.mrb[0].mxu0 %v1292
        %v1455 = vpop.f32.mrb[0].mxu0
        %v1456 = vadd.f32 %v1183, %v1455
        %v1457 = vpop.f32.mrb[0].mxu0
        %v1458 = vpop.f32.mrb[0].mxu0
        %v1459 = vadd.f32 %v1186, %v1458
        %v1460 = vpop.f32.mrb[0].mxu0
        %1461 = vmatprep.mubr.bf16.mxu0 0
        %1462 = vmatmul.mubr.bf16.gmra.mrb[0].mxu0 %v1293
        %v1463 = vpop.f32.mrb[0].mxu0
        %v1464 = vadd.f32 %v1191, %v1463
        %v1465 = vpop.f32.mrb[0].mxu0
        %v1466 = vpop.f32.mrb[0].mxu0
        %v1467 = vadd.f32 %v1194, %v1466
        %v1468 = vpop.f32.mrb[0].mxu0
        %1469 = vmatprep.mubr.bf16.mxu0 0
        %1470 = vmatmul.mubr.bf16.gmra.mrb[0].mxu0 %v1294
        %v1471 = vpop.f32.mrb[0].mxu0
        %v1472 = vadd.f32 %v1199, %v1471
        %v1473 = vpop.f32.mrb[0].mxu0
        %v1474 = vpop.f32.mrb[0].mxu0
        %v1475 = vadd.f32 %v1202, %v1474
        %v1476 = vpop.f32.mrb[0].mxu0
        %1477 = vmatprep.mubr.bf16.mxu0 0
        %1478 = vmatmul.mubr.bf16.gmra.mrb[0].mxu0 %v1295
        %v1479 = vpop.f32.mrb[0].mxu0
        %v1480 = vadd.f32 %v1207, %v1479
        %v1481 = vpop.f32.mrb[0].mxu0
        %v1482 = vpop.f32.mrb[0].mxu0
        %v1483 = vadd.f32 %v1210, %v1482
        %v1484 = vpop.f32.mrb[0].mxu0
        %1485 = vmatprep.mubr.bf16.mxu0 0
        %1486 = vmatmul.mubr.bf16.gmra.mrb[0].mxu0 %v1296
        %v1487 = vpop.f32.mrb[0].mxu0
        %v1488 = vadd.f32 %v1215, %v1487
        %v1489 = vpop.f32.mrb[0].mxu0
        %v1490 = vpop.f32.mrb[0].mxu0
        %v1491 = vadd.f32 %v1218, %v1490
        %v1492 = vpop.f32.mrb[0].mxu0
        %1493 = vmatprep.mubr.bf16.mxu0 0
        %1494 = vmatmul.mubr.bf16.gmra.mrb[0].mxu0 %v1297
        %v1495 = vpop.f32.mrb[0].mxu0
        %v1496 = vadd.f32 %v1223, %v1495
        %v1497 = vpop.f32.mrb[0].mxu0
        %v1498 = vpop.f32.mrb[0].mxu0
        %v1499 = vadd.f32 %v1226, %v1498
        %v1500 = vpop.f32.mrb[0].mxu0
        %1501 = vmatprep.mubr.bf16.mxu0 0
        %1502 = vmatmul.mubr.bf16.gmra.mrb[0].mxu0 %v1298
        %v1503 = vpop.f32.mrb[0].mxu0
        %v1504 = vadd.f32 %v1231, %v1503
        %v1505 = vpop.f32.mrb[0].mxu0
        %v1506 = vpop.f32.mrb[0].mxu0
        %v1507 = vadd.f32 %v1234, %v1506
        %v1508 = vpop.f32.mrb[0].mxu0
        %1509 = vmatprep.mubr.bf16.mxu0 0
        %1510 = vmatmul.mubr.bf16.gmra.mrb[0].mxu0 %v1299
        %v1511 = vpop.f32.mrb[0].mxu0
        %v1512 = vadd.f32 %v1239, %v1511
        %v1513 = vpop.f32.mrb[0].mxu0
        %v1514 = vpop.f32.mrb[0].mxu0
        %v1515 = vadd.f32 %v1242, %v1514
        %v1516 = vpop.f32.mrb[0].mxu0
        %1517 = vmatprep.mubr.bf16.mxu0 0
        %1518 = vmatmul.mubr.bf16.gmra.mrb[0].mxu0 %v1300
        %v1519 = vpop.f32.mrb[0].mxu0
        %v1520 = vadd.f32 %v1247, %v1519
        %v1521 = vpop.f32.mrb[0].mxu0
        %v1522 = vpop.f32.mrb[0].mxu0
        %v1523 = vadd.f32 %v1250, %v1522
        %v1524 = vpop.f32.mrb[0].mxu0
        %1525 = vdwg.mxu0
        %v1526 = vld [vmem:[#allocation2 + $0x8] sm:$0xf]
        %v1527 = vld [vmem:[#allocation2 + $0xc] sm:$0xf]
        %v1528 = vld [vmem:[#allocation2 + $0x10] sm:$0x1]
        %v1529 = vld [vmem:[#allocation2 + $0x1c] sm:$0xf]
        %v1530 = vld [vmem:[#allocation2 + $0x20] sm:$0xf]
        %v1531 = vld [vmem:[#allocation2 + $0x24] sm:$0x1]
        %v1532 = vld [vmem:[#allocation2 + $0x30] sm:$0xf]
        %v1533 = vld [vmem:[#allocation2 + $0x34] sm:$0xf]
        %v1534 = vld [vmem:[#allocation2 + $0x38] sm:$0x1]
        %v1535 = vld [vmem:[#allocation2 + $0x44] sm:$0xf]
        %v1536 = vld [vmem:[#allocation2 + $0x48] sm:$0xf]
        %v1537 = vld [vmem:[#allocation2 + $0x4c] sm:$0x1]
        %v1538 = vld [vmem:[#allocation2 + $0x58] sm:$0xf]
        %v1539 = vld [vmem:[#allocation2 + $0x5c] sm:$0xf]
        %v1540 = vld [vmem:[#allocation2 + $0x60] sm:$0x1]
        %v1541 = vld [vmem:[#allocation2 + $0x6c] sm:$0xf]
        %v1542 = vld [vmem:[#allocation2 + $0x70] sm:$0xf]
        %v1543 = vld [vmem:[#allocation2 + $0x74] sm:$0x1]
        %v1544 = vld [vmem:[#allocation2 + $0x80] sm:$0xf]
        %v1545 = vld [vmem:[#allocation2 + $0x84] sm:$0xf]
        %v1546 = vld [vmem:[#allocation2 + $0x88] sm:$0x1]
        %v1547 = vld [vmem:[#allocation2 + $0x94] sm:$0xf]
        %v1548 = vld [vmem:[#allocation2 + $0x98] sm:$0xf]
        %v1549 = vld [vmem:[#allocation2 + $0x9c] sm:$0x1]
        %v1550 = vld [vmem:[#allocation2 + $0xa8] sm:$0xf]
        %v1551 = vld [vmem:[#allocation2 + $0xac] sm:$0xf]
        %v1552 = vld [vmem:[#allocation2 + $0xb0] sm:$0x1]
        %v1553 = vld [vmem:[#allocation2 + $0xbc] sm:$0xf]
        %v1554 = vld [vmem:[#allocation2 + $0xc0] sm:$0xf]
        %v1555 = vld [vmem:[#allocation2 + $0xc4] sm:$0x1]
        %v1556 = vld [vmem:[#allocation2 + $0xd0] sm:$0xf]
        %v1557 = vld [vmem:[#allocation2 + $0xd4] sm:$0xf]
        %v1558 = vld [vmem:[#allocation2 + $0xd8] sm:$0x1]
        %v1559 = vld [vmem:[#allocation2 + $0xe4] sm:$0xf]
        %v1560 = vld [vmem:[#allocation2 + $0xe8] sm:$0xf]
        %v1561 = vld [vmem:[#allocation2 + $0xec] sm:$0x1]
        %v1562 = vld [vmem:[#allocation2 + $0xf8] sm:$0xf]
        %v1563 = vld [vmem:[#allocation2 + $0xfc] sm:$0xf]
        %v1564 = vld [vmem:[#allocation2 + $0x100] sm:$0x1]
        %v1565 = vld [vmem:[#allocation2 + $0x10c] sm:$0xf]
        %v1566 = vld [vmem:[#allocation2 + $0x110] sm:$0xf]
        %v1567 = vld [vmem:[#allocation2 + $0x114] sm:$0x1]
        %v1568 = vld [vmem:[#allocation2 + $0x120] sm:$0xf]
        %v1569 = vld [vmem:[#allocation2 + $0x124] sm:$0xf]
        %v1570 = vld [vmem:[#allocation2 + $0x128] sm:$0x1]
        %v1571 = vld [vmem:[#allocation2 + $0x134] sm:$0xf]
        %v1572 = vld [vmem:[#allocation2 + $0x138] sm:$0xf]
        %v1573 = vld [vmem:[#allocation2 + $0x13c] sm:$0x1]
        %vm1574 = vsmask.f32 3328
        %vm1575 = vsmask.f32 7440
        %vm1576 = vmor %vm1574, %vm1575
        %v1578 = vshrl.u32 %v1526, 16
        %v1580 = vrot.slane %v1578, 4
        %v1581 = vshll.u32 %v1526, 16
        %v1583 = vrot.slane %v1581, 5
        %v1584 = vor.u32 %v1580, %v1583
        %v1585 = vrot.slane %v1584, 4
        %v1587 = vshll.u32 %v1527, 16
        %v1589 = vrot.slane %v1587, 5
        %v1590 = vsel %vm1576, %v1585, %v1589
        %v1591 = vshrl.u32 %v1527, 16
        %v1593 = vrot.slane %v1591, 4
        %v1594 = vor.u32 %v1593, %v1589
        %v1595 = vrot.slane %v1594, 4
        %v1597 = vshll.u32 %v1528, 16
        %v1599 = vrot.slane %v1597, 5
        %v1600 = vsel %vm1576, %v1595, %v1599
        %v1602 = vshrl.u32 %v1529, 16
        %v1604 = vrot.slane %v1602, 4
        %v1605 = vshll.u32 %v1529, 16
        %v1607 = vrot.slane %v1605, 5
        %v1608 = vor.u32 %v1604, %v1607
        %v1609 = vrot.slane %v1608, 4
        %v1611 = vshll.u32 %v1530, 16
        %v1613 = vrot.slane %v1611, 5
        %v1614 = vsel %vm1576, %v1609, %v1613
        %v1615 = vshrl.u32 %v1530, 16
        %v1617 = vrot.slane %v1615, 4
        %v1618 = vor.u32 %v1617, %v1613
        %v1619 = vrot.slane %v1618, 4
        %v1621 = vshll.u32 %v1531, 16
        %v1623 = vrot.slane %v1621, 5
        %v1624 = vsel %vm1576, %v1619, %v1623
        %v1626 = vshrl.u32 %v1532, 16
        %v1628 = vrot.slane %v1626, 4
        %v1629 = vshll.u32 %v1532, 16
        %v1631 = vrot.slane %v1629, 5
        %v1632 = vor.u32 %v1628, %v1631
        %v1633 = vrot.slane %v1632, 4
        %v1635 = vshll.u32 %v1533, 16
        %v1637 = vrot.slane %v1635, 5
        %v1638 = vsel %vm1576, %v1633, %v1637
        %v1639 = vshrl.u32 %v1533, 16
        %v1641 = vrot.slane %v1639, 4
        %v1642 = vor.u32 %v1641, %v1637
        %v1643 = vrot.slane %v1642, 4
        %v1645 = vshll.u32 %v1534, 16
        %v1647 = vrot.slane %v1645, 5
        %v1648 = vsel %vm1576, %v1643, %v1647
        %v1650 = vshrl.u32 %v1535, 16
        %v1652 = vrot.slane %v1650, 4
        %v1653 = vshll.u32 %v1535, 16
        %v1655 = vrot.slane %v1653, 5
        %v1656 = vor.u32 %v1652, %v1655
        %v1657 = vrot.slane %v1656, 4
        %v1659 = vshll.u32 %v1536, 16
        %v1661 = vrot.slane %v1659, 5
        %v1662 = vsel %vm1576, %v1657, %v1661
        %v1663 = vshrl.u32 %v1536, 16
        %v1665 = vrot.slane %v1663, 4
        %v1666 = vor.u32 %v1665, %v1661
        %v1667 = vrot.slane %v1666, 4
        %v1669 = vshll.u32 %v1537, 16
        %v1671 = vrot.slane %v1669, 5
        %v1672 = vsel %vm1576, %v1667, %v1671
        %v1674 = vshrl.u32 %v1538, 16
        %v1676 = vrot.slane %v1674, 4
        %v1677 = vshll.u32 %v1538, 16
        %v1679 = vrot.slane %v1677, 5
        %v1680 = vor.u32 %v1676, %v1679
        %v1681 = vrot.slane %v1680, 4
        %v1683 = vshll.u32 %v1539, 16
        %v1685 = vrot.slane %v1683, 5
        %v1686 = vsel %vm1576, %v1681, %v1685
        %v1687 = vshrl.u32 %v1539, 16
        %v1689 = vrot.slane %v1687, 4
        %v1690 = vor.u32 %v1689, %v1685
        %v1691 = vrot.slane %v1690, 4
        %v1693 = vshll.u32 %v1540, 16
        %v1695 = vrot.slane %v1693, 5
        %v1696 = vsel %vm1576, %v1691, %v1695
        %v1698 = vshrl.u32 %v1541, 16
        %v1700 = vrot.slane %v1698, 4
        %v1701 = vshll.u32 %v1541, 16
        %v1703 = vrot.slane %v1701, 5
        %v1704 = vor.u32 %v1700, %v1703
        %v1705 = vrot.slane %v1704, 4
        %v1707 = vshll.u32 %v1542, 16
        %v1709 = vrot.slane %v1707, 5
        %v1710 = vsel %vm1576, %v1705, %v1709
        %v1711 = vshrl.u32 %v1542, 16
        %v1713 = vrot.slane %v1711, 4
        %v1714 = vor.u32 %v1713, %v1709
        %v1715 = vrot.slane %v1714, 4
        %v1717 = vshll.u32 %v1543, 16
        %v1719 = vrot.slane %v1717, 5
        %v1720 = vsel %vm1576, %v1715, %v1719
        %v1722 = vshrl.u32 %v1544, 16
        %v1724 = vrot.slane %v1722, 4
        %v1725 = vshll.u32 %v1544, 16
        %v1727 = vrot.slane %v1725, 5
        %v1728 = vor.u32 %v1724, %v1727
        %v1729 = vrot.slane %v1728, 4
        %v1731 = vshll.u32 %v1545, 16
        %v1733 = vrot.slane %v1731, 5
        %v1734 = vsel %vm1576, %v1729, %v1733
        %v1735 = vshrl.u32 %v1545, 16
        %v1737 = vrot.slane %v1735, 4
        %v1738 = vor.u32 %v1737, %v1733
        %v1739 = vrot.slane %v1738, 4
        %v1741 = vshll.u32 %v1546, 16
        %v1743 = vrot.slane %v1741, 5
        %v1744 = vsel %vm1576, %v1739, %v1743
        %v1746 = vshrl.u32 %v1547, 16
        %v1748 = vrot.slane %v1746, 4
        %v1749 = vshll.u32 %v1547, 16
        %v1751 = vrot.slane %v1749, 5
        %v1752 = vor.u32 %v1748, %v1751
        %v1753 = vrot.slane %v1752, 4
        %v1755 = vshll.u32 %v1548, 16
        %v1757 = vrot.slane %v1755, 5
        %v1758 = vsel %vm1576, %v1753, %v1757
        %v1759 = vshrl.u32 %v1548, 16
        %v1761 = vrot.slane %v1759, 4
        %v1762 = vor.u32 %v1761, %v1757
        %v1763 = vrot.slane %v1762, 4
        %v1765 = vshll.u32 %v1549, 16
        %v1767 = vrot.slane %v1765, 5
        %v1768 = vsel %vm1576, %v1763, %v1767
        %v1770 = vshrl.u32 %v1550, 16
        %v1772 = vrot.slane %v1770, 4
        %v1773 = vshll.u32 %v1550, 16
        %v1775 = vrot.slane %v1773, 5
        %v1776 = vor.u32 %v1772, %v1775
        %v1777 = vrot.slane %v1776, 4
        %v1779 = vshll.u32 %v1551, 16
        %v1781 = vrot.slane %v1779, 5
        %v1782 = vsel %vm1576, %v1777, %v1781
        %v1783 = vshrl.u32 %v1551, 16
        %v1785 = vrot.slane %v1783, 4
        %v1786 = vor.u32 %v1785, %v1781
        %v1787 = vrot.slane %v1786, 4
        %v1789 = vshll.u32 %v1552, 16
        %v1791 = vrot.slane %v1789, 5
        %v1792 = vsel %vm1576, %v1787, %v1791
        %v1794 = vshrl.u32 %v1553, 16
        %v1796 = vrot.slane %v1794, 4
        %v1797 = vshll.u32 %v1553, 16
        %v1799 = vrot.slane %v1797, 5
        %v1800 = vor.u32 %v1796, %v1799
        %v1801 = vrot.slane %v1800, 4
        %v1803 = vshll.u32 %v1554, 16
        %v1805 = vrot.slane %v1803, 5
        %v1806 = vsel %vm1576, %v1801, %v1805
        %v1807 = vshrl.u32 %v1554, 16
        %v1809 = vrot.slane %v1807, 4
        %v1810 = vor.u32 %v1809, %v1805
        %v1811 = vrot.slane %v1810, 4
        %v1813 = vshll.u32 %v1555, 16
        %v1815 = vrot.slane %v1813, 5
        %v1816 = vsel %vm1576, %v1811, %v1815
        %v1818 = vshrl.u32 %v1556, 16
        %v1820 = vrot.slane %v1818, 4
        %v1821 = vshll.u32 %v1556, 16
        %v1823 = vrot.slane %v1821, 5
        %v1824 = vor.u32 %v1820, %v1823
        %v1825 = vrot.slane %v1824, 4
        %v1827 = vshll.u32 %v1557, 16
        %v1829 = vrot.slane %v1827, 5
        %v1830 = vsel %vm1576, %v1825, %v1829
        %v1831 = vshrl.u32 %v1557, 16
        %v1833 = vrot.slane %v1831, 4
        %v1834 = vor.u32 %v1833, %v1829
        %v1835 = vrot.slane %v1834, 4
        %v1837 = vshll.u32 %v1558, 16
        %v1839 = vrot.slane %v1837, 5
        %v1840 = vsel %vm1576, %v1835, %v1839
        %v1842 = vshrl.u32 %v1559, 16
        %v1844 = vrot.slane %v1842, 4
        %v1845 = vshll.u32 %v1559, 16
        %v1847 = vrot.slane %v1845, 5
        %v1848 = vor.u32 %v1844, %v1847
        %v1849 = vrot.slane %v1848, 4
        %v1851 = vshll.u32 %v1560, 16
        %v1853 = vrot.slane %v1851, 5
        %v1854 = vsel %vm1576, %v1849, %v1853
        %v1855 = vshrl.u32 %v1560, 16
        %v1857 = vrot.slane %v1855, 4
        %v1858 = vor.u32 %v1857, %v1853
        %v1859 = vrot.slane %v1858, 4
        %v1861 = vshll.u32 %v1561, 16
        %v1863 = vrot.slane %v1861, 5
        %v1864 = vsel %vm1576, %v1859, %v1863
        %v1866 = vshrl.u32 %v1562, 16
        %v1868 = vrot.slane %v1866, 4
        %v1869 = vshll.u32 %v1562, 16
        %v1871 = vrot.slane %v1869, 5
        %v1872 = vor.u32 %v1868, %v1871
        %v1873 = vrot.slane %v1872, 4
        %v1875 = vshll.u32 %v1563, 16
        %v1877 = vrot.slane %v1875, 5
        %v1878 = vsel %vm1576, %v1873, %v1877
        %v1879 = vshrl.u32 %v1563, 16
        %v1881 = vrot.slane %v1879, 4
        %v1882 = vor.u32 %v1881, %v1877
        %v1883 = vrot.slane %v1882, 4
        %v1885 = vshll.u32 %v1564, 16
        %v1887 = vrot.slane %v1885, 5
        %v1888 = vsel %vm1576, %v1883, %v1887
        %v1890 = vshrl.u32 %v1565, 16
        %v1892 = vrot.slane %v1890, 4
        %v1893 = vshll.u32 %v1565, 16
        %v1895 = vrot.slane %v1893, 5
        %v1896 = vor.u32 %v1892, %v1895
        %v1897 = vrot.slane %v1896, 4
        %v1899 = vshll.u32 %v1566, 16
        %v1901 = vrot.slane %v1899, 5
        %v1902 = vsel %vm1576, %v1897, %v1901
        %v1903 = vshrl.u32 %v1566, 16
        %v1905 = vrot.slane %v1903, 4
        %v1906 = vor.u32 %v1905, %v1901
        %v1907 = vrot.slane %v1906, 4
        %v1909 = vshll.u32 %v1567, 16
        %v1911 = vrot.slane %v1909, 5
        %v1912 = vsel %vm1576, %v1907, %v1911
        %v1914 = vshrl.u32 %v1568, 16
        %v1916 = vrot.slane %v1914, 4
        %v1917 = vshll.u32 %v1568, 16
        %v1919 = vrot.slane %v1917, 5
        %v1920 = vor.u32 %v1916, %v1919
        %v1921 = vrot.slane %v1920, 4
        %v1923 = vshll.u32 %v1569, 16
        %v1925 = vrot.slane %v1923, 5
        %v1926 = vsel %vm1576, %v1921, %v1925
        %v1927 = vshrl.u32 %v1569, 16
        %v1929 = vrot.slane %v1927, 4
        %v1930 = vor.u32 %v1929, %v1925
        %v1931 = vrot.slane %v1930, 4
        %v1933 = vshll.u32 %v1570, 16
        %v1935 = vrot.slane %v1933, 5
        %v1936 = vsel %vm1576, %v1931, %v1935
        %v1938 = vshrl.u32 %v1571, 16
        %v1940 = vrot.slane %v1938, 4
        %v1941 = vshll.u32 %v1571, 16
        %v1943 = vrot.slane %v1941, 5
        %v1944 = vor.u32 %v1940, %v1943
        %v1945 = vrot.slane %v1944, 4
        %v1947 = vshll.u32 %v1572, 16
        %v1949 = vrot.slane %v1947, 5
        %v1950 = vsel %vm1576, %v1945, %v1949
        %v1951 = vshrl.u32 %v1572, 16
        %v1953 = vrot.slane %v1951, 4
        %v1954 = vor.u32 %v1953, %v1949
        %v1955 = vrot.slane %v1954, 4
        %v1957 = vshll.u32 %v1573, 16
        %v1959 = vrot.slane %v1957, 5
        %v1960 = vsel %vm1576, %v1955, %v1959
        %s1961 = scalar_lea.vmem [#allocation7], 128
        %v1962 = vld [vmem:[%s1961] sm:$0xf]
        %v1963 = vld [vmem:[%s1961 + $0x4] sm:$0xf]
        %v1964 = vld [vmem:[%s1961 + $0x8] sm:$0xf]
        %v1965 = vld [vmem:[%s1961 + $0xc] sm:$0xf]
        %v1966 = vld [vmem:[%s1961 + $0x10] sm:$0xf]
        %v1967 = vld [vmem:[%s1961 + $0x14] sm:$0xf]
        %v1968 = vld [vmem:[%s1961 + $0x18] sm:$0xf]
        %v1969 = vld [vmem:[%s1961 + $0x1c] sm:$0xf]
        %v1970 = vld [vmem:[%s1961 + $0x20] sm:$0xf]
        %v1971 = vld [vmem:[%s1961 + $0x24] sm:$0xf]
        %v1972 = vld [vmem:[%s1961 + $0x28] sm:$0xf]
        %v1973 = vld [vmem:[%s1961 + $0x2c] sm:$0xf]
        %v1974 = vld [vmem:[%s1961 + $0x30] sm:$0xf]
        %v1975 = vld [vmem:[%s1961 + $0x34] sm:$0xf]
        %v1976 = vld [vmem:[%s1961 + $0x38] sm:$0xf]
        %v1977 = vld [vmem:[%s1961 + $0x3c] sm:$0xf]
        %v1978 = vunpack.c.l.b16 %v1590
        %v1979 = vunpack.c.l.b16 %v1600
        %v1980 = vunpack.c.l.b16 %v1614
        %v1981 = vunpack.c.l.b16 %v1624
        %v1982 = vunpack.c.l.b16 %v1638
        %v1983 = vunpack.c.l.b16 %v1648
        %v1984 = vunpack.c.l.b16 %v1662
        %v1985 = vunpack.c.l.b16 %v1672
        %v1986 = vunpack.c.l.b16 %v1686
        %v1987 = vunpack.c.l.b16 %v1696
        %v1988 = vunpack.c.l.b16 %v1710
        %v1989 = vunpack.c.l.b16 %v1720
        %v1990 = vunpack.c.l.b16 %v1734
        %v1991 = vunpack.c.l.b16 %v1744
        %v1992 = vunpack.c.l.b16 %v1758
        %v1993 = vunpack.c.l.b16 %v1768
        %v1994 = vunpack.c.l.b16 %v1782
        %v1995 = vunpack.c.l.b16 %v1792
        %v1996 = vunpack.c.l.b16 %v1806
        %v1997 = vunpack.c.l.b16 %v1816
        %v1998 = vunpack.c.l.b16 %v1830
        %v1999 = vunpack.c.l.b16 %v1840
        %v2000 = vunpack.c.l.b16 %v1854
        %v2001 = vunpack.c.l.b16 %v1864
        %v2002 = vunpack.c.l.b16 %v1878
        %v2003 = vunpack.c.l.b16 %v1888
        %v2004 = vunpack.c.l.b16 %v1902
        %v2005 = vunpack.c.l.b16 %v1912
        %v2006 = vunpack.c.l.b16 %v1926
        %v2007 = vunpack.c.l.b16 %v1936
        %v2008 = vunpack.c.l.b16 %v1950
        %v2009 = vunpack.c.l.b16 %v1960
        %v2010 = vpack.c.b16 %v1979, %v1978
        %v2011 = vpack.c.b16 %v1981, %v1980
        %v2012 = vpack.c.b16 %v1983, %v1982
        %v2013 = vpack.c.b16 %v1985, %v1984
        %v2014 = vpack.c.b16 %v1987, %v1986
        %v2015 = vpack.c.b16 %v1989, %v1988
        %v2016 = vpack.c.b16 %v1991, %v1990
        %v2017 = vpack.c.b16 %v1993, %v1992
        %v2018 = vpack.c.b16 %v1995, %v1994
        %v2019 = vpack.c.b16 %v1997, %v1996
        %v2020 = vpack.c.b16 %v1999, %v1998
        %v2021 = vpack.c.b16 %v2001, %v2000
        %v2022 = vpack.c.b16 %v2003, %v2002
        %v2023 = vpack.c.b16 %v2005, %v2004
        %v2024 = vpack.c.b16 %v2007, %v2006
        %v2025 = vpack.c.b16 %v2009, %v2008
        %v2058 = vunpack.c.l.b16 %v1962
        %v2059 = vunpack.c.l.b16 %v1963
        %v2060 = vunpack.c.l.b16 %v1964
        %v2061 = vunpack.c.l.b16 %v1965
        %v2062 = vunpack.c.l.b16 %v1966
        %v2063 = vunpack.c.l.b16 %v1967
        %v2064 = vunpack.c.l.b16 %v1968
        %v2065 = vunpack.c.l.b16 %v1969
        %v2066 = vunpack.c.l.b16 %v1970
        %v2067 = vunpack.c.l.b16 %v1971
        %v2068 = vunpack.c.l.b16 %v1972
        %v2069 = vunpack.c.l.b16 %v1973
        %v2070 = vunpack.c.l.b16 %v1974
        %v2071 = vunpack.c.l.b16 %v1975
        %v2072 = vunpack.c.l.b16 %v1976
        %v2073 = vunpack.c.l.b16 %v1977
        %v2074 = vpack.c.b16 %v2059, %v2058
        %v2075 = vpack.c.b16 %v2061, %v2060
        %v2076 = vpack.c.b16 %v2063, %v2062
        %v2077 = vpack.c.b16 %v2065, %v2064
        %v2078 = vpack.c.b16 %v2067, %v2066
        %v2079 = vpack.c.b16 %v2069, %v2068
        %v2080 = vpack.c.b16 %v2071, %v2070
        %v2081 = vpack.c.b16 %v2073, %v2072
        %2090 = vmatprep.subr.bf16.mxu0 0
        %2091 = vmatpush1.bf16.msra.mxu0 %v2074
        %2092 = vmatprep.subr.bf16.mxu0 0
        %2093 = vmatpush1.bf16.msra.mxu0 %v2075
        %2094 = vmatprep.subr.bf16.mxu0 0
        %2095 = vmatpush1.bf16.msra.mxu0 %v2076
        %2096 = vmatprep.subr.bf16.mxu0 0
        %2097 = vmatpush1.bf16.msra.mxu0 %v2077
        %2098 = vmatprep.subr.bf16.mxu0 0
        %2099 = vmatpush1.bf16.msra.mxu0 %v2078
        %2100 = vmatprep.subr.bf16.mxu0 0
        %2101 = vmatpush1.bf16.msra.mxu0 %v2079
        %2102 = vmatprep.subr.bf16.mxu0 0
        %2103 = vmatpush1.bf16.msra.mxu0 %v2080
        %2104 = vmatprep.subr.bf16.mxu0 0
        %2105 = vmatpush1.bf16.msra.mxu0 %v2081
        %2106 = vmatprep.subr.bf16.mxu0 0
        %2107 = vmatpush1.bf16.msra.mxu0 0
        %2108 = vmatprep.subr.bf16.mxu0 0
        %2109 = vmatpush1.bf16.msra.mxu0 0
        %2110 = vmatprep.subr.bf16.mxu0 0
        %2111 = vmatpush1.bf16.msra.mxu0 0
        %2112 = vmatprep.subr.bf16.mxu0 0
        %2113 = vmatpush1.bf16.msra.mxu0 0
        %2114 = vmatprep.subr.bf16.mxu0 0
        %2115 = vmatpush1.bf16.msra.mxu0 0
        %2116 = vmatprep.subr.bf16.mxu0 0
        %2117 = vmatpush1.bf16.msra.mxu0 0
        %2118 = vmatprep.subr.bf16.mxu0 0
        %2119 = vmatpush1.bf16.msra.mxu0 0
        %2120 = vmatprep.subr.bf16.mxu0 0
        %2121 = vmatpush1.bf16.msra.mxu0 0
        %2122 = vmatprep.mubr.bf16.mxu0 0
        %2123 = vmatmul.mubr.bf16.gmra.mrb[0].mxu0 %v2010
        %v2124 = vpop.f32.mrb[0].mxu0
        %v2125 = vadd.f32 0.0, %v2124
        %v2126 = vpop.f32.mrb[0].mxu0
        %v2127 = vpop.f32.mrb[0].mxu0
        %v2128 = vadd.f32 0.0, %v2127
        %v2129 = vpop.f32.mrb[0].mxu0
        %2130 = vmatprep.mubr.bf16.mxu0 0
        %2131 = vmatmul.mubr.bf16.gmra.mrb[0].mxu0 %v2011
        %v2132 = vpop.f32.mrb[0].mxu0
        %v2133 = vadd.f32 0.0, %v2132
        %v2134 = vpop.f32.mrb[0].mxu0
        %v2135 = vpop.f32.mrb[0].mxu0
        %v2136 = vadd.f32 0.0, %v2135
        %v2137 = vpop.f32.mrb[0].mxu0
        %2138 = vmatprep.mubr.bf16.mxu0 0
        %2139 = vmatmul.mubr.bf16.gmra.mrb[0].mxu0 %v2012
        %v2140 = vpop.f32.mrb[0].mxu0
        %v2141 = vadd.f32 0.0, %v2140
        %v2142 = vpop.f32.mrb[0].mxu0
        %v2143 = vpop.f32.mrb[0].mxu0
        %v2144 = vadd.f32 0.0, %v2143
        %v2145 = vpop.f32.mrb[0].mxu0
        %2146 = vmatprep.mubr.bf16.mxu0 0
        %2147 = vmatmul.mubr.bf16.gmra.mrb[0].mxu0 %v2013
        %v2148 = vpop.f32.mrb[0].mxu0
        %v2149 = vadd.f32 0.0, %v2148
        %v2150 = vpop.f32.mrb[0].mxu0
        %v2151 = vpop.f32.mrb[0].mxu0
        %v2152 = vadd.f32 0.0, %v2151
        %v2153 = vpop.f32.mrb[0].mxu0
        %2154 = vmatprep.mubr.bf16.mxu0 0
        %2155 = vmatmul.mubr.bf16.gmra.mrb[0].mxu0 %v2014
        %v2156 = vpop.f32.mrb[0].mxu0
        %v2157 = vadd.f32 0.0, %v2156
        %v2158 = vpop.f32.mrb[0].mxu0
        %v2159 = vpop.f32.mrb[0].mxu0
        %v2160 = vadd.f32 0.0, %v2159
        %v2161 = vpop.f32.mrb[0].mxu0
        %2162 = vmatprep.mubr.bf16.mxu0 0
        %2163 = vmatmul.mubr.bf16.gmra.mrb[0].mxu0 %v2015
        %v2164 = vpop.f32.mrb[0].mxu0
        %v2165 = vadd.f32 0.0, %v2164
        %v2166 = vpop.f32.mrb[0].mxu0
        %v2167 = vpop.f32.mrb[0].mxu0
        %v2168 = vadd.f32 0.0, %v2167
        %v2169 = vpop.f32.mrb[0].mxu0
        %2170 = vmatprep.mubr.bf16.mxu0 0
        %2171 = vmatmul.mubr.bf16.gmra.mrb[0].mxu0 %v2016
        %v2172 = vpop.f32.mrb[0].mxu0
        %v2173 = vadd.f32 0.0, %v2172
        %v2174 = vpop.f32.mrb[0].mxu0
        %v2175 = vpop.f32.mrb[0].mxu0
        %v2176 = vadd.f32 0.0, %v2175
        %v2177 = vpop.f32.mrb[0].mxu0
        %2178 = vmatprep.mubr.bf16.mxu0 0
        %2179 = vmatmul.mubr.bf16.gmra.mrb[0].mxu0 %v2017
        %v2180 = vpop.f32.mrb[0].mxu0
        %v2181 = vadd.f32 0.0, %v2180
        %v2182 = vpop.f32.mrb[0].mxu0
        %v2183 = vpop.f32.mrb[0].mxu0
        %v2184 = vadd.f32 0.0, %v2183
        %v2185 = vpop.f32.mrb[0].mxu0
        %2186 = vmatprep.mubr.bf16.mxu0 0
        %2187 = vmatmul.mubr.bf16.gmra.mrb[0].mxu0 %v2018
        %v2188 = vpop.f32.mrb[0].mxu0
        %v2189 = vadd.f32 0.0, %v2188
        %v2190 = vpop.f32.mrb[0].mxu0
        %v2191 = vpop.f32.mrb[0].mxu0
        %v2192 = vadd.f32 0.0, %v2191
        %v2193 = vpop.f32.mrb[0].mxu0
        %2194 = vmatprep.mubr.bf16.mxu0 0
        %2195 = vmatmul.mubr.bf16.gmra.mrb[0].mxu0 %v2019
        %v2196 = vpop.f32.mrb[0].mxu0
        %v2197 = vadd.f32 0.0, %v2196
        %v2198 = vpop.f32.mrb[0].mxu0
        %v2199 = vpop.f32.mrb[0].mxu0
        %v2200 = vadd.f32 0.0, %v2199
        %v2201 = vpop.f32.mrb[0].mxu0
        %2202 = vmatprep.mubr.bf16.mxu0 0
        %2203 = vmatmul.mubr.bf16.gmra.mrb[0].mxu0 %v2020
        %v2204 = vpop.f32.mrb[0].mxu0
        %v2205 = vadd.f32 0.0, %v2204
        %v2206 = vpop.f32.mrb[0].mxu0
        %v2207 = vpop.f32.mrb[0].mxu0
        %v2208 = vadd.f32 0.0, %v2207
        %v2209 = vpop.f32.mrb[0].mxu0
        %2210 = vmatprep.mubr.bf16.mxu0 0
        %2211 = vmatmul.mubr.bf16.gmra.mrb[0].mxu0 %v2021
        %v2212 = vpop.f32.mrb[0].mxu0
        %v2213 = vadd.f32 0.0, %v2212
        %v2214 = vpop.f32.mrb[0].mxu0
        %v2215 = vpop.f32.mrb[0].mxu0
        %v2216 = vadd.f32 0.0, %v2215
        %v2217 = vpop.f32.mrb[0].mxu0
        %2218 = vmatprep.mubr.bf16.mxu0 0
        %2219 = vmatmul.mubr.bf16.gmra.mrb[0].mxu0 %v2022
        %v2220 = vpop.f32.mrb[0].mxu0
        %v2221 = vadd.f32 0.0, %v2220
        %v2222 = vpop.f32.mrb[0].mxu0
        %v2223 = vpop.f32.mrb[0].mxu0
        %v2224 = vadd.f32 0.0, %v2223
        %v2225 = vpop.f32.mrb[0].mxu0
        %2226 = vmatprep.mubr.bf16.mxu0 0
        %2227 = vmatmul.mubr.bf16.gmra.mrb[0].mxu0 %v2023
        %v2228 = vpop.f32.mrb[0].mxu0
        %v2229 = vadd.f32 0.0, %v2228
        %v2230 = vpop.f32.mrb[0].mxu0
        %v2231 = vpop.f32.mrb[0].mxu0
        %v2232 = vadd.f32 0.0, %v2231
        %v2233 = vpop.f32.mrb[0].mxu0
        %2234 = vmatprep.mubr.bf16.mxu0 0
        %2235 = vmatmul.mubr.bf16.gmra.mrb[0].mxu0 %v2024
        %v2236 = vpop.f32.mrb[0].mxu0
        %v2237 = vadd.f32 0.0, %v2236
        %v2238 = vpop.f32.mrb[0].mxu0
        %v2239 = vpop.f32.mrb[0].mxu0
        %v2240 = vadd.f32 0.0, %v2239
        %v2241 = vpop.f32.mrb[0].mxu0
        %2242 = vmatprep.mubr.bf16.mxu0 0
        %2243 = vmatmul.mubr.bf16.gmra.mrb[0].mxu0 %v2025
        %v2244 = vpop.f32.mrb[0].mxu0
        %v2245 = vadd.f32 0.0, %v2244
        %v2246 = vpop.f32.mrb[0].mxu0
        %v2247 = vpop.f32.mrb[0].mxu0
        %v2248 = vadd.f32 0.0, %v2247
        %v2249 = vpop.f32.mrb[0].mxu0
        %2250 = vdwg.mxu0
        %v2251 = vadd.f32 %v1400, %v2125
        %v2252 = vadd.f32 %v1403, %v2128
        %v2253 = vadd.f32 %v1408, %v2133
        %v2254 = vadd.f32 %v1411, %v2136
        %v2255 = vadd.f32 %v1416, %v2141
        %v2256 = vadd.f32 %v1419, %v2144
        %v2257 = vadd.f32 %v1424, %v2149
        %v2258 = vadd.f32 %v1427, %v2152
        %v2259 = vadd.f32 %v1432, %v2157
        %v2260 = vadd.f32 %v1435, %v2160
        %v2261 = vadd.f32 %v1440, %v2165
        %v2262 = vadd.f32 %v1443, %v2168
        %v2263 = vadd.f32 %v1448, %v2173
        %v2264 = vadd.f32 %v1451, %v2176
        %v2265 = vadd.f32 %v1456, %v2181
        %v2266 = vadd.f32 %v1459, %v2184
        %v2267 = vadd.f32 %v1464, %v2189
        %v2268 = vadd.f32 %v1467, %v2192
        %v2269 = vadd.f32 %v1472, %v2197
        %v2270 = vadd.f32 %v1475, %v2200
        %v2271 = vadd.f32 %v1480, %v2205
        %v2272 = vadd.f32 %v1483, %v2208
        %v2273 = vadd.f32 %v1488, %v2213
        %v2274 = vadd.f32 %v1491, %v2216
        %v2275 = vadd.f32 %v1496, %v2221
        %v2276 = vadd.f32 %v1499, %v2224
        %v2277 = vadd.f32 %v1504, %v2229
        %v2278 = vadd.f32 %v1507, %v2232
        %v2279 = vadd.f32 %v1512, %v2237
        %v2280 = vadd.f32 %v1515, %v2240
        %v2281 = vadd.f32 %v1520, %v2245
        %v2282 = vadd.f32 %v1523, %v2248
        %v2283 = vld [vmem:[%s477 + $0x4] sm:$0x8]
        %v2284 = vld [vmem:[%s477 + $0x8] sm:$0xf]
        %v2285 = vld [vmem:[%s477 + $0xc] sm:$0xf]
        %v2286 = vld [vmem:[%s477 + $0x18] sm:$0x8]
        %v2287 = vld [vmem:[%s477 + $0x1c] sm:$0xf]
        %v2288 = vld [vmem:[%s477 + $0x20] sm:$0xf]
        %v2289 = vld [vmem:[%s477 + $0x2c] sm:$0x8]
        %v2290 = vld [vmem:[%s477 + $0x30] sm:$0xf]
        %v2291 = vld [vmem:[%s477 + $0x34] sm:$0xf]
        %v2292 = vld [vmem:[%s477 + $0x40] sm:$0x8]
        %v2293 = vld [vmem:[%s477 + $0x44] sm:$0xf]
        %v2294 = vld [vmem:[%s477 + $0x48] sm:$0xf]
        %v2295 = vld [vmem:[%s477 + $0x54] sm:$0x8]
        %v2296 = vld [vmem:[%s477 + $0x58] sm:$0xf]
        %v2297 = vld [vmem:[%s477 + $0x5c] sm:$0xf]
        %v2298 = vld [vmem:[%s477 + $0x68] sm:$0x8]
        %v2299 = vld [vmem:[%s477 + $0x6c] sm:$0xf]
        %v2300 = vld [vmem:[%s477 + $0x70] sm:$0xf]
        %v2301 = vld [vmem:[%s477 + $0x7c] sm:$0x8]
        %v2302 = vld [vmem:[%s477 + $0x80] sm:$0xf]
        %v2303 = vld [vmem:[%s477 + $0x84] sm:$0xf]
        %v2304 = vld [vmem:[%s477 + $0x90] sm:$0x8]
        %v2305 = vld [vmem:[%s477 + $0x94] sm:$0xf]
        %v2306 = vld [vmem:[%s477 + $0x98] sm:$0xf]
        %v2307 = vld [vmem:[%s477 + $0xa4] sm:$0x8]
        %v2308 = vld [vmem:[%s477 + $0xa8] sm:$0xf]
        %v2309 = vld [vmem:[%s477 + $0xac] sm:$0xf]
        %v2310 = vld [vmem:[%s477 + $0xb8] sm:$0x8]
        %v2311 = vld [vmem:[%s477 + $0xbc] sm:$0xf]
        %v2312 = vld [vmem:[%s477 + $0xc0] sm:$0xf]
        %v2313 = vld [vmem:[%s477 + $0xcc] sm:$0x8]
        %v2314 = vld [vmem:[%s477 + $0xd0] sm:$0xf]
        %v2315 = vld [vmem:[%s477 + $0xd4] sm:$0xf]
        %v2316 = vld [vmem:[%s477 + $0xe0] sm:$0x8]
        %v2317 = vld [vmem:[%s477 + $0xe4] sm:$0xf]
        %v2318 = vld [vmem:[%s477 + $0xe8] sm:$0xf]
        %v2319 = vld [vmem:[%s477 + $0xf4] sm:$0x8]
        %v2320 = vld [vmem:[%s477 + $0xf8] sm:$0xf]
        %v2321 = vld [vmem:[%s477 + $0xfc] sm:$0xf]
        %v2322 = vld [vmem:[%s477 + $0x108] sm:$0x8]
        %v2323 = vld [vmem:[%s477 + $0x10c] sm:$0xf]
        %v2324 = vld [vmem:[%s477 + $0x110] sm:$0xf]
        %v2325 = vld [vmem:[%s477 + $0x11c] sm:$0x8]
        %v2326 = vld [vmem:[%s477 + $0x120] sm:$0xf]
        %v2327 = vld [vmem:[%s477 + $0x124] sm:$0xf]
        %v2328 = vld [vmem:[%s477 + $0x130] sm:$0x8]
        %v2329 = vld [vmem:[%s477 + $0x134] sm:$0xf]
        %v2330 = vld [vmem:[%s477 + $0x138] sm:$0xf]
        %v2332 = vshrl.u32 %v2283, 16
        %v2334 = vrot.slane %v2332, 7
        %v2335 = vrot.slane %v2334, 4
        %v2337 = vshrl.u32 %v2284, 16
        %v2339 = vrot.slane %v2337, 7
        %v2340 = vshll.u32 %v2284, 16
        %v2342 = vor.u32 %v2339, %v2340
        %v2343 = vsel %vm562, %v2335, %v2342
        %v2344 = vrot.slane %v2339, 4
        %v2346 = vshrl.u32 %v2285, 16
        %v2348 = vrot.slane %v2346, 7
        %v2349 = vshll.u32 %v2285, 16
        %v2351 = vor.u32 %v2348, %v2349
        %v2352 = vsel %vm562, %v2344, %v2351
        %v2354 = vshrl.u32 %v2286, 16
        %v2356 = vrot.slane %v2354, 7
        %v2357 = vrot.slane %v2356, 4
        %v2359 = vshrl.u32 %v2287, 16
        %v2361 = vrot.slane %v2359, 7
        %v2362 = vshll.u32 %v2287, 16
        %v2364 = vor.u32 %v2361, %v2362
        %v2365 = vsel %vm562, %v2357, %v2364
        %v2366 = vrot.slane %v2361, 4
        %v2368 = vshrl.u32 %v2288, 16
        %v2370 = vrot.slane %v2368, 7
        %v2371 = vshll.u32 %v2288, 16
        %v2373 = vor.u32 %v2370, %v2371
        %v2374 = vsel %vm562, %v2366, %v2373
        %v2376 = vshrl.u32 %v2289, 16
        %v2378 = vrot.slane %v2376, 7
        %v2379 = vrot.slane %v2378, 4
        %v2381 = vshrl.u32 %v2290, 16
        %v2383 = vrot.slane %v2381, 7
        %v2384 = vshll.u32 %v2290, 16
        %v2386 = vor.u32 %v2383, %v2384
        %v2387 = vsel %vm562, %v2379, %v2386
        %v2388 = vrot.slane %v2383, 4
        %v2390 = vshrl.u32 %v2291, 16
        %v2392 = vrot.slane %v2390, 7
        %v2393 = vshll.u32 %v2291, 16
        %v2395 = vor.u32 %v2392, %v2393
        %v2396 = vsel %vm562, %v2388, %v2395
        %v2398 = vshrl.u32 %v2292, 16
        %v2400 = vrot.slane %v2398, 7
        %v2401 = vrot.slane %v2400, 4
        %v2403 = vshrl.u32 %v2293, 16
        %v2405 = vrot.slane %v2403, 7
        %v2406 = vshll.u32 %v2293, 16
        %v2408 = vor.u32 %v2405, %v2406
        %v2409 = vsel %vm562, %v2401, %v2408
        %v2410 = vrot.slane %v2405, 4
        %v2412 = vshrl.u32 %v2294, 16
        %v2414 = vrot.slane %v2412, 7
        %v2415 = vshll.u32 %v2294, 16
        %v2417 = vor.u32 %v2414, %v2415
        %v2418 = vsel %vm562, %v2410, %v2417
        %v2420 = vshrl.u32 %v2295, 16
        %v2422 = vrot.slane %v2420, 7
        %v2423 = vrot.slane %v2422, 4
        %v2425 = vshrl.u32 %v2296, 16
        %v2427 = vrot.slane %v2425, 7
        %v2428 = vshll.u32 %v2296, 16
        %v2430 = vor.u32 %v2427, %v2428
        %v2431 = vsel %vm562, %v2423, %v2430
        %v2432 = vrot.slane %v2427, 4
        %v2434 = vshrl.u32 %v2297, 16
        %v2436 = vrot.slane %v2434, 7
        %v2437 = vshll.u32 %v2297, 16
        %v2439 = vor.u32 %v2436, %v2437
        %v2440 = vsel %vm562, %v2432, %v2439
        %v2442 = vshrl.u32 %v2298, 16
        %v2444 = vrot.slane %v2442, 7
        %v2445 = vrot.slane %v2444, 4
        %v2447 = vshrl.u32 %v2299, 16
        %v2449 = vrot.slane %v2447, 7
        %v2450 = vshll.u32 %v2299, 16
        %v2452 = vor.u32 %v2449, %v2450
        %v2453 = vsel %vm562, %v2445, %v2452
        %v2454 = vrot.slane %v2449, 4
        %v2456 = vshrl.u32 %v2300, 16
        %v2458 = vrot.slane %v2456, 7
        %v2459 = vshll.u32 %v2300, 16
        %v2461 = vor.u32 %v2458, %v2459
        %v2462 = vsel %vm562, %v2454, %v2461
        %v2464 = vshrl.u32 %v2301, 16
        %v2466 = vrot.slane %v2464, 7
        %v2467 = vrot.slane %v2466, 4
        %v2469 = vshrl.u32 %v2302, 16
        %v2471 = vrot.slane %v2469, 7
        %v2472 = vshll.u32 %v2302, 16
        %v2474 = vor.u32 %v2471, %v2472
        %v2475 = vsel %vm562, %v2467, %v2474
        %v2476 = vrot.slane %v2471, 4
        %v2478 = vshrl.u32 %v2303, 16
        %v2480 = vrot.slane %v2478, 7
        %v2481 = vshll.u32 %v2303, 16
        %v2483 = vor.u32 %v2480, %v2481
        %v2484 = vsel %vm562, %v2476, %v2483
        %v2486 = vshrl.u32 %v2304, 16
        %v2488 = vrot.slane %v2486, 7
        %v2489 = vrot.slane %v2488, 4
        %v2491 = vshrl.u32 %v2305, 16
        %v2493 = vrot.slane %v2491, 7
        %v2494 = vshll.u32 %v2305, 16
        %v2496 = vor.u32 %v2493, %v2494
        %v2497 = vsel %vm562, %v2489, %v2496
        %v2498 = vrot.slane %v2493, 4
        %v2500 = vshrl.u32 %v2306, 16
        %v2502 = vrot.slane %v2500, 7
        %v2503 = vshll.u32 %v2306, 16
        %v2505 = vor.u32 %v2502, %v2503
        %v2506 = vsel %vm562, %v2498, %v2505
        %v2508 = vshrl.u32 %v2307, 16
        %v2510 = vrot.slane %v2508, 7
        %v2511 = vrot.slane %v2510, 4
        %v2513 = vshrl.u32 %v2308, 16
        %v2515 = vrot.slane %v2513, 7
        %v2516 = vshll.u32 %v2308, 16
        %v2518 = vor.u32 %v2515, %v2516
        %v2519 = vsel %vm562, %v2511, %v2518
        %v2520 = vrot.slane %v2515, 4
        %v2522 = vshrl.u32 %v2309, 16
        %v2524 = vrot.slane %v2522, 7
        %v2525 = vshll.u32 %v2309, 16
        %v2527 = vor.u32 %v2524, %v2525
        %v2528 = vsel %vm562, %v2520, %v2527
        %v2530 = vshrl.u32 %v2310, 16
        %v2532 = vrot.slane %v2530, 7
        %v2533 = vrot.slane %v2532, 4
        %v2535 = vshrl.u32 %v2311, 16
        %v2537 = vrot.slane %v2535, 7
        %v2538 = vshll.u32 %v2311, 16
        %v2540 = vor.u32 %v2537, %v2538
        %v2541 = vsel %vm562, %v2533, %v2540
        %v2542 = vrot.slane %v2537, 4
        %v2544 = vshrl.u32 %v2312, 16
        %v2546 = vrot.slane %v2544, 7
        %v2547 = vshll.u32 %v2312, 16
        %v2549 = vor.u32 %v2546, %v2547
        %v2550 = vsel %vm562, %v2542, %v2549
        %v2552 = vshrl.u32 %v2313, 16
        %v2554 = vrot.slane %v2552, 7
        %v2555 = vrot.slane %v2554, 4
        %v2557 = vshrl.u32 %v2314, 16
        %v2559 = vrot.slane %v2557, 7
        %v2560 = vshll.u32 %v2314, 16
        %v2562 = vor.u32 %v2559, %v2560
        %v2563 = vsel %vm562, %v2555, %v2562
        %v2564 = vrot.slane %v2559, 4
        %v2566 = vshrl.u32 %v2315, 16
        %v2568 = vrot.slane %v2566, 7
        %v2569 = vshll.u32 %v2315, 16
        %v2571 = vor.u32 %v2568, %v2569
        %v2572 = vsel %vm562, %v2564, %v2571
        %v2574 = vshrl.u32 %v2316, 16
        %v2576 = vrot.slane %v2574, 7
        %v2577 = vrot.slane %v2576, 4
        %v2579 = vshrl.u32 %v2317, 16
        %v2581 = vrot.slane %v2579, 7
        %v2582 = vshll.u32 %v2317, 16
        %v2584 = vor.u32 %v2581, %v2582
        %v2585 = vsel %vm562, %v2577, %v2584
        %v2586 = vrot.slane %v2581, 4
        %v2588 = vshrl.u32 %v2318, 16
        %v2590 = vrot.slane %v2588, 7
        %v2591 = vshll.u32 %v2318, 16
        %v2593 = vor.u32 %v2590, %v2591
        %v2594 = vsel %vm562, %v2586, %v2593
        %v2596 = vshrl.u32 %v2319, 16
        %v2598 = vrot.slane %v2596, 7
        %v2599 = vrot.slane %v2598, 4
        %v2601 = vshrl.u32 %v2320, 16
        %v2603 = vrot.slane %v2601, 7
        %v2604 = vshll.u32 %v2320, 16
        %v2606 = vor.u32 %v2603, %v2604
        %v2607 = vsel %vm562, %v2599, %v2606
        %v2608 = vrot.slane %v2603, 4
        %v2610 = vshrl.u32 %v2321, 16
        %v2612 = vrot.slane %v2610, 7
        %v2613 = vshll.u32 %v2321, 16
        %v2615 = vor.u32 %v2612, %v2613
        %v2616 = vsel %vm562, %v2608, %v2615
        %v2618 = vshrl.u32 %v2322, 16
        %v2620 = vrot.slane %v2618, 7
        %v2621 = vrot.slane %v2620, 4
        %v2623 = vshrl.u32 %v2323, 16
        %v2625 = vrot.slane %v2623, 7
        %v2626 = vshll.u32 %v2323, 16
        %v2628 = vor.u32 %v2625, %v2626
        %v2629 = vsel %vm562, %v2621, %v2628
        %v2630 = vrot.slane %v2625, 4
        %v2632 = vshrl.u32 %v2324, 16
        %v2634 = vrot.slane %v2632, 7
        %v2635 = vshll.u32 %v2324, 16
        %v2637 = vor.u32 %v2634, %v2635
        %v2638 = vsel %vm562, %v2630, %v2637
        %v2640 = vshrl.u32 %v2325, 16
        %v2642 = vrot.slane %v2640, 7
        %v2643 = vrot.slane %v2642, 4
        %v2645 = vshrl.u32 %v2326, 16
        %v2647 = vrot.slane %v2645, 7
        %v2648 = vshll.u32 %v2326, 16
        %v2650 = vor.u32 %v2647, %v2648
        %v2651 = vsel %vm562, %v2643, %v2650
        %v2652 = vrot.slane %v2647, 4
        %v2654 = vshrl.u32 %v2327, 16
        %v2656 = vrot.slane %v2654, 7
        %v2657 = vshll.u32 %v2327, 16
        %v2659 = vor.u32 %v2656, %v2657
        %v2660 = vsel %vm562, %v2652, %v2659
        %v2662 = vshrl.u32 %v2328, 16
        %v2664 = vrot.slane %v2662, 7
        %v2665 = vrot.slane %v2664, 4
        %v2667 = vshrl.u32 %v2329, 16
        %v2669 = vrot.slane %v2667, 7
        %v2670 = vshll.u32 %v2329, 16
        %v2672 = vor.u32 %v2669, %v2670
        %v2673 = vsel %vm562, %v2665, %v2672
        %v2674 = vrot.slane %v2669, 4
        %v2676 = vshrl.u32 %v2330, 16
        %v2678 = vrot.slane %v2676, 7
        %v2679 = vshll.u32 %v2330, 16
        %v2681 = vor.u32 %v2678, %v2679
        %v2682 = vsel %vm562, %v2674, %v2681
        %s2683 = scalar_lea.vmem [#allocation7], 192
        %v2684 = vld [vmem:[%s2683] sm:$0xf]
        %v2685 = vld [vmem:[%s2683 + $0x4] sm:$0xf]
        %v2686 = vld [vmem:[%s2683 + $0x8] sm:$0xf]
        %v2687 = vld [vmem:[%s2683 + $0xc] sm:$0xf]
        %v2688 = vld [vmem:[%s2683 + $0x10] sm:$0xf]
        %v2689 = vld [vmem:[%s2683 + $0x14] sm:$0xf]
        %v2690 = vld [vmem:[%s2683 + $0x18] sm:$0xf]
        %v2691 = vld [vmem:[%s2683 + $0x1c] sm:$0xf]
        %v2692 = vld [vmem:[%s2683 + $0x20] sm:$0xf]
        %v2693 = vld [vmem:[%s2683 + $0x24] sm:$0xf]
        %v2694 = vld [vmem:[%s2683 + $0x28] sm:$0xf]
        %v2695 = vld [vmem:[%s2683 + $0x2c] sm:$0xf]
        %v2696 = vld [vmem:[%s2683 + $0x30] sm:$0xf]
        %v2697 = vld [vmem:[%s2683 + $0x34] sm:$0xf]
        %v2698 = vld [vmem:[%s2683 + $0x38] sm:$0xf]
        %v2699 = vld [vmem:[%s2683 + $0x3c] sm:$0xf]
        %v2700 = vunpack.c.l.b16 %v2343
        %v2701 = vunpack.c.l.b16 %v2352
        %v2702 = vunpack.c.l.b16 %v2365
        %v2703 = vunpack.c.l.b16 %v2374
        %v2704 = vunpack.c.l.b16 %v2387
        %v2705 = vunpack.c.l.b16 %v2396
        %v2706 = vunpack.c.l.b16 %v2409
        %v2707 = vunpack.c.l.b16 %v2418
        %v2708 = vunpack.c.l.b16 %v2431
        %v2709 = vunpack.c.l.b16 %v2440
        %v2710 = vunpack.c.l.b16 %v2453
        %v2711 = vunpack.c.l.b16 %v2462
        %v2712 = vunpack.c.l.b16 %v2475
        %v2713 = vunpack.c.l.b16 %v2484
        %v2714 = vunpack.c.l.b16 %v2497
        %v2715 = vunpack.c.l.b16 %v2506
        %v2716 = vunpack.c.l.b16 %v2519
        %v2717 = vunpack.c.l.b16 %v2528
        %v2718 = vunpack.c.l.b16 %v2541
        %v2719 = vunpack.c.l.b16 %v2550
        %v2720 = vunpack.c.l.b16 %v2563
        %v2721 = vunpack.c.l.b16 %v2572
        %v2722 = vunpack.c.l.b16 %v2585
        %v2723 = vunpack.c.l.b16 %v2594
        %v2724 = vunpack.c.l.b16 %v2607
        %v2725 = vunpack.c.l.b16 %v2616
        %v2726 = vunpack.c.l.b16 %v2629
        %v2727 = vunpack.c.l.b16 %v2638
        %v2728 = vunpack.c.l.b16 %v2651
        %v2729 = vunpack.c.l.b16 %v2660
        %v2730 = vunpack.c.l.b16 %v2673
        %v2731 = vunpack.c.l.b16 %v2682
        %v2732 = vpack.c.b16 %v2701, %v2700
        %v2733 = vpack.c.b16 %v2703, %v2702
        %v2734 = vpack.c.b16 %v2705, %v2704
        %v2735 = vpack.c.b16 %v2707, %v2706
        %v2736 = vpack.c.b16 %v2709, %v2708
        %v2737 = vpack.c.b16 %v2711, %v2710
        %v2738 = vpack.c.b16 %v2713, %v2712
        %v2739 = vpack.c.b16 %v2715, %v2714
        %v2740 = vpack.c.b16 %v2717, %v2716
        %v2741 = vpack.c.b16 %v2719, %v2718
        %v2742 = vpack.c.b16 %v2721, %v2720
        %v2743 = vpack.c.b16 %v2723, %v2722
        %v2744 = vpack.c.b16 %v2725, %v2724
        %v2745 = vpack.c.b16 %v2727, %v2726
        %v2746 = vpack.c.b16 %v2729, %v2728
        %v2747 = vpack.c.b16 %v2731, %v2730
        %v2780 = vunpack.c.l.b16 %v2684
        %v2781 = vunpack.c.l.b16 %v2685
        %v2782 = vunpack.c.l.b16 %v2686
        %v2783 = vunpack.c.l.b16 %v2687
        %v2784 = vunpack.c.l.b16 %v2688
        %v2785 = vunpack.c.l.b16 %v2689
        %v2786 = vunpack.c.l.b16 %v2690
        %v2787 = vunpack.c.l.b16 %v2691
        %v2788 = vunpack.c.l.b16 %v2692
        %v2789 = vunpack.c.l.b16 %v2693
        %v2790 = vunpack.c.l.b16 %v2694
        %v2791 = vunpack.c.l.b16 %v2695
        %v2792 = vunpack.c.l.b16 %v2696
        %v2793 = vunpack.c.l.b16 %v2697
        %v2794 = vunpack.c.l.b16 %v2698
        %v2795 = vunpack.c.l.b16 %v2699
        %v2796 = vpack.c.b16 %v2781, %v2780
        %v2797 = vpack.c.b16 %v2783, %v2782
        %v2798 = vpack.c.b16 %v2785, %v2784
        %v2799 = vpack.c.b16 %v2787, %v2786
        %v2800 = vpack.c.b16 %v2789, %v2788
        %v2801 = vpack.c.b16 %v2791, %v2790
        %v2802 = vpack.c.b16 %v2793, %v2792
        %v2803 = vpack.c.b16 %v2795, %v2794
        %2812 = vmatprep.subr.bf16.mxu0 0
        %2813 = vmatpush1.bf16.msra.mxu0 %v2796
        %2814 = vmatprep.subr.bf16.mxu0 0
        %2815 = vmatpush1.bf16.msra.mxu0 %v2797
        %2816 = vmatprep.subr.bf16.mxu0 0
        %2817 = vmatpush1.bf16.msra.mxu0 %v2798
        %2818 = vmatprep.subr.bf16.mxu0 0
        %2819 = vmatpush1.bf16.msra.mxu0 %v2799
        %2820 = vmatprep.subr.bf16.mxu0 0
        %2821 = vmatpush1.bf16.msra.mxu0 %v2800
        %2822 = vmatprep.subr.bf16.mxu0 0
        %2823 = vmatpush1.bf16.msra.mxu0 %v2801
        %2824 = vmatprep.subr.bf16.mxu0 0
        %2825 = vmatpush1.bf16.msra.mxu0 %v2802
        %2826 = vmatprep.subr.bf16.mxu0 0
        %2827 = vmatpush1.bf16.msra.mxu0 %v2803
        %2828 = vmatprep.subr.bf16.mxu0 0
        %2829 = vmatpush1.bf16.msra.mxu0 0
        %2830 = vmatprep.subr.bf16.mxu0 0
        %2831 = vmatpush1.bf16.msra.mxu0 0
        %2832 = vmatprep.subr.bf16.mxu0 0
        %2833 = vmatpush1.bf16.msra.mxu0 0
        %2834 = vmatprep.subr.bf16.mxu0 0
        %2835 = vmatpush1.bf16.msra.mxu0 0
        %2836 = vmatprep.subr.bf16.mxu0 0
        %2837 = vmatpush1.bf16.msra.mxu0 0
        %2838 = vmatprep.subr.bf16.mxu0 0
        %2839 = vmatpush1.bf16.msra.mxu0 0
        %2840 = vmatprep.subr.bf16.mxu0 0
        %2841 = vmatpush1.bf16.msra.mxu0 0
        %2842 = vmatprep.subr.bf16.mxu0 0
        %2843 = vmatpush1.bf16.msra.mxu0 0
        %2844 = vmatprep.mubr.bf16.mxu0 0
        %2845 = vmatmul.mubr.bf16.gmra.mrb[0].mxu0 %v2732
        %v2846 = vpop.f32.mrb[0].mxu0
        %v2847 = vadd.f32 0.0, %v2846
        %v2848 = vpop.f32.mrb[0].mxu0
        %v2849 = vpop.f32.mrb[0].mxu0
        %v2850 = vadd.f32 0.0, %v2849
        %v2851 = vpop.f32.mrb[0].mxu0
        %2852 = vmatprep.mubr.bf16.mxu0 0
        %2853 = vmatmul.mubr.bf16.gmra.mrb[0].mxu0 %v2733
        %v2854 = vpop.f32.mrb[0].mxu0
        %v2855 = vadd.f32 0.0, %v2854
        %v2856 = vpop.f32.mrb[0].mxu0
        %v2857 = vpop.f32.mrb[0].mxu0
        %v2858 = vadd.f32 0.0, %v2857
        %v2859 = vpop.f32.mrb[0].mxu0
        %2860 = vmatprep.mubr.bf16.mxu0 0
        %2861 = vmatmul.mubr.bf16.gmra.mrb[0].mxu0 %v2734
        %v2862 = vpop.f32.mrb[0].mxu0
        %v2863 = vadd.f32 0.0, %v2862
        %v2864 = vpop.f32.mrb[0].mxu0
        %v2865 = vpop.f32.mrb[0].mxu0
        %v2866 = vadd.f32 0.0, %v2865
        %v2867 = vpop.f32.mrb[0].mxu0
        %2868 = vmatprep.mubr.bf16.mxu0 0
        %2869 = vmatmul.mubr.bf16.gmra.mrb[0].mxu0 %v2735
        %v2870 = vpop.f32.mrb[0].mxu0
        %v2871 = vadd.f32 0.0, %v2870
        %v2872 = vpop.f32.mrb[0].mxu0
        %v2873 = vpop.f32.mrb[0].mxu0
        %v2874 = vadd.f32 0.0, %v2873
        %v2875 = vpop.f32.mrb[0].mxu0
        %2876 = vmatprep.mubr.bf16.mxu0 0
        %2877 = vmatmul.mubr.bf16.gmra.mrb[0].mxu0 %v2736
        %v2878 = vpop.f32.mrb[0].mxu0
        %v2879 = vadd.f32 0.0, %v2878
        %v2880 = vpop.f32.mrb[0].mxu0
        %v2881 = vpop.f32.mrb[0].mxu0
        %v2882 = vadd.f32 0.0, %v2881
        %v2883 = vpop.f32.mrb[0].mxu0
        %2884 = vmatprep.mubr.bf16.mxu0 0
        %2885 = vmatmul.mubr.bf16.gmra.mrb[0].mxu0 %v2737
        %v2886 = vpop.f32.mrb[0].mxu0
        %v2887 = vadd.f32 0.0, %v2886
        %v2888 = vpop.f32.mrb[0].mxu0
        %v2889 = vpop.f32.mrb[0].mxu0
        %v2890 = vadd.f32 0.0, %v2889
        %v2891 = vpop.f32.mrb[0].mxu0
        %2892 = vmatprep.mubr.bf16.mxu0 0
        %2893 = vmatmul.mubr.bf16.gmra.mrb[0].mxu0 %v2738
        %v2894 = vpop.f32.mrb[0].mxu0
        %v2895 = vadd.f32 0.0, %v2894
        %v2896 = vpop.f32.mrb[0].mxu0
        %v2897 = vpop.f32.mrb[0].mxu0
        %v2898 = vadd.f32 0.0, %v2897
        %v2899 = vpop.f32.mrb[0].mxu0
        %2900 = vmatprep.mubr.bf16.mxu0 0
        %2901 = vmatmul.mubr.bf16.gmra.mrb[0].mxu0 %v2739
        %v2902 = vpop.f32.mrb[0].mxu0
        %v2903 = vadd.f32 0.0, %v2902
        %v2904 = vpop.f32.mrb[0].mxu0
        %v2905 = vpop.f32.mrb[0].mxu0
        %v2906 = vadd.f32 0.0, %v2905
        %v2907 = vpop.f32.mrb[0].mxu0
        %2908 = vmatprep.mubr.bf16.mxu0 0
        %2909 = vmatmul.mubr.bf16.gmra.mrb[0].mxu0 %v2740
        %v2910 = vpop.f32.mrb[0].mxu0
        %v2911 = vadd.f32 0.0, %v2910
        %v2912 = vpop.f32.mrb[0].mxu0
        %v2913 = vpop.f32.mrb[0].mxu0
        %v2914 = vadd.f32 0.0, %v2913
        %v2915 = vpop.f32.mrb[0].mxu0
        %2916 = vmatprep.mubr.bf16.mxu0 0
        %2917 = vmatmul.mubr.bf16.gmra.mrb[0].mxu0 %v2741
        %v2918 = vpop.f32.mrb[0].mxu0
        %v2919 = vadd.f32 0.0, %v2918
        %v2920 = vpop.f32.mrb[0].mxu0
        %v2921 = vpop.f32.mrb[0].mxu0
        %v2922 = vadd.f32 0.0, %v2921
        %v2923 = vpop.f32.mrb[0].mxu0
        %2924 = vmatprep.mubr.bf16.mxu0 0
        %2925 = vmatmul.mubr.bf16.gmra.mrb[0].mxu0 %v2742
        %v2926 = vpop.f32.mrb[0].mxu0
        %v2927 = vadd.f32 0.0, %v2926
        %v2928 = vpop.f32.mrb[0].mxu0
        %v2929 = vpop.f32.mrb[0].mxu0
        %v2930 = vadd.f32 0.0, %v2929
        %v2931 = vpop.f32.mrb[0].mxu0
        %2932 = vmatprep.mubr.bf16.mxu0 0
        %2933 = vmatmul.mubr.bf16.gmra.mrb[0].mxu0 %v2743
        %v2934 = vpop.f32.mrb[0].mxu0
        %v2935 = vadd.f32 0.0, %v2934
        %v2936 = vpop.f32.mrb[0].mxu0
        %v2937 = vpop.f32.mrb[0].mxu0
        %v2938 = vadd.f32 0.0, %v2937
        %v2939 = vpop.f32.mrb[0].mxu0
        %2940 = vmatprep.mubr.bf16.mxu0 0
        %2941 = vmatmul.mubr.bf16.gmra.mrb[0].mxu0 %v2744
        %v2942 = vpop.f32.mrb[0].mxu0
        %v2943 = vadd.f32 0.0, %v2942
        %v2944 = vpop.f32.mrb[0].mxu0
        %v2945 = vpop.f32.mrb[0].mxu0
        %v2946 = vadd.f32 0.0, %v2945
        %v2947 = vpop.f32.mrb[0].mxu0
        %2948 = vmatprep.mubr.bf16.mxu0 0
        %2949 = vmatmul.mubr.bf16.gmra.mrb[0].mxu0 %v2745
        %v2950 = vpop.f32.mrb[0].mxu0
        %v2951 = vadd.f32 0.0, %v2950
        %v2952 = vpop.f32.mrb[0].mxu0
        %v2953 = vpop.f32.mrb[0].mxu0
        %v2954 = vadd.f32 0.0, %v2953
        %v2955 = vpop.f32.mrb[0].mxu0
        %2956 = vmatprep.mubr.bf16.mxu0 0
        %2957 = vmatmul.mubr.bf16.gmra.mrb[0].mxu0 %v2746
        %v2958 = vpop.f32.mrb[0].mxu0
        %v2959 = vadd.f32 0.0, %v2958
        %v2960 = vpop.f32.mrb[0].mxu0
        %v2961 = vpop.f32.mrb[0].mxu0
        %v2962 = vadd.f32 0.0, %v2961
        %v2963 = vpop.f32.mrb[0].mxu0
        %2964 = vmatprep.mubr.bf16.mxu0 0
        %2965 = vmatmul.mubr.bf16.gmra.mrb[0].mxu0 %v2747
        %v2966 = vpop.f32.mrb[0].mxu0
        %v2967 = vadd.f32 0.0, %v2966
        %v2968 = vpop.f32.mrb[0].mxu0
        %v2969 = vpop.f32.mrb[0].mxu0
        %v2970 = vadd.f32 0.0, %v2969
        %v2971 = vpop.f32.mrb[0].mxu0
        %2972 = vdwg.mxu0
        %v2973 = vadd.f32 %v2251, %v2847
        %v2974 = vadd.f32 %v2252, %v2850
        %v2975 = vadd.f32 %v2253, %v2855
        %v2976 = vadd.f32 %v2254, %v2858
        %v2977 = vadd.f32 %v2255, %v2863
        %v2978 = vadd.f32 %v2256, %v2866
        %v2979 = vadd.f32 %v2257, %v2871
        %v2980 = vadd.f32 %v2258, %v2874
        %v2981 = vadd.f32 %v2259, %v2879
        %v2982 = vadd.f32 %v2260, %v2882
        %v2983 = vadd.f32 %v2261, %v2887
        %v2984 = vadd.f32 %v2262, %v2890
        %v2985 = vadd.f32 %v2263, %v2895
        %v2986 = vadd.f32 %v2264, %v2898
        %v2987 = vadd.f32 %v2265, %v2903
        %v2988 = vadd.f32 %v2266, %v2906
        %v2989 = vadd.f32 %v2267, %v2911
        %v2990 = vadd.f32 %v2268, %v2914
        %v2991 = vadd.f32 %v2269, %v2919
        %v2992 = vadd.f32 %v2270, %v2922
        %v2993 = vadd.f32 %v2271, %v2927
        %v2994 = vadd.f32 %v2272, %v2930
        %v2995 = vadd.f32 %v2273, %v2935
        %v2996 = vadd.f32 %v2274, %v2938
        %v2997 = vadd.f32 %v2275, %v2943
        %v2998 = vadd.f32 %v2276, %v2946
        %v2999 = vadd.f32 %v2277, %v2951
        %v3000 = vadd.f32 %v2278, %v2954
        %v3001 = vadd.f32 %v2279, %v2959
        %v3002 = vadd.f32 %v2280, %v2962
        %v3003 = vadd.f32 %v2281, %v2967
        %v3004 = vadd.f32 %v2282, %v2970
        %s3005 = scalar_lea.vmem [#allocation7], 256
        %v3006 = vld [vmem:[%s3005] sm:$0xf]
        %v3007 = vld [vmem:[%s3005 + $0x4] sm:$0xf]
        %v3008 = vld [vmem:[%s3005 + $0x8] sm:$0xf]
        %v3009 = vld [vmem:[%s3005 + $0xc] sm:$0xf]
        %v3010 = vld [vmem:[%s3005 + $0x10] sm:$0xf]
        %v3011 = vld [vmem:[%s3005 + $0x14] sm:$0xf]
        %v3012 = vld [vmem:[%s3005 + $0x18] sm:$0xf]
        %v3013 = vld [vmem:[%s3005 + $0x1c] sm:$0xf]
        %v3014 = vld [vmem:[%s3005 + $0x20] sm:$0xf]
        %v3015 = vld [vmem:[%s3005 + $0x24] sm:$0xf]
        %v3016 = vld [vmem:[%s3005 + $0x28] sm:$0xf]
        %v3017 = vld [vmem:[%s3005 + $0x2c] sm:$0xf]
        %v3018 = vld [vmem:[%s3005 + $0x30] sm:$0xf]
        %v3019 = vld [vmem:[%s3005 + $0x34] sm:$0xf]
        %v3020 = vld [vmem:[%s3005 + $0x38] sm:$0xf]
        %v3021 = vld [vmem:[%s3005 + $0x3c] sm:$0xf]
        %v3054 = vunpack.c.l.b16 %v2284
        %v3055 = vunpack.c.l.b16 %v2285
        %v3056 = vunpack.c.l.b16 %v2287
        %v3057 = vunpack.c.l.b16 %v2288
        %v3058 = vunpack.c.l.b16 %v2290
        %v3059 = vunpack.c.l.b16 %v2291
        %v3060 = vunpack.c.l.b16 %v2293
        %v3061 = vunpack.c.l.b16 %v2294
        %v3062 = vunpack.c.l.b16 %v2296
        %v3063 = vunpack.c.l.b16 %v2297
        %v3064 = vunpack.c.l.b16 %v2299
        %v3065 = vunpack.c.l.b16 %v2300
        %v3066 = vunpack.c.l.b16 %v2302
        %v3067 = vunpack.c.l.b16 %v2303
        %v3068 = vunpack.c.l.b16 %v2305
        %v3069 = vunpack.c.l.b16 %v2306
        %v3070 = vunpack.c.l.b16 %v2308
        %v3071 = vunpack.c.l.b16 %v2309
        %v3072 = vunpack.c.l.b16 %v2311
        %v3073 = vunpack.c.l.b16 %v2312
        %v3074 = vunpack.c.l.b16 %v2314
        %v3075 = vunpack.c.l.b16 %v2315
        %v3076 = vunpack.c.l.b16 %v2317
        %v3077 = vunpack.c.l.b16 %v2318
        %v3078 = vunpack.c.l.b16 %v2320
        %v3079 = vunpack.c.l.b16 %v2321
        %v3080 = vunpack.c.l.b16 %v2323
        %v3081 = vunpack.c.l.b16 %v2324
        %v3082 = vunpack.c.l.b16 %v2326
        %v3083 = vunpack.c.l.b16 %v2327
        %v3084 = vunpack.c.l.b16 %v2329
        %v3085 = vunpack.c.l.b16 %v2330
        %v3086 = vpack.c.b16 %v3055, %v3054
        %v3087 = vpack.c.b16 %v3057, %v3056
        %v3088 = vpack.c.b16 %v3059, %v3058
        %v3089 = vpack.c.b16 %v3061, %v3060
        %v3090 = vpack.c.b16 %v3063, %v3062
        %v3091 = vpack.c.b16 %v3065, %v3064
        %v3092 = vpack.c.b16 %v3067, %v3066
        %v3093 = vpack.c.b16 %v3069, %v3068
        %v3094 = vpack.c.b16 %v3071, %v3070
        %v3095 = vpack.c.b16 %v3073, %v3072
        %v3096 = vpack.c.b16 %v3075, %v3074
        %v3097 = vpack.c.b16 %v3077, %v3076
        %v3098 = vpack.c.b16 %v3079, %v3078
        %v3099 = vpack.c.b16 %v3081, %v3080
        %v3100 = vpack.c.b16 %v3083, %v3082
        %v3101 = vpack.c.b16 %v3085, %v3084
        %v3134 = vunpack.c.l.b16 %v3006
        %v3135 = vunpack.c.l.b16 %v3007
        %v3136 = vunpack.c.l.b16 %v3008
        %v3137 = vunpack.c.l.b16 %v3009
        %v3138 = vunpack.c.l.b16 %v3010
        %v3139 = vunpack.c.l.b16 %v3011
        %v3140 = vunpack.c.l.b16 %v3012
        %v3141 = vunpack.c.l.b16 %v3013
        %v3142 = vunpack.c.l.b16 %v3014
        %v3143 = vunpack.c.l.b16 %v3015
        %v3144 = vunpack.c.l.b16 %v3016
        %v3145 = vunpack.c.l.b16 %v3017
        %v3146 = vunpack.c.l.b16 %v3018
        %v3147 = vunpack.c.l.b16 %v3019
        %v3148 = vunpack.c.l.b16 %v3020
        %v3149 = vunpack.c.l.b16 %v3021
        %v3150 = vpack.c.b16 %v3135, %v3134
        %v3151 = vpack.c.b16 %v3137, %v3136
        %v3152 = vpack.c.b16 %v3139, %v3138
        %v3153 = vpack.c.b16 %v3141, %v3140
        %v3154 = vpack.c.b16 %v3143, %v3142
        %v3155 = vpack.c.b16 %v3145, %v3144
        %v3156 = vpack.c.b16 %v3147, %v3146
        %v3157 = vpack.c.b16 %v3149, %v3148
        %3166 = vmatprep.subr.bf16.mxu0 0
        %3167 = vmatpush1.bf16.msra.mxu0 %v3150
        %3168 = vmatprep.subr.bf16.mxu0 0
        %3169 = vmatpush1.bf16.msra.mxu0 %v3151
        %3170 = vmatprep.subr.bf16.mxu0 0
        %3171 = vmatpush1.bf16.msra.mxu0 %v3152
        %3172 = vmatprep.subr.bf16.mxu0 0
        %3173 = vmatpush1.bf16.msra.mxu0 %v3153
        %3174 = vmatprep.subr.bf16.mxu0 0
        %3175 = vmatpush1.bf16.msra.mxu0 %v3154
        %3176 = vmatprep.subr.bf16.mxu0 0
        %3177 = vmatpush1.bf16.msra.mxu0 %v3155
        %3178 = vmatprep.subr.bf16.mxu0 0
        %3179 = vmatpush1.bf16.msra.mxu0 %v3156
        %3180 = vmatprep.subr.bf16.mxu0 0
        %3181 = vmatpush1.bf16.msra.mxu0 %v3157
        %3182 = vmatprep.subr.bf16.mxu0 0
        %3183 = vmatpush1.bf16.msra.mxu0 0
        %3184 = vmatprep.subr.bf16.mxu0 0
        %3185 = vmatpush1.bf16.msra.mxu0 0
        %3186 = vmatprep.subr.bf16.mxu0 0
        %3187 = vmatpush1.bf16.msra.mxu0 0
        %3188 = vmatprep.subr.bf16.mxu0 0
        %3189 = vmatpush1.bf16.msra.mxu0 0
        %3190 = vmatprep.subr.bf16.mxu0 0
        %3191 = vmatpush1.bf16.msra.mxu0 0
        %3192 = vmatprep.subr.bf16.mxu0 0
        %3193 = vmatpush1.bf16.msra.mxu0 0
        %3194 = vmatprep.subr.bf16.mxu0 0
        %3195 = vmatpush1.bf16.msra.mxu0 0
        %3196 = vmatprep.subr.bf16.mxu0 0
        %3197 = vmatpush1.bf16.msra.mxu0 0
        %3198 = vmatprep.mubr.bf16.mxu0 0
        %3199 = vmatmul.mubr.bf16.gmra.mrb[0].mxu0 %v3086
        %v3200 = vpop.f32.mrb[0].mxu0
        %v3201 = vadd.f32 0.0, %v3200
        %v3202 = vpop.f32.mrb[0].mxu0
        %v3203 = vpop.f32.mrb[0].mxu0
        %v3204 = vadd.f32 0.0, %v3203
        %v3205 = vpop.f32.mrb[0].mxu0
        %3206 = vmatprep.mubr.bf16.mxu0 0
        %3207 = vmatmul.mubr.bf16.gmra.mrb[0].mxu0 %v3087
        %v3208 = vpop.f32.mrb[0].mxu0
        %v3209 = vadd.f32 0.0, %v3208
        %v3210 = vpop.f32.mrb[0].mxu0
        %v3211 = vpop.f32.mrb[0].mxu0
        %v3212 = vadd.f32 0.0, %v3211
        %v3213 = vpop.f32.mrb[0].mxu0
        %3214 = vmatprep.mubr.bf16.mxu0 0
        %3215 = vmatmul.mubr.bf16.gmra.mrb[0].mxu0 %v3088
        %v3216 = vpop.f32.mrb[0].mxu0
        %v3217 = vadd.f32 0.0, %v3216
        %v3218 = vpop.f32.mrb[0].mxu0
        %v3219 = vpop.f32.mrb[0].mxu0
        %v3220 = vadd.f32 0.0, %v3219
        %v3221 = vpop.f32.mrb[0].mxu0
        %3222 = vmatprep.mubr.bf16.mxu0 0
        %3223 = vmatmul.mubr.bf16.gmra.mrb[0].mxu0 %v3089
        %v3224 = vpop.f32.mrb[0].mxu0
        %v3225 = vadd.f32 0.0, %v3224
        %v3226 = vpop.f32.mrb[0].mxu0
        %v3227 = vpop.f32.mrb[0].mxu0
        %v3228 = vadd.f32 0.0, %v3227
        %v3229 = vpop.f32.mrb[0].mxu0
        %3230 = vmatprep.mubr.bf16.mxu0 0
        %3231 = vmatmul.mubr.bf16.gmra.mrb[0].mxu0 %v3090
        %v3232 = vpop.f32.mrb[0].mxu0
        %v3233 = vadd.f32 0.0, %v3232
        %v3234 = vpop.f32.mrb[0].mxu0
        %v3235 = vpop.f32.mrb[0].mxu0
        %v3236 = vadd.f32 0.0, %v3235
        %v3237 = vpop.f32.mrb[0].mxu0
        %3238 = vmatprep.mubr.bf16.mxu0 0
        %3239 = vmatmul.mubr.bf16.gmra.mrb[0].mxu0 %v3091
        %v3240 = vpop.f32.mrb[0].mxu0
        %v3241 = vadd.f32 0.0, %v3240
        %v3242 = vpop.f32.mrb[0].mxu0
        %v3243 = vpop.f32.mrb[0].mxu0
        %v3244 = vadd.f32 0.0, %v3243
        %v3245 = vpop.f32.mrb[0].mxu0
        %3246 = vmatprep.mubr.bf16.mxu0 0
        %3247 = vmatmul.mubr.bf16.gmra.mrb[0].mxu0 %v3092
        %v3248 = vpop.f32.mrb[0].mxu0
        %v3249 = vadd.f32 0.0, %v3248
        %v3250 = vpop.f32.mrb[0].mxu0
        %v3251 = vpop.f32.mrb[0].mxu0
        %v3252 = vadd.f32 0.0, %v3251
        %v3253 = vpop.f32.mrb[0].mxu0
        %3254 = vmatprep.mubr.bf16.mxu0 0
        %3255 = vmatmul.mubr.bf16.gmra.mrb[0].mxu0 %v3093
        %v3256 = vpop.f32.mrb[0].mxu0
        %v3257 = vadd.f32 0.0, %v3256
        %v3258 = vpop.f32.mrb[0].mxu0
        %v3259 = vpop.f32.mrb[0].mxu0
        %v3260 = vadd.f32 0.0, %v3259
        %v3261 = vpop.f32.mrb[0].mxu0
        %3262 = vmatprep.mubr.bf16.mxu0 0
        %3263 = vmatmul.mubr.bf16.gmra.mrb[0].mxu0 %v3094
        %v3264 = vpop.f32.mrb[0].mxu0
        %v3265 = vadd.f32 0.0, %v3264
        %v3266 = vpop.f32.mrb[0].mxu0
        %v3267 = vpop.f32.mrb[0].mxu0
        %v3268 = vadd.f32 0.0, %v3267
        %v3269 = vpop.f32.mrb[0].mxu0
        %3270 = vmatprep.mubr.bf16.mxu0 0
        %3271 = vmatmul.mubr.bf16.gmra.mrb[0].mxu0 %v3095
        %v3272 = vpop.f32.mrb[0].mxu0
        %v3273 = vadd.f32 0.0, %v3272
        %v3274 = vpop.f32.mrb[0].mxu0
        %v3275 = vpop.f32.mrb[0].mxu0
        %v3276 = vadd.f32 0.0, %v3275
        %v3277 = vpop.f32.mrb[0].mxu0
        %3278 = vmatprep.mubr.bf16.mxu0 0
        %3279 = vmatmul.mubr.bf16.gmra.mrb[0].mxu0 %v3096
        %v3280 = vpop.f32.mrb[0].mxu0
        %v3281 = vadd.f32 0.0, %v3280
        %v3282 = vpop.f32.mrb[0].mxu0
        %v3283 = vpop.f32.mrb[0].mxu0
        %v3284 = vadd.f32 0.0, %v3283
        %v3285 = vpop.f32.mrb[0].mxu0
        %3286 = vmatprep.mubr.bf16.mxu0 0
        %3287 = vmatmul.mubr.bf16.gmra.mrb[0].mxu0 %v3097
        %v3288 = vpop.f32.mrb[0].mxu0
        %v3289 = vadd.f32 0.0, %v3288
        %v3290 = vpop.f32.mrb[0].mxu0
        %v3291 = vpop.f32.mrb[0].mxu0
        %v3292 = vadd.f32 0.0, %v3291
        %v3293 = vpop.f32.mrb[0].mxu0
        %3294 = vmatprep.mubr.bf16.mxu0 0
        %3295 = vmatmul.mubr.bf16.gmra.mrb[0].mxu0 %v3098
        %v3296 = vpop.f32.mrb[0].mxu0
        %v3297 = vadd.f32 0.0, %v3296
        %v3298 = vpop.f32.mrb[0].mxu0
        %v3299 = vpop.f32.mrb[0].mxu0
        %v3300 = vadd.f32 0.0, %v3299
        %v3301 = vpop.f32.mrb[0].mxu0
        %3302 = vmatprep.mubr.bf16.mxu0 0
        %3303 = vmatmul.mubr.bf16.gmra.mrb[0].mxu0 %v3099
        %v3304 = vpop.f32.mrb[0].mxu0
        %v3305 = vadd.f32 0.0, %v3304
        %v3306 = vpop.f32.mrb[0].mxu0
        %v3307 = vpop.f32.mrb[0].mxu0
        %v3308 = vadd.f32 0.0, %v3307
        %v3309 = vpop.f32.mrb[0].mxu0
        %3310 = vmatprep.mubr.bf16.mxu0 0
        %3311 = vmatmul.mubr.bf16.gmra.mrb[0].mxu0 %v3100
        %v3312 = vpop.f32.mrb[0].mxu0
        %v3313 = vadd.f32 0.0, %v3312
        %v3314 = vpop.f32.mrb[0].mxu0
        %v3315 = vpop.f32.mrb[0].mxu0
        %v3316 = vadd.f32 0.0, %v3315
        %v3317 = vpop.f32.mrb[0].mxu0
        %3318 = vmatprep.mubr.bf16.mxu0 0
        %3319 = vmatmul.mubr.bf16.gmra.mrb[0].mxu0 %v3101
        %v3320 = vpop.f32.mrb[0].mxu0
        %v3321 = vadd.f32 0.0, %v3320
        %v3322 = vpop.f32.mrb[0].mxu0
        %v3323 = vpop.f32.mrb[0].mxu0
        %v3324 = vadd.f32 0.0, %v3323
        %v3325 = vpop.f32.mrb[0].mxu0
        %3326 = vdwg.mxu0
        %v3327 = vadd.f32 %v2973, %v3201
        %v3328 = vadd.f32 %v2974, %v3204
        %v3329 = vadd.f32 %v2975, %v3209
        %v3330 = vadd.f32 %v2976, %v3212
        %v3331 = vadd.f32 %v2977, %v3217
        %v3332 = vadd.f32 %v2978, %v3220
        %v3333 = vadd.f32 %v2979, %v3225
        %v3334 = vadd.f32 %v2980, %v3228
        %v3335 = vadd.f32 %v2981, %v3233
        %v3336 = vadd.f32 %v2982, %v3236
        %v3337 = vadd.f32 %v2983, %v3241
        %v3338 = vadd.f32 %v2984, %v3244
        %v3339 = vadd.f32 %v2985, %v3249
        %v3340 = vadd.f32 %v2986, %v3252
        %v3341 = vadd.f32 %v2987, %v3257
        %v3342 = vadd.f32 %v2988, %v3260
        %v3343 = vadd.f32 %v2989, %v3265
        %v3344 = vadd.f32 %v2990, %v3268
        %v3345 = vadd.f32 %v2991, %v3273
        %v3346 = vadd.f32 %v2992, %v3276
        %v3347 = vadd.f32 %v2993, %v3281
        %v3348 = vadd.f32 %v2994, %v3284
        %v3349 = vadd.f32 %v2995, %v3289
        %v3350 = vadd.f32 %v2996, %v3292
        %v3351 = vadd.f32 %v2997, %v3297
        %v3352 = vadd.f32 %v2998, %v3300
        %v3353 = vadd.f32 %v2999, %v3305
        %v3354 = vadd.f32 %v3000, %v3308
        %v3355 = vadd.f32 %v3001, %v3313
        %v3356 = vadd.f32 %v3002, %v3316
        %v3357 = vadd.f32 %v3003, %v3321
        %v3358 = vadd.f32 %v3004, %v3324
        %v3359 = vld [vmem:[%s477 + $0x8] sm:$0xf]
        %v3360 = vld [vmem:[%s477 + $0xc] sm:$0xf]
        %v3361 = vld [vmem:[%s477 + $0x10] sm:$0x1]
        %v3362 = vld [vmem:[%s477 + $0x1c] sm:$0xf]
        %v3363 = vld [vmem:[%s477 + $0x20] sm:$0xf]
        %v3364 = vld [vmem:[%s477 + $0x24] sm:$0x1]
        %v3365 = vld [vmem:[%s477 + $0x30] sm:$0xf]
        %v3366 = vld [vmem:[%s477 + $0x34] sm:$0xf]
        %v3367 = vld [vmem:[%s477 + $0x38] sm:$0x1]
        %v3368 = vld [vmem:[%s477 + $0x44] sm:$0xf]
        %v3369 = vld [vmem:[%s477 + $0x48] sm:$0xf]
        %v3370 = vld [vmem:[%s477 + $0x4c] sm:$0x1]
        %v3371 = vld [vmem:[%s477 + $0x58] sm:$0xf]
        %v3372 = vld [vmem:[%s477 + $0x5c] sm:$0xf]
        %v3373 = vld [vmem:[%s477 + $0x60] sm:$0x1]
        %v3374 = vld [vmem:[%s477 + $0x6c] sm:$0xf]
        %v3375 = vld [vmem:[%s477 + $0x70] sm:$0xf]
        %v3376 = vld [vmem:[%s477 + $0x74] sm:$0x1]
        %v3377 = vld [vmem:[%s477 + $0x80] sm:$0xf]
        %v3378 = vld [vmem:[%s477 + $0x84] sm:$0xf]
        %v3379 = vld [vmem:[%s477 + $0x88] sm:$0x1]
        %v3380 = vld [vmem:[%s477 + $0x94] sm:$0xf]
        %v3381 = vld [vmem:[%s477 + $0x98] sm:$0xf]
        %v3382 = vld [vmem:[%s477 + $0x9c] sm:$0x1]
        %v3383 = vld [vmem:[%s477 + $0xa8] sm:$0xf]
        %v3384 = vld [vmem:[%s477 + $0xac] sm:$0xf]
        %v3385 = vld [vmem:[%s477 + $0xb0] sm:$0x1]
        %v3386 = vld [vmem:[%s477 + $0xbc] sm:$0xf]
        %v3387 = vld [vmem:[%s477 + $0xc0] sm:$0xf]
        %v3388 = vld [vmem:[%s477 + $0xc4] sm:$0x1]
        %v3389 = vld [vmem:[%s477 + $0xd0] sm:$0xf]
        %v3390 = vld [vmem:[%s477 + $0xd4] sm:$0xf]
        %v3391 = vld [vmem:[%s477 + $0xd8] sm:$0x1]
        %v3392 = vld [vmem:[%s477 + $0xe4] sm:$0xf]
        %v3393 = vld [vmem:[%s477 + $0xe8] sm:$0xf]
        %v3394 = vld [vmem:[%s477 + $0xec] sm:$0x1]
        %v3395 = vld [vmem:[%s477 + $0xf8] sm:$0xf]
        %v3396 = vld [vmem:[%s477 + $0xfc] sm:$0xf]
        %v3397 = vld [vmem:[%s477 + $0x100] sm:$0x1]
        %v3398 = vld [vmem:[%s477 + $0x10c] sm:$0xf]
        %v3399 = vld [vmem:[%s477 + $0x110] sm:$0xf]
        %v3400 = vld [vmem:[%s477 + $0x114] sm:$0x1]
        %v3401 = vld [vmem:[%s477 + $0x120] sm:$0xf]
        %v3402 = vld [vmem:[%s477 + $0x124] sm:$0xf]
        %v3403 = vld [vmem:[%s477 + $0x128] sm:$0x1]
        %v3404 = vld [vmem:[%s477 + $0x134] sm:$0xf]
        %v3405 = vld [vmem:[%s477 + $0x138] sm:$0xf]
        %v3406 = vld [vmem:[%s477 + $0x13c] sm:$0x1]
        %v3408 = vshrl.u32 %v3359, 16
        %v3410 = vrot.slane %v3408, 4
        %v3411 = vshll.u32 %v3359, 16
        %v3413 = vrot.slane %v3411, 5
        %v3414 = vor.u32 %v3410, %v3413
        %v3415 = vrot.slane %v3414, 4
        %v3417 = vshll.u32 %v3360, 16
        %v3419 = vrot.slane %v3417, 5
        %v3420 = vsel %vm1576, %v3415, %v3419
        %v3421 = vshrl.u32 %v3360, 16
        %v3423 = vrot.slane %v3421, 4
        %v3424 = vor.u32 %v3423, %v3419
        %v3425 = vrot.slane %v3424, 4
        %v3427 = vshll.u32 %v3361, 16
        %v3429 = vrot.slane %v3427, 5
        %v3430 = vsel %vm1576, %v3425, %v3429
        %v3432 = vshrl.u32 %v3362, 16
        %v3434 = vrot.slane %v3432, 4
        %v3435 = vshll.u32 %v3362, 16
        %v3437 = vrot.slane %v3435, 5
        %v3438 = vor.u32 %v3434, %v3437
        %v3439 = vrot.slane %v3438, 4
        %v3441 = vshll.u32 %v3363, 16
        %v3443 = vrot.slane %v3441, 5
        %v3444 = vsel %vm1576, %v3439, %v3443
        %v3445 = vshrl.u32 %v3363, 16
        %v3447 = vrot.slane %v3445, 4
        %v3448 = vor.u32 %v3447, %v3443
        %v3449 = vrot.slane %v3448, 4
        %v3451 = vshll.u32 %v3364, 16
        %v3453 = vrot.slane %v3451, 5
        %v3454 = vsel %vm1576, %v3449, %v3453
        %v3456 = vshrl.u32 %v3365, 16
        %v3458 = vrot.slane %v3456, 4
        %v3459 = vshll.u32 %v3365, 16
        %v3461 = vrot.slane %v3459, 5
        %v3462 = vor.u32 %v3458, %v3461
        %v3463 = vrot.slane %v3462, 4
        %v3465 = vshll.u32 %v3366, 16
        %v3467 = vrot.slane %v3465, 5
        %v3468 = vsel %vm1576, %v3463, %v3467
        %v3469 = vshrl.u32 %v3366, 16
        %v3471 = vrot.slane %v3469, 4
        %v3472 = vor.u32 %v3471, %v3467
        %v3473 = vrot.slane %v3472, 4
        %v3475 = vshll.u32 %v3367, 16
        %v3477 = vrot.slane %v3475, 5
        %v3478 = vsel %vm1576, %v3473, %v3477
        %v3480 = vshrl.u32 %v3368, 16
        %v3482 = vrot.slane %v3480, 4
        %v3483 = vshll.u32 %v3368, 16
        %v3485 = vrot.slane %v3483, 5
        %v3486 = vor.u32 %v3482, %v3485
        %v3487 = vrot.slane %v3486, 4
        %v3489 = vshll.u32 %v3369, 16
        %v3491 = vrot.slane %v3489, 5
        %v3492 = vsel %vm1576, %v3487, %v3491
        %v3493 = vshrl.u32 %v3369, 16
        %v3495 = vrot.slane %v3493, 4
        %v3496 = vor.u32 %v3495, %v3491
        %v3497 = vrot.slane %v3496, 4
        %v3499 = vshll.u32 %v3370, 16
        %v3501 = vrot.slane %v3499, 5
        %v3502 = vsel %vm1576, %v3497, %v3501
        %v3504 = vshrl.u32 %v3371, 16
        %v3506 = vrot.slane %v3504, 4
        %v3507 = vshll.u32 %v3371, 16
        %v3509 = vrot.slane %v3507, 5
        %v3510 = vor.u32 %v3506, %v3509
        %v3511 = vrot.slane %v3510, 4
        %v3513 = vshll.u32 %v3372, 16
        %v3515 = vrot.slane %v3513, 5
        %v3516 = vsel %vm1576, %v3511, %v3515
        %v3517 = vshrl.u32 %v3372, 16
        %v3519 = vrot.slane %v3517, 4
        %v3520 = vor.u32 %v3519, %v3515
        %v3521 = vrot.slane %v3520, 4
        %v3523 = vshll.u32 %v3373, 16
        %v3525 = vrot.slane %v3523, 5
        %v3526 = vsel %vm1576, %v3521, %v3525
        %v3528 = vshrl.u32 %v3374, 16
        %v3530 = vrot.slane %v3528, 4
        %v3531 = vshll.u32 %v3374, 16
        %v3533 = vrot.slane %v3531, 5
        %v3534 = vor.u32 %v3530, %v3533
        %v3535 = vrot.slane %v3534, 4
        %v3537 = vshll.u32 %v3375, 16
        %v3539 = vrot.slane %v3537, 5
        %v3540 = vsel %vm1576, %v3535, %v3539
        %v3541 = vshrl.u32 %v3375, 16
        %v3543 = vrot.slane %v3541, 4
        %v3544 = vor.u32 %v3543, %v3539
        %v3545 = vrot.slane %v3544, 4
        %v3547 = vshll.u32 %v3376, 16
        %v3549 = vrot.slane %v3547, 5
        %v3550 = vsel %vm1576, %v3545, %v3549
        %v3552 = vshrl.u32 %v3377, 16
        %v3554 = vrot.slane %v3552, 4
        %v3555 = vshll.u32 %v3377, 16
        %v3557 = vrot.slane %v3555, 5
        %v3558 = vor.u32 %v3554, %v3557
        %v3559 = vrot.slane %v3558, 4
        %v3561 = vshll.u32 %v3378, 16
        %v3563 = vrot.slane %v3561, 5
        %v3564 = vsel %vm1576, %v3559, %v3563
        %v3565 = vshrl.u32 %v3378, 16
        %v3567 = vrot.slane %v3565, 4
        %v3568 = vor.u32 %v3567, %v3563
        %v3569 = vrot.slane %v3568, 4
        %v3571 = vshll.u32 %v3379, 16
        %v3573 = vrot.slane %v3571, 5
        %v3574 = vsel %vm1576, %v3569, %v3573
        %v3576 = vshrl.u32 %v3380, 16
        %v3578 = vrot.slane %v3576, 4
        %v3579 = vshll.u32 %v3380, 16
        %v3581 = vrot.slane %v3579, 5
        %v3582 = vor.u32 %v3578, %v3581
        %v3583 = vrot.slane %v3582, 4
        %v3585 = vshll.u32 %v3381, 16
        %v3587 = vrot.slane %v3585, 5
        %v3588 = vsel %vm1576, %v3583, %v3587
        %v3589 = vshrl.u32 %v3381, 16
        %v3591 = vrot.slane %v3589, 4
        %v3592 = vor.u32 %v3591, %v3587
        %v3593 = vrot.slane %v3592, 4
        %v3595 = vshll.u32 %v3382, 16
        %v3597 = vrot.slane %v3595, 5
        %v3598 = vsel %vm1576, %v3593, %v3597
        %v3600 = vshrl.u32 %v3383, 16
        %v3602 = vrot.slane %v3600, 4
        %v3603 = vshll.u32 %v3383, 16
        %v3605 = vrot.slane %v3603, 5
        %v3606 = vor.u32 %v3602, %v3605
        %v3607 = vrot.slane %v3606, 4
        %v3609 = vshll.u32 %v3384, 16
        %v3611 = vrot.slane %v3609, 5
        %v3612 = vsel %vm1576, %v3607, %v3611
        %v3613 = vshrl.u32 %v3384, 16
        %v3615 = vrot.slane %v3613, 4
        %v3616 = vor.u32 %v3615, %v3611
        %v3617 = vrot.slane %v3616, 4
        %v3619 = vshll.u32 %v3385, 16
        %v3621 = vrot.slane %v3619, 5
        %v3622 = vsel %vm1576, %v3617, %v3621
        %v3624 = vshrl.u32 %v3386, 16
        %v3626 = vrot.slane %v3624, 4
        %v3627 = vshll.u32 %v3386, 16
        %v3629 = vrot.slane %v3627, 5
        %v3630 = vor.u32 %v3626, %v3629
        %v3631 = vrot.slane %v3630, 4
        %v3633 = vshll.u32 %v3387, 16
        %v3635 = vrot.slane %v3633, 5
        %v3636 = vsel %vm1576, %v3631, %v3635
        %v3637 = vshrl.u32 %v3387, 16
        %v3639 = vrot.slane %v3637, 4
        %v3640 = vor.u32 %v3639, %v3635
        %v3641 = vrot.slane %v3640, 4
        %v3643 = vshll.u32 %v3388, 16
        %v3645 = vrot.slane %v3643, 5
        %v3646 = vsel %vm1576, %v3641, %v3645
        %v3648 = vshrl.u32 %v3389, 16
        %v3650 = vrot.slane %v3648, 4
        %v3651 = vshll.u32 %v3389, 16
        %v3653 = vrot.slane %v3651, 5
        %v3654 = vor.u32 %v3650, %v3653
        %v3655 = vrot.slane %v3654, 4
        %v3657 = vshll.u32 %v3390, 16
        %v3659 = vrot.slane %v3657, 5
        %v3660 = vsel %vm1576, %v3655, %v3659
        %v3661 = vshrl.u32 %v3390, 16
        %v3663 = vrot.slane %v3661, 4
        %v3664 = vor.u32 %v3663, %v3659
        %v3665 = vrot.slane %v3664, 4
        %v3667 = vshll.u32 %v3391, 16
        %v3669 = vrot.slane %v3667, 5
        %v3670 = vsel %vm1576, %v3665, %v3669
        %v3672 = vshrl.u32 %v3392, 16
        %v3674 = vrot.slane %v3672, 4
        %v3675 = vshll.u32 %v3392, 16
        %v3677 = vrot.slane %v3675, 5
        %v3678 = vor.u32 %v3674, %v3677
        %v3679 = vrot.slane %v3678, 4
        %v3681 = vshll.u32 %v3393, 16
        %v3683 = vrot.slane %v3681, 5
        %v3684 = vsel %vm1576, %v3679, %v3683
        %v3685 = vshrl.u32 %v3393, 16
        %v3687 = vrot.slane %v3685, 4
        %v3688 = vor.u32 %v3687, %v3683
        %v3689 = vrot.slane %v3688, 4
        %v3691 = vshll.u32 %v3394, 16
        %v3693 = vrot.slane %v3691, 5
        %v3694 = vsel %vm1576, %v3689, %v3693
        %v3696 = vshrl.u32 %v3395, 16
        %v3698 = vrot.slane %v3696, 4
        %v3699 = vshll.u32 %v3395, 16
        %v3701 = vrot.slane %v3699, 5
        %v3702 = vor.u32 %v3698, %v3701
        %v3703 = vrot.slane %v3702, 4
        %v3705 = vshll.u32 %v3396, 16
        %v3707 = vrot.slane %v3705, 5
        %v3708 = vsel %vm1576, %v3703, %v3707
        %v3709 = vshrl.u32 %v3396, 16
        %v3711 = vrot.slane %v3709, 4
        %v3712 = vor.u32 %v3711, %v3707
        %v3713 = vrot.slane %v3712, 4
        %v3715 = vshll.u32 %v3397, 16
        %v3717 = vrot.slane %v3715, 5
        %v3718 = vsel %vm1576, %v3713, %v3717
        %v3720 = vshrl.u32 %v3398, 16
        %v3722 = vrot.slane %v3720, 4
        %v3723 = vshll.u32 %v3398, 16
        %v3725 = vrot.slane %v3723, 5
        %v3726 = vor.u32 %v3722, %v3725
        %v3727 = vrot.slane %v3726, 4
        %v3729 = vshll.u32 %v3399, 16
        %v3731 = vrot.slane %v3729, 5
        %v3732 = vsel %vm1576, %v3727, %v3731
        %v3733 = vshrl.u32 %v3399, 16
        %v3735 = vrot.slane %v3733, 4
        %v3736 = vor.u32 %v3735, %v3731
        %v3737 = vrot.slane %v3736, 4
        %v3739 = vshll.u32 %v3400, 16
        %v3741 = vrot.slane %v3739, 5
        %v3742 = vsel %vm1576, %v3737, %v3741
        %v3744 = vshrl.u32 %v3401, 16
        %v3746 = vrot.slane %v3744, 4
        %v3747 = vshll.u32 %v3401, 16
        %v3749 = vrot.slane %v3747, 5
        %v3750 = vor.u32 %v3746, %v3749
        %v3751 = vrot.slane %v3750, 4
        %v3753 = vshll.u32 %v3402, 16
        %v3755 = vrot.slane %v3753, 5
        %v3756 = vsel %vm1576, %v3751, %v3755
        %v3757 = vshrl.u32 %v3402, 16
        %v3759 = vrot.slane %v3757, 4
        %v3760 = vor.u32 %v3759, %v3755
        %v3761 = vrot.slane %v3760, 4
        %v3763 = vshll.u32 %v3403, 16
        %v3765 = vrot.slane %v3763, 5
        %v3766 = vsel %vm1576, %v3761, %v3765
        %v3768 = vshrl.u32 %v3404, 16
        %v3770 = vrot.slane %v3768, 4
        %v3771 = vshll.u32 %v3404, 16
        %v3773 = vrot.slane %v3771, 5
        %v3774 = vor.u32 %v3770, %v3773
        %v3775 = vrot.slane %v3774, 4
        %v3777 = vshll.u32 %v3405, 16
        %v3779 = vrot.slane %v3777, 5
        %v3780 = vsel %vm1576, %v3775, %v3779
        %v3781 = vshrl.u32 %v3405, 16
        %v3783 = vrot.slane %v3781, 4
        %v3784 = vor.u32 %v3783, %v3779
        %v3785 = vrot.slane %v3784, 4
        %v3787 = vshll.u32 %v3406, 16
        %v3789 = vrot.slane %v3787, 5
        %v3790 = vsel %vm1576, %v3785, %v3789
        %s3791 = scalar_lea.vmem [#allocation7], 320
        %v3792 = vld [vmem:[%s3791] sm:$0xf]
        %v3793 = vld [vmem:[%s3791 + $0x4] sm:$0xf]
        %v3794 = vld [vmem:[%s3791 + $0x8] sm:$0xf]
        %v3795 = vld [vmem:[%s3791 + $0xc] sm:$0xf]
        %v3796 = vld [vmem:[%s3791 + $0x10] sm:$0xf]
        %v3797 = vld [vmem:[%s3791 + $0x14] sm:$0xf]
        %v3798 = vld [vmem:[%s3791 + $0x18] sm:$0xf]
        %v3799 = vld [vmem:[%s3791 + $0x1c] sm:$0xf]
        %v3800 = vld [vmem:[%s3791 + $0x20] sm:$0xf]
        %v3801 = vld [vmem:[%s3791 + $0x24] sm:$0xf]
        %v3802 = vld [vmem:[%s3791 + $0x28] sm:$0xf]
        %v3803 = vld [vmem:[%s3791 + $0x2c] sm:$0xf]
        %v3804 = vld [vmem:[%s3791 + $0x30] sm:$0xf]
        %v3805 = vld [vmem:[%s3791 + $0x34] sm:$0xf]
        %v3806 = vld [vmem:[%s3791 + $0x38] sm:$0xf]
        %v3807 = vld [vmem:[%s3791 + $0x3c] sm:$0xf]
        %v3808 = vunpack.c.l.b16 %v3420
        %v3809 = vunpack.c.l.b16 %v3430
        %v3810 = vunpack.c.l.b16 %v3444
        %v3811 = vunpack.c.l.b16 %v3454
        %v3812 = vunpack.c.l.b16 %v3468
        %v3813 = vunpack.c.l.b16 %v3478
        %v3814 = vunpack.c.l.b16 %v3492
        %v3815 = vunpack.c.l.b16 %v3502
        %v3816 = vunpack.c.l.b16 %v3516
        %v3817 = vunpack.c.l.b16 %v3526
        %v3818 = vunpack.c.l.b16 %v3540
        %v3819 = vunpack.c.l.b16 %v3550
        %v3820 = vunpack.c.l.b16 %v3564
        %v3821 = vunpack.c.l.b16 %v3574
        %v3822 = vunpack.c.l.b16 %v3588
        %v3823 = vunpack.c.l.b16 %v3598
        %v3824 = vunpack.c.l.b16 %v3612
        %v3825 = vunpack.c.l.b16 %v3622
        %v3826 = vunpack.c.l.b16 %v3636
        %v3827 = vunpack.c.l.b16 %v3646
        %v3828 = vunpack.c.l.b16 %v3660
        %v3829 = vunpack.c.l.b16 %v3670
        %v3830 = vunpack.c.l.b16 %v3684
        %v3831 = vunpack.c.l.b16 %v3694
        %v3832 = vunpack.c.l.b16 %v3708
        %v3833 = vunpack.c.l.b16 %v3718
        %v3834 = vunpack.c.l.b16 %v3732
        %v3835 = vunpack.c.l.b16 %v3742
        %v3836 = vunpack.c.l.b16 %v3756
        %v3837 = vunpack.c.l.b16 %v3766
        %v3838 = vunpack.c.l.b16 %v3780
        %v3839 = vunpack.c.l.b16 %v3790
        %v3840 = vpack.c.b16 %v3809, %v3808
        %v3841 = vpack.c.b16 %v3811, %v3810
        %v3842 = vpack.c.b16 %v3813, %v3812
        %v3843 = vpack.c.b16 %v3815, %v3814
        %v3844 = vpack.c.b16 %v3817, %v3816
        %v3845 = vpack.c.b16 %v3819, %v3818
        %v3846 = vpack.c.b16 %v3821, %v3820
        %v3847 = vpack.c.b16 %v3823, %v3822
        %v3848 = vpack.c.b16 %v3825, %v3824
        %v3849 = vpack.c.b16 %v3827, %v3826
        %v3850 = vpack.c.b16 %v3829, %v3828
        %v3851 = vpack.c.b16 %v3831, %v3830
        %v3852 = vpack.c.b16 %v3833, %v3832
        %v3853 = vpack.c.b16 %v3835, %v3834
        %v3854 = vpack.c.b16 %v3837, %v3836
        %v3855 = vpack.c.b16 %v3839, %v3838
        %v3888 = vunpack.c.l.b16 %v3792
        %v3889 = vunpack.c.l.b16 %v3793
        %v3890 = vunpack.c.l.b16 %v3794
        %v3891 = vunpack.c.l.b16 %v3795
        %v3892 = vunpack.c.l.b16 %v3796
        %v3893 = vunpack.c.l.b16 %v3797
        %v3894 = vunpack.c.l.b16 %v3798
        %v3895 = vunpack.c.l.b16 %v3799
        %v3896 = vunpack.c.l.b16 %v3800
        %v3897 = vunpack.c.l.b16 %v3801
        %v3898 = vunpack.c.l.b16 %v3802
        %v3899 = vunpack.c.l.b16 %v3803
        %v3900 = vunpack.c.l.b16 %v3804
        %v3901 = vunpack.c.l.b16 %v3805
        %v3902 = vunpack.c.l.b16 %v3806
        %v3903 = vunpack.c.l.b16 %v3807
        %v3904 = vpack.c.b16 %v3889, %v3888
        %v3905 = vpack.c.b16 %v3891, %v3890
        %v3906 = vpack.c.b16 %v3893, %v3892
        %v3907 = vpack.c.b16 %v3895, %v3894
        %v3908 = vpack.c.b16 %v3897, %v3896
        %v3909 = vpack.c.b16 %v3899, %v3898
        %v3910 = vpack.c.b16 %v3901, %v3900
        %v3911 = vpack.c.b16 %v3903, %v3902
        %3920 = vmatprep.subr.bf16.mxu0 0
        %3921 = vmatpush1.bf16.msra.mxu0 %v3904
        %3922 = vmatprep.subr.bf16.mxu0 0
        %3923 = vmatpush1.bf16.msra.mxu0 %v3905
        %3924 = vmatprep.subr.bf16.mxu0 0
        %3925 = vmatpush1.bf16.msra.mxu0 %v3906
        %3926 = vmatprep.subr.bf16.mxu0 0
        %3927 = vmatpush1.bf16.msra.mxu0 %v3907
        %3928 = vmatprep.subr.bf16.mxu0 0
        %3929 = vmatpush1.bf16.msra.mxu0 %v3908
        %3930 = vmatprep.subr.bf16.mxu0 0
        %3931 = vmatpush1.bf16.msra.mxu0 %v3909
        %3932 = vmatprep.subr.bf16.mxu0 0
        %3933 = vmatpush1.bf16.msra.mxu0 %v3910
        %3934 = vmatprep.subr.bf16.mxu0 0
        %3935 = vmatpush1.bf16.msra.mxu0 %v3911
        %3936 = vmatprep.subr.bf16.mxu0 0
        %3937 = vmatpush1.bf16.msra.mxu0 0
        %3938 = vmatprep.subr.bf16.mxu0 0
        %3939 = vmatpush1.bf16.msra.mxu0 0
        %3940 = vmatprep.subr.bf16.mxu0 0
        %3941 = vmatpush1.bf16.msra.mxu0 0
        %3942 = vmatprep.subr.bf16.mxu0 0
        %3943 = vmatpush1.bf16.msra.mxu0 0
        %3944 = vmatprep.subr.bf16.mxu0 0
        %3945 = vmatpush1.bf16.msra.mxu0 0
        %3946 = vmatprep.subr.bf16.mxu0 0
        %3947 = vmatpush1.bf16.msra.mxu0 0
        %3948 = vmatprep.subr.bf16.mxu0 0
        %3949 = vmatpush1.bf16.msra.mxu0 0
        %3950 = vmatprep.subr.bf16.mxu0 0
        %3951 = vmatpush1.bf16.msra.mxu0 0
        %3952 = vmatprep.mubr.bf16.mxu0 0
        %3953 = vmatmul.mubr.bf16.gmra.mrb[0].mxu0 %v3840
        %v3954 = vpop.f32.mrb[0].mxu0
        %v3955 = vadd.f32 0.0, %v3954
        %v3956 = vpop.f32.mrb[0].mxu0
        %v3957 = vpop.f32.mrb[0].mxu0
        %v3958 = vadd.f32 0.0, %v3957
        %v3959 = vpop.f32.mrb[0].mxu0
        %3960 = vmatprep.mubr.bf16.mxu0 0
        %3961 = vmatmul.mubr.bf16.gmra.mrb[0].mxu0 %v3841
        %v3962 = vpop.f32.mrb[0].mxu0
        %v3963 = vadd.f32 0.0, %v3962
        %v3964 = vpop.f32.mrb[0].mxu0
        %v3965 = vpop.f32.mrb[0].mxu0
        %v3966 = vadd.f32 0.0, %v3965
        %v3967 = vpop.f32.mrb[0].mxu0
        %3968 = vmatprep.mubr.bf16.mxu0 0
        %3969 = vmatmul.mubr.bf16.gmra.mrb[0].mxu0 %v3842
        %v3970 = vpop.f32.mrb[0].mxu0
        %v3971 = vadd.f32 0.0, %v3970
        %v3972 = vpop.f32.mrb[0].mxu0
        %v3973 = vpop.f32.mrb[0].mxu0
        %v3974 = vadd.f32 0.0, %v3973
        %v3975 = vpop.f32.mrb[0].mxu0
        %3976 = vmatprep.mubr.bf16.mxu0 0
        %3977 = vmatmul.mubr.bf16.gmra.mrb[0].mxu0 %v3843
        %v3978 = vpop.f32.mrb[0].mxu0
        %v3979 = vadd.f32 0.0, %v3978
        %v3980 = vpop.f32.mrb[0].mxu0
        %v3981 = vpop.f32.mrb[0].mxu0
        %v3982 = vadd.f32 0.0, %v3981
        %v3983 = vpop.f32.mrb[0].mxu0
        %3984 = vmatprep.mubr.bf16.mxu0 0
        %3985 = vmatmul.mubr.bf16.gmra.mrb[0].mxu0 %v3844
        %v3986 = vpop.f32.mrb[0].mxu0
        %v3987 = vadd.f32 0.0, %v3986
        %v3988 = vpop.f32.mrb[0].mxu0
        %v3989 = vpop.f32.mrb[0].mxu0
        %v3990 = vadd.f32 0.0, %v3989
        %v3991 = vpop.f32.mrb[0].mxu0
        %3992 = vmatprep.mubr.bf16.mxu0 0
        %3993 = vmatmul.mubr.bf16.gmra.mrb[0].mxu0 %v3845
        %v3994 = vpop.f32.mrb[0].mxu0
        %v3995 = vadd.f32 0.0, %v3994
        %v3996 = vpop.f32.mrb[0].mxu0
        %v3997 = vpop.f32.mrb[0].mxu0
        %v3998 = vadd.f32 0.0, %v3997
        %v3999 = vpop.f32.mrb[0].mxu0
        %4000 = vmatprep.mubr.bf16.mxu0 0
        %4001 = vmatmul.mubr.bf16.gmra.mrb[0].mxu0 %v3846
        %v4002 = vpop.f32.mrb[0].mxu0
        %v4003 = vadd.f32 0.0, %v4002
        %v4004 = vpop.f32.mrb[0].mxu0
        %v4005 = vpop.f32.mrb[0].mxu0
        %v4006 = vadd.f32 0.0, %v4005
        %v4007 = vpop.f32.mrb[0].mxu0
        %4008 = vmatprep.mubr.bf16.mxu0 0
        %4009 = vmatmul.mubr.bf16.gmra.mrb[0].mxu0 %v3847
        %v4010 = vpop.f32.mrb[0].mxu0
        %v4011 = vadd.f32 0.0, %v4010
        %v4012 = vpop.f32.mrb[0].mxu0
        %v4013 = vpop.f32.mrb[0].mxu0
        %v4014 = vadd.f32 0.0, %v4013
        %v4015 = vpop.f32.mrb[0].mxu0
        %4016 = vmatprep.mubr.bf16.mxu0 0
        %4017 = vmatmul.mubr.bf16.gmra.mrb[0].mxu0 %v3848
        %v4018 = vpop.f32.mrb[0].mxu0
        %v4019 = vadd.f32 0.0, %v4018
        %v4020 = vpop.f32.mrb[0].mxu0
        %v4021 = vpop.f32.mrb[0].mxu0
        %v4022 = vadd.f32 0.0, %v4021
        %v4023 = vpop.f32.mrb[0].mxu0
        %4024 = vmatprep.mubr.bf16.mxu0 0
        %4025 = vmatmul.mubr.bf16.gmra.mrb[0].mxu0 %v3849
        %v4026 = vpop.f32.mrb[0].mxu0
        %v4027 = vadd.f32 0.0, %v4026
        %v4028 = vpop.f32.mrb[0].mxu0
        %v4029 = vpop.f32.mrb[0].mxu0
        %v4030 = vadd.f32 0.0, %v4029
        %v4031 = vpop.f32.mrb[0].mxu0
        %4032 = vmatprep.mubr.bf16.mxu0 0
        %4033 = vmatmul.mubr.bf16.gmra.mrb[0].mxu0 %v3850
        %v4034 = vpop.f32.mrb[0].mxu0
        %v4035 = vadd.f32 0.0, %v4034
        %v4036 = vpop.f32.mrb[0].mxu0
        %v4037 = vpop.f32.mrb[0].mxu0
        %v4038 = vadd.f32 0.0, %v4037
        %v4039 = vpop.f32.mrb[0].mxu0
        %4040 = vmatprep.mubr.bf16.mxu0 0
        %4041 = vmatmul.mubr.bf16.gmra.mrb[0].mxu0 %v3851
        %v4042 = vpop.f32.mrb[0].mxu0
        %v4043 = vadd.f32 0.0, %v4042
        %v4044 = vpop.f32.mrb[0].mxu0
        %v4045 = vpop.f32.mrb[0].mxu0
        %v4046 = vadd.f32 0.0, %v4045
        %v4047 = vpop.f32.mrb[0].mxu0
        %4048 = vmatprep.mubr.bf16.mxu0 0
        %4049 = vmatmul.mubr.bf16.gmra.mrb[0].mxu0 %v3852
        %v4050 = vpop.f32.mrb[0].mxu0
        %v4051 = vadd.f32 0.0, %v4050
        %v4052 = vpop.f32.mrb[0].mxu0
        %v4053 = vpop.f32.mrb[0].mxu0
        %v4054 = vadd.f32 0.0, %v4053
        %v4055 = vpop.f32.mrb[0].mxu0
        %4056 = vmatprep.mubr.bf16.mxu0 0
        %4057 = vmatmul.mubr.bf16.gmra.mrb[0].mxu0 %v3853
        %v4058 = vpop.f32.mrb[0].mxu0
        %v4059 = vadd.f32 0.0, %v4058
        %v4060 = vpop.f32.mrb[0].mxu0
        %v4061 = vpop.f32.mrb[0].mxu0
        %v4062 = vadd.f32 0.0, %v4061
        %v4063 = vpop.f32.mrb[0].mxu0
        %4064 = vmatprep.mubr.bf16.mxu0 0
        %4065 = vmatmul.mubr.bf16.gmra.mrb[0].mxu0 %v3854
        %v4066 = vpop.f32.mrb[0].mxu0
        %v4067 = vadd.f32 0.0, %v4066
        %v4068 = vpop.f32.mrb[0].mxu0
        %v4069 = vpop.f32.mrb[0].mxu0
        %v4070 = vadd.f32 0.0, %v4069
        %v4071 = vpop.f32.mrb[0].mxu0
        %4072 = vmatprep.mubr.bf16.mxu0 0
        %4073 = vmatmul.mubr.bf16.gmra.mrb[0].mxu0 %v3855
        %v4074 = vpop.f32.mrb[0].mxu0
        %v4075 = vadd.f32 0.0, %v4074
        %v4076 = vpop.f32.mrb[0].mxu0
        %v4077 = vpop.f32.mrb[0].mxu0
        %v4078 = vadd.f32 0.0, %v4077
        %v4079 = vpop.f32.mrb[0].mxu0
        %4080 = vdwg.mxu0
        %v4081 = vadd.f32 %v3327, %v3955
        %v4082 = vadd.f32 %v3328, %v3958
        %v4083 = vadd.f32 %v3329, %v3963
        %v4084 = vadd.f32 %v3330, %v3966
        %v4085 = vadd.f32 %v3331, %v3971
        %v4086 = vadd.f32 %v3332, %v3974
        %v4087 = vadd.f32 %v3333, %v3979
        %v4088 = vadd.f32 %v3334, %v3982
        %v4089 = vadd.f32 %v3335, %v3987
        %v4090 = vadd.f32 %v3336, %v3990
        %v4091 = vadd.f32 %v3337, %v3995
        %v4092 = vadd.f32 %v3338, %v3998
        %v4093 = vadd.f32 %v3339, %v4003
        %v4094 = vadd.f32 %v3340, %v4006
        %v4095 = vadd.f32 %v3341, %v4011
        %v4096 = vadd.f32 %v3342, %v4014
        %v4097 = vadd.f32 %v3343, %v4019
        %v4098 = vadd.f32 %v3344, %v4022
        %v4099 = vadd.f32 %v3345, %v4027
        %v4100 = vadd.f32 %v3346, %v4030
        %v4101 = vadd.f32 %v3347, %v4035
        %v4102 = vadd.f32 %v3348, %v4038
        %v4103 = vadd.f32 %v3349, %v4043
        %v4104 = vadd.f32 %v3350, %v4046
        %v4105 = vadd.f32 %v3351, %v4051
        %v4106 = vadd.f32 %v3352, %v4054
        %v4107 = vadd.f32 %v3353, %v4059
        %v4108 = vadd.f32 %v3354, %v4062
        %v4109 = vadd.f32 %v3355, %v4067
        %v4110 = vadd.f32 %v3356, %v4070
        %v4111 = vadd.f32 %v3357, %v4075
        %v4112 = vadd.f32 %v3358, %v4078
        %s4113 = scalar_lea.vmem [#allocation2], 40
        %v4114 = vld [vmem:[%s4113 + $0x4] sm:$0x8]
        %v4115 = vld [vmem:[%s4113 + $0x8] sm:$0xf]
        %v4116 = vld [vmem:[%s4113 + $0xc] sm:$0xf]
        %v4117 = vld [vmem:[%s4113 + $0x18] sm:$0x8]
        %v4118 = vld [vmem:[%s4113 + $0x1c] sm:$0xf]
        %v4119 = vld [vmem:[%s4113 + $0x20] sm:$0xf]
        %v4120 = vld [vmem:[%s4113 + $0x2c] sm:$0x8]
        %v4121 = vld [vmem:[%s4113 + $0x30] sm:$0xf]
        %v4122 = vld [vmem:[%s4113 + $0x34] sm:$0xf]
        %v4123 = vld [vmem:[%s4113 + $0x40] sm:$0x8]
        %v4124 = vld [vmem:[%s4113 + $0x44] sm:$0xf]
        %v4125 = vld [vmem:[%s4113 + $0x48] sm:$0xf]
        %v4126 = vld [vmem:[%s4113 + $0x54] sm:$0x8]
        %v4127 = vld [vmem:[%s4113 + $0x58] sm:$0xf]
        %v4128 = vld [vmem:[%s4113 + $0x5c] sm:$0xf]
        %v4129 = vld [vmem:[%s4113 + $0x68] sm:$0x8]
        %v4130 = vld [vmem:[%s4113 + $0x6c] sm:$0xf]
        %v4131 = vld [vmem:[%s4113 + $0x70] sm:$0xf]
        %v4132 = vld [vmem:[%s4113 + $0x7c] sm:$0x8]
        %v4133 = vld [vmem:[%s4113 + $0x80] sm:$0xf]
        %v4134 = vld [vmem:[%s4113 + $0x84] sm:$0xf]
        %v4135 = vld [vmem:[%s4113 + $0x90] sm:$0x8]
        %v4136 = vld [vmem:[%s4113 + $0x94] sm:$0xf]
        %v4137 = vld [vmem:[%s4113 + $0x98] sm:$0xf]
        %v4138 = vld [vmem:[%s4113 + $0xa4] sm:$0x8]
        %v4139 = vld [vmem:[%s4113 + $0xa8] sm:$0xf]
        %v4140 = vld [vmem:[%s4113 + $0xac] sm:$0xf]
        %v4141 = vld [vmem:[%s4113 + $0xb8] sm:$0x8]
        %v4142 = vld [vmem:[%s4113 + $0xbc] sm:$0xf]
        %v4143 = vld [vmem:[%s4113 + $0xc0] sm:$0xf]
        %v4144 = vld [vmem:[%s4113 + $0xcc] sm:$0x8]
        %v4145 = vld [vmem:[%s4113 + $0xd0] sm:$0xf]
        %v4146 = vld [vmem:[%s4113 + $0xd4] sm:$0xf]
        %v4147 = vld [vmem:[%s4113 + $0xe0] sm:$0x8]
        %v4148 = vld [vmem:[%s4113 + $0xe4] sm:$0xf]
        %v4149 = vld [vmem:[%s4113 + $0xe8] sm:$0xf]
        %v4150 = vld [vmem:[%s4113 + $0xf4] sm:$0x8]
        %v4151 = vld [vmem:[%s4113 + $0xf8] sm:$0xf]
        %v4152 = vld [vmem:[%s4113 + $0xfc] sm:$0xf]
        %v4153 = vld [vmem:[%s4113 + $0x108] sm:$0x8]
        %v4154 = vld [vmem:[%s4113 + $0x10c] sm:$0xf]
        %v4155 = vld [vmem:[%s4113 + $0x110] sm:$0xf]
        %v4156 = vld [vmem:[%s4113 + $0x11c] sm:$0x8]
        %v4157 = vld [vmem:[%s4113 + $0x120] sm:$0xf]
        %v4158 = vld [vmem:[%s4113 + $0x124] sm:$0xf]
        %v4159 = vld [vmem:[%s4113 + $0x130] sm:$0x8]
        %v4160 = vld [vmem:[%s4113 + $0x134] sm:$0xf]
        %v4161 = vld [vmem:[%s4113 + $0x138] sm:$0xf]
        %v4163 = vshrl.u32 %v4114, 16
        %v4165 = vrot.slane %v4163, 7
        %v4166 = vrot.slane %v4165, 4
        %v4168 = vshrl.u32 %v4115, 16
        %v4170 = vrot.slane %v4168, 7
        %v4171 = vshll.u32 %v4115, 16
        %v4173 = vor.u32 %v4170, %v4171
        %v4174 = vsel %vm562, %v4166, %v4173
        %v4175 = vrot.slane %v4170, 4
        %v4177 = vshrl.u32 %v4116, 16
        %v4179 = vrot.slane %v4177, 7
        %v4180 = vshll.u32 %v4116, 16
        %v4182 = vor.u32 %v4179, %v4180
        %v4183 = vsel %vm562, %v4175, %v4182
        %v4185 = vshrl.u32 %v4117, 16
        %v4187 = vrot.slane %v4185, 7
        %v4188 = vrot.slane %v4187, 4
        %v4190 = vshrl.u32 %v4118, 16
        %v4192 = vrot.slane %v4190, 7
        %v4193 = vshll.u32 %v4118, 16
        %v4195 = vor.u32 %v4192, %v4193
        %v4196 = vsel %vm562, %v4188, %v4195
        %v4197 = vrot.slane %v4192, 4
        %v4199 = vshrl.u32 %v4119, 16
        %v4201 = vrot.slane %v4199, 7
        %v4202 = vshll.u32 %v4119, 16
        %v4204 = vor.u32 %v4201, %v4202
        %v4205 = vsel %vm562, %v4197, %v4204
        %v4207 = vshrl.u32 %v4120, 16
        %v4209 = vrot.slane %v4207, 7
        %v4210 = vrot.slane %v4209, 4
        %v4212 = vshrl.u32 %v4121, 16
        %v4214 = vrot.slane %v4212, 7
        %v4215 = vshll.u32 %v4121, 16
        %v4217 = vor.u32 %v4214, %v4215
        %v4218 = vsel %vm562, %v4210, %v4217
        %v4219 = vrot.slane %v4214, 4
        %v4221 = vshrl.u32 %v4122, 16
        %v4223 = vrot.slane %v4221, 7
        %v4224 = vshll.u32 %v4122, 16
        %v4226 = vor.u32 %v4223, %v4224
        %v4227 = vsel %vm562, %v4219, %v4226
        %v4229 = vshrl.u32 %v4123, 16
        %v4231 = vrot.slane %v4229, 7
        %v4232 = vrot.slane %v4231, 4
        %v4234 = vshrl.u32 %v4124, 16
        %v4236 = vrot.slane %v4234, 7
        %v4237 = vshll.u32 %v4124, 16
        %v4239 = vor.u32 %v4236, %v4237
        %v4240 = vsel %vm562, %v4232, %v4239
        %v4241 = vrot.slane %v4236, 4
        %v4243 = vshrl.u32 %v4125, 16
        %v4245 = vrot.slane %v4243, 7
        %v4246 = vshll.u32 %v4125, 16
        %v4248 = vor.u32 %v4245, %v4246
        %v4249 = vsel %vm562, %v4241, %v4248
        %v4251 = vshrl.u32 %v4126, 16
        %v4253 = vrot.slane %v4251, 7
        %v4254 = vrot.slane %v4253, 4
        %v4256 = vshrl.u32 %v4127, 16
        %v4258 = vrot.slane %v4256, 7
        %v4259 = vshll.u32 %v4127, 16
        %v4261 = vor.u32 %v4258, %v4259
        %v4262 = vsel %vm562, %v4254, %v4261
        %v4263 = vrot.slane %v4258, 4
        %v4265 = vshrl.u32 %v4128, 16
        %v4267 = vrot.slane %v4265, 7
        %v4268 = vshll.u32 %v4128, 16
        %v4270 = vor.u32 %v4267, %v4268
        %v4271 = vsel %vm562, %v4263, %v4270
        %v4273 = vshrl.u32 %v4129, 16
        %v4275 = vrot.slane %v4273, 7
        %v4276 = vrot.slane %v4275, 4
        %v4278 = vshrl.u32 %v4130, 16
        %v4280 = vrot.slane %v4278, 7
        %v4281 = vshll.u32 %v4130, 16
        %v4283 = vor.u32 %v4280, %v4281
        %v4284 = vsel %vm562, %v4276, %v4283
        %v4285 = vrot.slane %v4280, 4
        %v4287 = vshrl.u32 %v4131, 16
        %v4289 = vrot.slane %v4287, 7
        %v4290 = vshll.u32 %v4131, 16
        %v4292 = vor.u32 %v4289, %v4290
        %v4293 = vsel %vm562, %v4285, %v4292
        %v4295 = vshrl.u32 %v4132, 16
        %v4297 = vrot.slane %v4295, 7
        %v4298 = vrot.slane %v4297, 4
        %v4300 = vshrl.u32 %v4133, 16
        %v4302 = vrot.slane %v4300, 7
        %v4303 = vshll.u32 %v4133, 16
        %v4305 = vor.u32 %v4302, %v4303
        %v4306 = vsel %vm562, %v4298, %v4305
        %v4307 = vrot.slane %v4302, 4
        %v4309 = vshrl.u32 %v4134, 16
        %v4311 = vrot.slane %v4309, 7
        %v4312 = vshll.u32 %v4134, 16
        %v4314 = vor.u32 %v4311, %v4312
        %v4315 = vsel %vm562, %v4307, %v4314
        %v4317 = vshrl.u32 %v4135, 16
        %v4319 = vrot.slane %v4317, 7
        %v4320 = vrot.slane %v4319, 4
        %v4322 = vshrl.u32 %v4136, 16
        %v4324 = vrot.slane %v4322, 7
        %v4325 = vshll.u32 %v4136, 16
        %v4327 = vor.u32 %v4324, %v4325
        %v4328 = vsel %vm562, %v4320, %v4327
        %v4329 = vrot.slane %v4324, 4
        %v4331 = vshrl.u32 %v4137, 16
        %v4333 = vrot.slane %v4331, 7
        %v4334 = vshll.u32 %v4137, 16
        %v4336 = vor.u32 %v4333, %v4334
        %v4337 = vsel %vm562, %v4329, %v4336
        %v4339 = vshrl.u32 %v4138, 16
        %v4341 = vrot.slane %v4339, 7
        %v4342 = vrot.slane %v4341, 4
        %v4344 = vshrl.u32 %v4139, 16
        %v4346 = vrot.slane %v4344, 7
        %v4347 = vshll.u32 %v4139, 16
        %v4349 = vor.u32 %v4346, %v4347
        %v4350 = vsel %vm562, %v4342, %v4349
        %v4351 = vrot.slane %v4346, 4
        %v4353 = vshrl.u32 %v4140, 16
        %v4355 = vrot.slane %v4353, 7
        %v4356 = vshll.u32 %v4140, 16
        %v4358 = vor.u32 %v4355, %v4356
        %v4359 = vsel %vm562, %v4351, %v4358
        %v4361 = vshrl.u32 %v4141, 16
        %v4363 = vrot.slane %v4361, 7
        %v4364 = vrot.slane %v4363, 4
        %v4366 = vshrl.u32 %v4142, 16
        %v4368 = vrot.slane %v4366, 7
        %v4369 = vshll.u32 %v4142, 16
        %v4371 = vor.u32 %v4368, %v4369
        %v4372 = vsel %vm562, %v4364, %v4371
        %v4373 = vrot.slane %v4368, 4
        %v4375 = vshrl.u32 %v4143, 16
        %v4377 = vrot.slane %v4375, 7
        %v4378 = vshll.u32 %v4143, 16
        %v4380 = vor.u32 %v4377, %v4378
        %v4381 = vsel %vm562, %v4373, %v4380
        %v4383 = vshrl.u32 %v4144, 16
        %v4385 = vrot.slane %v4383, 7
        %v4386 = vrot.slane %v4385, 4
        %v4388 = vshrl.u32 %v4145, 16
        %v4390 = vrot.slane %v4388, 7
        %v4391 = vshll.u32 %v4145, 16
        %v4393 = vor.u32 %v4390, %v4391
        %v4394 = vsel %vm562, %v4386, %v4393
        %v4395 = vrot.slane %v4390, 4
        %v4397 = vshrl.u32 %v4146, 16
        %v4399 = vrot.slane %v4397, 7
        %v4400 = vshll.u32 %v4146, 16
        %v4402 = vor.u32 %v4399, %v4400
        %v4403 = vsel %vm562, %v4395, %v4402
        %v4405 = vshrl.u32 %v4147, 16
        %v4407 = vrot.slane %v4405, 7
        %v4408 = vrot.slane %v4407, 4
        %v4410 = vshrl.u32 %v4148, 16
        %v4412 = vrot.slane %v4410, 7
        %v4413 = vshll.u32 %v4148, 16
        %v4415 = vor.u32 %v4412, %v4413
        %v4416 = vsel %vm562, %v4408, %v4415
        %v4417 = vrot.slane %v4412, 4
        %v4419 = vshrl.u32 %v4149, 16
        %v4421 = vrot.slane %v4419, 7
        %v4422 = vshll.u32 %v4149, 16
        %v4424 = vor.u32 %v4421, %v4422
        %v4425 = vsel %vm562, %v4417, %v4424
        %v4427 = vshrl.u32 %v4150, 16
        %v4429 = vrot.slane %v4427, 7
        %v4430 = vrot.slane %v4429, 4
        %v4432 = vshrl.u32 %v4151, 16
        %v4434 = vrot.slane %v4432, 7
        %v4435 = vshll.u32 %v4151, 16
        %v4437 = vor.u32 %v4434, %v4435
        %v4438 = vsel %vm562, %v4430, %v4437
        %v4439 = vrot.slane %v4434, 4
        %v4441 = vshrl.u32 %v4152, 16
        %v4443 = vrot.slane %v4441, 7
        %v4444 = vshll.u32 %v4152, 16
        %v4446 = vor.u32 %v4443, %v4444
        %v4447 = vsel %vm562, %v4439, %v4446
        %v4449 = vshrl.u32 %v4153, 16
        %v4451 = vrot.slane %v4449, 7
        %v4452 = vrot.slane %v4451, 4
        %v4454 = vshrl.u32 %v4154, 16
        %v4456 = vrot.slane %v4454, 7
        %v4457 = vshll.u32 %v4154, 16
        %v4459 = vor.u32 %v4456, %v4457
        %v4460 = vsel %vm562, %v4452, %v4459
        %v4461 = vrot.slane %v4456, 4
        %v4463 = vshrl.u32 %v4155, 16
        %v4465 = vrot.slane %v4463, 7
        %v4466 = vshll.u32 %v4155, 16
        %v4468 = vor.u32 %v4465, %v4466
        %v4469 = vsel %vm562, %v4461, %v4468
        %v4471 = vshrl.u32 %v4156, 16
        %v4473 = vrot.slane %v4471, 7
        %v4474 = vrot.slane %v4473, 4
        %v4476 = vshrl.u32 %v4157, 16
        %v4478 = vrot.slane %v4476, 7
        %v4479 = vshll.u32 %v4157, 16
        %v4481 = vor.u32 %v4478, %v4479
        %v4482 = vsel %vm562, %v4474, %v4481
        %v4483 = vrot.slane %v4478, 4
        %v4485 = vshrl.u32 %v4158, 16
        %v4487 = vrot.slane %v4485, 7
        %v4488 = vshll.u32 %v4158, 16
        %v4490 = vor.u32 %v4487, %v4488
        %v4491 = vsel %vm562, %v4483, %v4490
        %v4493 = vshrl.u32 %v4159, 16
        %v4495 = vrot.slane %v4493, 7
        %v4496 = vrot.slane %v4495, 4
        %v4498 = vshrl.u32 %v4160, 16
        %v4500 = vrot.slane %v4498, 7
        %v4501 = vshll.u32 %v4160, 16
        %v4503 = vor.u32 %v4500, %v4501
        %v4504 = vsel %vm562, %v4496, %v4503
        %v4505 = vrot.slane %v4500, 4
        %v4507 = vshrl.u32 %v4161, 16
        %v4509 = vrot.slane %v4507, 7
        %v4510 = vshll.u32 %v4161, 16
        %v4512 = vor.u32 %v4509, %v4510
        %v4513 = vsel %vm562, %v4505, %v4512
        %s4514 = scalar_lea.vmem [#allocation7], 384
        %v4515 = vld [vmem:[%s4514] sm:$0xf]
        %v4516 = vld [vmem:[%s4514 + $0x4] sm:$0xf]
        %v4517 = vld [vmem:[%s4514 + $0x8] sm:$0xf]
        %v4518 = vld [vmem:[%s4514 + $0xc] sm:$0xf]
        %v4519 = vld [vmem:[%s4514 + $0x10] sm:$0xf]
        %v4520 = vld [vmem:[%s4514 + $0x14] sm:$0xf]
        %v4521 = vld [vmem:[%s4514 + $0x18] sm:$0xf]
        %v4522 = vld [vmem:[%s4514 + $0x1c] sm:$0xf]
        %v4523 = vld [vmem:[%s4514 + $0x20] sm:$0xf]
        %v4524 = vld [vmem:[%s4514 + $0x24] sm:$0xf]
        %v4525 = vld [vmem:[%s4514 + $0x28] sm:$0xf]
        %v4526 = vld [vmem:[%s4514 + $0x2c] sm:$0xf]
        %v4527 = vld [vmem:[%s4514 + $0x30] sm:$0xf]
        %v4528 = vld [vmem:[%s4514 + $0x34] sm:$0xf]
        %v4529 = vld [vmem:[%s4514 + $0x38] sm:$0xf]
        %v4530 = vld [vmem:[%s4514 + $0x3c] sm:$0xf]
        %v4531 = vunpack.c.l.b16 %v4174
        %v4532 = vunpack.c.l.b16 %v4183
        %v4533 = vunpack.c.l.b16 %v4196
        %v4534 = vunpack.c.l.b16 %v4205
        %v4535 = vunpack.c.l.b16 %v4218
        %v4536 = vunpack.c.l.b16 %v4227
        %v4537 = vunpack.c.l.b16 %v4240
        %v4538 = vunpack.c.l.b16 %v4249
        %v4539 = vunpack.c.l.b16 %v4262
        %v4540 = vunpack.c.l.b16 %v4271
        %v4541 = vunpack.c.l.b16 %v4284
        %v4542 = vunpack.c.l.b16 %v4293
        %v4543 = vunpack.c.l.b16 %v4306
        %v4544 = vunpack.c.l.b16 %v4315
        %v4545 = vunpack.c.l.b16 %v4328
        %v4546 = vunpack.c.l.b16 %v4337
        %v4547 = vunpack.c.l.b16 %v4350
        %v4548 = vunpack.c.l.b16 %v4359
        %v4549 = vunpack.c.l.b16 %v4372
        %v4550 = vunpack.c.l.b16 %v4381
        %v4551 = vunpack.c.l.b16 %v4394
        %v4552 = vunpack.c.l.b16 %v4403
        %v4553 = vunpack.c.l.b16 %v4416
        %v4554 = vunpack.c.l.b16 %v4425
        %v4555 = vunpack.c.l.b16 %v4438
        %v4556 = vunpack.c.l.b16 %v4447
        %v4557 = vunpack.c.l.b16 %v4460
        %v4558 = vunpack.c.l.b16 %v4469
        %v4559 = vunpack.c.l.b16 %v4482
        %v4560 = vunpack.c.l.b16 %v4491
        %v4561 = vunpack.c.l.b16 %v4504
        %v4562 = vunpack.c.l.b16 %v4513
        %v4563 = vpack.c.b16 %v4532, %v4531
        %v4564 = vpack.c.b16 %v4534, %v4533
        %v4565 = vpack.c.b16 %v4536, %v4535
        %v4566 = vpack.c.b16 %v4538, %v4537
        %v4567 = vpack.c.b16 %v4540, %v4539
        %v4568 = vpack.c.b16 %v4542, %v4541
        %v4569 = vpack.c.b16 %v4544, %v4543
        %v4570 = vpack.c.b16 %v4546, %v4545
        %v4571 = vpack.c.b16 %v4548, %v4547
        %v4572 = vpack.c.b16 %v4550, %v4549
        %v4573 = vpack.c.b16 %v4552, %v4551
        %v4574 = vpack.c.b16 %v4554, %v4553
        %v4575 = vpack.c.b16 %v4556, %v4555
        %v4576 = vpack.c.b16 %v4558, %v4557
        %v4577 = vpack.c.b16 %v4560, %v4559
        %v4578 = vpack.c.b16 %v4562, %v4561
        %v4611 = vunpack.c.l.b16 %v4515
        %v4612 = vunpack.c.l.b16 %v4516
        %v4613 = vunpack.c.l.b16 %v4517
        %v4614 = vunpack.c.l.b16 %v4518
        %v4615 = vunpack.c.l.b16 %v4519
        %v4616 = vunpack.c.l.b16 %v4520
        %v4617 = vunpack.c.l.b16 %v4521
        %v4618 = vunpack.c.l.b16 %v4522
        %v4619 = vunpack.c.l.b16 %v4523
        %v4620 = vunpack.c.l.b16 %v4524
        %v4621 = vunpack.c.l.b16 %v4525
        %v4622 = vunpack.c.l.b16 %v4526
        %v4623 = vunpack.c.l.b16 %v4527
        %v4624 = vunpack.c.l.b16 %v4528
        %v4625 = vunpack.c.l.b16 %v4529
        %v4626 = vunpack.c.l.b16 %v4530
        %v4627 = vpack.c.b16 %v4612, %v4611
        %v4628 = vpack.c.b16 %v4614, %v4613
        %v4629 = vpack.c.b16 %v4616, %v4615
        %v4630 = vpack.c.b16 %v4618, %v4617
        %v4631 = vpack.c.b16 %v4620, %v4619
        %v4632 = vpack.c.b16 %v4622, %v4621
        %v4633 = vpack.c.b16 %v4624, %v4623
        %v4634 = vpack.c.b16 %v4626, %v4625
        %4643 = vmatprep.subr.bf16.mxu0 0
        %4644 = vmatpush1.bf16.msra.mxu0 %v4627
        %4645 = vmatprep.subr.bf16.mxu0 0
        %4646 = vmatpush1.bf16.msra.mxu0 %v4628
        %4647 = vmatprep.subr.bf16.mxu0 0
        %4648 = vmatpush1.bf16.msra.mxu0 %v4629
        %4649 = vmatprep.subr.bf16.mxu0 0
        %4650 = vmatpush1.bf16.msra.mxu0 %v4630
        %4651 = vmatprep.subr.bf16.mxu0 0
        %4652 = vmatpush1.bf16.msra.mxu0 %v4631
        %4653 = vmatprep.subr.bf16.mxu0 0
        %4654 = vmatpush1.bf16.msra.mxu0 %v4632
        %4655 = vmatprep.subr.bf16.mxu0 0
        %4656 = vmatpush1.bf16.msra.mxu0 %v4633
        %4657 = vmatprep.subr.bf16.mxu0 0
        %4658 = vmatpush1.bf16.msra.mxu0 %v4634
        %4659 = vmatprep.subr.bf16.mxu0 0
        %4660 = vmatpush1.bf16.msra.mxu0 0
        %4661 = vmatprep.subr.bf16.mxu0 0
        %4662 = vmatpush1.bf16.msra.mxu0 0
        %4663 = vmatprep.subr.bf16.mxu0 0
        %4664 = vmatpush1.bf16.msra.mxu0 0
        %4665 = vmatprep.subr.bf16.mxu0 0
        %4666 = vmatpush1.bf16.msra.mxu0 0
        %4667 = vmatprep.subr.bf16.mxu0 0
        %4668 = vmatpush1.bf16.msra.mxu0 0
        %4669 = vmatprep.subr.bf16.mxu0 0
        %4670 = vmatpush1.bf16.msra.mxu0 0
        %4671 = vmatprep.subr.bf16.mxu0 0
        %4672 = vmatpush1.bf16.msra.mxu0 0
        %4673 = vmatprep.subr.bf16.mxu0 0
        %4674 = vmatpush1.bf16.msra.mxu0 0
        %4675 = vmatprep.mubr.bf16.mxu0 0
        %4676 = vmatmul.mubr.bf16.gmra.mrb[0].mxu0 %v4563
        %v4677 = vpop.f32.mrb[0].mxu0
        %v4678 = vadd.f32 0.0, %v4677
        %v4679 = vpop.f32.mrb[0].mxu0
        %v4680 = vpop.f32.mrb[0].mxu0
        %v4681 = vadd.f32 0.0, %v4680
        %v4682 = vpop.f32.mrb[0].mxu0
        %4683 = vmatprep.mubr.bf16.mxu0 0
        %4684 = vmatmul.mubr.bf16.gmra.mrb[0].mxu0 %v4564
        %v4685 = vpop.f32.mrb[0].mxu0
        %v4686 = vadd.f32 0.0, %v4685
        %v4687 = vpop.f32.mrb[0].mxu0
        %v4688 = vpop.f32.mrb[0].mxu0
        %v4689 = vadd.f32 0.0, %v4688
        %v4690 = vpop.f32.mrb[0].mxu0
        %4691 = vmatprep.mubr.bf16.mxu0 0
        %4692 = vmatmul.mubr.bf16.gmra.mrb[0].mxu0 %v4565
        %v4693 = vpop.f32.mrb[0].mxu0
        %v4694 = vadd.f32 0.0, %v4693
        %v4695 = vpop.f32.mrb[0].mxu0
        %v4696 = vpop.f32.mrb[0].mxu0
        %v4697 = vadd.f32 0.0, %v4696
        %v4698 = vpop.f32.mrb[0].mxu0
        %4699 = vmatprep.mubr.bf16.mxu0 0
        %4700 = vmatmul.mubr.bf16.gmra.mrb[0].mxu0 %v4566
        %v4701 = vpop.f32.mrb[0].mxu0
        %v4702 = vadd.f32 0.0, %v4701
        %v4703 = vpop.f32.mrb[0].mxu0
        %v4704 = vpop.f32.mrb[0].mxu0
        %v4705 = vadd.f32 0.0, %v4704
        %v4706 = vpop.f32.mrb[0].mxu0
        %4707 = vmatprep.mubr.bf16.mxu0 0
        %4708 = vmatmul.mubr.bf16.gmra.mrb[0].mxu0 %v4567
        %v4709 = vpop.f32.mrb[0].mxu0
        %v4710 = vadd.f32 0.0, %v4709
        %v4711 = vpop.f32.mrb[0].mxu0
        %v4712 = vpop.f32.mrb[0].mxu0
        %v4713 = vadd.f32 0.0, %v4712
        %v4714 = vpop.f32.mrb[0].mxu0
        %4715 = vmatprep.mubr.bf16.mxu0 0
        %4716 = vmatmul.mubr.bf16.gmra.mrb[0].mxu0 %v4568
        %v4717 = vpop.f32.mrb[0].mxu0
        %v4718 = vadd.f32 0.0, %v4717
        %v4719 = vpop.f32.mrb[0].mxu0
        %v4720 = vpop.f32.mrb[0].mxu0
        %v4721 = vadd.f32 0.0, %v4720
        %v4722 = vpop.f32.mrb[0].mxu0
        %4723 = vmatprep.mubr.bf16.mxu0 0
        %4724 = vmatmul.mubr.bf16.gmra.mrb[0].mxu0 %v4569
        %v4725 = vpop.f32.mrb[0].mxu0
        %v4726 = vadd.f32 0.0, %v4725
        %v4727 = vpop.f32.mrb[0].mxu0
        %v4728 = vpop.f32.mrb[0].mxu0
        %v4729 = vadd.f32 0.0, %v4728
        %v4730 = vpop.f32.mrb[0].mxu0
        %4731 = vmatprep.mubr.bf16.mxu0 0
        %4732 = vmatmul.mubr.bf16.gmra.mrb[0].mxu0 %v4570
        %v4733 = vpop.f32.mrb[0].mxu0
        %v4734 = vadd.f32 0.0, %v4733
        %v4735 = vpop.f32.mrb[0].mxu0
        %v4736 = vpop.f32.mrb[0].mxu0
        %v4737 = vadd.f32 0.0, %v4736
        %v4738 = vpop.f32.mrb[0].mxu0
        %4739 = vmatprep.mubr.bf16.mxu0 0
        %4740 = vmatmul.mubr.bf16.gmra.mrb[0].mxu0 %v4571
        %v4741 = vpop.f32.mrb[0].mxu0
        %v4742 = vadd.f32 0.0, %v4741
        %v4743 = vpop.f32.mrb[0].mxu0
        %v4744 = vpop.f32.mrb[0].mxu0
        %v4745 = vadd.f32 0.0, %v4744
        %v4746 = vpop.f32.mrb[0].mxu0
        %4747 = vmatprep.mubr.bf16.mxu0 0
        %4748 = vmatmul.mubr.bf16.gmra.mrb[0].mxu0 %v4572
        %v4749 = vpop.f32.mrb[0].mxu0
        %v4750 = vadd.f32 0.0, %v4749
        %v4751 = vpop.f32.mrb[0].mxu0
        %v4752 = vpop.f32.mrb[0].mxu0
        %v4753 = vadd.f32 0.0, %v4752
        %v4754 = vpop.f32.mrb[0].mxu0
        %4755 = vmatprep.mubr.bf16.mxu0 0
        %4756 = vmatmul.mubr.bf16.gmra.mrb[0].mxu0 %v4573
        %v4757 = vpop.f32.mrb[0].mxu0
        %v4758 = vadd.f32 0.0, %v4757
        %v4759 = vpop.f32.mrb[0].mxu0
        %v4760 = vpop.f32.mrb[0].mxu0
        %v4761 = vadd.f32 0.0, %v4760
        %v4762 = vpop.f32.mrb[0].mxu0
        %4763 = vmatprep.mubr.bf16.mxu0 0
        %4764 = vmatmul.mubr.bf16.gmra.mrb[0].mxu0 %v4574
        %v4765 = vpop.f32.mrb[0].mxu0
        %v4766 = vadd.f32 0.0, %v4765
        %v4767 = vpop.f32.mrb[0].mxu0
        %v4768 = vpop.f32.mrb[0].mxu0
        %v4769 = vadd.f32 0.0, %v4768
        %v4770 = vpop.f32.mrb[0].mxu0
        %4771 = vmatprep.mubr.bf16.mxu0 0
        %4772 = vmatmul.mubr.bf16.gmra.mrb[0].mxu0 %v4575
        %v4773 = vpop.f32.mrb[0].mxu0
        %v4774 = vadd.f32 0.0, %v4773
        %v4775 = vpop.f32.mrb[0].mxu0
        %v4776 = vpop.f32.mrb[0].mxu0
        %v4777 = vadd.f32 0.0, %v4776
        %v4778 = vpop.f32.mrb[0].mxu0
        %4779 = vmatprep.mubr.bf16.mxu0 0
        %4780 = vmatmul.mubr.bf16.gmra.mrb[0].mxu0 %v4576
        %v4781 = vpop.f32.mrb[0].mxu0
        %v4782 = vadd.f32 0.0, %v4781
        %v4783 = vpop.f32.mrb[0].mxu0
        %v4784 = vpop.f32.mrb[0].mxu0
        %v4785 = vadd.f32 0.0, %v4784
        %v4786 = vpop.f32.mrb[0].mxu0
        %4787 = vmatprep.mubr.bf16.mxu0 0
        %4788 = vmatmul.mubr.bf16.gmra.mrb[0].mxu0 %v4577
        %v4789 = vpop.f32.mrb[0].mxu0
        %v4790 = vadd.f32 0.0, %v4789
        %v4791 = vpop.f32.mrb[0].mxu0
        %v4792 = vpop.f32.mrb[0].mxu0
        %v4793 = vadd.f32 0.0, %v4792
        %v4794 = vpop.f32.mrb[0].mxu0
        %4795 = vmatprep.mubr.bf16.mxu0 0
        %4796 = vmatmul.mubr.bf16.gmra.mrb[0].mxu0 %v4578
        %v4797 = vpop.f32.mrb[0].mxu0
        %v4798 = vadd.f32 0.0, %v4797
        %v4799 = vpop.f32.mrb[0].mxu0
        %v4800 = vpop.f32.mrb[0].mxu0
        %v4801 = vadd.f32 0.0, %v4800
        %v4802 = vpop.f32.mrb[0].mxu0
        %4803 = vdwg.mxu0
        %v4804 = vadd.f32 %v4081, %v4678
        %v4805 = vadd.f32 %v4082, %v4681
        %v4806 = vadd.f32 %v4083, %v4686
        %v4807 = vadd.f32 %v4084, %v4689
        %v4808 = vadd.f32 %v4085, %v4694
        %v4809 = vadd.f32 %v4086, %v4697
        %v4810 = vadd.f32 %v4087, %v4702
        %v4811 = vadd.f32 %v4088, %v4705
        %v4812 = vadd.f32 %v4089, %v4710
        %v4813 = vadd.f32 %v4090, %v4713
        %v4814 = vadd.f32 %v4091, %v4718
        %v4815 = vadd.f32 %v4092, %v4721
        %v4816 = vadd.f32 %v4093, %v4726
        %v4817 = vadd.f32 %v4094, %v4729
        %v4818 = vadd.f32 %v4095, %v4734
        %v4819 = vadd.f32 %v4096, %v4737
        %v4820 = vadd.f32 %v4097, %v4742
        %v4821 = vadd.f32 %v4098, %v4745
        %v4822 = vadd.f32 %v4099, %v4750
        %v4823 = vadd.f32 %v4100, %v4753
        %v4824 = vadd.f32 %v4101, %v4758
        %v4825 = vadd.f32 %v4102, %v4761
        %v4826 = vadd.f32 %v4103, %v4766
        %v4827 = vadd.f32 %v4104, %v4769
        %v4828 = vadd.f32 %v4105, %v4774
        %v4829 = vadd.f32 %v4106, %v4777
        %v4830 = vadd.f32 %v4107, %v4782
        %v4831 = vadd.f32 %v4108, %v4785
        %v4832 = vadd.f32 %v4109, %v4790
        %v4833 = vadd.f32 %v4110, %v4793
        %v4834 = vadd.f32 %v4111, %v4798
        %v4835 = vadd.f32 %v4112, %v4801
        %s4836 = scalar_lea.vmem [#allocation7], 448
        %v4837 = vld [vmem:[%s4836] sm:$0xf]
        %v4838 = vld [vmem:[%s4836 + $0x4] sm:$0xf]
        %v4839 = vld [vmem:[%s4836 + $0x8] sm:$0xf]
        %v4840 = vld [vmem:[%s4836 + $0xc] sm:$0xf]
        %v4841 = vld [vmem:[%s4836 + $0x10] sm:$0xf]
        %v4842 = vld [vmem:[%s4836 + $0x14] sm:$0xf]
        %v4843 = vld [vmem:[%s4836 + $0x18] sm:$0xf]
        %v4844 = vld [vmem:[%s4836 + $0x1c] sm:$0xf]
        %v4845 = vld [vmem:[%s4836 + $0x20] sm:$0xf]
        %v4846 = vld [vmem:[%s4836 + $0x24] sm:$0xf]
        %v4847 = vld [vmem:[%s4836 + $0x28] sm:$0xf]
        %v4848 = vld [vmem:[%s4836 + $0x2c] sm:$0xf]
        %v4849 = vld [vmem:[%s4836 + $0x30] sm:$0xf]
        %v4850 = vld [vmem:[%s4836 + $0x34] sm:$0xf]
        %v4851 = vld [vmem:[%s4836 + $0x38] sm:$0xf]
        %v4852 = vld [vmem:[%s4836 + $0x3c] sm:$0xf]
        %v4885 = vunpack.c.l.b16 %v4115
        %v4886 = vunpack.c.l.b16 %v4116
        %v4887 = vunpack.c.l.b16 %v4118
        %v4888 = vunpack.c.l.b16 %v4119
        %v4889 = vunpack.c.l.b16 %v4121
        %v4890 = vunpack.c.l.b16 %v4122
        %v4891 = vunpack.c.l.b16 %v4124
        %v4892 = vunpack.c.l.b16 %v4125
        %v4893 = vunpack.c.l.b16 %v4127
        %v4894 = vunpack.c.l.b16 %v4128
        %v4895 = vunpack.c.l.b16 %v4130
        %v4896 = vunpack.c.l.b16 %v4131
        %v4897 = vunpack.c.l.b16 %v4133
        %v4898 = vunpack.c.l.b16 %v4134
        %v4899 = vunpack.c.l.b16 %v4136
        %v4900 = vunpack.c.l.b16 %v4137
        %v4901 = vunpack.c.l.b16 %v4139
        %v4902 = vunpack.c.l.b16 %v4140
        %v4903 = vunpack.c.l.b16 %v4142
        %v4904 = vunpack.c.l.b16 %v4143
        %v4905 = vunpack.c.l.b16 %v4145
        %v4906 = vunpack.c.l.b16 %v4146
        %v4907 = vunpack.c.l.b16 %v4148
        %v4908 = vunpack.c.l.b16 %v4149
        %v4909 = vunpack.c.l.b16 %v4151
        %v4910 = vunpack.c.l.b16 %v4152
        %v4911 = vunpack.c.l.b16 %v4154
        %v4912 = vunpack.c.l.b16 %v4155
        %v4913 = vunpack.c.l.b16 %v4157
        %v4914 = vunpack.c.l.b16 %v4158
        %v4915 = vunpack.c.l.b16 %v4160
        %v4916 = vunpack.c.l.b16 %v4161
        %v4917 = vpack.c.b16 %v4886, %v4885
        %v4918 = vpack.c.b16 %v4888, %v4887
        %v4919 = vpack.c.b16 %v4890, %v4889
        %v4920 = vpack.c.b16 %v4892, %v4891
        %v4921 = vpack.c.b16 %v4894, %v4893
        %v4922 = vpack.c.b16 %v4896, %v4895
        %v4923 = vpack.c.b16 %v4898, %v4897
        %v4924 = vpack.c.b16 %v4900, %v4899
        %v4925 = vpack.c.b16 %v4902, %v4901
        %v4926 = vpack.c.b16 %v4904, %v4903
        %v4927 = vpack.c.b16 %v4906, %v4905
        %v4928 = vpack.c.b16 %v4908, %v4907
        %v4929 = vpack.c.b16 %v4910, %v4909
        %v4930 = vpack.c.b16 %v4912, %v4911
        %v4931 = vpack.c.b16 %v4914, %v4913
        %v4932 = vpack.c.b16 %v4916, %v4915
        %v4965 = vunpack.c.l.b16 %v4837
        %v4966 = vunpack.c.l.b16 %v4838
        %v4967 = vunpack.c.l.b16 %v4839
        %v4968 = vunpack.c.l.b16 %v4840
        %v4969 = vunpack.c.l.b16 %v4841
        %v4970 = vunpack.c.l.b16 %v4842
        %v4971 = vunpack.c.l.b16 %v4843
        %v4972 = vunpack.c.l.b16 %v4844
        %v4973 = vunpack.c.l.b16 %v4845
        %v4974 = vunpack.c.l.b16 %v4846
        %v4975 = vunpack.c.l.b16 %v4847
        %v4976 = vunpack.c.l.b16 %v4848
        %v4977 = vunpack.c.l.b16 %v4849
        %v4978 = vunpack.c.l.b16 %v4850
        %v4979 = vunpack.c.l.b16 %v4851
        %v4980 = vunpack.c.l.b16 %v4852
        %v4981 = vpack.c.b16 %v4966, %v4965
        %v4982 = vpack.c.b16 %v4968, %v4967
        %v4983 = vpack.c.b16 %v4970, %v4969
        %v4984 = vpack.c.b16 %v4972, %v4971
        %v4985 = vpack.c.b16 %v4974, %v4973
        %v4986 = vpack.c.b16 %v4976, %v4975
        %v4987 = vpack.c.b16 %v4978, %v4977
        %v4988 = vpack.c.b16 %v4980, %v4979
        %4997 = vmatprep.subr.bf16.mxu0 0
        %4998 = vmatpush1.bf16.msra.mxu0 %v4981
        %4999 = vmatprep.subr.bf16.mxu0 0
        %5000 = vmatpush1.bf16.msra.mxu0 %v4982
        %5001 = vmatprep.subr.bf16.mxu0 0
        %5002 = vmatpush1.bf16.msra.mxu0 %v4983
        %5003 = vmatprep.subr.bf16.mxu0 0
        %5004 = vmatpush1.bf16.msra.mxu0 %v4984
        %5005 = vmatprep.subr.bf16.mxu0 0
        %5006 = vmatpush1.bf16.msra.mxu0 %v4985
        %5007 = vmatprep.subr.bf16.mxu0 0
        %5008 = vmatpush1.bf16.msra.mxu0 %v4986
        %5009 = vmatprep.subr.bf16.mxu0 0
        %5010 = vmatpush1.bf16.msra.mxu0 %v4987
        %5011 = vmatprep.subr.bf16.mxu0 0
        %5012 = vmatpush1.bf16.msra.mxu0 %v4988
        %5013 = vmatprep.subr.bf16.mxu0 0
        %5014 = vmatpush1.bf16.msra.mxu0 0
        %5015 = vmatprep.subr.bf16.mxu0 0
        %5016 = vmatpush1.bf16.msra.mxu0 0
        %5017 = vmatprep.subr.bf16.mxu0 0
        %5018 = vmatpush1.bf16.msra.mxu0 0
        %5019 = vmatprep.subr.bf16.mxu0 0
        %5020 = vmatpush1.bf16.msra.mxu0 0
        %5021 = vmatprep.subr.bf16.mxu0 0
        %5022 = vmatpush1.bf16.msra.mxu0 0
        %5023 = vmatprep.subr.bf16.mxu0 0
        %5024 = vmatpush1.bf16.msra.mxu0 0
        %5025 = vmatprep.subr.bf16.mxu0 0
        %5026 = vmatpush1.bf16.msra.mxu0 0
        %5027 = vmatprep.subr.bf16.mxu0 0
        %5028 = vmatpush1.bf16.msra.mxu0 0
        %5029 = vmatprep.mubr.bf16.mxu0 0
        %5030 = vmatmul.mubr.bf16.gmra.mrb[0].mxu0 %v4917
        %v5031 = vpop.f32.mrb[0].mxu0
        %v5032 = vadd.f32 0.0, %v5031
        %v5033 = vpop.f32.mrb[0].mxu0
        %v5034 = vpop.f32.mrb[0].mxu0
        %v5035 = vadd.f32 0.0, %v5034
        %v5036 = vpop.f32.mrb[0].mxu0
        %5037 = vmatprep.mubr.bf16.mxu0 0
        %5038 = vmatmul.mubr.bf16.gmra.mrb[0].mxu0 %v4918
        %v5039 = vpop.f32.mrb[0].mxu0
        %v5040 = vadd.f32 0.0, %v5039
        %v5041 = vpop.f32.mrb[0].mxu0
        %v5042 = vpop.f32.mrb[0].mxu0
        %v5043 = vadd.f32 0.0, %v5042
        %v5044 = vpop.f32.mrb[0].mxu0
        %5045 = vmatprep.mubr.bf16.mxu0 0
        %5046 = vmatmul.mubr.bf16.gmra.mrb[0].mxu0 %v4919
        %v5047 = vpop.f32.mrb[0].mxu0
        %v5048 = vadd.f32 0.0, %v5047
        %v5049 = vpop.f32.mrb[0].mxu0
        %v5050 = vpop.f32.mrb[0].mxu0
        %v5051 = vadd.f32 0.0, %v5050
        %v5052 = vpop.f32.mrb[0].mxu0
        %5053 = vmatprep.mubr.bf16.mxu0 0
        %5054 = vmatmul.mubr.bf16.gmra.mrb[0].mxu0 %v4920
        %v5055 = vpop.f32.mrb[0].mxu0
        %v5056 = vadd.f32 0.0, %v5055
        %v5057 = vpop.f32.mrb[0].mxu0
        %v5058 = vpop.f32.mrb[0].mxu0
        %v5059 = vadd.f32 0.0, %v5058
        %v5060 = vpop.f32.mrb[0].mxu0
        %5061 = vmatprep.mubr.bf16.mxu0 0
        %5062 = vmatmul.mubr.bf16.gmra.mrb[0].mxu0 %v4921
        %v5063 = vpop.f32.mrb[0].mxu0
        %v5064 = vadd.f32 0.0, %v5063
        %v5065 = vpop.f32.mrb[0].mxu0
        %v5066 = vpop.f32.mrb[0].mxu0
        %v5067 = vadd.f32 0.0, %v5066
        %v5068 = vpop.f32.mrb[0].mxu0
        %5069 = vmatprep.mubr.bf16.mxu0 0
        %5070 = vmatmul.mubr.bf16.gmra.mrb[0].mxu0 %v4922
        %v5071 = vpop.f32.mrb[0].mxu0
        %v5072 = vadd.f32 0.0, %v5071
        %v5073 = vpop.f32.mrb[0].mxu0
        %v5074 = vpop.f32.mrb[0].mxu0
        %v5075 = vadd.f32 0.0, %v5074
        %v5076 = vpop.f32.mrb[0].mxu0
        %5077 = vmatprep.mubr.bf16.mxu0 0
        %5078 = vmatmul.mubr.bf16.gmra.mrb[0].mxu0 %v4923
        %v5079 = vpop.f32.mrb[0].mxu0
        %v5080 = vadd.f32 0.0, %v5079
        %v5081 = vpop.f32.mrb[0].mxu0
        %v5082 = vpop.f32.mrb[0].mxu0
        %v5083 = vadd.f32 0.0, %v5082
        %v5084 = vpop.f32.mrb[0].mxu0
        %5085 = vmatprep.mubr.bf16.mxu0 0
        %5086 = vmatmul.mubr.bf16.gmra.mrb[0].mxu0 %v4924
        %v5087 = vpop.f32.mrb[0].mxu0
        %v5088 = vadd.f32 0.0, %v5087
        %v5089 = vpop.f32.mrb[0].mxu0
        %v5090 = vpop.f32.mrb[0].mxu0
        %v5091 = vadd.f32 0.0, %v5090
        %v5092 = vpop.f32.mrb[0].mxu0
        %5093 = vmatprep.mubr.bf16.mxu0 0
        %5094 = vmatmul.mubr.bf16.gmra.mrb[0].mxu0 %v4925
        %v5095 = vpop.f32.mrb[0].mxu0
        %v5096 = vadd.f32 0.0, %v5095
        %v5097 = vpop.f32.mrb[0].mxu0
        %v5098 = vpop.f32.mrb[0].mxu0
        %v5099 = vadd.f32 0.0, %v5098
        %v5100 = vpop.f32.mrb[0].mxu0
        %5101 = vmatprep.mubr.bf16.mxu0 0
        %5102 = vmatmul.mubr.bf16.gmra.mrb[0].mxu0 %v4926
        %v5103 = vpop.f32.mrb[0].mxu0
        %v5104 = vadd.f32 0.0, %v5103
        %v5105 = vpop.f32.mrb[0].mxu0
        %v5106 = vpop.f32.mrb[0].mxu0
        %v5107 = vadd.f32 0.0, %v5106
        %v5108 = vpop.f32.mrb[0].mxu0
        %5109 = vmatprep.mubr.bf16.mxu0 0
        %5110 = vmatmul.mubr.bf16.gmra.mrb[0].mxu0 %v4927
        %v5111 = vpop.f32.mrb[0].mxu0
        %v5112 = vadd.f32 0.0, %v5111
        %v5113 = vpop.f32.mrb[0].mxu0
        %v5114 = vpop.f32.mrb[0].mxu0
        %v5115 = vadd.f32 0.0, %v5114
        %v5116 = vpop.f32.mrb[0].mxu0
        %5117 = vmatprep.mubr.bf16.mxu0 0
        %5118 = vmatmul.mubr.bf16.gmra.mrb[0].mxu0 %v4928
        %v5119 = vpop.f32.mrb[0].mxu0
        %v5120 = vadd.f32 0.0, %v5119
        %v5121 = vpop.f32.mrb[0].mxu0
        %v5122 = vpop.f32.mrb[0].mxu0
        %v5123 = vadd.f32 0.0, %v5122
        %v5124 = vpop.f32.mrb[0].mxu0
        %5125 = vmatprep.mubr.bf16.mxu0 0
        %5126 = vmatmul.mubr.bf16.gmra.mrb[0].mxu0 %v4929
        %v5127 = vpop.f32.mrb[0].mxu0
        %v5128 = vadd.f32 0.0, %v5127
        %v5129 = vpop.f32.mrb[0].mxu0
        %v5130 = vpop.f32.mrb[0].mxu0
        %v5131 = vadd.f32 0.0, %v5130
        %v5132 = vpop.f32.mrb[0].mxu0
        %5133 = vmatprep.mubr.bf16.mxu0 0
        %5134 = vmatmul.mubr.bf16.gmra.mrb[0].mxu0 %v4930
        %v5135 = vpop.f32.mrb[0].mxu0
        %v5136 = vadd.f32 0.0, %v5135
        %v5137 = vpop.f32.mrb[0].mxu0
        %v5138 = vpop.f32.mrb[0].mxu0
        %v5139 = vadd.f32 0.0, %v5138
        %v5140 = vpop.f32.mrb[0].mxu0
        %5141 = vmatprep.mubr.bf16.mxu0 0
        %5142 = vmatmul.mubr.bf16.gmra.mrb[0].mxu0 %v4931
        %v5143 = vpop.f32.mrb[0].mxu0
        %v5144 = vadd.f32 0.0, %v5143
        %v5145 = vpop.f32.mrb[0].mxu0
        %v5146 = vpop.f32.mrb[0].mxu0
        %v5147 = vadd.f32 0.0, %v5146
        %v5148 = vpop.f32.mrb[0].mxu0
        %5149 = vmatprep.mubr.bf16.mxu0 0
        %5150 = vmatmul.mubr.bf16.gmra.mrb[0].mxu0 %v4932
        %v5151 = vpop.f32.mrb[0].mxu0
        %v5152 = vadd.f32 0.0, %v5151
        %v5153 = vpop.f32.mrb[0].mxu0
        %v5154 = vpop.f32.mrb[0].mxu0
        %v5155 = vadd.f32 0.0, %v5154
        %v5156 = vpop.f32.mrb[0].mxu0
        %5157 = vdwg.mxu0
        %v5158 = vadd.f32 %v4804, %v5032
        %v5159 = vadd.f32 %v4805, %v5035
        %v5160 = vadd.f32 %v4806, %v5040
        %v5161 = vadd.f32 %v4807, %v5043
        %v5162 = vadd.f32 %v4808, %v5048
        %v5163 = vadd.f32 %v4809, %v5051
        %v5164 = vadd.f32 %v4810, %v5056
        %v5165 = vadd.f32 %v4811, %v5059
        %v5166 = vadd.f32 %v4812, %v5064
        %v5167 = vadd.f32 %v4813, %v5067
        %v5168 = vadd.f32 %v4814, %v5072
        %v5169 = vadd.f32 %v4815, %v5075
        %v5170 = vadd.f32 %v4816, %v5080
        %v5171 = vadd.f32 %v4817, %v5083
        %v5172 = vadd.f32 %v4818, %v5088
        %v5173 = vadd.f32 %v4819, %v5091
        %v5174 = vadd.f32 %v4820, %v5096
        %v5175 = vadd.f32 %v4821, %v5099
        %v5176 = vadd.f32 %v4822, %v5104
        %v5177 = vadd.f32 %v4823, %v5107
        %v5178 = vadd.f32 %v4824, %v5112
        %v5179 = vadd.f32 %v4825, %v5115
        %v5180 = vadd.f32 %v4826, %v5120
        %v5181 = vadd.f32 %v4827, %v5123
        %v5182 = vadd.f32 %v4828, %v5128
        %v5183 = vadd.f32 %v4829, %v5131
        %v5184 = vadd.f32 %v4830, %v5136
        %v5185 = vadd.f32 %v4831, %v5139
        %v5186 = vadd.f32 %v4832, %v5144
        %v5187 = vadd.f32 %v4833, %v5147
        %v5188 = vadd.f32 %v4834, %v5152
        %v5189 = vadd.f32 %v4835, %v5155
        %v5190 = vld [vmem:[%s4113 + $0x8] sm:$0xf]
        %v5191 = vld [vmem:[%s4113 + $0xc] sm:$0xf]
        %v5192 = vld [vmem:[%s4113 + $0x10] sm:$0x1]
        %v5193 = vld [vmem:[%s4113 + $0x1c] sm:$0xf]
        %v5194 = vld [vmem:[%s4113 + $0x20] sm:$0xf]
        %v5195 = vld [vmem:[%s4113 + $0x24] sm:$0x1]
        %v5196 = vld [vmem:[%s4113 + $0x30] sm:$0xf]
        %v5197 = vld [vmem:[%s4113 + $0x34] sm:$0xf]
        %v5198 = vld [vmem:[%s4113 + $0x38] sm:$0x1]
        %v5199 = vld [vmem:[%s4113 + $0x44] sm:$0xf]
        %v5200 = vld [vmem:[%s4113 + $0x48] sm:$0xf]
        %v5201 = vld [vmem:[%s4113 + $0x4c] sm:$0x1]
        %v5202 = vld [vmem:[%s4113 + $0x58] sm:$0xf]
        %v5203 = vld [vmem:[%s4113 + $0x5c] sm:$0xf]
        %v5204 = vld [vmem:[%s4113 + $0x60] sm:$0x1]
        %v5205 = vld [vmem:[%s4113 + $0x6c] sm:$0xf]
        %v5206 = vld [vmem:[%s4113 + $0x70] sm:$0xf]
        %v5207 = vld [vmem:[%s4113 + $0x74] sm:$0x1]
        %v5208 = vld [vmem:[%s4113 + $0x80] sm:$0xf]
        %v5209 = vld [vmem:[%s4113 + $0x84] sm:$0xf]
        %v5210 = vld [vmem:[%s4113 + $0x88] sm:$0x1]
        %v5211 = vld [vmem:[%s4113 + $0x94] sm:$0xf]
        %v5212 = vld [vmem:[%s4113 + $0x98] sm:$0xf]
        %v5213 = vld [vmem:[%s4113 + $0x9c] sm:$0x1]
        %v5214 = vld [vmem:[%s4113 + $0xa8] sm:$0xf]
        %v5215 = vld [vmem:[%s4113 + $0xac] sm:$0xf]
        %v5216 = vld [vmem:[%s4113 + $0xb0] sm:$0x1]
        %v5217 = vld [vmem:[%s4113 + $0xbc] sm:$0xf]
        %v5218 = vld [vmem:[%s4113 + $0xc0] sm:$0xf]
        %v5219 = vld [vmem:[%s4113 + $0xc4] sm:$0x1]
        %v5220 = vld [vmem:[%s4113 + $0xd0] sm:$0xf]
        %v5221 = vld [vmem:[%s4113 + $0xd4] sm:$0xf]
        %v5222 = vld [vmem:[%s4113 + $0xd8] sm:$0x1]
        %v5223 = vld [vmem:[%s4113 + $0xe4] sm:$0xf]
        %v5224 = vld [vmem:[%s4113 + $0xe8] sm:$0xf]
        %v5225 = vld [vmem:[%s4113 + $0xec] sm:$0x1]
        %v5226 = vld [vmem:[%s4113 + $0xf8] sm:$0xf]
        %v5227 = vld [vmem:[%s4113 + $0xfc] sm:$0xf]
        %v5228 = vld [vmem:[%s4113 + $0x100] sm:$0x1]
        %v5229 = vld [vmem:[%s4113 + $0x10c] sm:$0xf]
        %v5230 = vld [vmem:[%s4113 + $0x110] sm:$0xf]
        %v5231 = vld [vmem:[%s4113 + $0x114] sm:$0x1]
        %v5232 = vld [vmem:[%s4113 + $0x120] sm:$0xf]
        %v5233 = vld [vmem:[%s4113 + $0x124] sm:$0xf]
        %v5234 = vld [vmem:[%s4113 + $0x128] sm:$0x1]
        %v5235 = vld [vmem:[%s4113 + $0x134] sm:$0xf]
        %v5236 = vld [vmem:[%s4113 + $0x138] sm:$0xf]
        %v5237 = vld [vmem:[%s4113 + $0x13c] sm:$0x1]
        %v5239 = vshrl.u32 %v5190, 16
        %v5241 = vrot.slane %v5239, 4
        %v5242 = vshll.u32 %v5190, 16
        %v5244 = vrot.slane %v5242, 5
        %v5245 = vor.u32 %v5241, %v5244
        %v5246 = vrot.slane %v5245, 4
        %v5248 = vshll.u32 %v5191, 16
        %v5250 = vrot.slane %v5248, 5
        %v5251 = vsel %vm1576, %v5246, %v5250
        %v5252 = vshrl.u32 %v5191, 16
        %v5254 = vrot.slane %v5252, 4
        %v5255 = vor.u32 %v5254, %v5250
        %v5256 = vrot.slane %v5255, 4
        %v5258 = vshll.u32 %v5192, 16
        %v5260 = vrot.slane %v5258, 5
        %v5261 = vsel %vm1576, %v5256, %v5260
        %v5263 = vshrl.u32 %v5193, 16
        %v5265 = vrot.slane %v5263, 4
        %v5266 = vshll.u32 %v5193, 16
        %v5268 = vrot.slane %v5266, 5
        %v5269 = vor.u32 %v5265, %v5268
        %v5270 = vrot.slane %v5269, 4
        %v5272 = vshll.u32 %v5194, 16
        %v5274 = vrot.slane %v5272, 5
        %v5275 = vsel %vm1576, %v5270, %v5274
        %v5276 = vshrl.u32 %v5194, 16
        %v5278 = vrot.slane %v5276, 4
        %v5279 = vor.u32 %v5278, %v5274
        %v5280 = vrot.slane %v5279, 4
        %v5282 = vshll.u32 %v5195, 16
        %v5284 = vrot.slane %v5282, 5
        %v5285 = vsel %vm1576, %v5280, %v5284
        %v5287 = vshrl.u32 %v5196, 16
        %v5289 = vrot.slane %v5287, 4
        %v5290 = vshll.u32 %v5196, 16
        %v5292 = vrot.slane %v5290, 5
        %v5293 = vor.u32 %v5289, %v5292
        %v5294 = vrot.slane %v5293, 4
        %v5296 = vshll.u32 %v5197, 16
        %v5298 = vrot.slane %v5296, 5
        %v5299 = vsel %vm1576, %v5294, %v5298
        %v5300 = vshrl.u32 %v5197, 16
        %v5302 = vrot.slane %v5300, 4
        %v5303 = vor.u32 %v5302, %v5298
        %v5304 = vrot.slane %v5303, 4
        %v5306 = vshll.u32 %v5198, 16
        %v5308 = vrot.slane %v5306, 5
        %v5309 = vsel %vm1576, %v5304, %v5308
        %v5311 = vshrl.u32 %v5199, 16
        %v5313 = vrot.slane %v5311, 4
        %v5314 = vshll.u32 %v5199, 16
        %v5316 = vrot.slane %v5314, 5
        %v5317 = vor.u32 %v5313, %v5316
        %v5318 = vrot.slane %v5317, 4
        %v5320 = vshll.u32 %v5200, 16
        %v5322 = vrot.slane %v5320, 5
        %v5323 = vsel %vm1576, %v5318, %v5322
        %v5324 = vshrl.u32 %v5200, 16
        %v5326 = vrot.slane %v5324, 4
        %v5327 = vor.u32 %v5326, %v5322
        %v5328 = vrot.slane %v5327, 4
        %v5330 = vshll.u32 %v5201, 16
        %v5332 = vrot.slane %v5330, 5
        %v5333 = vsel %vm1576, %v5328, %v5332
        %v5335 = vshrl.u32 %v5202, 16
        %v5337 = vrot.slane %v5335, 4
        %v5338 = vshll.u32 %v5202, 16
        %v5340 = vrot.slane %v5338, 5
        %v5341 = vor.u32 %v5337, %v5340
        %v5342 = vrot.slane %v5341, 4
        %v5344 = vshll.u32 %v5203, 16
        %v5346 = vrot.slane %v5344, 5
        %v5347 = vsel %vm1576, %v5342, %v5346
        %v5348 = vshrl.u32 %v5203, 16
        %v5350 = vrot.slane %v5348, 4
        %v5351 = vor.u32 %v5350, %v5346
        %v5352 = vrot.slane %v5351, 4
        %v5354 = vshll.u32 %v5204, 16
        %v5356 = vrot.slane %v5354, 5
        %v5357 = vsel %vm1576, %v5352, %v5356
        %v5359 = vshrl.u32 %v5205, 16
        %v5361 = vrot.slane %v5359, 4
        %v5362 = vshll.u32 %v5205, 16
        %v5364 = vrot.slane %v5362, 5
        %v5365 = vor.u32 %v5361, %v5364
        %v5366 = vrot.slane %v5365, 4
        %v5368 = vshll.u32 %v5206, 16
        %v5370 = vrot.slane %v5368, 5
        %v5371 = vsel %vm1576, %v5366, %v5370
        %v5372 = vshrl.u32 %v5206, 16
        %v5374 = vrot.slane %v5372, 4
        %v5375 = vor.u32 %v5374, %v5370
        %v5376 = vrot.slane %v5375, 4
        %v5378 = vshll.u32 %v5207, 16
        %v5380 = vrot.slane %v5378, 5
        %v5381 = vsel %vm1576, %v5376, %v5380
        %v5383 = vshrl.u32 %v5208, 16
        %v5385 = vrot.slane %v5383, 4
        %v5386 = vshll.u32 %v5208, 16
        %v5388 = vrot.slane %v5386, 5
        %v5389 = vor.u32 %v5385, %v5388
        %v5390 = vrot.slane %v5389, 4
        %v5392 = vshll.u32 %v5209, 16
        %v5394 = vrot.slane %v5392, 5
        %v5395 = vsel %vm1576, %v5390, %v5394
        %v5396 = vshrl.u32 %v5209, 16
        %v5398 = vrot.slane %v5396, 4
        %v5399 = vor.u32 %v5398, %v5394
        %v5400 = vrot.slane %v5399, 4
        %v5402 = vshll.u32 %v5210, 16
        %v5404 = vrot.slane %v5402, 5
        %v5405 = vsel %vm1576, %v5400, %v5404
        %v5407 = vshrl.u32 %v5211, 16
        %v5409 = vrot.slane %v5407, 4
        %v5410 = vshll.u32 %v5211, 16
        %v5412 = vrot.slane %v5410, 5
        %v5413 = vor.u32 %v5409, %v5412
        %v5414 = vrot.slane %v5413, 4
        %v5416 = vshll.u32 %v5212, 16
        %v5418 = vrot.slane %v5416, 5
        %v5419 = vsel %vm1576, %v5414, %v5418
        %v5420 = vshrl.u32 %v5212, 16
        %v5422 = vrot.slane %v5420, 4
        %v5423 = vor.u32 %v5422, %v5418
        %v5424 = vrot.slane %v5423, 4
        %v5426 = vshll.u32 %v5213, 16
        %v5428 = vrot.slane %v5426, 5
        %v5429 = vsel %vm1576, %v5424, %v5428
        %v5431 = vshrl.u32 %v5214, 16
        %v5433 = vrot.slane %v5431, 4
        %v5434 = vshll.u32 %v5214, 16
        %v5436 = vrot.slane %v5434, 5
        %v5437 = vor.u32 %v5433, %v5436
        %v5438 = vrot.slane %v5437, 4
        %v5440 = vshll.u32 %v5215, 16
        %v5442 = vrot.slane %v5440, 5
        %v5443 = vsel %vm1576, %v5438, %v5442
        %v5444 = vshrl.u32 %v5215, 16
        %v5446 = vrot.slane %v5444, 4
        %v5447 = vor.u32 %v5446, %v5442
        %v5448 = vrot.slane %v5447, 4
        %v5450 = vshll.u32 %v5216, 16
        %v5452 = vrot.slane %v5450, 5
        %v5453 = vsel %vm1576, %v5448, %v5452
        %v5455 = vshrl.u32 %v5217, 16
        %v5457 = vrot.slane %v5455, 4
        %v5458 = vshll.u32 %v5217, 16
        %v5460 = vrot.slane %v5458, 5
        %v5461 = vor.u32 %v5457, %v5460
        %v5462 = vrot.slane %v5461, 4
        %v5464 = vshll.u32 %v5218, 16
        %v5466 = vrot.slane %v5464, 5
        %v5467 = vsel %vm1576, %v5462, %v5466
        %v5468 = vshrl.u32 %v5218, 16
        %v5470 = vrot.slane %v5468, 4
        %v5471 = vor.u32 %v5470, %v5466
        %v5472 = vrot.slane %v5471, 4
        %v5474 = vshll.u32 %v5219, 16
        %v5476 = vrot.slane %v5474, 5
        %v5477 = vsel %vm1576, %v5472, %v5476
        %v5479 = vshrl.u32 %v5220, 16
        %v5481 = vrot.slane %v5479, 4
        %v5482 = vshll.u32 %v5220, 16
        %v5484 = vrot.slane %v5482, 5
        %v5485 = vor.u32 %v5481, %v5484
        %v5486 = vrot.slane %v5485, 4
        %v5488 = vshll.u32 %v5221, 16
        %v5490 = vrot.slane %v5488, 5
        %v5491 = vsel %vm1576, %v5486, %v5490
        %v5492 = vshrl.u32 %v5221, 16
        %v5494 = vrot.slane %v5492, 4
        %v5495 = vor.u32 %v5494, %v5490
        %v5496 = vrot.slane %v5495, 4
        %v5498 = vshll.u32 %v5222, 16
        %v5500 = vrot.slane %v5498, 5
        %v5501 = vsel %vm1576, %v5496, %v5500
        %v5503 = vshrl.u32 %v5223, 16
        %v5505 = vrot.slane %v5503, 4
        %v5506 = vshll.u32 %v5223, 16
        %v5508 = vrot.slane %v5506, 5
        %v5509 = vor.u32 %v5505, %v5508
        %v5510 = vrot.slane %v5509, 4
        %v5512 = vshll.u32 %v5224, 16
        %v5514 = vrot.slane %v5512, 5
        %v5515 = vsel %vm1576, %v5510, %v5514
        %v5516 = vshrl.u32 %v5224, 16
        %v5518 = vrot.slane %v5516, 4
        %v5519 = vor.u32 %v5518, %v5514
        %v5520 = vrot.slane %v5519, 4
        %v5522 = vshll.u32 %v5225, 16
        %v5524 = vrot.slane %v5522, 5
        %v5525 = vsel %vm1576, %v5520, %v5524
        %v5527 = vshrl.u32 %v5226, 16
        %v5529 = vrot.slane %v5527, 4
        %v5530 = vshll.u32 %v5226, 16
        %v5532 = vrot.slane %v5530, 5
        %v5533 = vor.u32 %v5529, %v5532
        %v5534 = vrot.slane %v5533, 4
        %v5536 = vshll.u32 %v5227, 16
        %v5538 = vrot.slane %v5536, 5
        %v5539 = vsel %vm1576, %v5534, %v5538
        %v5540 = vshrl.u32 %v5227, 16
        %v5542 = vrot.slane %v5540, 4
        %v5543 = vor.u32 %v5542, %v5538
        %v5544 = vrot.slane %v5543, 4
        %v5546 = vshll.u32 %v5228, 16
        %v5548 = vrot.slane %v5546, 5
        %v5549 = vsel %vm1576, %v5544, %v5548
        %v5551 = vshrl.u32 %v5229, 16
        %v5553 = vrot.slane %v5551, 4
        %v5554 = vshll.u32 %v5229, 16
        %v5556 = vrot.slane %v5554, 5
        %v5557 = vor.u32 %v5553, %v5556
        %v5558 = vrot.slane %v5557, 4
        %v5560 = vshll.u32 %v5230, 16
        %v5562 = vrot.slane %v5560, 5
        %v5563 = vsel %vm1576, %v5558, %v5562
        %v5564 = vshrl.u32 %v5230, 16
        %v5566 = vrot.slane %v5564, 4
        %v5567 = vor.u32 %v5566, %v5562
        %v5568 = vrot.slane %v5567, 4
        %v5570 = vshll.u32 %v5231, 16
        %v5572 = vrot.slane %v5570, 5
        %v5573 = vsel %vm1576, %v5568, %v5572
        %v5575 = vshrl.u32 %v5232, 16
        %v5577 = vrot.slane %v5575, 4
        %v5578 = vshll.u32 %v5232, 16
        %v5580 = vrot.slane %v5578, 5
        %v5581 = vor.u32 %v5577, %v5580
        %v5582 = vrot.slane %v5581, 4
        %v5584 = vshll.u32 %v5233, 16
        %v5586 = vrot.slane %v5584, 5
        %v5587 = vsel %vm1576, %v5582, %v5586
        %v5588 = vshrl.u32 %v5233, 16
        %v5590 = vrot.slane %v5588, 4
        %v5591 = vor.u32 %v5590, %v5586
        %v5592 = vrot.slane %v5591, 4
        %v5594 = vshll.u32 %v5234, 16
        %v5596 = vrot.slane %v5594, 5
        %v5597 = vsel %vm1576, %v5592, %v5596
        %v5599 = vshrl.u32 %v5235, 16
        %v5601 = vrot.slane %v5599, 4
        %v5602 = vshll.u32 %v5235, 16
        %v5604 = vrot.slane %v5602, 5
        %v5605 = vor.u32 %v5601, %v5604
        %v5606 = vrot.slane %v5605, 4
        %v5608 = vshll.u32 %v5236, 16
        %v5610 = vrot.slane %v5608, 5
        %v5611 = vsel %vm1576, %v5606, %v5610
        %v5612 = vshrl.u32 %v5236, 16
        %v5614 = vrot.slane %v5612, 4
        %v5615 = vor.u32 %v5614, %v5610
        %v5616 = vrot.slane %v5615, 4
        %v5618 = vshll.u32 %v5237, 16
        %v5620 = vrot.slane %v5618, 5
        %v5621 = vsel %vm1576, %v5616, %v5620
        %s5622 = scalar_lea.vmem [#allocation7], 512
        %v5623 = vld [vmem:[%s5622] sm:$0xf]
        %v5624 = vld [vmem:[%s5622 + $0x4] sm:$0xf]
        %v5625 = vld [vmem:[%s5622 + $0x8] sm:$0xf]
        %v5626 = vld [vmem:[%s5622 + $0xc] sm:$0xf]
        %v5627 = vld [vmem:[%s5622 + $0x10] sm:$0xf]
        %v5628 = vld [vmem:[%s5622 + $0x14] sm:$0xf]
        %v5629 = vld [vmem:[%s5622 + $0x18] sm:$0xf]
        %v5630 = vld [vmem:[%s5622 + $0x1c] sm:$0xf]
        %v5631 = vld [vmem:[%s5622 + $0x20] sm:$0xf]
        %v5632 = vld [vmem:[%s5622 + $0x24] sm:$0xf]
        %v5633 = vld [vmem:[%s5622 + $0x28] sm:$0xf]
        %v5634 = vld [vmem:[%s5622 + $0x2c] sm:$0xf]
        %v5635 = vld [vmem:[%s5622 + $0x30] sm:$0xf]
        %v5636 = vld [vmem:[%s5622 + $0x34] sm:$0xf]
        %v5637 = vld [vmem:[%s5622 + $0x38] sm:$0xf]
        %v5638 = vld [vmem:[%s5622 + $0x3c] sm:$0xf]
        %v5639 = vunpack.c.l.b16 %v5251
        %v5640 = vunpack.c.l.b16 %v5261
        %v5641 = vunpack.c.l.b16 %v5275
        %v5642 = vunpack.c.l.b16 %v5285
        %v5643 = vunpack.c.l.b16 %v5299
        %v5644 = vunpack.c.l.b16 %v5309
        %v5645 = vunpack.c.l.b16 %v5323
        %v5646 = vunpack.c.l.b16 %v5333
        %v5647 = vunpack.c.l.b16 %v5347
        %v5648 = vunpack.c.l.b16 %v5357
        %v5649 = vunpack.c.l.b16 %v5371
        %v5650 = vunpack.c.l.b16 %v5381
        %v5651 = vunpack.c.l.b16 %v5395
        %v5652 = vunpack.c.l.b16 %v5405
        %v5653 = vunpack.c.l.b16 %v5419
        %v5654 = vunpack.c.l.b16 %v5429
        %v5655 = vunpack.c.l.b16 %v5443
        %v5656 = vunpack.c.l.b16 %v5453
        %v5657 = vunpack.c.l.b16 %v5467
        %v5658 = vunpack.c.l.b16 %v5477
        %v5659 = vunpack.c.l.b16 %v5491
        %v5660 = vunpack.c.l.b16 %v5501
        %v5661 = vunpack.c.l.b16 %v5515
        %v5662 = vunpack.c.l.b16 %v5525
        %v5663 = vunpack.c.l.b16 %v5539
        %v5664 = vunpack.c.l.b16 %v5549
        %v5665 = vunpack.c.l.b16 %v5563
        %v5666 = vunpack.c.l.b16 %v5573
        %v5667 = vunpack.c.l.b16 %v5587
        %v5668 = vunpack.c.l.b16 %v5597
        %v5669 = vunpack.c.l.b16 %v5611
        %v5670 = vunpack.c.l.b16 %v5621
        %v5671 = vpack.c.b16 %v5640, %v5639
        %v5672 = vpack.c.b16 %v5642, %v5641
        %v5673 = vpack.c.b16 %v5644, %v5643
        %v5674 = vpack.c.b16 %v5646, %v5645
        %v5675 = vpack.c.b16 %v5648, %v5647
        %v5676 = vpack.c.b16 %v5650, %v5649
        %v5677 = vpack.c.b16 %v5652, %v5651
        %v5678 = vpack.c.b16 %v5654, %v5653
        %v5679 = vpack.c.b16 %v5656, %v5655
        %v5680 = vpack.c.b16 %v5658, %v5657
        %v5681 = vpack.c.b16 %v5660, %v5659
        %v5682 = vpack.c.b16 %v5662, %v5661
        %v5683 = vpack.c.b16 %v5664, %v5663
        %v5684 = vpack.c.b16 %v5666, %v5665
        %v5685 = vpack.c.b16 %v5668, %v5667
        %v5686 = vpack.c.b16 %v5670, %v5669
        %v5719 = vunpack.c.l.b16 %v5623
        %v5720 = vunpack.c.l.b16 %v5624
        %v5721 = vunpack.c.l.b16 %v5625
        %v5722 = vunpack.c.l.b16 %v5626
        %v5723 = vunpack.c.l.b16 %v5627
        %v5724 = vunpack.c.l.b16 %v5628
        %v5725 = vunpack.c.l.b16 %v5629
        %v5726 = vunpack.c.l.b16 %v5630
        %v5727 = vunpack.c.l.b16 %v5631
        %v5728 = vunpack.c.l.b16 %v5632
        %v5729 = vunpack.c.l.b16 %v5633
        %v5730 = vunpack.c.l.b16 %v5634
        %v5731 = vunpack.c.l.b16 %v5635
        %v5732 = vunpack.c.l.b16 %v5636
        %v5733 = vunpack.c.l.b16 %v5637
        %v5734 = vunpack.c.l.b16 %v5638
        %v5735 = vpack.c.b16 %v5720, %v5719
        %v5736 = vpack.c.b16 %v5722, %v5721
        %v5737 = vpack.c.b16 %v5724, %v5723
        %v5738 = vpack.c.b16 %v5726, %v5725
        %v5739 = vpack.c.b16 %v5728, %v5727
        %v5740 = vpack.c.b16 %v5730, %v5729
        %v5741 = vpack.c.b16 %v5732, %v5731
        %v5742 = vpack.c.b16 %v5734, %v5733
        %5751 = vmatprep.subr.bf16.mxu0 0
        %5752 = vmatpush1.bf16.msra.mxu0 %v5735
        %5753 = vmatprep.subr.bf16.mxu0 0
        %5754 = vmatpush1.bf16.msra.mxu0 %v5736
        %5755 = vmatprep.subr.bf16.mxu0 0
        %5756 = vmatpush1.bf16.msra.mxu0 %v5737
        %5757 = vmatprep.subr.bf16.mxu0 0
        %5758 = vmatpush1.bf16.msra.mxu0 %v5738
        %5759 = vmatprep.subr.bf16.mxu0 0
        %5760 = vmatpush1.bf16.msra.mxu0 %v5739
        %5761 = vmatprep.subr.bf16.mxu0 0
        %5762 = vmatpush1.bf16.msra.mxu0 %v5740
        %5763 = vmatprep.subr.bf16.mxu0 0
        %5764 = vmatpush1.bf16.msra.mxu0 %v5741
        %5765 = vmatprep.subr.bf16.mxu0 0
        %5766 = vmatpush1.bf16.msra.mxu0 %v5742
        %5767 = vmatprep.subr.bf16.mxu0 0
        %5768 = vmatpush1.bf16.msra.mxu0 0
        %5769 = vmatprep.subr.bf16.mxu0 0
        %5770 = vmatpush1.bf16.msra.mxu0 0
        %5771 = vmatprep.subr.bf16.mxu0 0
        %5772 = vmatpush1.bf16.msra.mxu0 0
        %5773 = vmatprep.subr.bf16.mxu0 0
        %5774 = vmatpush1.bf16.msra.mxu0 0
        %5775 = vmatprep.subr.bf16.mxu0 0
        %5776 = vmatpush1.bf16.msra.mxu0 0
        %5777 = vmatprep.subr.bf16.mxu0 0
        %5778 = vmatpush1.bf16.msra.mxu0 0
        %5779 = vmatprep.subr.bf16.mxu0 0
        %5780 = vmatpush1.bf16.msra.mxu0 0
        %5781 = vmatprep.subr.bf16.mxu0 0
        %5782 = vmatpush1.bf16.msra.mxu0 0
        %5783 = vmatprep.mubr.bf16.mxu0 0
        %5784 = vmatmul.mubr.bf16.gmra.mrb[0].mxu0 %v5671
        %v5785 = vpop.f32.mrb[0].mxu0
        %v5786 = vadd.f32 0.0, %v5785
        %v5787 = vpop.f32.mrb[0].mxu0
        %v5788 = vpop.f32.mrb[0].mxu0
        %v5789 = vadd.f32 0.0, %v5788
        %v5790 = vpop.f32.mrb[0].mxu0
        %5791 = vmatprep.mubr.bf16.mxu0 0
        %5792 = vmatmul.mubr.bf16.gmra.mrb[0].mxu0 %v5672
        %v5793 = vpop.f32.mrb[0].mxu0
        %v5794 = vadd.f32 0.0, %v5793
        %v5795 = vpop.f32.mrb[0].mxu0
        %v5796 = vpop.f32.mrb[0].mxu0
        %v5797 = vadd.f32 0.0, %v5796
        %v5798 = vpop.f32.mrb[0].mxu0
        %5799 = vmatprep.mubr.bf16.mxu0 0
        %5800 = vmatmul.mubr.bf16.gmra.mrb[0].mxu0 %v5673
        %v5801 = vpop.f32.mrb[0].mxu0
        %v5802 = vadd.f32 0.0, %v5801
        %v5803 = vpop.f32.mrb[0].mxu0
        %v5804 = vpop.f32.mrb[0].mxu0
        %v5805 = vadd.f32 0.0, %v5804
        %v5806 = vpop.f32.mrb[0].mxu0
        %5807 = vmatprep.mubr.bf16.mxu0 0
        %5808 = vmatmul.mubr.bf16.gmra.mrb[0].mxu0 %v5674
        %v5809 = vpop.f32.mrb[0].mxu0
        %v5810 = vadd.f32 0.0, %v5809
        %v5811 = vpop.f32.mrb[0].mxu0
        %v5812 = vpop.f32.mrb[0].mxu0
        %v5813 = vadd.f32 0.0, %v5812
        %v5814 = vpop.f32.mrb[0].mxu0
        %5815 = vmatprep.mubr.bf16.mxu0 0
        %5816 = vmatmul.mubr.bf16.gmra.mrb[0].mxu0 %v5675
        %v5817 = vpop.f32.mrb[0].mxu0
        %v5818 = vadd.f32 0.0, %v5817
        %v5819 = vpop.f32.mrb[0].mxu0
        %v5820 = vpop.f32.mrb[0].mxu0
        %v5821 = vadd.f32 0.0, %v5820
        %v5822 = vpop.f32.mrb[0].mxu0
        %5823 = vmatprep.mubr.bf16.mxu0 0
        %5824 = vmatmul.mubr.bf16.gmra.mrb[0].mxu0 %v5676
        %v5825 = vpop.f32.mrb[0].mxu0
        %v5826 = vadd.f32 0.0, %v5825
        %v5827 = vpop.f32.mrb[0].mxu0
        %v5828 = vpop.f32.mrb[0].mxu0
        %v5829 = vadd.f32 0.0, %v5828
        %v5830 = vpop.f32.mrb[0].mxu0
        %5831 = vmatprep.mubr.bf16.mxu0 0
        %5832 = vmatmul.mubr.bf16.gmra.mrb[0].mxu0 %v5677
        %v5833 = vpop.f32.mrb[0].mxu0
        %v5834 = vadd.f32 0.0, %v5833
        %v5835 = vpop.f32.mrb[0].mxu0
        %v5836 = vpop.f32.mrb[0].mxu0
        %v5837 = vadd.f32 0.0, %v5836
        %v5838 = vpop.f32.mrb[0].mxu0
        %5839 = vmatprep.mubr.bf16.mxu0 0
        %5840 = vmatmul.mubr.bf16.gmra.mrb[0].mxu0 %v5678
        %v5841 = vpop.f32.mrb[0].mxu0
        %v5842 = vadd.f32 0.0, %v5841
        %v5843 = vpop.f32.mrb[0].mxu0
        %v5844 = vpop.f32.mrb[0].mxu0
        %v5845 = vadd.f32 0.0, %v5844
        %v5846 = vpop.f32.mrb[0].mxu0
        %5847 = vmatprep.mubr.bf16.mxu0 0
        %5848 = vmatmul.mubr.bf16.gmra.mrb[0].mxu0 %v5679
        %v5849 = vpop.f32.mrb[0].mxu0
        %v5850 = vadd.f32 0.0, %v5849
        %v5851 = vpop.f32.mrb[0].mxu0
        %v5852 = vpop.f32.mrb[0].mxu0
        %v5853 = vadd.f32 0.0, %v5852
        %v5854 = vpop.f32.mrb[0].mxu0
        %5855 = vmatprep.mubr.bf16.mxu0 0
        %5856 = vmatmul.mubr.bf16.gmra.mrb[0].mxu0 %v5680
        %v5857 = vpop.f32.mrb[0].mxu0
        %v5858 = vadd.f32 0.0, %v5857
        %v5859 = vpop.f32.mrb[0].mxu0
        %v5860 = vpop.f32.mrb[0].mxu0
        %v5861 = vadd.f32 0.0, %v5860
        %v5862 = vpop.f32.mrb[0].mxu0
        %5863 = vmatprep.mubr.bf16.mxu0 0
        %5864 = vmatmul.mubr.bf16.gmra.mrb[0].mxu0 %v5681
        %v5865 = vpop.f32.mrb[0].mxu0
        %v5866 = vadd.f32 0.0, %v5865
        %v5867 = vpop.f32.mrb[0].mxu0
        %v5868 = vpop.f32.mrb[0].mxu0
        %v5869 = vadd.f32 0.0, %v5868
        %v5870 = vpop.f32.mrb[0].mxu0
        %5871 = vmatprep.mubr.bf16.mxu0 0
        %5872 = vmatmul.mubr.bf16.gmra.mrb[0].mxu0 %v5682
        %v5873 = vpop.f32.mrb[0].mxu0
        %v5874 = vadd.f32 0.0, %v5873
        %v5875 = vpop.f32.mrb[0].mxu0
        %v5876 = vpop.f32.mrb[0].mxu0
        %v5877 = vadd.f32 0.0, %v5876
        %v5878 = vpop.f32.mrb[0].mxu0
        %5879 = vmatprep.mubr.bf16.mxu0 0
        %5880 = vmatmul.mubr.bf16.gmra.mrb[0].mxu0 %v5683
        %v5881 = vpop.f32.mrb[0].mxu0
        %v5882 = vadd.f32 0.0, %v5881
        %v5883 = vpop.f32.mrb[0].mxu0
        %v5884 = vpop.f32.mrb[0].mxu0
        %v5885 = vadd.f32 0.0, %v5884
        %v5886 = vpop.f32.mrb[0].mxu0
        %5887 = vmatprep.mubr.bf16.mxu0 0
        %5888 = vmatmul.mubr.bf16.gmra.mrb[0].mxu0 %v5684
        %v5889 = vpop.f32.mrb[0].mxu0
        %v5890 = vadd.f32 0.0, %v5889
        %v5891 = vpop.f32.mrb[0].mxu0
        %v5892 = vpop.f32.mrb[0].mxu0
        %v5893 = vadd.f32 0.0, %v5892
        %v5894 = vpop.f32.mrb[0].mxu0
        %5895 = vmatprep.mubr.bf16.mxu0 0
        %5896 = vmatmul.mubr.bf16.gmra.mrb[0].mxu0 %v5685
        %v5897 = vpop.f32.mrb[0].mxu0
        %v5898 = vadd.f32 0.0, %v5897
        %v5899 = vpop.f32.mrb[0].mxu0
        %v5900 = vpop.f32.mrb[0].mxu0
        %v5901 = vadd.f32 0.0, %v5900
        %v5902 = vpop.f32.mrb[0].mxu0
        %5903 = vmatprep.mubr.bf16.mxu0 0
        %5904 = vmatmul.mubr.bf16.gmra.mrb[0].mxu0 %v5686
        %v5905 = vpop.f32.mrb[0].mxu0
        %v5906 = vadd.f32 0.0, %v5905
        %v5907 = vpop.f32.mrb[0].mxu0
        %v5908 = vpop.f32.mrb[0].mxu0
        %v5909 = vadd.f32 0.0, %v5908
        %v5910 = vpop.f32.mrb[0].mxu0
        %5911 = vdwg.mxu0
        %v5912 = vadd.f32 %v5158, %v5786
        %v5913 = vadd.f32 %v5159, %v5789
        %v5914 = vadd.f32 %v5160, %v5794
        %v5915 = vadd.f32 %v5161, %v5797
        %v5916 = vadd.f32 %v5162, %v5802
        %v5917 = vadd.f32 %v5163, %v5805
        %v5918 = vadd.f32 %v5164, %v5810
        %v5919 = vadd.f32 %v5165, %v5813
        %v5920 = vadd.f32 %v5166, %v5818
        %v5921 = vadd.f32 %v5167, %v5821
        %v5922 = vadd.f32 %v5168, %v5826
        %v5923 = vadd.f32 %v5169, %v5829
        %v5924 = vadd.f32 %v5170, %v5834
        %v5925 = vadd.f32 %v5171, %v5837
        %v5926 = vadd.f32 %v5172, %v5842
        %v5927 = vadd.f32 %v5173, %v5845
        %v5928 = vadd.f32 %v5174, %v5850
        %v5929 = vadd.f32 %v5175, %v5853
        %v5930 = vadd.f32 %v5176, %v5858
        %v5931 = vadd.f32 %v5177, %v5861
        %v5932 = vadd.f32 %v5178, %v5866
        %v5933 = vadd.f32 %v5179, %v5869
        %v5934 = vadd.f32 %v5180, %v5874
        %v5935 = vadd.f32 %v5181, %v5877
        %v5936 = vadd.f32 %v5182, %v5882
        %v5937 = vadd.f32 %v5183, %v5885
        %v5938 = vadd.f32 %v5184, %v5890
        %v5939 = vadd.f32 %v5185, %v5893
        %v5940 = vadd.f32 %v5186, %v5898
        %v5941 = vadd.f32 %v5187, %v5901
        %v5942 = vadd.f32 %v5188, %v5906
        %v5943 = vadd.f32 %v5189, %v5909
        %v5945 = vlaneseq
        %v5946 = vshrl.u32 %v5945, 7
        %v5947 = vsub.s32 0, %v5946
        %v5948 = vrot.slane %v510, %v5947
        %v5950 = vmul.f32 %v5912, %v5948
        %v5951 = vmul.f32 %v5913, %v5948
        %v5952 = vmul.f32 %v5914, %v5948
        %v5953 = vmul.f32 %v5915, %v5948
        %v5954 = vmul.f32 %v5916, %v5948
        %v5955 = vmul.f32 %v5917, %v5948
        %v5956 = vmul.f32 %v5918, %v5948
        %v5957 = vmul.f32 %v5919, %v5948
        %v5958 = vmul.f32 %v5920, %v5948
        %v5959 = vmul.f32 %v5921, %v5948
        %v5960 = vmul.f32 %v5922, %v5948
        %v5961 = vmul.f32 %v5923, %v5948
        %v5962 = vmul.f32 %v5924, %v5948
        %v5963 = vmul.f32 %v5925, %v5948
        %v5964 = vmul.f32 %v5926, %v5948
        %v5965 = vmul.f32 %v5927, %v5948
        %v5966 = vmul.f32 %v5928, %v5948
        %v5967 = vmul.f32 %v5929, %v5948
        %v5968 = vmul.f32 %v5930, %v5948
        %v5969 = vmul.f32 %v5931, %v5948
        %v5970 = vmul.f32 %v5932, %v5948
        %v5971 = vmul.f32 %v5933, %v5948
        %v5972 = vmul.f32 %v5934, %v5948
        %v5973 = vmul.f32 %v5935, %v5948
        %v5974 = vmul.f32 %v5936, %v5948
        %v5975 = vmul.f32 %v5937, %v5948
        %v5976 = vmul.f32 %v5938, %v5948
        %v5977 = vmul.f32 %v5939, %v5948
        %v5978 = vmul.f32 %v5940, %v5948
        %v5979 = vmul.f32 %v5941, %v5948
        %v5980 = vmul.f32 %v5942, %v5948
        %v5981 = vmul.f32 %v5943, %v5948
        %v5983 = vlaneseq
        %v5984 = vshrl.u32 %v5983, 7
        %v5985 = vsub.s32 0, %v5984
        %v5986 = vrot.slane %v511, %v5985
        %v5988 = vadd.f32 %v5950, %v5986
        %v5989 = vadd.f32 %v5951, %v5986
        %v5990 = vadd.f32 %v5952, %v5986
        %v5991 = vadd.f32 %v5953, %v5986
        %v5992 = vadd.f32 %v5954, %v5986
        %v5993 = vadd.f32 %v5955, %v5986
        %v5994 = vadd.f32 %v5956, %v5986
        %v5995 = vadd.f32 %v5957, %v5986
        %v5996 = vadd.f32 %v5958, %v5986
        %v5997 = vadd.f32 %v5959, %v5986
        %v5998 = vadd.f32 %v5960, %v5986
        %v5999 = vadd.f32 %v5961, %v5986
        %v6000 = vadd.f32 %v5962, %v5986
        %v6001 = vadd.f32 %v5963, %v5986
        %v6002 = vadd.f32 %v5964, %v5986
        %v6003 = vadd.f32 %v5965, %v5986
        %v6004 = vadd.f32 %v5966, %v5986
        %v6005 = vadd.f32 %v5967, %v5986
        %v6006 = vadd.f32 %v5968, %v5986
        %v6007 = vadd.f32 %v5969, %v5986
        %v6008 = vadd.f32 %v5970, %v5986
        %v6009 = vadd.f32 %v5971, %v5986
        %v6010 = vadd.f32 %v5972, %v5986
        %v6011 = vadd.f32 %v5973, %v5986
        %v6012 = vadd.f32 %v5974, %v5986
        %v6013 = vadd.f32 %v5975, %v5986
        %v6014 = vadd.f32 %v5976, %v5986
        %v6015 = vadd.f32 %v5977, %v5986
        %v6016 = vadd.f32 %v5978, %v5986
        %v6017 = vadd.f32 %v5979, %v5986
        %v6018 = vadd.f32 %v5980, %v5986
        %v6019 = vadd.f32 %v5981, %v5986
        %v6020 = vmax.f32 %v5988, 0.0
        %v6021 = vmax.f32 %v5989, 0.0
        %v6022 = vmax.f32 %v5990, 0.0
        %v6023 = vmax.f32 %v5991, 0.0
        %v6024 = vmax.f32 %v5992, 0.0
        %v6025 = vmax.f32 %v5993, 0.0
        %v6026 = vmax.f32 %v5994, 0.0
        %v6027 = vmax.f32 %v5995, 0.0
        %v6028 = vmax.f32 %v5996, 0.0
        %v6029 = vmax.f32 %v5997, 0.0
        %v6030 = vmax.f32 %v5998, 0.0
        %v6031 = vmax.f32 %v5999, 0.0
        %v6032 = vmax.f32 %v6000, 0.0
        %v6033 = vmax.f32 %v6001, 0.0
        %v6034 = vmax.f32 %v6002, 0.0
        %v6035 = vmax.f32 %v6003, 0.0
        %v6036 = vmax.f32 %v6004, 0.0
        %v6037 = vmax.f32 %v6005, 0.0
        %v6038 = vmax.f32 %v6006, 0.0
        %v6039 = vmax.f32 %v6007, 0.0
        %v6040 = vmax.f32 %v6008, 0.0
        %v6041 = vmax.f32 %v6009, 0.0
        %v6042 = vmax.f32 %v6010, 0.0
        %v6043 = vmax.f32 %v6011, 0.0
        %v6044 = vmax.f32 %v6012, 0.0
        %v6045 = vmax.f32 %v6013, 0.0
        %v6046 = vmax.f32 %v6014, 0.0
        %v6047 = vmax.f32 %v6015, 0.0
        %v6048 = vmax.f32 %v6016, 0.0
        %v6049 = vmax.f32 %v6017, 0.0
        %v6050 = vmax.f32 %v6018, 0.0
        %v6051 = vmax.f32 %v6019, 0.0
        %v6052 = vpack.c.bf16 %v6021, %v6020
        %v6053 = vpack.c.bf16 %v6023, %v6022
        %v6054 = vpack.c.bf16 %v6025, %v6024
        %v6055 = vpack.c.bf16 %v6027, %v6026
        %v6056 = vpack.c.bf16 %v6029, %v6028
        %v6057 = vpack.c.bf16 %v6031, %v6030
        %v6058 = vpack.c.bf16 %v6033, %v6032
        %v6059 = vpack.c.bf16 %v6035, %v6034
        %v6060 = vpack.c.bf16 %v6037, %v6036
        %v6061 = vpack.c.bf16 %v6039, %v6038
        %v6062 = vpack.c.bf16 %v6041, %v6040
        %v6063 = vpack.c.bf16 %v6043, %v6042
        %v6064 = vpack.c.bf16 %v6045, %v6044
        %v6065 = vpack.c.bf16 %v6047, %v6046
        %v6066 = vpack.c.bf16 %v6049, %v6048
        %v6067 = vpack.c.bf16 %v6051, %v6050
        %v6084 = vunpack.c.l.b16 %v6052
        %v6085 = vunpack.c.h.b16 %v6052
        %v6086 = vunpack.c.l.b16 %v6053
        %v6087 = vunpack.c.h.b16 %v6053
        %v6088 = vunpack.c.l.b16 %v6054
        %v6089 = vunpack.c.h.b16 %v6054
        %v6090 = vunpack.c.l.b16 %v6055
        %v6091 = vunpack.c.h.b16 %v6055
        %v6092 = vunpack.c.l.b16 %v6056
        %v6093 = vunpack.c.h.b16 %v6056
        %v6094 = vunpack.c.l.b16 %v6057
        %v6095 = vunpack.c.h.b16 %v6057
        %v6096 = vunpack.c.l.b16 %v6058
        %v6097 = vunpack.c.h.b16 %v6058
        %v6098 = vunpack.c.l.b16 %v6059
        %v6099 = vunpack.c.h.b16 %v6059
        %v6100 = vunpack.c.l.b16 %v6060
        %v6101 = vunpack.c.h.b16 %v6060
        %v6102 = vunpack.c.l.b16 %v6061
        %v6103 = vunpack.c.h.b16 %v6061
        %v6104 = vunpack.c.l.b16 %v6062
        %v6105 = vunpack.c.h.b16 %v6062
        %v6106 = vunpack.c.l.b16 %v6063
        %v6107 = vunpack.c.h.b16 %v6063
        %v6108 = vunpack.c.l.b16 %v6064
        %v6109 = vunpack.c.h.b16 %v6064
        %v6110 = vunpack.c.l.b16 %v6065
        %v6111 = vunpack.c.h.b16 %v6065
        %v6112 = vunpack.c.l.b16 %v6066
        %v6113 = vunpack.c.h.b16 %v6066
        %v6114 = vunpack.c.l.b16 %v6067
        %v6115 = vunpack.c.h.b16 %v6067
        %v6116 = vpack.c.b16 %v6084, %v6084
        %v6117 = vpack.c.b16 %v6085, %v6085
        %v6118 = vpack.c.b16 %v6086, %v6086
        %v6119 = vpack.c.b16 %v6087, %v6087
        %v6120 = vpack.c.b16 %v6088, %v6088
        %v6121 = vpack.c.b16 %v6089, %v6089
        %v6122 = vpack.c.b16 %v6090, %v6090
        %v6123 = vpack.c.b16 %v6091, %v6091
        %v6124 = vpack.c.b16 %v6092, %v6092
        %v6125 = vpack.c.b16 %v6093, %v6093
        %v6126 = vpack.c.b16 %v6094, %v6094
        %v6127 = vpack.c.b16 %v6095, %v6095
        %v6128 = vpack.c.b16 %v6096, %v6096
        %v6129 = vpack.c.b16 %v6097, %v6097
        %v6130 = vpack.c.b16 %v6098, %v6098
        %v6131 = vpack.c.b16 %v6099, %v6099
        %v6132 = vpack.c.b16 %v6100, %v6100
        %v6133 = vpack.c.b16 %v6101, %v6101
        %v6134 = vpack.c.b16 %v6102, %v6102
        %v6135 = vpack.c.b16 %v6103, %v6103
        %v6136 = vpack.c.b16 %v6104, %v6104
        %v6137 = vpack.c.b16 %v6105, %v6105
        %v6138 = vpack.c.b16 %v6106, %v6106
        %v6139 = vpack.c.b16 %v6107, %v6107
        %v6140 = vpack.c.b16 %v6108, %v6108
        %v6141 = vpack.c.b16 %v6109, %v6109
        %v6142 = vpack.c.b16 %v6110, %v6110
        %v6143 = vpack.c.b16 %v6111, %v6111
        %v6144 = vpack.c.b16 %v6112, %v6112
        %v6145 = vpack.c.b16 %v6113, %v6113
        %v6146 = vpack.c.b16 %v6114, %v6114
        %v6147 = vpack.c.b16 %v6115, %v6115
        %s6180 = scalar_lea.vmem [#allocation3], 20
        %6181 = vst [vmem:[%s6180 + $0x8] sm:$0xf] %v6116
        %6182 = vst [vmem:[%s6180 + $0xc] sm:$0xf] %v6117
        %6183 = vst [vmem:[%s6180 + $0x1c] sm:$0xf] %v6118
        %6184 = vst [vmem:[%s6180 + $0x20] sm:$0xf] %v6119
        %6185 = vst [vmem:[%s6180 + $0x30] sm:$0xf] %v6120
        %6186 = vst [vmem:[%s6180 + $0x34] sm:$0xf] %v6121
        %6187 = vst [vmem:[%s6180 + $0x44] sm:$0xf] %v6122
        %6188 = vst [vmem:[%s6180 + $0x48] sm:$0xf] %v6123
        %6189 = vst [vmem:[%s6180 + $0x58] sm:$0xf] %v6124
        %6190 = vst [vmem:[%s6180 + $0x5c] sm:$0xf] %v6125
        %6191 = vst [vmem:[%s6180 + $0x6c] sm:$0xf] %v6126
        %6192 = vst [vmem:[%s6180 + $0x70] sm:$0xf] %v6127
        %6193 = vst [vmem:[%s6180 + $0x80] sm:$0xf] %v6128
        %6194 = vst [vmem:[%s6180 + $0x84] sm:$0xf] %v6129
        %6195 = vst [vmem:[%s6180 + $0x94] sm:$0xf] %v6130
        %6196 = vst [vmem:[%s6180 + $0x98] sm:$0xf] %v6131
        %6197 = vst [vmem:[%s6180 + $0xa8] sm:$0xf] %v6132
        %6198 = vst [vmem:[%s6180 + $0xac] sm:$0xf] %v6133
        %6199 = vst [vmem:[%s6180 + $0xbc] sm:$0xf] %v6134
        %6200 = vst [vmem:[%s6180 + $0xc0] sm:$0xf] %v6135
        %6201 = vst [vmem:[%s6180 + $0xd0] sm:$0xf] %v6136
        %6202 = vst [vmem:[%s6180 + $0xd4] sm:$0xf] %v6137
        %6203 = vst [vmem:[%s6180 + $0xe4] sm:$0xf] %v6138
        %6204 = vst [vmem:[%s6180 + $0xe8] sm:$0xf] %v6139
        %6205 = vst [vmem:[%s6180 + $0xf8] sm:$0xf] %v6140
        %6206 = vst [vmem:[%s6180 + $0xfc] sm:$0xf] %v6141
        %6207 = vst [vmem:[%s6180 + $0x10c] sm:$0xf] %v6142
        %6208 = vst [vmem:[%s6180 + $0x110] sm:$0xf] %v6143
        %6209 = vst [vmem:[%s6180 + $0x120] sm:$0xf] %v6144
        %6210 = vst [vmem:[%s6180 + $0x124] sm:$0xf] %v6145
        %6211 = vst [vmem:[%s6180 + $0x134] sm:$0xf] %v6146
        %6212 = vst [vmem:[%s6180 + $0x138] sm:$0xf] %v6147
        %v6213 = vld [vmem:[%s5] sm:$0x1]
        %v6214 = vld [vmem:[%s6] sm:$0x1]
        %v6215 = vld [vmem:[#allocation3 + $0x4] sm:$0x8]
        %v6216 = vld [vmem:[#allocation3 + $0x8] sm:$0xf]
        %v6217 = vld [vmem:[#allocation3 + $0xc] sm:$0xf]
        %v6218 = vld [vmem:[#allocation3 + $0x18] sm:$0x8]
        %v6219 = vld [vmem:[#allocation3 + $0x1c] sm:$0xf]
        %v6220 = vld [vmem:[#allocation3 + $0x20] sm:$0xf]
        %v6221 = vld [vmem:[#allocation3 + $0x2c] sm:$0x8]
        %v6222 = vld [vmem:[#allocation3 + $0x30] sm:$0xf]
        %v6223 = vld [vmem:[#allocation3 + $0x34] sm:$0xf]
        %v6224 = vld [vmem:[#allocation3 + $0x40] sm:$0x8]
        %v6225 = vld [vmem:[#allocation3 + $0x44] sm:$0xf]
        %v6226 = vld [vmem:[#allocation3 + $0x48] sm:$0xf]
        %v6227 = vld [vmem:[#allocation3 + $0x54] sm:$0x8]
        %v6228 = vld [vmem:[#allocation3 + $0x58] sm:$0xf]
        %v6229 = vld [vmem:[#allocation3 + $0x5c] sm:$0xf]
        %v6230 = vld [vmem:[#allocation3 + $0x68] sm:$0x8]
        %v6231 = vld [vmem:[#allocation3 + $0x6c] sm:$0xf]
        %v6232 = vld [vmem:[#allocation3 + $0x70] sm:$0xf]
        %v6233 = vld [vmem:[#allocation3 + $0x7c] sm:$0x8]
        %v6234 = vld [vmem:[#allocation3 + $0x80] sm:$0xf]
        %v6235 = vld [vmem:[#allocation3 + $0x84] sm:$0xf]
        %v6236 = vld [vmem:[#allocation3 + $0x90] sm:$0x8]
        %v6237 = vld [vmem:[#allocation3 + $0x94] sm:$0xf]
        %v6238 = vld [vmem:[#allocation3 + $0x98] sm:$0xf]
        %v6239 = vld [vmem:[#allocation3 + $0xa4] sm:$0x8]
        %v6240 = vld [vmem:[#allocation3 + $0xa8] sm:$0xf]
        %v6241 = vld [vmem:[#allocation3 + $0xac] sm:$0xf]
        %v6242 = vld [vmem:[#allocation3 + $0xb8] sm:$0x8]
        %v6243 = vld [vmem:[#allocation3 + $0xbc] sm:$0xf]
        %v6244 = vld [vmem:[#allocation3 + $0xc0] sm:$0xf]
        %v6245 = vld [vmem:[#allocation3 + $0xcc] sm:$0x8]
        %v6246 = vld [vmem:[#allocation3 + $0xd0] sm:$0xf]
        %v6247 = vld [vmem:[#allocation3 + $0xd4] sm:$0xf]
        %v6248 = vld [vmem:[#allocation3 + $0xe0] sm:$0x8]
        %v6249 = vld [vmem:[#allocation3 + $0xe4] sm:$0xf]
        %v6250 = vld [vmem:[#allocation3 + $0xe8] sm:$0xf]
        %v6251 = vld [vmem:[#allocation3 + $0xf4] sm:$0x8]
        %v6252 = vld [vmem:[#allocation3 + $0xf8] sm:$0xf]
        %v6253 = vld [vmem:[#allocation3 + $0xfc] sm:$0xf]
        %v6254 = vld [vmem:[#allocation3 + $0x108] sm:$0x8]
        %v6255 = vld [vmem:[#allocation3 + $0x10c] sm:$0xf]
        %v6256 = vld [vmem:[#allocation3 + $0x110] sm:$0xf]
        %v6257 = vld [vmem:[#allocation3 + $0x11c] sm:$0x8]
        %v6258 = vld [vmem:[#allocation3 + $0x120] sm:$0xf]
        %v6259 = vld [vmem:[#allocation3 + $0x124] sm:$0xf]
        %v6260 = vld [vmem:[#allocation3 + $0x130] sm:$0x8]
        %v6261 = vld [vmem:[#allocation3 + $0x134] sm:$0xf]
        %v6262 = vld [vmem:[#allocation3 + $0x138] sm:$0xf]
        %v6264 = vshrl.u32 %v6215, 16
        %v6266 = vrot.slane %v6264, 7
        %v6267 = vrot.slane %v6266, 4
        %v6269 = vshrl.u32 %v6216, 16
        %v6271 = vrot.slane %v6269, 7
        %v6272 = vshll.u32 %v6216, 16
        %v6274 = vor.u32 %v6271, %v6272
        %v6275 = vsel %vm562, %v6267, %v6274
        %v6276 = vrot.slane %v6271, 4
        %v6278 = vshrl.u32 %v6217, 16
        %v6280 = vrot.slane %v6278, 7
        %v6281 = vshll.u32 %v6217, 16
        %v6283 = vor.u32 %v6280, %v6281
        %v6284 = vsel %vm562, %v6276, %v6283
        %v6286 = vshrl.u32 %v6218, 16
        %v6288 = vrot.slane %v6286, 7
        %v6289 = vrot.slane %v6288, 4
        %v6291 = vshrl.u32 %v6219, 16
        %v6293 = vrot.slane %v6291, 7
        %v6294 = vshll.u32 %v6219, 16
        %v6296 = vor.u32 %v6293, %v6294
        %v6297 = vsel %vm562, %v6289, %v6296
        %v6298 = vrot.slane %v6293, 4
        %v6300 = vshrl.u32 %v6220, 16
        %v6302 = vrot.slane %v6300, 7
        %v6303 = vshll.u32 %v6220, 16
        %v6305 = vor.u32 %v6302, %v6303
        %v6306 = vsel %vm562, %v6298, %v6305
        %v6308 = vshrl.u32 %v6221, 16
        %v6310 = vrot.slane %v6308, 7
        %v6311 = vrot.slane %v6310, 4
        %v6313 = vshrl.u32 %v6222, 16
        %v6315 = vrot.slane %v6313, 7
        %v6316 = vshll.u32 %v6222, 16
        %v6318 = vor.u32 %v6315, %v6316
        %v6319 = vsel %vm562, %v6311, %v6318
        %v6320 = vrot.slane %v6315, 4
        %v6322 = vshrl.u32 %v6223, 16
        %v6324 = vrot.slane %v6322, 7
        %v6325 = vshll.u32 %v6223, 16
        %v6327 = vor.u32 %v6324, %v6325
        %v6328 = vsel %vm562, %v6320, %v6327
        %v6330 = vshrl.u32 %v6224, 16
        %v6332 = vrot.slane %v6330, 7
        %v6333 = vrot.slane %v6332, 4
        %v6335 = vshrl.u32 %v6225, 16
        %v6337 = vrot.slane %v6335, 7
        %v6338 = vshll.u32 %v6225, 16
        %v6340 = vor.u32 %v6337, %v6338
        %v6341 = vsel %vm562, %v6333, %v6340
        %v6342 = vrot.slane %v6337, 4
        %v6344 = vshrl.u32 %v6226, 16
        %v6346 = vrot.slane %v6344, 7
        %v6347 = vshll.u32 %v6226, 16
        %v6349 = vor.u32 %v6346, %v6347
        %v6350 = vsel %vm562, %v6342, %v6349
        %v6352 = vshrl.u32 %v6227, 16
        %v6354 = vrot.slane %v6352, 7
        %v6355 = vrot.slane %v6354, 4
        %v6357 = vshrl.u32 %v6228, 16
        %v6359 = vrot.slane %v6357, 7
        %v6360 = vshll.u32 %v6228, 16
        %v6362 = vor.u32 %v6359, %v6360
        %v6363 = vsel %vm562, %v6355, %v6362
        %v6364 = vrot.slane %v6359, 4
        %v6366 = vshrl.u32 %v6229, 16
        %v6368 = vrot.slane %v6366, 7
        %v6369 = vshll.u32 %v6229, 16
        %v6371 = vor.u32 %v6368, %v6369
        %v6372 = vsel %vm562, %v6364, %v6371
        %v6374 = vshrl.u32 %v6230, 16
        %v6376 = vrot.slane %v6374, 7
        %v6377 = vrot.slane %v6376, 4
        %v6379 = vshrl.u32 %v6231, 16
        %v6381 = vrot.slane %v6379, 7
        %v6382 = vshll.u32 %v6231, 16
        %v6384 = vor.u32 %v6381, %v6382
        %v6385 = vsel %vm562, %v6377, %v6384
        %v6386 = vrot.slane %v6381, 4
        %v6388 = vshrl.u32 %v6232, 16
        %v6390 = vrot.slane %v6388, 7
        %v6391 = vshll.u32 %v6232, 16
        %v6393 = vor.u32 %v6390, %v6391
        %v6394 = vsel %vm562, %v6386, %v6393
        %v6396 = vshrl.u32 %v6233, 16
        %v6398 = vrot.slane %v6396, 7
        %v6399 = vrot.slane %v6398, 4
        %v6401 = vshrl.u32 %v6234, 16
        %v6403 = vrot.slane %v6401, 7
        %v6404 = vshll.u32 %v6234, 16
        %v6406 = vor.u32 %v6403, %v6404
        %v6407 = vsel %vm562, %v6399, %v6406
        %v6408 = vrot.slane %v6403, 4
        %v6410 = vshrl.u32 %v6235, 16
        %v6412 = vrot.slane %v6410, 7
        %v6413 = vshll.u32 %v6235, 16
        %v6415 = vor.u32 %v6412, %v6413
        %v6416 = vsel %vm562, %v6408, %v6415
        %v6418 = vshrl.u32 %v6236, 16
        %v6420 = vrot.slane %v6418, 7
        %v6421 = vrot.slane %v6420, 4
        %v6423 = vshrl.u32 %v6237, 16
        %v6425 = vrot.slane %v6423, 7
        %v6426 = vshll.u32 %v6237, 16
        %v6428 = vor.u32 %v6425, %v6426
        %v6429 = vsel %vm562, %v6421, %v6428
        %v6430 = vrot.slane %v6425, 4
        %v6432 = vshrl.u32 %v6238, 16
        %v6434 = vrot.slane %v6432, 7
        %v6435 = vshll.u32 %v6238, 16
        %v6437 = vor.u32 %v6434, %v6435
        %v6438 = vsel %vm562, %v6430, %v6437
        %v6440 = vshrl.u32 %v6239, 16
        %v6442 = vrot.slane %v6440, 7
        %v6443 = vrot.slane %v6442, 4
        %v6445 = vshrl.u32 %v6240, 16
        %v6447 = vrot.slane %v6445, 7
        %v6448 = vshll.u32 %v6240, 16
        %v6450 = vor.u32 %v6447, %v6448
        %v6451 = vsel %vm562, %v6443, %v6450
        %v6452 = vrot.slane %v6447, 4
        %v6454 = vshrl.u32 %v6241, 16
        %v6456 = vrot.slane %v6454, 7
        %v6457 = vshll.u32 %v6241, 16
        %v6459 = vor.u32 %v6456, %v6457
        %v6460 = vsel %vm562, %v6452, %v6459
        %v6462 = vshrl.u32 %v6242, 16
        %v6464 = vrot.slane %v6462, 7
        %v6465 = vrot.slane %v6464, 4
        %v6467 = vshrl.u32 %v6243, 16
        %v6469 = vrot.slane %v6467, 7
        %v6470 = vshll.u32 %v6243, 16
        %v6472 = vor.u32 %v6469, %v6470
        %v6473 = vsel %vm562, %v6465, %v6472
        %v6474 = vrot.slane %v6469, 4
        %v6476 = vshrl.u32 %v6244, 16
        %v6478 = vrot.slane %v6476, 7
        %v6479 = vshll.u32 %v6244, 16
        %v6481 = vor.u32 %v6478, %v6479
        %v6482 = vsel %vm562, %v6474, %v6481
        %v6484 = vshrl.u32 %v6245, 16
        %v6486 = vrot.slane %v6484, 7
        %v6487 = vrot.slane %v6486, 4
        %v6489 = vshrl.u32 %v6246, 16
        %v6491 = vrot.slane %v6489, 7
        %v6492 = vshll.u32 %v6246, 16
        %v6494 = vor.u32 %v6491, %v6492
        %v6495 = vsel %vm562, %v6487, %v6494
        %v6496 = vrot.slane %v6491, 4
        %v6498 = vshrl.u32 %v6247, 16
        %v6500 = vrot.slane %v6498, 7
        %v6501 = vshll.u32 %v6247, 16
        %v6503 = vor.u32 %v6500, %v6501
        %v6504 = vsel %vm562, %v6496, %v6503
        %v6506 = vshrl.u32 %v6248, 16
        %v6508 = vrot.slane %v6506, 7
        %v6509 = vrot.slane %v6508, 4
        %v6511 = vshrl.u32 %v6249, 16
        %v6513 = vrot.slane %v6511, 7
        %v6514 = vshll.u32 %v6249, 16
        %v6516 = vor.u32 %v6513, %v6514
        %v6517 = vsel %vm562, %v6509, %v6516
        %v6518 = vrot.slane %v6513, 4
        %v6520 = vshrl.u32 %v6250, 16
        %v6522 = vrot.slane %v6520, 7
        %v6523 = vshll.u32 %v6250, 16
        %v6525 = vor.u32 %v6522, %v6523
        %v6526 = vsel %vm562, %v6518, %v6525
        %v6528 = vshrl.u32 %v6251, 16
        %v6530 = vrot.slane %v6528, 7
        %v6531 = vrot.slane %v6530, 4
        %v6533 = vshrl.u32 %v6252, 16
        %v6535 = vrot.slane %v6533, 7
        %v6536 = vshll.u32 %v6252, 16
        %v6538 = vor.u32 %v6535, %v6536
        %v6539 = vsel %vm562, %v6531, %v6538
        %v6540 = vrot.slane %v6535, 4
        %v6542 = vshrl.u32 %v6253, 16
        %v6544 = vrot.slane %v6542, 7
        %v6545 = vshll.u32 %v6253, 16
        %v6547 = vor.u32 %v6544, %v6545
        %v6548 = vsel %vm562, %v6540, %v6547
        %v6550 = vshrl.u32 %v6254, 16
        %v6552 = vrot.slane %v6550, 7
        %v6553 = vrot.slane %v6552, 4
        %v6555 = vshrl.u32 %v6255, 16
        %v6557 = vrot.slane %v6555, 7
        %v6558 = vshll.u32 %v6255, 16
        %v6560 = vor.u32 %v6557, %v6558
        %v6561 = vsel %vm562, %v6553, %v6560
        %v6562 = vrot.slane %v6557, 4
        %v6564 = vshrl.u32 %v6256, 16
        %v6566 = vrot.slane %v6564, 7
        %v6567 = vshll.u32 %v6256, 16
        %v6569 = vor.u32 %v6566, %v6567
        %v6570 = vsel %vm562, %v6562, %v6569
        %v6572 = vshrl.u32 %v6257, 16
        %v6574 = vrot.slane %v6572, 7
        %v6575 = vrot.slane %v6574, 4
        %v6577 = vshrl.u32 %v6258, 16
        %v6579 = vrot.slane %v6577, 7
        %v6580 = vshll.u32 %v6258, 16
        %v6582 = vor.u32 %v6579, %v6580
        %v6583 = vsel %vm562, %v6575, %v6582
        %v6584 = vrot.slane %v6579, 4
        %v6586 = vshrl.u32 %v6259, 16
        %v6588 = vrot.slane %v6586, 7
        %v6589 = vshll.u32 %v6259, 16
        %v6591 = vor.u32 %v6588, %v6589
        %v6592 = vsel %vm562, %v6584, %v6591
        %v6594 = vshrl.u32 %v6260, 16
        %v6596 = vrot.slane %v6594, 7
        %v6597 = vrot.slane %v6596, 4
        %v6599 = vshrl.u32 %v6261, 16
        %v6601 = vrot.slane %v6599, 7
        %v6602 = vshll.u32 %v6261, 16
        %v6604 = vor.u32 %v6601, %v6602
        %v6605 = vsel %vm562, %v6597, %v6604
        %v6606 = vrot.slane %v6601, 4
        %v6608 = vshrl.u32 %v6262, 16
        %v6610 = vrot.slane %v6608, 7
        %v6611 = vshll.u32 %v6262, 16
        %v6613 = vor.u32 %v6610, %v6611
        %v6614 = vsel %vm562, %v6606, %v6613
        %v6615 = vld [vmem:[#allocation9] sm:$0xf]
        %v6616 = vld [vmem:[#allocation9 + $0x4] sm:$0xf]
        %v6617 = vld [vmem:[#allocation9 + $0x8] sm:$0xf]
        %v6618 = vld [vmem:[#allocation9 + $0xc] sm:$0xf]
        %v6619 = vld [vmem:[#allocation9 + $0x10] sm:$0xf]
        %v6620 = vld [vmem:[#allocation9 + $0x14] sm:$0xf]
        %v6621 = vld [vmem:[#allocation9 + $0x18] sm:$0xf]
        %v6622 = vld [vmem:[#allocation9 + $0x1c] sm:$0xf]
        %v6623 = vld [vmem:[#allocation9 + $0x20] sm:$0xf]
        %v6624 = vld [vmem:[#allocation9 + $0x24] sm:$0xf]
        %v6625 = vld [vmem:[#allocation9 + $0x28] sm:$0xf]
        %v6626 = vld [vmem:[#allocation9 + $0x2c] sm:$0xf]
        %v6627 = vld [vmem:[#allocation9 + $0x30] sm:$0xf]
        %v6628 = vld [vmem:[#allocation9 + $0x34] sm:$0xf]
        %v6629 = vld [vmem:[#allocation9 + $0x38] sm:$0xf]
        %v6630 = vld [vmem:[#allocation9 + $0x3c] sm:$0xf]
        %s6631 = scalar_lea.vmem [#allocation9], 64
        %v6632 = vld [vmem:[%s6631] sm:$0xf]
        %v6633 = vld [vmem:[%s6631 + $0x4] sm:$0xf]
        %v6634 = vld [vmem:[%s6631 + $0x8] sm:$0xf]
        %v6635 = vld [vmem:[%s6631 + $0xc] sm:$0xf]
        %v6636 = vld [vmem:[%s6631 + $0x10] sm:$0xf]
        %v6637 = vld [vmem:[%s6631 + $0x14] sm:$0xf]
        %v6638 = vld [vmem:[%s6631 + $0x18] sm:$0xf]
        %v6639 = vld [vmem:[%s6631 + $0x1c] sm:$0xf]
        %v6640 = vld [vmem:[%s6631 + $0x20] sm:$0xf]
        %v6641 = vld [vmem:[%s6631 + $0x24] sm:$0xf]
        %v6642 = vld [vmem:[%s6631 + $0x28] sm:$0xf]
        %v6643 = vld [vmem:[%s6631 + $0x2c] sm:$0xf]
        %v6644 = vld [vmem:[%s6631 + $0x30] sm:$0xf]
        %v6645 = vld [vmem:[%s6631 + $0x34] sm:$0xf]
        %v6646 = vld [vmem:[%s6631 + $0x38] sm:$0xf]
        %v6647 = vld [vmem:[%s6631 + $0x3c] sm:$0xf]
        %v6680 = vunpack.c.l.b16 %v6216
        %v6681 = vunpack.c.l.b16 %v6217
        %v6682 = vunpack.c.l.b16 %v6219
        %v6683 = vunpack.c.l.b16 %v6220
        %v6684 = vunpack.c.l.b16 %v6222
        %v6685 = vunpack.c.l.b16 %v6223
        %v6686 = vunpack.c.l.b16 %v6225
        %v6687 = vunpack.c.l.b16 %v6226
        %v6688 = vunpack.c.l.b16 %v6228
        %v6689 = vunpack.c.l.b16 %v6229
        %v6690 = vunpack.c.l.b16 %v6231
        %v6691 = vunpack.c.l.b16 %v6232
        %v6692 = vunpack.c.l.b16 %v6234
        %v6693 = vunpack.c.l.b16 %v6235
        %v6694 = vunpack.c.l.b16 %v6237
        %v6695 = vunpack.c.l.b16 %v6238
        %v6696 = vunpack.c.l.b16 %v6240
        %v6697 = vunpack.c.l.b16 %v6241
        %v6698 = vunpack.c.l.b16 %v6243
        %v6699 = vunpack.c.l.b16 %v6244
        %v6700 = vunpack.c.l.b16 %v6246
        %v6701 = vunpack.c.l.b16 %v6247
        %v6702 = vunpack.c.l.b16 %v6249
        %v6703 = vunpack.c.l.b16 %v6250
        %v6704 = vunpack.c.l.b16 %v6252
        %v6705 = vunpack.c.l.b16 %v6253
        %v6706 = vunpack.c.l.b16 %v6255
        %v6707 = vunpack.c.l.b16 %v6256
        %v6708 = vunpack.c.l.b16 %v6258
        %v6709 = vunpack.c.l.b16 %v6259
        %v6710 = vunpack.c.l.b16 %v6261
        %v6711 = vunpack.c.l.b16 %v6262
        %v6712 = vpack.c.b16 %v6681, %v6680
        %v6713 = vpack.c.b16 %v6683, %v6682
        %v6714 = vpack.c.b16 %v6685, %v6684
        %v6715 = vpack.c.b16 %v6687, %v6686
        %v6716 = vpack.c.b16 %v6689, %v6688
        %v6717 = vpack.c.b16 %v6691, %v6690
        %v6718 = vpack.c.b16 %v6693, %v6692
        %v6719 = vpack.c.b16 %v6695, %v6694
        %v6720 = vpack.c.b16 %v6697, %v6696
        %v6721 = vpack.c.b16 %v6699, %v6698
        %v6722 = vpack.c.b16 %v6701, %v6700
        %v6723 = vpack.c.b16 %v6703, %v6702
        %v6724 = vpack.c.b16 %v6705, %v6704
        %v6725 = vpack.c.b16 %v6707, %v6706
        %v6726 = vpack.c.b16 %v6709, %v6708
        %v6727 = vpack.c.b16 %v6711, %v6710
        %v6760 = vunpack.c.l.b16 %v6632
        %v6761 = vunpack.c.l.b16 %v6633
        %v6762 = vunpack.c.l.b16 %v6634
        %v6763 = vunpack.c.l.b16 %v6635
        %v6764 = vunpack.c.l.b16 %v6636
        %v6765 = vunpack.c.l.b16 %v6637
        %v6766 = vunpack.c.l.b16 %v6638
        %v6767 = vunpack.c.l.b16 %v6639
        %v6768 = vunpack.c.l.b16 %v6640
        %v6769 = vunpack.c.l.b16 %v6641
        %v6770 = vunpack.c.l.b16 %v6642
        %v6771 = vunpack.c.l.b16 %v6643
        %v6772 = vunpack.c.l.b16 %v6644
        %v6773 = vunpack.c.l.b16 %v6645
        %v6774 = vunpack.c.l.b16 %v6646
        %v6775 = vunpack.c.l.b16 %v6647
        %v6776 = vpack.c.b16 %v6761, %v6760
        %v6777 = vpack.c.b16 %v6763, %v6762
        %v6778 = vpack.c.b16 %v6765, %v6764
        %v6779 = vpack.c.b16 %v6767, %v6766
        %v6780 = vpack.c.b16 %v6769, %v6768
        %v6781 = vpack.c.b16 %v6771, %v6770
        %v6782 = vpack.c.b16 %v6773, %v6772
        %v6783 = vpack.c.b16 %v6775, %v6774
        %6792 = vmatprep.subr.bf16.mxu0 0
        %6793 = vmatpush1.bf16.msra.mxu0 %v6776
        %6794 = vmatprep.subr.bf16.mxu0 0
        %6795 = vmatpush1.bf16.msra.mxu0 %v6777
        %6796 = vmatprep.subr.bf16.mxu0 0
        %6797 = vmatpush1.bf16.msra.mxu0 %v6778
        %6798 = vmatprep.subr.bf16.mxu0 0
        %6799 = vmatpush1.bf16.msra.mxu0 %v6779
        %6800 = vmatprep.subr.bf16.mxu0 0
        %6801 = vmatpush1.bf16.msra.mxu0 %v6780
        %6802 = vmatprep.subr.bf16.mxu0 0
        %6803 = vmatpush1.bf16.msra.mxu0 %v6781
        %6804 = vmatprep.subr.bf16.mxu0 0
        %6805 = vmatpush1.bf16.msra.mxu0 %v6782
        %6806 = vmatprep.subr.bf16.mxu0 0
        %6807 = vmatpush1.bf16.msra.mxu0 %v6783
        %6808 = vmatprep.subr.bf16.mxu0 0
        %6809 = vmatpush1.bf16.msra.mxu0 0
        %6810 = vmatprep.subr.bf16.mxu0 0
        %6811 = vmatpush1.bf16.msra.mxu0 0
        %6812 = vmatprep.subr.bf16.mxu0 0
        %6813 = vmatpush1.bf16.msra.mxu0 0
        %6814 = vmatprep.subr.bf16.mxu0 0
        %6815 = vmatpush1.bf16.msra.mxu0 0
        %6816 = vmatprep.subr.bf16.mxu0 0
        %6817 = vmatpush1.bf16.msra.mxu0 0
        %6818 = vmatprep.subr.bf16.mxu0 0
        %6819 = vmatpush1.bf16.msra.mxu0 0
        %6820 = vmatprep.subr.bf16.mxu0 0
        %6821 = vmatpush1.bf16.msra.mxu0 0
        %6822 = vmatprep.subr.bf16.mxu0 0
        %6823 = vmatpush1.bf16.msra.mxu0 0
        %6824 = vmatprep.mubr.bf16.mxu0 0
        %6825 = vmatmul.mubr.bf16.gmra.mrb[0].mxu0 %v6712
        %v6826 = vpop.f32.mrb[0].mxu0
        %v6827 = vadd.f32 0.0, %v6826
        %v6828 = vpop.f32.mrb[0].mxu0
        %v6829 = vpop.f32.mrb[0].mxu0
        %v6830 = vadd.f32 0.0, %v6829
        %v6831 = vpop.f32.mrb[0].mxu0
        %6832 = vmatprep.mubr.bf16.mxu0 0
        %6833 = vmatmul.mubr.bf16.gmra.mrb[0].mxu0 %v6713
        %v6834 = vpop.f32.mrb[0].mxu0
        %v6835 = vadd.f32 0.0, %v6834
        %v6836 = vpop.f32.mrb[0].mxu0
        %v6837 = vpop.f32.mrb[0].mxu0
        %v6838 = vadd.f32 0.0, %v6837
        %v6839 = vpop.f32.mrb[0].mxu0
        %6840 = vmatprep.mubr.bf16.mxu0 0
        %6841 = vmatmul.mubr.bf16.gmra.mrb[0].mxu0 %v6714
        %v6842 = vpop.f32.mrb[0].mxu0
        %v6843 = vadd.f32 0.0, %v6842
        %v6844 = vpop.f32.mrb[0].mxu0
        %v6845 = vpop.f32.mrb[0].mxu0
        %v6846 = vadd.f32 0.0, %v6845
        %v6847 = vpop.f32.mrb[0].mxu0
        %6848 = vmatprep.mubr.bf16.mxu0 0
        %6849 = vmatmul.mubr.bf16.gmra.mrb[0].mxu0 %v6715
        %v6850 = vpop.f32.mrb[0].mxu0
        %v6851 = vadd.f32 0.0, %v6850
        %v6852 = vpop.f32.mrb[0].mxu0
        %v6853 = vpop.f32.mrb[0].mxu0
        %v6854 = vadd.f32 0.0, %v6853
        %v6855 = vpop.f32.mrb[0].mxu0
        %6856 = vmatprep.mubr.bf16.mxu0 0
        %6857 = vmatmul.mubr.bf16.gmra.mrb[0].mxu0 %v6716
        %v6858 = vpop.f32.mrb[0].mxu0
        %v6859 = vadd.f32 0.0, %v6858
        %v6860 = vpop.f32.mrb[0].mxu0
        %v6861 = vpop.f32.mrb[0].mxu0
        %v6862 = vadd.f32 0.0, %v6861
        %v6863 = vpop.f32.mrb[0].mxu0
        %6864 = vmatprep.mubr.bf16.mxu0 0
        %6865 = vmatmul.mubr.bf16.gmra.mrb[0].mxu0 %v6717
        %v6866 = vpop.f32.mrb[0].mxu0
        %v6867 = vadd.f32 0.0, %v6866
        %v6868 = vpop.f32.mrb[0].mxu0
        %v6869 = vpop.f32.mrb[0].mxu0
        %v6870 = vadd.f32 0.0, %v6869
        %v6871 = vpop.f32.mrb[0].mxu0
        %6872 = vmatprep.mubr.bf16.mxu0 0
        %6873 = vmatmul.mubr.bf16.gmra.mrb[0].mxu0 %v6718
        %v6874 = vpop.f32.mrb[0].mxu0
        %v6875 = vadd.f32 0.0, %v6874
        %v6876 = vpop.f32.mrb[0].mxu0
        %v6877 = vpop.f32.mrb[0].mxu0
        %v6878 = vadd.f32 0.0, %v6877
        %v6879 = vpop.f32.mrb[0].mxu0
        %6880 = vmatprep.mubr.bf16.mxu0 0
        %6881 = vmatmul.mubr.bf16.gmra.mrb[0].mxu0 %v6719
        %v6882 = vpop.f32.mrb[0].mxu0
        %v6883 = vadd.f32 0.0, %v6882
        %v6884 = vpop.f32.mrb[0].mxu0
        %v6885 = vpop.f32.mrb[0].mxu0
        %v6886 = vadd.f32 0.0, %v6885
        %v6887 = vpop.f32.mrb[0].mxu0
        %6888 = vmatprep.mubr.bf16.mxu0 0
        %6889 = vmatmul.mubr.bf16.gmra.mrb[0].mxu0 %v6720
        %v6890 = vpop.f32.mrb[0].mxu0
        %v6891 = vadd.f32 0.0, %v6890
        %v6892 = vpop.f32.mrb[0].mxu0
        %v6893 = vpop.f32.mrb[0].mxu0
        %v6894 = vadd.f32 0.0, %v6893
        %v6895 = vpop.f32.mrb[0].mxu0
        %6896 = vmatprep.mubr.bf16.mxu0 0
        %6897 = vmatmul.mubr.bf16.gmra.mrb[0].mxu0 %v6721
        %v6898 = vpop.f32.mrb[0].mxu0
        %v6899 = vadd.f32 0.0, %v6898
        %v6900 = vpop.f32.mrb[0].mxu0
        %v6901 = vpop.f32.mrb[0].mxu0
        %v6902 = vadd.f32 0.0, %v6901
        %v6903 = vpop.f32.mrb[0].mxu0
        %6904 = vmatprep.mubr.bf16.mxu0 0
        %6905 = vmatmul.mubr.bf16.gmra.mrb[0].mxu0 %v6722
        %v6906 = vpop.f32.mrb[0].mxu0
        %v6907 = vadd.f32 0.0, %v6906
        %v6908 = vpop.f32.mrb[0].mxu0
        %v6909 = vpop.f32.mrb[0].mxu0
        %v6910 = vadd.f32 0.0, %v6909
        %v6911 = vpop.f32.mrb[0].mxu0
        %6912 = vmatprep.mubr.bf16.mxu0 0
        %6913 = vmatmul.mubr.bf16.gmra.mrb[0].mxu0 %v6723
        %v6914 = vpop.f32.mrb[0].mxu0
        %v6915 = vadd.f32 0.0, %v6914
        %v6916 = vpop.f32.mrb[0].mxu0
        %v6917 = vpop.f32.mrb[0].mxu0
        %v6918 = vadd.f32 0.0, %v6917
        %v6919 = vpop.f32.mrb[0].mxu0
        %6920 = vmatprep.mubr.bf16.mxu0 0
        %6921 = vmatmul.mubr.bf16.gmra.mrb[0].mxu0 %v6724
        %v6922 = vpop.f32.mrb[0].mxu0
        %v6923 = vadd.f32 0.0, %v6922
        %v6924 = vpop.f32.mrb[0].mxu0
        %v6925 = vpop.f32.mrb[0].mxu0
        %v6926 = vadd.f32 0.0, %v6925
        %v6927 = vpop.f32.mrb[0].mxu0
        %6928 = vmatprep.mubr.bf16.mxu0 0
        %6929 = vmatmul.mubr.bf16.gmra.mrb[0].mxu0 %v6725
        %v6930 = vpop.f32.mrb[0].mxu0
        %v6931 = vadd.f32 0.0, %v6930
        %v6932 = vpop.f32.mrb[0].mxu0
        %v6933 = vpop.f32.mrb[0].mxu0
        %v6934 = vadd.f32 0.0, %v6933
        %v6935 = vpop.f32.mrb[0].mxu0
        %6936 = vmatprep.mubr.bf16.mxu0 0
        %6937 = vmatmul.mubr.bf16.gmra.mrb[0].mxu0 %v6726
        %v6938 = vpop.f32.mrb[0].mxu0
        %v6939 = vadd.f32 0.0, %v6938
        %v6940 = vpop.f32.mrb[0].mxu0
        %v6941 = vpop.f32.mrb[0].mxu0
        %v6942 = vadd.f32 0.0, %v6941
        %v6943 = vpop.f32.mrb[0].mxu0
        %6944 = vmatprep.mubr.bf16.mxu0 0
        %6945 = vmatmul.mubr.bf16.gmra.mrb[0].mxu0 %v6727
        %v6946 = vpop.f32.mrb[0].mxu0
        %v6947 = vadd.f32 0.0, %v6946
        %v6948 = vpop.f32.mrb[0].mxu0
        %v6949 = vpop.f32.mrb[0].mxu0
        %v6950 = vadd.f32 0.0, %v6949
        %v6951 = vpop.f32.mrb[0].mxu0
        %6952 = vdwg.mxu0
        %v6953 = vunpack.c.l.b16 %v6275
        %v6954 = vunpack.c.l.b16 %v6284
        %v6955 = vunpack.c.l.b16 %v6297
        %v6956 = vunpack.c.l.b16 %v6306
        %v6957 = vunpack.c.l.b16 %v6319
        %v6958 = vunpack.c.l.b16 %v6328
        %v6959 = vunpack.c.l.b16 %v6341
        %v6960 = vunpack.c.l.b16 %v6350
        %v6961 = vunpack.c.l.b16 %v6363
        %v6962 = vunpack.c.l.b16 %v6372
        %v6963 = vunpack.c.l.b16 %v6385
        %v6964 = vunpack.c.l.b16 %v6394
        %v6965 = vunpack.c.l.b16 %v6407
        %v6966 = vunpack.c.l.b16 %v6416
        %v6967 = vunpack.c.l.b16 %v6429
        %v6968 = vunpack.c.l.b16 %v6438
        %v6969 = vunpack.c.l.b16 %v6451
        %v6970 = vunpack.c.l.b16 %v6460
        %v6971 = vunpack.c.l.b16 %v6473
        %v6972 = vunpack.c.l.b16 %v6482
        %v6973 = vunpack.c.l.b16 %v6495
        %v6974 = vunpack.c.l.b16 %v6504
        %v6975 = vunpack.c.l.b16 %v6517
        %v6976 = vunpack.c.l.b16 %v6526
        %v6977 = vunpack.c.l.b16 %v6539
        %v6978 = vunpack.c.l.b16 %v6548
        %v6979 = vunpack.c.l.b16 %v6561
        %v6980 = vunpack.c.l.b16 %v6570
        %v6981 = vunpack.c.l.b16 %v6583
        %v6982 = vunpack.c.l.b16 %v6592
        %v6983 = vunpack.c.l.b16 %v6605
        %v6984 = vunpack.c.l.b16 %v6614
        %v6985 = vpack.c.b16 %v6954, %v6953
        %v6986 = vpack.c.b16 %v6956, %v6955
        %v6987 = vpack.c.b16 %v6958, %v6957
        %v6988 = vpack.c.b16 %v6960, %v6959
        %v6989 = vpack.c.b16 %v6962, %v6961
        %v6990 = vpack.c.b16 %v6964, %v6963
        %v6991 = vpack.c.b16 %v6966, %v6965
        %v6992 = vpack.c.b16 %v6968, %v6967
        %v6993 = vpack.c.b16 %v6970, %v6969
        %v6994 = vpack.c.b16 %v6972, %v6971
        %v6995 = vpack.c.b16 %v6974, %v6973
        %v6996 = vpack.c.b16 %v6976, %v6975
        %v6997 = vpack.c.b16 %v6978, %v6977
        %v6998 = vpack.c.b16 %v6980, %v6979
        %v6999 = vpack.c.b16 %v6982, %v6981
        %v7000 = vpack.c.b16 %v6984, %v6983
        %v7033 = vunpack.c.l.b16 %v6615
        %v7034 = vunpack.c.l.b16 %v6616
        %v7035 = vunpack.c.l.b16 %v6617
        %v7036 = vunpack.c.l.b16 %v6618
        %v7037 = vunpack.c.l.b16 %v6619
        %v7038 = vunpack.c.l.b16 %v6620
        %v7039 = vunpack.c.l.b16 %v6621
        %v7040 = vunpack.c.l.b16 %v6622
        %v7041 = vunpack.c.l.b16 %v6623
        %v7042 = vunpack.c.l.b16 %v6624
        %v7043 = vunpack.c.l.b16 %v6625
        %v7044 = vunpack.c.l.b16 %v6626
        %v7045 = vunpack.c.l.b16 %v6627
        %v7046 = vunpack.c.l.b16 %v6628
        %v7047 = vunpack.c.l.b16 %v6629
        %v7048 = vunpack.c.l.b16 %v6630
        %v7049 = vpack.c.b16 %v7034, %v7033
        %v7050 = vpack.c.b16 %v7036, %v7035
        %v7051 = vpack.c.b16 %v7038, %v7037
        %v7052 = vpack.c.b16 %v7040, %v7039
        %v7053 = vpack.c.b16 %v7042, %v7041
        %v7054 = vpack.c.b16 %v7044, %v7043
        %v7055 = vpack.c.b16 %v7046, %v7045
        %v7056 = vpack.c.b16 %v7048, %v7047
        %7065 = vmatprep.subr.bf16.mxu0 0
        %7066 = vmatpush1.bf16.msra.mxu0 %v7049
        %7067 = vmatprep.subr.bf16.mxu0 0
        %7068 = vmatpush1.bf16.msra.mxu0 %v7050
        %7069 = vmatprep.subr.bf16.mxu0 0
        %7070 = vmatpush1.bf16.msra.mxu0 %v7051
        %7071 = vmatprep.subr.bf16.mxu0 0
        %7072 = vmatpush1.bf16.msra.mxu0 %v7052
        %7073 = vmatprep.subr.bf16.mxu0 0
        %7074 = vmatpush1.bf16.msra.mxu0 %v7053
        %7075 = vmatprep.subr.bf16.mxu0 0
        %7076 = vmatpush1.bf16.msra.mxu0 %v7054
        %7077 = vmatprep.subr.bf16.mxu0 0
        %7078 = vmatpush1.bf16.msra.mxu0 %v7055
        %7079 = vmatprep.subr.bf16.mxu0 0
        %7080 = vmatpush1.bf16.msra.mxu0 %v7056
        %7081 = vmatprep.subr.bf16.mxu0 0
        %7082 = vmatpush1.bf16.msra.mxu0 0
        %7083 = vmatprep.subr.bf16.mxu0 0
        %7084 = vmatpush1.bf16.msra.mxu0 0
        %7085 = vmatprep.subr.bf16.mxu0 0
        %7086 = vmatpush1.bf16.msra.mxu0 0
        %7087 = vmatprep.subr.bf16.mxu0 0
        %7088 = vmatpush1.bf16.msra.mxu0 0
        %7089 = vmatprep.subr.bf16.mxu0 0
        %7090 = vmatpush1.bf16.msra.mxu0 0
        %7091 = vmatprep.subr.bf16.mxu0 0
        %7092 = vmatpush1.bf16.msra.mxu0 0
        %7093 = vmatprep.subr.bf16.mxu0 0
        %7094 = vmatpush1.bf16.msra.mxu0 0
        %7095 = vmatprep.subr.bf16.mxu0 0
        %7096 = vmatpush1.bf16.msra.mxu0 0
        %7097 = vmatprep.mubr.bf16.mxu0 0
        %7098 = vmatmul.mubr.bf16.gmra.mrb[0].mxu0 %v6985
        %v7099 = vpop.f32.mrb[0].mxu0
        %v7100 = vadd.f32 %v6827, %v7099
        %v7101 = vpop.f32.mrb[0].mxu0
        %v7102 = vpop.f32.mrb[0].mxu0
        %v7103 = vadd.f32 %v6830, %v7102
        %v7104 = vpop.f32.mrb[0].mxu0
        %7105 = vmatprep.mubr.bf16.mxu0 0
        %7106 = vmatmul.mubr.bf16.gmra.mrb[0].mxu0 %v6986
        %v7107 = vpop.f32.mrb[0].mxu0
        %v7108 = vadd.f32 %v6835, %v7107
        %v7109 = vpop.f32.mrb[0].mxu0
        %v7110 = vpop.f32.mrb[0].mxu0
        %v7111 = vadd.f32 %v6838, %v7110
        %v7112 = vpop.f32.mrb[0].mxu0
        %7113 = vmatprep.mubr.bf16.mxu0 0
        %7114 = vmatmul.mubr.bf16.gmra.mrb[0].mxu0 %v6987
        %v7115 = vpop.f32.mrb[0].mxu0
        %v7116 = vadd.f32 %v6843, %v7115
        %v7117 = vpop.f32.mrb[0].mxu0
        %v7118 = vpop.f32.mrb[0].mxu0
        %v7119 = vadd.f32 %v6846, %v7118
        %v7120 = vpop.f32.mrb[0].mxu0
        %7121 = vmatprep.mubr.bf16.mxu0 0
        %7122 = vmatmul.mubr.bf16.gmra.mrb[0].mxu0 %v6988
        %v7123 = vpop.f32.mrb[0].mxu0
        %v7124 = vadd.f32 %v6851, %v7123
        %v7125 = vpop.f32.mrb[0].mxu0
        %v7126 = vpop.f32.mrb[0].mxu0
        %v7127 = vadd.f32 %v6854, %v7126
        %v7128 = vpop.f32.mrb[0].mxu0
        %7129 = vmatprep.mubr.bf16.mxu0 0
        %7130 = vmatmul.mubr.bf16.gmra.mrb[0].mxu0 %v6989
        %v7131 = vpop.f32.mrb[0].mxu0
        %v7132 = vadd.f32 %v6859, %v7131
        %v7133 = vpop.f32.mrb[0].mxu0
        %v7134 = vpop.f32.mrb[0].mxu0
        %v7135 = vadd.f32 %v6862, %v7134
        %v7136 = vpop.f32.mrb[0].mxu0
        %7137 = vmatprep.mubr.bf16.mxu0 0
        %7138 = vmatmul.mubr.bf16.gmra.mrb[0].mxu0 %v6990
        %v7139 = vpop.f32.mrb[0].mxu0
        %v7140 = vadd.f32 %v6867, %v7139
        %v7141 = vpop.f32.mrb[0].mxu0
        %v7142 = vpop.f32.mrb[0].mxu0
        %v7143 = vadd.f32 %v6870, %v7142
        %v7144 = vpop.f32.mrb[0].mxu0
        %7145 = vmatprep.mubr.bf16.mxu0 0
        %7146 = vmatmul.mubr.bf16.gmra.mrb[0].mxu0 %v6991
        %v7147 = vpop.f32.mrb[0].mxu0
        %v7148 = vadd.f32 %v6875, %v7147
        %v7149 = vpop.f32.mrb[0].mxu0
        %v7150 = vpop.f32.mrb[0].mxu0
        %v7151 = vadd.f32 %v6878, %v7150
        %v7152 = vpop.f32.mrb[0].mxu0
        %7153 = vmatprep.mubr.bf16.mxu0 0
        %7154 = vmatmul.mubr.bf16.gmra.mrb[0].mxu0 %v6992
        %v7155 = vpop.f32.mrb[0].mxu0
        %v7156 = vadd.f32 %v6883, %v7155
        %v7157 = vpop.f32.mrb[0].mxu0
        %v7158 = vpop.f32.mrb[0].mxu0
        %v7159 = vadd.f32 %v6886, %v7158
        %v7160 = vpop.f32.mrb[0].mxu0
        %7161 = vmatprep.mubr.bf16.mxu0 0
        %7162 = vmatmul.mubr.bf16.gmra.mrb[0].mxu0 %v6993
        %v7163 = vpop.f32.mrb[0].mxu0
        %v7164 = vadd.f32 %v6891, %v7163
        %v7165 = vpop.f32.mrb[0].mxu0
        %v7166 = vpop.f32.mrb[0].mxu0
        %v7167 = vadd.f32 %v6894, %v7166
        %v7168 = vpop.f32.mrb[0].mxu0
        %7169 = vmatprep.mubr.bf16.mxu0 0
        %7170 = vmatmul.mubr.bf16.gmra.mrb[0].mxu0 %v6994
        %v7171 = vpop.f32.mrb[0].mxu0
        %v7172 = vadd.f32 %v6899, %v7171
        %v7173 = vpop.f32.mrb[0].mxu0
        %v7174 = vpop.f32.mrb[0].mxu0
        %v7175 = vadd.f32 %v6902, %v7174
        %v7176 = vpop.f32.mrb[0].mxu0
        %7177 = vmatprep.mubr.bf16.mxu0 0
        %7178 = vmatmul.mubr.bf16.gmra.mrb[0].mxu0 %v6995
        %v7179 = vpop.f32.mrb[0].mxu0
        %v7180 = vadd.f32 %v6907, %v7179
        %v7181 = vpop.f32.mrb[0].mxu0
        %v7182 = vpop.f32.mrb[0].mxu0
        %v7183 = vadd.f32 %v6910, %v7182
        %v7184 = vpop.f32.mrb[0].mxu0
        %7185 = vmatprep.mubr.bf16.mxu0 0
        %7186 = vmatmul.mubr.bf16.gmra.mrb[0].mxu0 %v6996
        %v7187 = vpop.f32.mrb[0].mxu0
        %v7188 = vadd.f32 %v6915, %v7187
        %v7189 = vpop.f32.mrb[0].mxu0
        %v7190 = vpop.f32.mrb[0].mxu0
        %v7191 = vadd.f32 %v6918, %v7190
        %v7192 = vpop.f32.mrb[0].mxu0
        %7193 = vmatprep.mubr.bf16.mxu0 0
        %7194 = vmatmul.mubr.bf16.gmra.mrb[0].mxu0 %v6997
        %v7195 = vpop.f32.mrb[0].mxu0
        %v7196 = vadd.f32 %v6923, %v7195
        %v7197 = vpop.f32.mrb[0].mxu0
        %v7198 = vpop.f32.mrb[0].mxu0
        %v7199 = vadd.f32 %v6926, %v7198
        %v7200 = vpop.f32.mrb[0].mxu0
        %7201 = vmatprep.mubr.bf16.mxu0 0
        %7202 = vmatmul.mubr.bf16.gmra.mrb[0].mxu0 %v6998
        %v7203 = vpop.f32.mrb[0].mxu0
        %v7204 = vadd.f32 %v6931, %v7203
        %v7205 = vpop.f32.mrb[0].mxu0
        %v7206 = vpop.f32.mrb[0].mxu0
        %v7207 = vadd.f32 %v6934, %v7206
        %v7208 = vpop.f32.mrb[0].mxu0
        %7209 = vmatprep.mubr.bf16.mxu0 0
        %7210 = vmatmul.mubr.bf16.gmra.mrb[0].mxu0 %v6999
        %v7211 = vpop.f32.mrb[0].mxu0
        %v7212 = vadd.f32 %v6939, %v7211
        %v7213 = vpop.f32.mrb[0].mxu0
        %v7214 = vpop.f32.mrb[0].mxu0
        %v7215 = vadd.f32 %v6942, %v7214
        %v7216 = vpop.f32.mrb[0].mxu0
        %7217 = vmatprep.mubr.bf16.mxu0 0
        %7218 = vmatmul.mubr.bf16.gmra.mrb[0].mxu0 %v7000
        %v7219 = vpop.f32.mrb[0].mxu0
        %v7220 = vadd.f32 %v6947, %v7219
        %v7221 = vpop.f32.mrb[0].mxu0
        %v7222 = vpop.f32.mrb[0].mxu0
        %v7223 = vadd.f32 %v6950, %v7222
        %v7224 = vpop.f32.mrb[0].mxu0
        %7225 = vdwg.mxu0
        %v7226 = vld [vmem:[#allocation3 + $0x8] sm:$0xf]
        %v7227 = vld [vmem:[#allocation3 + $0xc] sm:$0xf]
        %v7228 = vld [vmem:[#allocation3 + $0x10] sm:$0x1]
        %v7229 = vld [vmem:[#allocation3 + $0x1c] sm:$0xf]
        %v7230 = vld [vmem:[#allocation3 + $0x20] sm:$0xf]
        %v7231 = vld [vmem:[#allocation3 + $0x24] sm:$0x1]
        %v7232 = vld [vmem:[#allocation3 + $0x30] sm:$0xf]
        %v7233 = vld [vmem:[#allocation3 + $0x34] sm:$0xf]
        %v7234 = vld [vmem:[#allocation3 + $0x38] sm:$0x1]
        %v7235 = vld [vmem:[#allocation3 + $0x44] sm:$0xf]
        %v7236 = vld [vmem:[#allocation3 + $0x48] sm:$0xf]
        %v7237 = vld [vmem:[#allocation3 + $0x4c] sm:$0x1]
        %v7238 = vld [vmem:[#allocation3 + $0x58] sm:$0xf]
        %v7239 = vld [vmem:[#allocation3 + $0x5c] sm:$0xf]
        %v7240 = vld [vmem:[#allocation3 + $0x60] sm:$0x1]
        %v7241 = vld [vmem:[#allocation3 + $0x6c] sm:$0xf]
        %v7242 = vld [vmem:[#allocation3 + $0x70] sm:$0xf]
        %v7243 = vld [vmem:[#allocation3 + $0x74] sm:$0x1]
        %v7244 = vld [vmem:[#allocation3 + $0x80] sm:$0xf]
        %v7245 = vld [vmem:[#allocation3 + $0x84] sm:$0xf]
        %v7246 = vld [vmem:[#allocation3 + $0x88] sm:$0x1]
        %v7247 = vld [vmem:[#allocation3 + $0x94] sm:$0xf]
        %v7248 = vld [vmem:[#allocation3 + $0x98] sm:$0xf]
        %v7249 = vld [vmem:[#allocation3 + $0x9c] sm:$0x1]
        %v7250 = vld [vmem:[#allocation3 + $0xa8] sm:$0xf]
        %v7251 = vld [vmem:[#allocation3 + $0xac] sm:$0xf]
        %v7252 = vld [vmem:[#allocation3 + $0xb0] sm:$0x1]
        %v7253 = vld [vmem:[#allocation3 + $0xbc] sm:$0xf]
        %v7254 = vld [vmem:[#allocation3 + $0xc0] sm:$0xf]
        %v7255 = vld [vmem:[#allocation3 + $0xc4] sm:$0x1]
        %v7256 = vld [vmem:[#allocation3 + $0xd0] sm:$0xf]
        %v7257 = vld [vmem:[#allocation3 + $0xd4] sm:$0xf]
        %v7258 = vld [vmem:[#allocation3 + $0xd8] sm:$0x1]
        %v7259 = vld [vmem:[#allocation3 + $0xe4] sm:$0xf]
        %v7260 = vld [vmem:[#allocation3 + $0xe8] sm:$0xf]
        %v7261 = vld [vmem:[#allocation3 + $0xec] sm:$0x1]
        %v7262 = vld [vmem:[#allocation3 + $0xf8] sm:$0xf]
        %v7263 = vld [vmem:[#allocation3 + $0xfc] sm:$0xf]
        %v7264 = vld [vmem:[#allocation3 + $0x100] sm:$0x1]
        %v7265 = vld [vmem:[#allocation3 + $0x10c] sm:$0xf]
        %v7266 = vld [vmem:[#allocation3 + $0x110] sm:$0xf]
        %v7267 = vld [vmem:[#allocation3 + $0x114] sm:$0x1]
        %v7268 = vld [vmem:[#allocation3 + $0x120] sm:$0xf]
        %v7269 = vld [vmem:[#allocation3 + $0x124] sm:$0xf]
        %v7270 = vld [vmem:[#allocation3 + $0x128] sm:$0x1]
        %v7271 = vld [vmem:[#allocation3 + $0x134] sm:$0xf]
        %v7272 = vld [vmem:[#allocation3 + $0x138] sm:$0xf]
        %v7273 = vld [vmem:[#allocation3 + $0x13c] sm:$0x1]
        %v7275 = vshrl.u32 %v7226, 16
        %v7277 = vrot.slane %v7275, 4
        %v7278 = vshll.u32 %v7226, 16
        %v7280 = vrot.slane %v7278, 5
        %v7281 = vor.u32 %v7277, %v7280
        %v7282 = vrot.slane %v7281, 4
        %v7284 = vshll.u32 %v7227, 16
        %v7286 = vrot.slane %v7284, 5
        %v7287 = vsel %vm1576, %v7282, %v7286
        %v7288 = vshrl.u32 %v7227, 16
        %v7290 = vrot.slane %v7288, 4
        %v7291 = vor.u32 %v7290, %v7286
        %v7292 = vrot.slane %v7291, 4
        %v7294 = vshll.u32 %v7228, 16
        %v7296 = vrot.slane %v7294, 5
        %v7297 = vsel %vm1576, %v7292, %v7296
        %v7299 = vshrl.u32 %v7229, 16
        %v7301 = vrot.slane %v7299, 4
        %v7302 = vshll.u32 %v7229, 16
        %v7304 = vrot.slane %v7302, 5
        %v7305 = vor.u32 %v7301, %v7304
        %v7306 = vrot.slane %v7305, 4
        %v7308 = vshll.u32 %v7230, 16
        %v7310 = vrot.slane %v7308, 5
        %v7311 = vsel %vm1576, %v7306, %v7310
        %v7312 = vshrl.u32 %v7230, 16
        %v7314 = vrot.slane %v7312, 4
        %v7315 = vor.u32 %v7314, %v7310
        %v7316 = vrot.slane %v7315, 4
        %v7318 = vshll.u32 %v7231, 16
        %v7320 = vrot.slane %v7318, 5
        %v7321 = vsel %vm1576, %v7316, %v7320
        %v7323 = vshrl.u32 %v7232, 16
        %v7325 = vrot.slane %v7323, 4
        %v7326 = vshll.u32 %v7232, 16
        %v7328 = vrot.slane %v7326, 5
        %v7329 = vor.u32 %v7325, %v7328
        %v7330 = vrot.slane %v7329, 4
        %v7332 = vshll.u32 %v7233, 16
        %v7334 = vrot.slane %v7332, 5
        %v7335 = vsel %vm1576, %v7330, %v7334
        %v7336 = vshrl.u32 %v7233, 16
        %v7338 = vrot.slane %v7336, 4
        %v7339 = vor.u32 %v7338, %v7334
        %v7340 = vrot.slane %v7339, 4
        %v7342 = vshll.u32 %v7234, 16
        %v7344 = vrot.slane %v7342, 5
        %v7345 = vsel %vm1576, %v7340, %v7344
        %v7347 = vshrl.u32 %v7235, 16
        %v7349 = vrot.slane %v7347, 4
        %v7350 = vshll.u32 %v7235, 16
        %v7352 = vrot.slane %v7350, 5
        %v7353 = vor.u32 %v7349, %v7352
        %v7354 = vrot.slane %v7353, 4
        %v7356 = vshll.u32 %v7236, 16
        %v7358 = vrot.slane %v7356, 5
        %v7359 = vsel %vm1576, %v7354, %v7358
        %v7360 = vshrl.u32 %v7236, 16
        %v7362 = vrot.slane %v7360, 4
        %v7363 = vor.u32 %v7362, %v7358
        %v7364 = vrot.slane %v7363, 4
        %v7366 = vshll.u32 %v7237, 16
        %v7368 = vrot.slane %v7366, 5
        %v7369 = vsel %vm1576, %v7364, %v7368
        %v7371 = vshrl.u32 %v7238, 16
        %v7373 = vrot.slane %v7371, 4
        %v7374 = vshll.u32 %v7238, 16
        %v7376 = vrot.slane %v7374, 5
        %v7377 = vor.u32 %v7373, %v7376
        %v7378 = vrot.slane %v7377, 4
        %v7380 = vshll.u32 %v7239, 16
        %v7382 = vrot.slane %v7380, 5
        %v7383 = vsel %vm1576, %v7378, %v7382
        %v7384 = vshrl.u32 %v7239, 16
        %v7386 = vrot.slane %v7384, 4
        %v7387 = vor.u32 %v7386, %v7382
        %v7388 = vrot.slane %v7387, 4
        %v7390 = vshll.u32 %v7240, 16
        %v7392 = vrot.slane %v7390, 5
        %v7393 = vsel %vm1576, %v7388, %v7392
        %v7395 = vshrl.u32 %v7241, 16
        %v7397 = vrot.slane %v7395, 4
        %v7398 = vshll.u32 %v7241, 16
        %v7400 = vrot.slane %v7398, 5
        %v7401 = vor.u32 %v7397, %v7400
        %v7402 = vrot.slane %v7401, 4
        %v7404 = vshll.u32 %v7242, 16
        %v7406 = vrot.slane %v7404, 5
        %v7407 = vsel %vm1576, %v7402, %v7406
        %v7408 = vshrl.u32 %v7242, 16
        %v7410 = vrot.slane %v7408, 4
        %v7411 = vor.u32 %v7410, %v7406
        %v7412 = vrot.slane %v7411, 4
        %v7414 = vshll.u32 %v7243, 16
        %v7416 = vrot.slane %v7414, 5
        %v7417 = vsel %vm1576, %v7412, %v7416
        %v7419 = vshrl.u32 %v7244, 16
        %v7421 = vrot.slane %v7419, 4
        %v7422 = vshll.u32 %v7244, 16
        %v7424 = vrot.slane %v7422, 5
        %v7425 = vor.u32 %v7421, %v7424
        %v7426 = vrot.slane %v7425, 4
        %v7428 = vshll.u32 %v7245, 16
        %v7430 = vrot.slane %v7428, 5
        %v7431 = vsel %vm1576, %v7426, %v7430
        %v7432 = vshrl.u32 %v7245, 16
        %v7434 = vrot.slane %v7432, 4
        %v7435 = vor.u32 %v7434, %v7430
        %v7436 = vrot.slane %v7435, 4
        %v7438 = vshll.u32 %v7246, 16
        %v7440 = vrot.slane %v7438, 5
        %v7441 = vsel %vm1576, %v7436, %v7440
        %v7443 = vshrl.u32 %v7247, 16
        %v7445 = vrot.slane %v7443, 4
        %v7446 = vshll.u32 %v7247, 16
        %v7448 = vrot.slane %v7446, 5
        %v7449 = vor.u32 %v7445, %v7448
        %v7450 = vrot.slane %v7449, 4
        %v7452 = vshll.u32 %v7248, 16
        %v7454 = vrot.slane %v7452, 5
        %v7455 = vsel %vm1576, %v7450, %v7454
        %v7456 = vshrl.u32 %v7248, 16
        %v7458 = vrot.slane %v7456, 4
        %v7459 = vor.u32 %v7458, %v7454
        %v7460 = vrot.slane %v7459, 4
        %v7462 = vshll.u32 %v7249, 16
        %v7464 = vrot.slane %v7462, 5
        %v7465 = vsel %vm1576, %v7460, %v7464
        %v7467 = vshrl.u32 %v7250, 16
        %v7469 = vrot.slane %v7467, 4
        %v7470 = vshll.u32 %v7250, 16
        %v7472 = vrot.slane %v7470, 5
        %v7473 = vor.u32 %v7469, %v7472
        %v7474 = vrot.slane %v7473, 4
        %v7476 = vshll.u32 %v7251, 16
        %v7478 = vrot.slane %v7476, 5
        %v7479 = vsel %vm1576, %v7474, %v7478
        %v7480 = vshrl.u32 %v7251, 16
        %v7482 = vrot.slane %v7480, 4
        %v7483 = vor.u32 %v7482, %v7478
        %v7484 = vrot.slane %v7483, 4
        %v7486 = vshll.u32 %v7252, 16
        %v7488 = vrot.slane %v7486, 5
        %v7489 = vsel %vm1576, %v7484, %v7488
        %v7491 = vshrl.u32 %v7253, 16
        %v7493 = vrot.slane %v7491, 4
        %v7494 = vshll.u32 %v7253, 16
        %v7496 = vrot.slane %v7494, 5
        %v7497 = vor.u32 %v7493, %v7496
        %v7498 = vrot.slane %v7497, 4
        %v7500 = vshll.u32 %v7254, 16
        %v7502 = vrot.slane %v7500, 5
        %v7503 = vsel %vm1576, %v7498, %v7502
        %v7504 = vshrl.u32 %v7254, 16
        %v7506 = vrot.slane %v7504, 4
        %v7507 = vor.u32 %v7506, %v7502
        %v7508 = vrot.slane %v7507, 4
        %v7510 = vshll.u32 %v7255, 16
        %v7512 = vrot.slane %v7510, 5
        %v7513 = vsel %vm1576, %v7508, %v7512
        %v7515 = vshrl.u32 %v7256, 16
        %v7517 = vrot.slane %v7515, 4
        %v7518 = vshll.u32 %v7256, 16
        %v7520 = vrot.slane %v7518, 5
        %v7521 = vor.u32 %v7517, %v7520
        %v7522 = vrot.slane %v7521, 4
        %v7524 = vshll.u32 %v7257, 16
        %v7526 = vrot.slane %v7524, 5
        %v7527 = vsel %vm1576, %v7522, %v7526
        %v7528 = vshrl.u32 %v7257, 16
        %v7530 = vrot.slane %v7528, 4
        %v7531 = vor.u32 %v7530, %v7526
        %v7532 = vrot.slane %v7531, 4
        %v7534 = vshll.u32 %v7258, 16
        %v7536 = vrot.slane %v7534, 5
        %v7537 = vsel %vm1576, %v7532, %v7536
        %v7539 = vshrl.u32 %v7259, 16
        %v7541 = vrot.slane %v7539, 4
        %v7542 = vshll.u32 %v7259, 16
        %v7544 = vrot.slane %v7542, 5
        %v7545 = vor.u32 %v7541, %v7544
        %v7546 = vrot.slane %v7545, 4
        %v7548 = vshll.u32 %v7260, 16
        %v7550 = vrot.slane %v7548, 5
        %v7551 = vsel %vm1576, %v7546, %v7550
        %v7552 = vshrl.u32 %v7260, 16
        %v7554 = vrot.slane %v7552, 4
        %v7555 = vor.u32 %v7554, %v7550
        %v7556 = vrot.slane %v7555, 4
        %v7558 = vshll.u32 %v7261, 16
        %v7560 = vrot.slane %v7558, 5
        %v7561 = vsel %vm1576, %v7556, %v7560
        %v7563 = vshrl.u32 %v7262, 16
        %v7565 = vrot.slane %v7563, 4
        %v7566 = vshll.u32 %v7262, 16
        %v7568 = vrot.slane %v7566, 5
        %v7569 = vor.u32 %v7565, %v7568
        %v7570 = vrot.slane %v7569, 4
        %v7572 = vshll.u32 %v7263, 16
        %v7574 = vrot.slane %v7572, 5
        %v7575 = vsel %vm1576, %v7570, %v7574
        %v7576 = vshrl.u32 %v7263, 16
        %v7578 = vrot.slane %v7576, 4
        %v7579 = vor.u32 %v7578, %v7574
        %v7580 = vrot.slane %v7579, 4
        %v7582 = vshll.u32 %v7264, 16
        %v7584 = vrot.slane %v7582, 5
        %v7585 = vsel %vm1576, %v7580, %v7584
        %v7587 = vshrl.u32 %v7265, 16
        %v7589 = vrot.slane %v7587, 4
        %v7590 = vshll.u32 %v7265, 16
        %v7592 = vrot.slane %v7590, 5
        %v7593 = vor.u32 %v7589, %v7592
        %v7594 = vrot.slane %v7593, 4
        %v7596 = vshll.u32 %v7266, 16
        %v7598 = vrot.slane %v7596, 5
        %v7599 = vsel %vm1576, %v7594, %v7598
        %v7600 = vshrl.u32 %v7266, 16
        %v7602 = vrot.slane %v7600, 4
        %v7603 = vor.u32 %v7602, %v7598
        %v7604 = vrot.slane %v7603, 4
        %v7606 = vshll.u32 %v7267, 16
        %v7608 = vrot.slane %v7606, 5
        %v7609 = vsel %vm1576, %v7604, %v7608
        %v7611 = vshrl.u32 %v7268, 16
        %v7613 = vrot.slane %v7611, 4
        %v7614 = vshll.u32 %v7268, 16
        %v7616 = vrot.slane %v7614, 5
        %v7617 = vor.u32 %v7613, %v7616
        %v7618 = vrot.slane %v7617, 4
        %v7620 = vshll.u32 %v7269, 16
        %v7622 = vrot.slane %v7620, 5
        %v7623 = vsel %vm1576, %v7618, %v7622
        %v7624 = vshrl.u32 %v7269, 16
        %v7626 = vrot.slane %v7624, 4
        %v7627 = vor.u32 %v7626, %v7622
        %v7628 = vrot.slane %v7627, 4
        %v7630 = vshll.u32 %v7270, 16
        %v7632 = vrot.slane %v7630, 5
        %v7633 = vsel %vm1576, %v7628, %v7632
        %v7635 = vshrl.u32 %v7271, 16
        %v7637 = vrot.slane %v7635, 4
        %v7638 = vshll.u32 %v7271, 16
        %v7640 = vrot.slane %v7638, 5
        %v7641 = vor.u32 %v7637, %v7640
        %v7642 = vrot.slane %v7641, 4
        %v7644 = vshll.u32 %v7272, 16
        %v7646 = vrot.slane %v7644, 5
        %v7647 = vsel %vm1576, %v7642, %v7646
        %v7648 = vshrl.u32 %v7272, 16
        %v7650 = vrot.slane %v7648, 4
        %v7651 = vor.u32 %v7650, %v7646
        %v7652 = vrot.slane %v7651, 4
        %v7654 = vshll.u32 %v7273, 16
        %v7656 = vrot.slane %v7654, 5
        %v7657 = vsel %vm1576, %v7652, %v7656
        %s7658 = scalar_lea.vmem [#allocation9], 128
        %v7659 = vld [vmem:[%s7658] sm:$0xf]
        %v7660 = vld [vmem:[%s7658 + $0x4] sm:$0xf]
        %v7661 = vld [vmem:[%s7658 + $0x8] sm:$0xf]
        %v7662 = vld [vmem:[%s7658 + $0xc] sm:$0xf]
        %v7663 = vld [vmem:[%s7658 + $0x10] sm:$0xf]
        %v7664 = vld [vmem:[%s7658 + $0x14] sm:$0xf]
        %v7665 = vld [vmem:[%s7658 + $0x18] sm:$0xf]
        %v7666 = vld [vmem:[%s7658 + $0x1c] sm:$0xf]
        %v7667 = vld [vmem:[%s7658 + $0x20] sm:$0xf]
        %v7668 = vld [vmem:[%s7658 + $0x24] sm:$0xf]
        %v7669 = vld [vmem:[%s7658 + $0x28] sm:$0xf]
        %v7670 = vld [vmem:[%s7658 + $0x2c] sm:$0xf]
        %v7671 = vld [vmem:[%s7658 + $0x30] sm:$0xf]
        %v7672 = vld [vmem:[%s7658 + $0x34] sm:$0xf]
        %v7673 = vld [vmem:[%s7658 + $0x38] sm:$0xf]
        %v7674 = vld [vmem:[%s7658 + $0x3c] sm:$0xf]
        %v7675 = vunpack.c.l.b16 %v7287
        %v7676 = vunpack.c.l.b16 %v7297
        %v7677 = vunpack.c.l.b16 %v7311
        %v7678 = vunpack.c.l.b16 %v7321
        %v7679 = vunpack.c.l.b16 %v7335
        %v7680 = vunpack.c.l.b16 %v7345
        %v7681 = vunpack.c.l.b16 %v7359
        %v7682 = vunpack.c.l.b16 %v7369
        %v7683 = vunpack.c.l.b16 %v7383
        %v7684 = vunpack.c.l.b16 %v7393
        %v7685 = vunpack.c.l.b16 %v7407
        %v7686 = vunpack.c.l.b16 %v7417
        %v7687 = vunpack.c.l.b16 %v7431
        %v7688 = vunpack.c.l.b16 %v7441
        %v7689 = vunpack.c.l.b16 %v7455
        %v7690 = vunpack.c.l.b16 %v7465
        %v7691 = vunpack.c.l.b16 %v7479
        %v7692 = vunpack.c.l.b16 %v7489
        %v7693 = vunpack.c.l.b16 %v7503
        %v7694 = vunpack.c.l.b16 %v7513
        %v7695 = vunpack.c.l.b16 %v7527
        %v7696 = vunpack.c.l.b16 %v7537
        %v7697 = vunpack.c.l.b16 %v7551
        %v7698 = vunpack.c.l.b16 %v7561
        %v7699 = vunpack.c.l.b16 %v7575
        %v7700 = vunpack.c.l.b16 %v7585
        %v7701 = vunpack.c.l.b16 %v7599
        %v7702 = vunpack.c.l.b16 %v7609
        %v7703 = vunpack.c.l.b16 %v7623
        %v7704 = vunpack.c.l.b16 %v7633
        %v7705 = vunpack.c.l.b16 %v7647
        %v7706 = vunpack.c.l.b16 %v7657
        %v7707 = vpack.c.b16 %v7676, %v7675
        %v7708 = vpack.c.b16 %v7678, %v7677
        %v7709 = vpack.c.b16 %v7680, %v7679
        %v7710 = vpack.c.b16 %v7682, %v7681
        %v7711 = vpack.c.b16 %v7684, %v7683
        %v7712 = vpack.c.b16 %v7686, %v7685
        %v7713 = vpack.c.b16 %v7688, %v7687
        %v7714 = vpack.c.b16 %v7690, %v7689
        %v7715 = vpack.c.b16 %v7692, %v7691
        %v7716 = vpack.c.b16 %v7694, %v7693
        %v7717 = vpack.c.b16 %v7696, %v7695
        %v7718 = vpack.c.b16 %v7698, %v7697
        %v7719 = vpack.c.b16 %v7700, %v7699
        %v7720 = vpack.c.b16 %v7702, %v7701
        %v7721 = vpack.c.b16 %v7704, %v7703
        %v7722 = vpack.c.b16 %v7706, %v7705
        %v7755 = vunpack.c.l.b16 %v7659
        %v7756 = vunpack.c.l.b16 %v7660
        %v7757 = vunpack.c.l.b16 %v7661
        %v7758 = vunpack.c.l.b16 %v7662
        %v7759 = vunpack.c.l.b16 %v7663
        %v7760 = vunpack.c.l.b16 %v7664
        %v7761 = vunpack.c.l.b16 %v7665
        %v7762 = vunpack.c.l.b16 %v7666
        %v7763 = vunpack.c.l.b16 %v7667
        %v7764 = vunpack.c.l.b16 %v7668
        %v7765 = vunpack.c.l.b16 %v7669
        %v7766 = vunpack.c.l.b16 %v7670
        %v7767 = vunpack.c.l.b16 %v7671
        %v7768 = vunpack.c.l.b16 %v7672
        %v7769 = vunpack.c.l.b16 %v7673
        %v7770 = vunpack.c.l.b16 %v7674
        %v7771 = vpack.c.b16 %v7756, %v7755
        %v7772 = vpack.c.b16 %v7758, %v7757
        %v7773 = vpack.c.b16 %v7760, %v7759
        %v7774 = vpack.c.b16 %v7762, %v7761
        %v7775 = vpack.c.b16 %v7764, %v7763
        %v7776 = vpack.c.b16 %v7766, %v7765
        %v7777 = vpack.c.b16 %v7768, %v7767
        %v7778 = vpack.c.b16 %v7770, %v7769
        %7787 = vmatprep.subr.bf16.mxu0 0
        %7788 = vmatpush1.bf16.msra.mxu0 %v7771
        %7789 = vmatprep.subr.bf16.mxu0 0
        %7790 = vmatpush1.bf16.msra.mxu0 %v7772
        %7791 = vmatprep.subr.bf16.mxu0 0
        %7792 = vmatpush1.bf16.msra.mxu0 %v7773
        %7793 = vmatprep.subr.bf16.mxu0 0
        %7794 = vmatpush1.bf16.msra.mxu0 %v7774
        %7795 = vmatprep.subr.bf16.mxu0 0
        %7796 = vmatpush1.bf16.msra.mxu0 %v7775
        %7797 = vmatprep.subr.bf16.mxu0 0
        %7798 = vmatpush1.bf16.msra.mxu0 %v7776
        %7799 = vmatprep.subr.bf16.mxu0 0
        %7800 = vmatpush1.bf16.msra.mxu0 %v7777
        %7801 = vmatprep.subr.bf16.mxu0 0
        %7802 = vmatpush1.bf16.msra.mxu0 %v7778
        %7803 = vmatprep.subr.bf16.mxu0 0
        %7804 = vmatpush1.bf16.msra.mxu0 0
        %7805 = vmatprep.subr.bf16.mxu0 0
        %7806 = vmatpush1.bf16.msra.mxu0 0
        %7807 = vmatprep.subr.bf16.mxu0 0
        %7808 = vmatpush1.bf16.msra.mxu0 0
        %7809 = vmatprep.subr.bf16.mxu0 0
        %7810 = vmatpush1.bf16.msra.mxu0 0
        %7811 = vmatprep.subr.bf16.mxu0 0
        %7812 = vmatpush1.bf16.msra.mxu0 0
        %7813 = vmatprep.subr.bf16.mxu0 0
        %7814 = vmatpush1.bf16.msra.mxu0 0
        %7815 = vmatprep.subr.bf16.mxu0 0
        %7816 = vmatpush1.bf16.msra.mxu0 0
        %7817 = vmatprep.subr.bf16.mxu0 0
        %7818 = vmatpush1.bf16.msra.mxu0 0
        %7819 = vmatprep.mubr.bf16.mxu0 0
        %7820 = vmatmul.mubr.bf16.gmra.mrb[0].mxu0 %v7707
        %v7821 = vpop.f32.mrb[0].mxu0
        %v7822 = vadd.f32 0.0, %v7821
        %v7823 = vpop.f32.mrb[0].mxu0
        %v7824 = vpop.f32.mrb[0].mxu0
        %v7825 = vadd.f32 0.0, %v7824
        %v7826 = vpop.f32.mrb[0].mxu0
        %7827 = vmatprep.mubr.bf16.mxu0 0
        %7828 = vmatmul.mubr.bf16.gmra.mrb[0].mxu0 %v7708
        %v7829 = vpop.f32.mrb[0].mxu0
        %v7830 = vadd.f32 0.0, %v7829
        %v7831 = vpop.f32.mrb[0].mxu0
        %v7832 = vpop.f32.mrb[0].mxu0
        %v7833 = vadd.f32 0.0, %v7832
        %v7834 = vpop.f32.mrb[0].mxu0
        %7835 = vmatprep.mubr.bf16.mxu0 0
        %7836 = vmatmul.mubr.bf16.gmra.mrb[0].mxu0 %v7709
        %v7837 = vpop.f32.mrb[0].mxu0
        %v7838 = vadd.f32 0.0, %v7837
        %v7839 = vpop.f32.mrb[0].mxu0
        %v7840 = vpop.f32.mrb[0].mxu0
        %v7841 = vadd.f32 0.0, %v7840
        %v7842 = vpop.f32.mrb[0].mxu0
        %7843 = vmatprep.mubr.bf16.mxu0 0
        %7844 = vmatmul.mubr.bf16.gmra.mrb[0].mxu0 %v7710
        %v7845 = vpop.f32.mrb[0].mxu0
        %v7846 = vadd.f32 0.0, %v7845
        %v7847 = vpop.f32.mrb[0].mxu0
        %v7848 = vpop.f32.mrb[0].mxu0
        %v7849 = vadd.f32 0.0, %v7848
        %v7850 = vpop.f32.mrb[0].mxu0
        %7851 = vmatprep.mubr.bf16.mxu0 0
        %7852 = vmatmul.mubr.bf16.gmra.mrb[0].mxu0 %v7711
        %v7853 = vpop.f32.mrb[0].mxu0
        %v7854 = vadd.f32 0.0, %v7853
        %v7855 = vpop.f32.mrb[0].mxu0
        %v7856 = vpop.f32.mrb[0].mxu0
        %v7857 = vadd.f32 0.0, %v7856
        %v7858 = vpop.f32.mrb[0].mxu0
        %7859 = vmatprep.mubr.bf16.mxu0 0
        %7860 = vmatmul.mubr.bf16.gmra.mrb[0].mxu0 %v7712
        %v7861 = vpop.f32.mrb[0].mxu0
        %v7862 = vadd.f32 0.0, %v7861
        %v7863 = vpop.f32.mrb[0].mxu0
        %v7864 = vpop.f32.mrb[0].mxu0
        %v7865 = vadd.f32 0.0, %v7864
        %v7866 = vpop.f32.mrb[0].mxu0
        %7867 = vmatprep.mubr.bf16.mxu0 0
        %7868 = vmatmul.mubr.bf16.gmra.mrb[0].mxu0 %v7713
        %v7869 = vpop.f32.mrb[0].mxu0
        %v7870 = vadd.f32 0.0, %v7869
        %v7871 = vpop.f32.mrb[0].mxu0
        %v7872 = vpop.f32.mrb[0].mxu0
        %v7873 = vadd.f32 0.0, %v7872
        %v7874 = vpop.f32.mrb[0].mxu0
        %7875 = vmatprep.mubr.bf16.mxu0 0
        %7876 = vmatmul.mubr.bf16.gmra.mrb[0].mxu0 %v7714
        %v7877 = vpop.f32.mrb[0].mxu0
        %v7878 = vadd.f32 0.0, %v7877
        %v7879 = vpop.f32.mrb[0].mxu0
        %v7880 = vpop.f32.mrb[0].mxu0
        %v7881 = vadd.f32 0.0, %v7880
        %v7882 = vpop.f32.mrb[0].mxu0
        %7883 = vmatprep.mubr.bf16.mxu0 0
        %7884 = vmatmul.mubr.bf16.gmra.mrb[0].mxu0 %v7715
        %v7885 = vpop.f32.mrb[0].mxu0
        %v7886 = vadd.f32 0.0, %v7885
        %v7887 = vpop.f32.mrb[0].mxu0
        %v7888 = vpop.f32.mrb[0].mxu0
        %v7889 = vadd.f32 0.0, %v7888
        %v7890 = vpop.f32.mrb[0].mxu0
        %7891 = vmatprep.mubr.bf16.mxu0 0
        %7892 = vmatmul.mubr.bf16.gmra.mrb[0].mxu0 %v7716
        %v7893 = vpop.f32.mrb[0].mxu0
        %v7894 = vadd.f32 0.0, %v7893
        %v7895 = vpop.f32.mrb[0].mxu0
        %v7896 = vpop.f32.mrb[0].mxu0
        %v7897 = vadd.f32 0.0, %v7896
        %v7898 = vpop.f32.mrb[0].mxu0
        %7899 = vmatprep.mubr.bf16.mxu0 0
        %7900 = vmatmul.mubr.bf16.gmra.mrb[0].mxu0 %v7717
        %v7901 = vpop.f32.mrb[0].mxu0
        %v7902 = vadd.f32 0.0, %v7901
        %v7903 = vpop.f32.mrb[0].mxu0
        %v7904 = vpop.f32.mrb[0].mxu0
        %v7905 = vadd.f32 0.0, %v7904
        %v7906 = vpop.f32.mrb[0].mxu0
        %7907 = vmatprep.mubr.bf16.mxu0 0
        %7908 = vmatmul.mubr.bf16.gmra.mrb[0].mxu0 %v7718
        %v7909 = vpop.f32.mrb[0].mxu0
        %v7910 = vadd.f32 0.0, %v7909
        %v7911 = vpop.f32.mrb[0].mxu0
        %v7912 = vpop.f32.mrb[0].mxu0
        %v7913 = vadd.f32 0.0, %v7912
        %v7914 = vpop.f32.mrb[0].mxu0
        %7915 = vmatprep.mubr.bf16.mxu0 0
        %7916 = vmatmul.mubr.bf16.gmra.mrb[0].mxu0 %v7719
        %v7917 = vpop.f32.mrb[0].mxu0
        %v7918 = vadd.f32 0.0, %v7917
        %v7919 = vpop.f32.mrb[0].mxu0
        %v7920 = vpop.f32.mrb[0].mxu0
        %v7921 = vadd.f32 0.0, %v7920
        %v7922 = vpop.f32.mrb[0].mxu0
        %7923 = vmatprep.mubr.bf16.mxu0 0
        %7924 = vmatmul.mubr.bf16.gmra.mrb[0].mxu0 %v7720
        %v7925 = vpop.f32.mrb[0].mxu0
        %v7926 = vadd.f32 0.0, %v7925
        %v7927 = vpop.f32.mrb[0].mxu0
        %v7928 = vpop.f32.mrb[0].mxu0
        %v7929 = vadd.f32 0.0, %v7928
        %v7930 = vpop.f32.mrb[0].mxu0
        %7931 = vmatprep.mubr.bf16.mxu0 0
        %7932 = vmatmul.mubr.bf16.gmra.mrb[0].mxu0 %v7721
        %v7933 = vpop.f32.mrb[0].mxu0
        %v7934 = vadd.f32 0.0, %v7933
        %v7935 = vpop.f32.mrb[0].mxu0
        %v7936 = vpop.f32.mrb[0].mxu0
        %v7937 = vadd.f32 0.0, %v7936
        %v7938 = vpop.f32.mrb[0].mxu0
        %7939 = vmatprep.mubr.bf16.mxu0 0
        %7940 = vmatmul.mubr.bf16.gmra.mrb[0].mxu0 %v7722
        %v7941 = vpop.f32.mrb[0].mxu0
        %v7942 = vadd.f32 0.0, %v7941
        %v7943 = vpop.f32.mrb[0].mxu0
        %v7944 = vpop.f32.mrb[0].mxu0
        %v7945 = vadd.f32 0.0, %v7944
        %v7946 = vpop.f32.mrb[0].mxu0
        %7947 = vdwg.mxu0
        %v7948 = vadd.f32 %v7100, %v7822
        %v7949 = vadd.f32 %v7103, %v7825
        %v7950 = vadd.f32 %v7108, %v7830
        %v7951 = vadd.f32 %v7111, %v7833
        %v7952 = vadd.f32 %v7116, %v7838
        %v7953 = vadd.f32 %v7119, %v7841
        %v7954 = vadd.f32 %v7124, %v7846
        %v7955 = vadd.f32 %v7127, %v7849
        %v7956 = vadd.f32 %v7132, %v7854
        %v7957 = vadd.f32 %v7135, %v7857
        %v7958 = vadd.f32 %v7140, %v7862
        %v7959 = vadd.f32 %v7143, %v7865
        %v7960 = vadd.f32 %v7148, %v7870
        %v7961 = vadd.f32 %v7151, %v7873
        %v7962 = vadd.f32 %v7156, %v7878
        %v7963 = vadd.f32 %v7159, %v7881
        %v7964 = vadd.f32 %v7164, %v7886
        %v7965 = vadd.f32 %v7167, %v7889
        %v7966 = vadd.f32 %v7172, %v7894
        %v7967 = vadd.f32 %v7175, %v7897
        %v7968 = vadd.f32 %v7180, %v7902
        %v7969 = vadd.f32 %v7183, %v7905
        %v7970 = vadd.f32 %v7188, %v7910
        %v7971 = vadd.f32 %v7191, %v7913
        %v7972 = vadd.f32 %v7196, %v7918
        %v7973 = vadd.f32 %v7199, %v7921
        %v7974 = vadd.f32 %v7204, %v7926
        %v7975 = vadd.f32 %v7207, %v7929
        %v7976 = vadd.f32 %v7212, %v7934
        %v7977 = vadd.f32 %v7215, %v7937
        %v7978 = vadd.f32 %v7220, %v7942
        %v7979 = vadd.f32 %v7223, %v7945
        %v7980 = vld [vmem:[%s6180 + $0x4] sm:$0x8]
        %v7981 = vld [vmem:[%s6180 + $0x8] sm:$0xf]
        %v7982 = vld [vmem:[%s6180 + $0xc] sm:$0xf]
        %v7983 = vld [vmem:[%s6180 + $0x18] sm:$0x8]
        %v7984 = vld [vmem:[%s6180 + $0x1c] sm:$0xf]
        %v7985 = vld [vmem:[%s6180 + $0x20] sm:$0xf]
        %v7986 = vld [vmem:[%s6180 + $0x2c] sm:$0x8]
        %v7987 = vld [vmem:[%s6180 + $0x30] sm:$0xf]
        %v7988 = vld [vmem:[%s6180 + $0x34] sm:$0xf]
        %v7989 = vld [vmem:[%s6180 + $0x40] sm:$0x8]
        %v7990 = vld [vmem:[%s6180 + $0x44] sm:$0xf]
        %v7991 = vld [vmem:[%s6180 + $0x48] sm:$0xf]
        %v7992 = vld [vmem:[%s6180 + $0x54] sm:$0x8]
        %v7993 = vld [vmem:[%s6180 + $0x58] sm:$0xf]
        %v7994 = vld [vmem:[%s6180 + $0x5c] sm:$0xf]
        %v7995 = vld [vmem:[%s6180 + $0x68] sm:$0x8]
        %v7996 = vld [vmem:[%s6180 + $0x6c] sm:$0xf]
        %v7997 = vld [vmem:[%s6180 + $0x70] sm:$0xf]
        %v7998 = vld [vmem:[%s6180 + $0x7c] sm:$0x8]
        %v7999 = vld [vmem:[%s6180 + $0x80] sm:$0xf]
        %v8000 = vld [vmem:[%s6180 + $0x84] sm:$0xf]
        %v8001 = vld [vmem:[%s6180 + $0x90] sm:$0x8]
        %v8002 = vld [vmem:[%s6180 + $0x94] sm:$0xf]
        %v8003 = vld [vmem:[%s6180 + $0x98] sm:$0xf]
        %v8004 = vld [vmem:[%s6180 + $0xa4] sm:$0x8]
        %v8005 = vld [vmem:[%s6180 + $0xa8] sm:$0xf]
        %v8006 = vld [vmem:[%s6180 + $0xac] sm:$0xf]
        %v8007 = vld [vmem:[%s6180 + $0xb8] sm:$0x8]
        %v8008 = vld [vmem:[%s6180 + $0xbc] sm:$0xf]
        %v8009 = vld [vmem:[%s6180 + $0xc0] sm:$0xf]
        %v8010 = vld [vmem:[%s6180 + $0xcc] sm:$0x8]
        %v8011 = vld [vmem:[%s6180 + $0xd0] sm:$0xf]
        %v8012 = vld [vmem:[%s6180 + $0xd4] sm:$0xf]
        %v8013 = vld [vmem:[%s6180 + $0xe0] sm:$0x8]
        %v8014 = vld [vmem:[%s6180 + $0xe4] sm:$0xf]
        %v8015 = vld [vmem:[%s6180 + $0xe8] sm:$0xf]
        %v8016 = vld [vmem:[%s6180 + $0xf4] sm:$0x8]
        %v8017 = vld [vmem:[%s6180 + $0xf8] sm:$0xf]
        %v8018 = vld [vmem:[%s6180 + $0xfc] sm:$0xf]
        %v8019 = vld [vmem:[%s6180 + $0x108] sm:$0x8]
        %v8020 = vld [vmem:[%s6180 + $0x10c] sm:$0xf]
        %v8021 = vld [vmem:[%s6180 + $0x110] sm:$0xf]
        %v8022 = vld [vmem:[%s6180 + $0x11c] sm:$0x8]
        %v8023 = vld [vmem:[%s6180 + $0x120] sm:$0xf]
        %v8024 = vld [vmem:[%s6180 + $0x124] sm:$0xf]
        %v8025 = vld [vmem:[%s6180 + $0x130] sm:$0x8]
        %v8026 = vld [vmem:[%s6180 + $0x134] sm:$0xf]
        %v8027 = vld [vmem:[%s6180 + $0x138] sm:$0xf]
        %v8029 = vshrl.u32 %v7980, 16
        %v8031 = vrot.slane %v8029, 7
        %v8032 = vrot.slane %v8031, 4
        %v8034 = vshrl.u32 %v7981, 16
        %v8036 = vrot.slane %v8034, 7
        %v8037 = vshll.u32 %v7981, 16
        %v8039 = vor.u32 %v8036, %v8037
        %v8040 = vsel %vm562, %v8032, %v8039
        %v8041 = vrot.slane %v8036, 4
        %v8043 = vshrl.u32 %v7982, 16
        %v8045 = vrot.slane %v8043, 7
        %v8046 = vshll.u32 %v7982, 16
        %v8048 = vor.u32 %v8045, %v8046
        %v8049 = vsel %vm562, %v8041, %v8048
        %v8051 = vshrl.u32 %v7983, 16
        %v8053 = vrot.slane %v8051, 7
        %v8054 = vrot.slane %v8053, 4
        %v8056 = vshrl.u32 %v7984, 16
        %v8058 = vrot.slane %v8056, 7
        %v8059 = vshll.u32 %v7984, 16
        %v8061 = vor.u32 %v8058, %v8059
        %v8062 = vsel %vm562, %v8054, %v8061
        %v8063 = vrot.slane %v8058, 4
        %v8065 = vshrl.u32 %v7985, 16
        %v8067 = vrot.slane %v8065, 7
        %v8068 = vshll.u32 %v7985, 16
        %v8070 = vor.u32 %v8067, %v8068
        %v8071 = vsel %vm562, %v8063, %v8070
        %v8073 = vshrl.u32 %v7986, 16
        %v8075 = vrot.slane %v8073, 7
        %v8076 = vrot.slane %v8075, 4
        %v8078 = vshrl.u32 %v7987, 16
        %v8080 = vrot.slane %v8078, 7
        %v8081 = vshll.u32 %v7987, 16
        %v8083 = vor.u32 %v8080, %v8081
        %v8084 = vsel %vm562, %v8076, %v8083
        %v8085 = vrot.slane %v8080, 4
        %v8087 = vshrl.u32 %v7988, 16
        %v8089 = vrot.slane %v8087, 7
        %v8090 = vshll.u32 %v7988, 16
        %v8092 = vor.u32 %v8089, %v8090
        %v8093 = vsel %vm562, %v8085, %v8092
        %v8095 = vshrl.u32 %v7989, 16
        %v8097 = vrot.slane %v8095, 7
        %v8098 = vrot.slane %v8097, 4
        %v8100 = vshrl.u32 %v7990, 16
        %v8102 = vrot.slane %v8100, 7
        %v8103 = vshll.u32 %v7990, 16
        %v8105 = vor.u32 %v8102, %v8103
        %v8106 = vsel %vm562, %v8098, %v8105
        %v8107 = vrot.slane %v8102, 4
        %v8109 = vshrl.u32 %v7991, 16
        %v8111 = vrot.slane %v8109, 7
        %v8112 = vshll.u32 %v7991, 16
        %v8114 = vor.u32 %v8111, %v8112
        %v8115 = vsel %vm562, %v8107, %v8114
        %v8117 = vshrl.u32 %v7992, 16
        %v8119 = vrot.slane %v8117, 7
        %v8120 = vrot.slane %v8119, 4
        %v8122 = vshrl.u32 %v7993, 16
        %v8124 = vrot.slane %v8122, 7
        %v8125 = vshll.u32 %v7993, 16
        %v8127 = vor.u32 %v8124, %v8125
        %v8128 = vsel %vm562, %v8120, %v8127
        %v8129 = vrot.slane %v8124, 4
        %v8131 = vshrl.u32 %v7994, 16
        %v8133 = vrot.slane %v8131, 7
        %v8134 = vshll.u32 %v7994, 16
        %v8136 = vor.u32 %v8133, %v8134
        %v8137 = vsel %vm562, %v8129, %v8136
        %v8139 = vshrl.u32 %v7995, 16
        %v8141 = vrot.slane %v8139, 7
        %v8142 = vrot.slane %v8141, 4
        %v8144 = vshrl.u32 %v7996, 16
        %v8146 = vrot.slane %v8144, 7
        %v8147 = vshll.u32 %v7996, 16
        %v8149 = vor.u32 %v8146, %v8147
        %v8150 = vsel %vm562, %v8142, %v8149
        %v8151 = vrot.slane %v8146, 4
        %v8153 = vshrl.u32 %v7997, 16
        %v8155 = vrot.slane %v8153, 7
        %v8156 = vshll.u32 %v7997, 16
        %v8158 = vor.u32 %v8155, %v8156
        %v8159 = vsel %vm562, %v8151, %v8158
        %v8161 = vshrl.u32 %v7998, 16
        %v8163 = vrot.slane %v8161, 7
        %v8164 = vrot.slane %v8163, 4
        %v8166 = vshrl.u32 %v7999, 16
        %v8168 = vrot.slane %v8166, 7
        %v8169 = vshll.u32 %v7999, 16
        %v8171 = vor.u32 %v8168, %v8169
        %v8172 = vsel %vm562, %v8164, %v8171
        %v8173 = vrot.slane %v8168, 4
        %v8175 = vshrl.u32 %v8000, 16
        %v8177 = vrot.slane %v8175, 7
        %v8178 = vshll.u32 %v8000, 16
        %v8180 = vor.u32 %v8177, %v8178
        %v8181 = vsel %vm562, %v8173, %v8180
        %v8183 = vshrl.u32 %v8001, 16
        %v8185 = vrot.slane %v8183, 7
        %v8186 = vrot.slane %v8185, 4
        %v8188 = vshrl.u32 %v8002, 16
        %v8190 = vrot.slane %v8188, 7
        %v8191 = vshll.u32 %v8002, 16
        %v8193 = vor.u32 %v8190, %v8191
        %v8194 = vsel %vm562, %v8186, %v8193
        %v8195 = vrot.slane %v8190, 4
        %v8197 = vshrl.u32 %v8003, 16
        %v8199 = vrot.slane %v8197, 7
        %v8200 = vshll.u32 %v8003, 16
        %v8202 = vor.u32 %v8199, %v8200
        %v8203 = vsel %vm562, %v8195, %v8202
        %v8205 = vshrl.u32 %v8004, 16
        %v8207 = vrot.slane %v8205, 7
        %v8208 = vrot.slane %v8207, 4
        %v8210 = vshrl.u32 %v8005, 16
        %v8212 = vrot.slane %v8210, 7
        %v8213 = vshll.u32 %v8005, 16
        %v8215 = vor.u32 %v8212, %v8213
        %v8216 = vsel %vm562, %v8208, %v8215
        %v8217 = vrot.slane %v8212, 4
        %v8219 = vshrl.u32 %v8006, 16
        %v8221 = vrot.slane %v8219, 7
        %v8222 = vshll.u32 %v8006, 16
        %v8224 = vor.u32 %v8221, %v8222
        %v8225 = vsel %vm562, %v8217, %v8224
        %v8227 = vshrl.u32 %v8007, 16
        %v8229 = vrot.slane %v8227, 7
        %v8230 = vrot.slane %v8229, 4
        %v8232 = vshrl.u32 %v8008, 16
        %v8234 = vrot.slane %v8232, 7
        %v8235 = vshll.u32 %v8008, 16
        %v8237 = vor.u32 %v8234, %v8235
        %v8238 = vsel %vm562, %v8230, %v8237
        %v8239 = vrot.slane %v8234, 4
        %v8241 = vshrl.u32 %v8009, 16
        %v8243 = vrot.slane %v8241, 7
        %v8244 = vshll.u32 %v8009, 16
        %v8246 = vor.u32 %v8243, %v8244
        %v8247 = vsel %vm562, %v8239, %v8246
        %v8249 = vshrl.u32 %v8010, 16
        %v8251 = vrot.slane %v8249, 7
        %v8252 = vrot.slane %v8251, 4
        %v8254 = vshrl.u32 %v8011, 16
        %v8256 = vrot.slane %v8254, 7
        %v8257 = vshll.u32 %v8011, 16
        %v8259 = vor.u32 %v8256, %v8257
        %v8260 = vsel %vm562, %v8252, %v8259
        %v8261 = vrot.slane %v8256, 4
        %v8263 = vshrl.u32 %v8012, 16
        %v8265 = vrot.slane %v8263, 7
        %v8266 = vshll.u32 %v8012, 16
        %v8268 = vor.u32 %v8265, %v8266
        %v8269 = vsel %vm562, %v8261, %v8268
        %v8271 = vshrl.u32 %v8013, 16
        %v8273 = vrot.slane %v8271, 7
        %v8274 = vrot.slane %v8273, 4
        %v8276 = vshrl.u32 %v8014, 16
        %v8278 = vrot.slane %v8276, 7
        %v8279 = vshll.u32 %v8014, 16
        %v8281 = vor.u32 %v8278, %v8279
        %v8282 = vsel %vm562, %v8274, %v8281
        %v8283 = vrot.slane %v8278, 4
        %v8285 = vshrl.u32 %v8015, 16
        %v8287 = vrot.slane %v8285, 7
        %v8288 = vshll.u32 %v8015, 16
        %v8290 = vor.u32 %v8287, %v8288
        %v8291 = vsel %vm562, %v8283, %v8290
        %v8293 = vshrl.u32 %v8016, 16
        %v8295 = vrot.slane %v8293, 7
        %v8296 = vrot.slane %v8295, 4
        %v8298 = vshrl.u32 %v8017, 16
        %v8300 = vrot.slane %v8298, 7
        %v8301 = vshll.u32 %v8017, 16
        %v8303 = vor.u32 %v8300, %v8301
        %v8304 = vsel %vm562, %v8296, %v8303
        %v8305 = vrot.slane %v8300, 4
        %v8307 = vshrl.u32 %v8018, 16
        %v8309 = vrot.slane %v8307, 7
        %v8310 = vshll.u32 %v8018, 16
        %v8312 = vor.u32 %v8309, %v8310
        %v8313 = vsel %vm562, %v8305, %v8312
        %v8315 = vshrl.u32 %v8019, 16
        %v8317 = vrot.slane %v8315, 7
        %v8318 = vrot.slane %v8317, 4
        %v8320 = vshrl.u32 %v8020, 16
        %v8322 = vrot.slane %v8320, 7
        %v8323 = vshll.u32 %v8020, 16
        %v8325 = vor.u32 %v8322, %v8323
        %v8326 = vsel %vm562, %v8318, %v8325
        %v8327 = vrot.slane %v8322, 4
        %v8329 = vshrl.u32 %v8021, 16
        %v8331 = vrot.slane %v8329, 7
        %v8332 = vshll.u32 %v8021, 16
        %v8334 = vor.u32 %v8331, %v8332
        %v8335 = vsel %vm562, %v8327, %v8334
        %v8337 = vshrl.u32 %v8022, 16
        %v8339 = vrot.slane %v8337, 7
        %v8340 = vrot.slane %v8339, 4
        %v8342 = vshrl.u32 %v8023, 16
        %v8344 = vrot.slane %v8342, 7
        %v8345 = vshll.u32 %v8023, 16
        %v8347 = vor.u32 %v8344, %v8345
        %v8348 = vsel %vm562, %v8340, %v8347
        %v8349 = vrot.slane %v8344, 4
        %v8351 = vshrl.u32 %v8024, 16
        %v8353 = vrot.slane %v8351, 7
        %v8354 = vshll.u32 %v8024, 16
        %v8356 = vor.u32 %v8353, %v8354
        %v8357 = vsel %vm562, %v8349, %v8356
        %v8359 = vshrl.u32 %v8025, 16
        %v8361 = vrot.slane %v8359, 7
        %v8362 = vrot.slane %v8361, 4
        %v8364 = vshrl.u32 %v8026, 16
        %v8366 = vrot.slane %v8364, 7
        %v8367 = vshll.u32 %v8026, 16
        %v8369 = vor.u32 %v8366, %v8367
        %v8370 = vsel %vm562, %v8362, %v8369
        %v8371 = vrot.slane %v8366, 4
        %v8373 = vshrl.u32 %v8027, 16
        %v8375 = vrot.slane %v8373, 7
        %v8376 = vshll.u32 %v8027, 16
        %v8378 = vor.u32 %v8375, %v8376
        %v8379 = vsel %vm562, %v8371, %v8378
        %s8380 = scalar_lea.vmem [#allocation9], 192
        %v8381 = vld [vmem:[%s8380] sm:$0xf]
        %v8382 = vld [vmem:[%s8380 + $0x4] sm:$0xf]
        %v8383 = vld [vmem:[%s8380 + $0x8] sm:$0xf]
        %v8384 = vld [vmem:[%s8380 + $0xc] sm:$0xf]
        %v8385 = vld [vmem:[%s8380 + $0x10] sm:$0xf]
        %v8386 = vld [vmem:[%s8380 + $0x14] sm:$0xf]
        %v8387 = vld [vmem:[%s8380 + $0x18] sm:$0xf]
        %v8388 = vld [vmem:[%s8380 + $0x1c] sm:$0xf]
        %v8389 = vld [vmem:[%s8380 + $0x20] sm:$0xf]
        %v8390 = vld [vmem:[%s8380 + $0x24] sm:$0xf]
        %v8391 = vld [vmem:[%s8380 + $0x28] sm:$0xf]
        %v8392 = vld [vmem:[%s8380 + $0x2c] sm:$0xf]
        %v8393 = vld [vmem:[%s8380 + $0x30] sm:$0xf]
        %v8394 = vld [vmem:[%s8380 + $0x34] sm:$0xf]
        %v8395 = vld [vmem:[%s8380 + $0x38] sm:$0xf]
        %v8396 = vld [vmem:[%s8380 + $0x3c] sm:$0xf]
        %v8397 = vunpack.c.l.b16 %v8040
        %v8398 = vunpack.c.l.b16 %v8049
        %v8399 = vunpack.c.l.b16 %v8062
        %v8400 = vunpack.c.l.b16 %v8071
        %v8401 = vunpack.c.l.b16 %v8084
        %v8402 = vunpack.c.l.b16 %v8093
        %v8403 = vunpack.c.l.b16 %v8106
        %v8404 = vunpack.c.l.b16 %v8115
        %v8405 = vunpack.c.l.b16 %v8128
        %v8406 = vunpack.c.l.b16 %v8137
        %v8407 = vunpack.c.l.b16 %v8150
        %v8408 = vunpack.c.l.b16 %v8159
        %v8409 = vunpack.c.l.b16 %v8172
        %v8410 = vunpack.c.l.b16 %v8181
        %v8411 = vunpack.c.l.b16 %v8194
        %v8412 = vunpack.c.l.b16 %v8203
        %v8413 = vunpack.c.l.b16 %v8216
        %v8414 = vunpack.c.l.b16 %v8225
        %v8415 = vunpack.c.l.b16 %v8238
        %v8416 = vunpack.c.l.b16 %v8247
        %v8417 = vunpack.c.l.b16 %v8260
        %v8418 = vunpack.c.l.b16 %v8269
        %v8419 = vunpack.c.l.b16 %v8282
        %v8420 = vunpack.c.l.b16 %v8291
        %v8421 = vunpack.c.l.b16 %v8304
        %v8422 = vunpack.c.l.b16 %v8313
        %v8423 = vunpack.c.l.b16 %v8326
        %v8424 = vunpack.c.l.b16 %v8335
        %v8425 = vunpack.c.l.b16 %v8348
        %v8426 = vunpack.c.l.b16 %v8357
        %v8427 = vunpack.c.l.b16 %v8370
        %v8428 = vunpack.c.l.b16 %v8379
        %v8429 = vpack.c.b16 %v8398, %v8397
        %v8430 = vpack.c.b16 %v8400, %v8399
        %v8431 = vpack.c.b16 %v8402, %v8401
        %v8432 = vpack.c.b16 %v8404, %v8403
        %v8433 = vpack.c.b16 %v8406, %v8405
        %v8434 = vpack.c.b16 %v8408, %v8407
        %v8435 = vpack.c.b16 %v8410, %v8409
        %v8436 = vpack.c.b16 %v8412, %v8411
        %v8437 = vpack.c.b16 %v8414, %v8413
        %v8438 = vpack.c.b16 %v8416, %v8415
        %v8439 = vpack.c.b16 %v8418, %v8417
        %v8440 = vpack.c.b16 %v8420, %v8419
        %v8441 = vpack.c.b16 %v8422, %v8421
        %v8442 = vpack.c.b16 %v8424, %v8423
        %v8443 = vpack.c.b16 %v8426, %v8425
        %v8444 = vpack.c.b16 %v8428, %v8427
        %v8477 = vunpack.c.l.b16 %v8381
        %v8478 = vunpack.c.l.b16 %v8382
        %v8479 = vunpack.c.l.b16 %v8383
        %v8480 = vunpack.c.l.b16 %v8384
        %v8481 = vunpack.c.l.b16 %v8385
        %v8482 = vunpack.c.l.b16 %v8386
        %v8483 = vunpack.c.l.b16 %v8387
        %v8484 = vunpack.c.l.b16 %v8388
        %v8485 = vunpack.c.l.b16 %v8389
        %v8486 = vunpack.c.l.b16 %v8390
        %v8487 = vunpack.c.l.b16 %v8391
        %v8488 = vunpack.c.l.b16 %v8392
        %v8489 = vunpack.c.l.b16 %v8393
        %v8490 = vunpack.c.l.b16 %v8394
        %v8491 = vunpack.c.l.b16 %v8395
        %v8492 = vunpack.c.l.b16 %v8396
        %v8493 = vpack.c.b16 %v8478, %v8477
        %v8494 = vpack.c.b16 %v8480, %v8479
        %v8495 = vpack.c.b16 %v8482, %v8481
        %v8496 = vpack.c.b16 %v8484, %v8483
        %v8497 = vpack.c.b16 %v8486, %v8485
        %v8498 = vpack.c.b16 %v8488, %v8487
        %v8499 = vpack.c.b16 %v8490, %v8489
        %v8500 = vpack.c.b16 %v8492, %v8491
        %8509 = vmatprep.subr.bf16.mxu0 0
        %8510 = vmatpush1.bf16.msra.mxu0 %v8493
        %8511 = vmatprep.subr.bf16.mxu0 0
        %8512 = vmatpush1.bf16.msra.mxu0 %v8494
        %8513 = vmatprep.subr.bf16.mxu0 0
        %8514 = vmatpush1.bf16.msra.mxu0 %v8495
        %8515 = vmatprep.subr.bf16.mxu0 0
        %8516 = vmatpush1.bf16.msra.mxu0 %v8496
        %8517 = vmatprep.subr.bf16.mxu0 0
        %8518 = vmatpush1.bf16.msra.mxu0 %v8497
        %8519 = vmatprep.subr.bf16.mxu0 0
        %8520 = vmatpush1.bf16.msra.mxu0 %v8498
        %8521 = vmatprep.subr.bf16.mxu0 0
        %8522 = vmatpush1.bf16.msra.mxu0 %v8499
        %8523 = vmatprep.subr.bf16.mxu0 0
        %8524 = vmatpush1.bf16.msra.mxu0 %v8500
        %8525 = vmatprep.subr.bf16.mxu0 0
        %8526 = vmatpush1.bf16.msra.mxu0 0
        %8527 = vmatprep.subr.bf16.mxu0 0
        %8528 = vmatpush1.bf16.msra.mxu0 0
        %8529 = vmatprep.subr.bf16.mxu0 0
        %8530 = vmatpush1.bf16.msra.mxu0 0
        %8531 = vmatprep.subr.bf16.mxu0 0
        %8532 = vmatpush1.bf16.msra.mxu0 0
        %8533 = vmatprep.subr.bf16.mxu0 0
        %8534 = vmatpush1.bf16.msra.mxu0 0
        %8535 = vmatprep.subr.bf16.mxu0 0
        %8536 = vmatpush1.bf16.msra.mxu0 0
        %8537 = vmatprep.subr.bf16.mxu0 0
        %8538 = vmatpush1.bf16.msra.mxu0 0
        %8539 = vmatprep.subr.bf16.mxu0 0
        %8540 = vmatpush1.bf16.msra.mxu0 0
        %8541 = vmatprep.mubr.bf16.mxu0 0
        %8542 = vmatmul.mubr.bf16.gmra.mrb[0].mxu0 %v8429
        %v8543 = vpop.f32.mrb[0].mxu0
        %v8544 = vadd.f32 0.0, %v8543
        %v8545 = vpop.f32.mrb[0].mxu0
        %v8546 = vpop.f32.mrb[0].mxu0
        %v8547 = vadd.f32 0.0, %v8546
        %v8548 = vpop.f32.mrb[0].mxu0
        %8549 = vmatprep.mubr.bf16.mxu0 0
        %8550 = vmatmul.mubr.bf16.gmra.mrb[0].mxu0 %v8430
        %v8551 = vpop.f32.mrb[0].mxu0
        %v8552 = vadd.f32 0.0, %v8551
        %v8553 = vpop.f32.mrb[0].mxu0
        %v8554 = vpop.f32.mrb[0].mxu0
        %v8555 = vadd.f32 0.0, %v8554
        %v8556 = vpop.f32.mrb[0].mxu0
        %8557 = vmatprep.mubr.bf16.mxu0 0
        %8558 = vmatmul.mubr.bf16.gmra.mrb[0].mxu0 %v8431
        %v8559 = vpop.f32.mrb[0].mxu0
        %v8560 = vadd.f32 0.0, %v8559
        %v8561 = vpop.f32.mrb[0].mxu0
        %v8562 = vpop.f32.mrb[0].mxu0
        %v8563 = vadd.f32 0.0, %v8562
        %v8564 = vpop.f32.mrb[0].mxu0
        %8565 = vmatprep.mubr.bf16.mxu0 0
        %8566 = vmatmul.mubr.bf16.gmra.mrb[0].mxu0 %v8432
        %v8567 = vpop.f32.mrb[0].mxu0
        %v8568 = vadd.f32 0.0, %v8567
        %v8569 = vpop.f32.mrb[0].mxu0
        %v8570 = vpop.f32.mrb[0].mxu0
        %v8571 = vadd.f32 0.0, %v8570
        %v8572 = vpop.f32.mrb[0].mxu0
        %8573 = vmatprep.mubr.bf16.mxu0 0
        %8574 = vmatmul.mubr.bf16.gmra.mrb[0].mxu0 %v8433
        %v8575 = vpop.f32.mrb[0].mxu0
        %v8576 = vadd.f32 0.0, %v8575
        %v8577 = vpop.f32.mrb[0].mxu0
        %v8578 = vpop.f32.mrb[0].mxu0
        %v8579 = vadd.f32 0.0, %v8578
        %v8580 = vpop.f32.mrb[0].mxu0
        %8581 = vmatprep.mubr.bf16.mxu0 0
        %8582 = vmatmul.mubr.bf16.gmra.mrb[0].mxu0 %v8434
        %v8583 = vpop.f32.mrb[0].mxu0
        %v8584 = vadd.f32 0.0, %v8583
        %v8585 = vpop.f32.mrb[0].mxu0
        %v8586 = vpop.f32.mrb[0].mxu0
        %v8587 = vadd.f32 0.0, %v8586
        %v8588 = vpop.f32.mrb[0].mxu0
        %8589 = vmatprep.mubr.bf16.mxu0 0
        %8590 = vmatmul.mubr.bf16.gmra.mrb[0].mxu0 %v8435
        %v8591 = vpop.f32.mrb[0].mxu0
        %v8592 = vadd.f32 0.0, %v8591
        %v8593 = vpop.f32.mrb[0].mxu0
        %v8594 = vpop.f32.mrb[0].mxu0
        %v8595 = vadd.f32 0.0, %v8594
        %v8596 = vpop.f32.mrb[0].mxu0
        %8597 = vmatprep.mubr.bf16.mxu0 0
        %8598 = vmatmul.mubr.bf16.gmra.mrb[0].mxu0 %v8436
        %v8599 = vpop.f32.mrb[0].mxu0
        %v8600 = vadd.f32 0.0, %v8599
        %v8601 = vpop.f32.mrb[0].mxu0
        %v8602 = vpop.f32.mrb[0].mxu0
        %v8603 = vadd.f32 0.0, %v8602
        %v8604 = vpop.f32.mrb[0].mxu0
        %8605 = vmatprep.mubr.bf16.mxu0 0
        %8606 = vmatmul.mubr.bf16.gmra.mrb[0].mxu0 %v8437
        %v8607 = vpop.f32.mrb[0].mxu0
        %v8608 = vadd.f32 0.0, %v8607
        %v8609 = vpop.f32.mrb[0].mxu0
        %v8610 = vpop.f32.mrb[0].mxu0
        %v8611 = vadd.f32 0.0, %v8610
        %v8612 = vpop.f32.mrb[0].mxu0
        %8613 = vmatprep.mubr.bf16.mxu0 0
        %8614 = vmatmul.mubr.bf16.gmra.mrb[0].mxu0 %v8438
        %v8615 = vpop.f32.mrb[0].mxu0
        %v8616 = vadd.f32 0.0, %v8615
        %v8617 = vpop.f32.mrb[0].mxu0
        %v8618 = vpop.f32.mrb[0].mxu0
        %v8619 = vadd.f32 0.0, %v8618
        %v8620 = vpop.f32.mrb[0].mxu0
        %8621 = vmatprep.mubr.bf16.mxu0 0
        %8622 = vmatmul.mubr.bf16.gmra.mrb[0].mxu0 %v8439
        %v8623 = vpop.f32.mrb[0].mxu0
        %v8624 = vadd.f32 0.0, %v8623
        %v8625 = vpop.f32.mrb[0].mxu0
        %v8626 = vpop.f32.mrb[0].mxu0
        %v8627 = vadd.f32 0.0, %v8626
        %v8628 = vpop.f32.mrb[0].mxu0
        %8629 = vmatprep.mubr.bf16.mxu0 0
        %8630 = vmatmul.mubr.bf16.gmra.mrb[0].mxu0 %v8440
        %v8631 = vpop.f32.mrb[0].mxu0
        %v8632 = vadd.f32 0.0, %v8631
        %v8633 = vpop.f32.mrb[0].mxu0
        %v8634 = vpop.f32.mrb[0].mxu0
        %v8635 = vadd.f32 0.0, %v8634
        %v8636 = vpop.f32.mrb[0].mxu0
        %8637 = vmatprep.mubr.bf16.mxu0 0
        %8638 = vmatmul.mubr.bf16.gmra.mrb[0].mxu0 %v8441
        %v8639 = vpop.f32.mrb[0].mxu0
        %v8640 = vadd.f32 0.0, %v8639
        %v8641 = vpop.f32.mrb[0].mxu0
        %v8642 = vpop.f32.mrb[0].mxu0
        %v8643 = vadd.f32 0.0, %v8642
        %v8644 = vpop.f32.mrb[0].mxu0
        %8645 = vmatprep.mubr.bf16.mxu0 0
        %8646 = vmatmul.mubr.bf16.gmra.mrb[0].mxu0 %v8442
        %v8647 = vpop.f32.mrb[0].mxu0
        %v8648 = vadd.f32 0.0, %v8647
        %v8649 = vpop.f32.mrb[0].mxu0
        %v8650 = vpop.f32.mrb[0].mxu0
        %v8651 = vadd.f32 0.0, %v8650
        %v8652 = vpop.f32.mrb[0].mxu0
        %8653 = vmatprep.mubr.bf16.mxu0 0
        %8654 = vmatmul.mubr.bf16.gmra.mrb[0].mxu0 %v8443
        %v8655 = vpop.f32.mrb[0].mxu0
        %v8656 = vadd.f32 0.0, %v8655
        %v8657 = vpop.f32.mrb[0].mxu0
        %v8658 = vpop.f32.mrb[0].mxu0
        %v8659 = vadd.f32 0.0, %v8658
        %v8660 = vpop.f32.mrb[0].mxu0
        %8661 = vmatprep.mubr.bf16.mxu0 0
        %8662 = vmatmul.mubr.bf16.gmra.mrb[0].mxu0 %v8444
        %v8663 = vpop.f32.mrb[0].mxu0
        %v8664 = vadd.f32 0.0, %v8663
        %v8665 = vpop.f32.mrb[0].mxu0
        %v8666 = vpop.f32.mrb[0].mxu0
        %v8667 = vadd.f32 0.0, %v8666
        %v8668 = vpop.f32.mrb[0].mxu0
        %8669 = vdwg.mxu0
        %v8670 = vadd.f32 %v7948, %v8544
        %v8671 = vadd.f32 %v7949, %v8547
        %v8672 = vadd.f32 %v7950, %v8552
        %v8673 = vadd.f32 %v7951, %v8555
        %v8674 = vadd.f32 %v7952, %v8560
        %v8675 = vadd.f32 %v7953, %v8563
        %v8676 = vadd.f32 %v7954, %v8568
        %v8677 = vadd.f32 %v7955, %v8571
        %v8678 = vadd.f32 %v7956, %v8576
        %v8679 = vadd.f32 %v7957, %v8579
        %v8680 = vadd.f32 %v7958, %v8584
        %v8681 = vadd.f32 %v7959, %v8587
        %v8682 = vadd.f32 %v7960, %v8592
        %v8683 = vadd.f32 %v7961, %v8595
        %v8684 = vadd.f32 %v7962, %v8600
        %v8685 = vadd.f32 %v7963, %v8603
        %v8686 = vadd.f32 %v7964, %v8608
        %v8687 = vadd.f32 %v7965, %v8611
        %v8688 = vadd.f32 %v7966, %v8616
        %v8689 = vadd.f32 %v7967, %v8619
        %v8690 = vadd.f32 %v7968, %v8624
        %v8691 = vadd.f32 %v7969, %v8627
        %v8692 = vadd.f32 %v7970, %v8632
        %v8693 = vadd.f32 %v7971, %v8635
        %v8694 = vadd.f32 %v7972, %v8640
        %v8695 = vadd.f32 %v7973, %v8643
        %v8696 = vadd.f32 %v7974, %v8648
        %v8697 = vadd.f32 %v7975, %v8651
        %v8698 = vadd.f32 %v7976, %v8656
        %v8699 = vadd.f32 %v7977, %v8659
        %v8700 = vadd.f32 %v7978, %v8664
        %v8701 = vadd.f32 %v7979, %v8667
        %s8702 = scalar_lea.vmem [#allocation9], 256
        %v8703 = vld [vmem:[%s8702] sm:$0xf]
        %v8704 = vld [vmem:[%s8702 + $0x4] sm:$0xf]
        %v8705 = vld [vmem:[%s8702 + $0x8] sm:$0xf]
        %v8706 = vld [vmem:[%s8702 + $0xc] sm:$0xf]
        %v8707 = vld [vmem:[%s8702 + $0x10] sm:$0xf]
        %v8708 = vld [vmem:[%s8702 + $0x14] sm:$0xf]
        %v8709 = vld [vmem:[%s8702 + $0x18] sm:$0xf]
        %v8710 = vld [vmem:[%s8702 + $0x1c] sm:$0xf]
        %v8711 = vld [vmem:[%s8702 + $0x20] sm:$0xf]
        %v8712 = vld [vmem:[%s8702 + $0x24] sm:$0xf]
        %v8713 = vld [vmem:[%s8702 + $0x28] sm:$0xf]
        %v8714 = vld [vmem:[%s8702 + $0x2c] sm:$0xf]
        %v8715 = vld [vmem:[%s8702 + $0x30] sm:$0xf]
        %v8716 = vld [vmem:[%s8702 + $0x34] sm:$0xf]
        %v8717 = vld [vmem:[%s8702 + $0x38] sm:$0xf]
        %v8718 = vld [vmem:[%s8702 + $0x3c] sm:$0xf]
        %v8751 = vunpack.c.l.b16 %v7981
        %v8752 = vunpack.c.l.b16 %v7982
        %v8753 = vunpack.c.l.b16 %v7984
        %v8754 = vunpack.c.l.b16 %v7985
        %v8755 = vunpack.c.l.b16 %v7987
        %v8756 = vunpack.c.l.b16 %v7988
        %v8757 = vunpack.c.l.b16 %v7990
        %v8758 = vunpack.c.l.b16 %v7991
        %v8759 = vunpack.c.l.b16 %v7993
        %v8760 = vunpack.c.l.b16 %v7994
        %v8761 = vunpack.c.l.b16 %v7996
        %v8762 = vunpack.c.l.b16 %v7997
        %v8763 = vunpack.c.l.b16 %v7999
        %v8764 = vunpack.c.l.b16 %v8000
        %v8765 = vunpack.c.l.b16 %v8002
        %v8766 = vunpack.c.l.b16 %v8003
        %v8767 = vunpack.c.l.b16 %v8005
        %v8768 = vunpack.c.l.b16 %v8006
        %v8769 = vunpack.c.l.b16 %v8008
        %v8770 = vunpack.c.l.b16 %v8009
        %v8771 = vunpack.c.l.b16 %v8011
        %v8772 = vunpack.c.l.b16 %v8012
        %v8773 = vunpack.c.l.b16 %v8014
        %v8774 = vunpack.c.l.b16 %v8015
        %v8775 = vunpack.c.l.b16 %v8017
        %v8776 = vunpack.c.l.b16 %v8018
        %v8777 = vunpack.c.l.b16 %v8020
        %v8778 = vunpack.c.l.b16 %v8021
        %v8779 = vunpack.c.l.b16 %v8023
        %v8780 = vunpack.c.l.b16 %v8024
        %v8781 = vunpack.c.l.b16 %v8026
        %v8782 = vunpack.c.l.b16 %v8027
        %v8783 = vpack.c.b16 %v8752, %v8751
        %v8784 = vpack.c.b16 %v8754, %v8753
        %v8785 = vpack.c.b16 %v8756, %v8755
        %v8786 = vpack.c.b16 %v8758, %v8757
        %v8787 = vpack.c.b16 %v8760, %v8759
        %v8788 = vpack.c.b16 %v8762, %v8761
        %v8789 = vpack.c.b16 %v8764, %v8763
        %v8790 = vpack.c.b16 %v8766, %v8765
        %v8791 = vpack.c.b16 %v8768, %v8767
        %v8792 = vpack.c.b16 %v8770, %v8769
        %v8793 = vpack.c.b16 %v8772, %v8771
        %v8794 = vpack.c.b16 %v8774, %v8773
        %v8795 = vpack.c.b16 %v8776, %v8775
        %v8796 = vpack.c.b16 %v8778, %v8777
        %v8797 = vpack.c.b16 %v8780, %v8779
        %v8798 = vpack.c.b16 %v8782, %v8781
        %v8831 = vunpack.c.l.b16 %v8703
        %v8832 = vunpack.c.l.b16 %v8704
        %v8833 = vunpack.c.l.b16 %v8705
        %v8834 = vunpack.c.l.b16 %v8706
        %v8835 = vunpack.c.l.b16 %v8707
        %v8836 = vunpack.c.l.b16 %v8708
        %v8837 = vunpack.c.l.b16 %v8709
        %v8838 = vunpack.c.l.b16 %v8710
        %v8839 = vunpack.c.l.b16 %v8711
        %v8840 = vunpack.c.l.b16 %v8712
        %v8841 = vunpack.c.l.b16 %v8713
        %v8842 = vunpack.c.l.b16 %v8714
        %v8843 = vunpack.c.l.b16 %v8715
        %v8844 = vunpack.c.l.b16 %v8716
        %v8845 = vunpack.c.l.b16 %v8717
        %v8846 = vunpack.c.l.b16 %v8718
        %v8847 = vpack.c.b16 %v8832, %v8831
        %v8848 = vpack.c.b16 %v8834, %v8833
        %v8849 = vpack.c.b16 %v8836, %v8835
        %v8850 = vpack.c.b16 %v8838, %v8837
        %v8851 = vpack.c.b16 %v8840, %v8839
        %v8852 = vpack.c.b16 %v8842, %v8841
        %v8853 = vpack.c.b16 %v8844, %v8843
        %v8854 = vpack.c.b16 %v8846, %v8845
        %8863 = vmatprep.subr.bf16.mxu0 0
        %8864 = vmatpush1.bf16.msra.mxu0 %v8847
        %8865 = vmatprep.subr.bf16.mxu0 0
        %8866 = vmatpush1.bf16.msra.mxu0 %v8848
        %8867 = vmatprep.subr.bf16.mxu0 0
        %8868 = vmatpush1.bf16.msra.mxu0 %v8849
        %8869 = vmatprep.subr.bf16.mxu0 0
        %8870 = vmatpush1.bf16.msra.mxu0 %v8850
        %8871 = vmatprep.subr.bf16.mxu0 0
        %8872 = vmatpush1.bf16.msra.mxu0 %v8851
        %8873 = vmatprep.subr.bf16.mxu0 0
        %8874 = vmatpush1.bf16.msra.mxu0 %v8852
        %8875 = vmatprep.subr.bf16.mxu0 0
        %8876 = vmatpush1.bf16.msra.mxu0 %v8853
        %8877 = vmatprep.subr.bf16.mxu0 0
        %8878 = vmatpush1.bf16.msra.mxu0 %v8854
        %8879 = vmatprep.subr.bf16.mxu0 0
        %8880 = vmatpush1.bf16.msra.mxu0 0
        %8881 = vmatprep.subr.bf16.mxu0 0
        %8882 = vmatpush1.bf16.msra.mxu0 0
        %8883 = vmatprep.subr.bf16.mxu0 0
        %8884 = vmatpush1.bf16.msra.mxu0 0
        %8885 = vmatprep.subr.bf16.mxu0 0
        %8886 = vmatpush1.bf16.msra.mxu0 0
        %8887 = vmatprep.subr.bf16.mxu0 0
        %8888 = vmatpush1.bf16.msra.mxu0 0
        %8889 = vmatprep.subr.bf16.mxu0 0
        %8890 = vmatpush1.bf16.msra.mxu0 0
        %8891 = vmatprep.subr.bf16.mxu0 0
        %8892 = vmatpush1.bf16.msra.mxu0 0
        %8893 = vmatprep.subr.bf16.mxu0 0
        %8894 = vmatpush1.bf16.msra.mxu0 0
        %8895 = vmatprep.mubr.bf16.mxu0 0
        %8896 = vmatmul.mubr.bf16.gmra.mrb[0].mxu0 %v8783
        %v8897 = vpop.f32.mrb[0].mxu0
        %v8898 = vadd.f32 0.0, %v8897
        %v8899 = vpop.f32.mrb[0].mxu0
        %v8900 = vpop.f32.mrb[0].mxu0
        %v8901 = vadd.f32 0.0, %v8900
        %v8902 = vpop.f32.mrb[0].mxu0
        %8903 = vmatprep.mubr.bf16.mxu0 0
        %8904 = vmatmul.mubr.bf16.gmra.mrb[0].mxu0 %v8784
        %v8905 = vpop.f32.mrb[0].mxu0
        %v8906 = vadd.f32 0.0, %v8905
        %v8907 = vpop.f32.mrb[0].mxu0
        %v8908 = vpop.f32.mrb[0].mxu0
        %v8909 = vadd.f32 0.0, %v8908
        %v8910 = vpop.f32.mrb[0].mxu0
        %8911 = vmatprep.mubr.bf16.mxu0 0
        %8912 = vmatmul.mubr.bf16.gmra.mrb[0].mxu0 %v8785
        %v8913 = vpop.f32.mrb[0].mxu0
        %v8914 = vadd.f32 0.0, %v8913
        %v8915 = vpop.f32.mrb[0].mxu0
        %v8916 = vpop.f32.mrb[0].mxu0
        %v8917 = vadd.f32 0.0, %v8916
        %v8918 = vpop.f32.mrb[0].mxu0
        %8919 = vmatprep.mubr.bf16.mxu0 0
        %8920 = vmatmul.mubr.bf16.gmra.mrb[0].mxu0 %v8786
        %v8921 = vpop.f32.mrb[0].mxu0
        %v8922 = vadd.f32 0.0, %v8921
        %v8923 = vpop.f32.mrb[0].mxu0
        %v8924 = vpop.f32.mrb[0].mxu0
        %v8925 = vadd.f32 0.0, %v8924
        %v8926 = vpop.f32.mrb[0].mxu0
        %8927 = vmatprep.mubr.bf16.mxu0 0
        %8928 = vmatmul.mubr.bf16.gmra.mrb[0].mxu0 %v8787
        %v8929 = vpop.f32.mrb[0].mxu0
        %v8930 = vadd.f32 0.0, %v8929
        %v8931 = vpop.f32.mrb[0].mxu0
        %v8932 = vpop.f32.mrb[0].mxu0
        %v8933 = vadd.f32 0.0, %v8932
        %v8934 = vpop.f32.mrb[0].mxu0
        %8935 = vmatprep.mubr.bf16.mxu0 0
        %8936 = vmatmul.mubr.bf16.gmra.mrb[0].mxu0 %v8788
        %v8937 = vpop.f32.mrb[0].mxu0
        %v8938 = vadd.f32 0.0, %v8937
        %v8939 = vpop.f32.mrb[0].mxu0
        %v8940 = vpop.f32.mrb[0].mxu0
        %v8941 = vadd.f32 0.0, %v8940
        %v8942 = vpop.f32.mrb[0].mxu0
        %8943 = vmatprep.mubr.bf16.mxu0 0
        %8944 = vmatmul.mubr.bf16.gmra.mrb[0].mxu0 %v8789
        %v8945 = vpop.f32.mrb[0].mxu0
        %v8946 = vadd.f32 0.0, %v8945
        %v8947 = vpop.f32.mrb[0].mxu0
        %v8948 = vpop.f32.mrb[0].mxu0
        %v8949 = vadd.f32 0.0, %v8948
        %v8950 = vpop.f32.mrb[0].mxu0
        %8951 = vmatprep.mubr.bf16.mxu0 0
        %8952 = vmatmul.mubr.bf16.gmra.mrb[0].mxu0 %v8790
        %v8953 = vpop.f32.mrb[0].mxu0
        %v8954 = vadd.f32 0.0, %v8953
        %v8955 = vpop.f32.mrb[0].mxu0
        %v8956 = vpop.f32.mrb[0].mxu0
        %v8957 = vadd.f32 0.0, %v8956
        %v8958 = vpop.f32.mrb[0].mxu0
        %8959 = vmatprep.mubr.bf16.mxu0 0
        %8960 = vmatmul.mubr.bf16.gmra.mrb[0].mxu0 %v8791
        %v8961 = vpop.f32.mrb[0].mxu0
        %v8962 = vadd.f32 0.0, %v8961
        %v8963 = vpop.f32.mrb[0].mxu0
        %v8964 = vpop.f32.mrb[0].mxu0
        %v8965 = vadd.f32 0.0, %v8964
        %v8966 = vpop.f32.mrb[0].mxu0
        %8967 = vmatprep.mubr.bf16.mxu0 0
        %8968 = vmatmul.mubr.bf16.gmra.mrb[0].mxu0 %v8792
        %v8969 = vpop.f32.mrb[0].mxu0
        %v8970 = vadd.f32 0.0, %v8969
        %v8971 = vpop.f32.mrb[0].mxu0
        %v8972 = vpop.f32.mrb[0].mxu0
        %v8973 = vadd.f32 0.0, %v8972
        %v8974 = vpop.f32.mrb[0].mxu0
        %8975 = vmatprep.mubr.bf16.mxu0 0
        %8976 = vmatmul.mubr.bf16.gmra.mrb[0].mxu0 %v8793
        %v8977 = vpop.f32.mrb[0].mxu0
        %v8978 = vadd.f32 0.0, %v8977
        %v8979 = vpop.f32.mrb[0].mxu0
        %v8980 = vpop.f32.mrb[0].mxu0
        %v8981 = vadd.f32 0.0, %v8980
        %v8982 = vpop.f32.mrb[0].mxu0
        %8983 = vmatprep.mubr.bf16.mxu0 0
        %8984 = vmatmul.mubr.bf16.gmra.mrb[0].mxu0 %v8794
        %v8985 = vpop.f32.mrb[0].mxu0
        %v8986 = vadd.f32 0.0, %v8985
        %v8987 = vpop.f32.mrb[0].mxu0
        %v8988 = vpop.f32.mrb[0].mxu0
        %v8989 = vadd.f32 0.0, %v8988
        %v8990 = vpop.f32.mrb[0].mxu0
        %8991 = vmatprep.mubr.bf16.mxu0 0
        %8992 = vmatmul.mubr.bf16.gmra.mrb[0].mxu0 %v8795
        %v8993 = vpop.f32.mrb[0].mxu0
        %v8994 = vadd.f32 0.0, %v8993
        %v8995 = vpop.f32.mrb[0].mxu0
        %v8996 = vpop.f32.mrb[0].mxu0
        %v8997 = vadd.f32 0.0, %v8996
        %v8998 = vpop.f32.mrb[0].mxu0
        %8999 = vmatprep.mubr.bf16.mxu0 0
        %9000 = vmatmul.mubr.bf16.gmra.mrb[0].mxu0 %v8796
        %v9001 = vpop.f32.mrb[0].mxu0
        %v9002 = vadd.f32 0.0, %v9001
        %v9003 = vpop.f32.mrb[0].mxu0
        %v9004 = vpop.f32.mrb[0].mxu0
        %v9005 = vadd.f32 0.0, %v9004
        %v9006 = vpop.f32.mrb[0].mxu0
        %9007 = vmatprep.mubr.bf16.mxu0 0
        %9008 = vmatmul.mubr.bf16.gmra.mrb[0].mxu0 %v8797
        %v9009 = vpop.f32.mrb[0].mxu0
        %v9010 = vadd.f32 0.0, %v9009
        %v9011 = vpop.f32.mrb[0].mxu0
        %v9012 = vpop.f32.mrb[0].mxu0
        %v9013 = vadd.f32 0.0, %v9012
        %v9014 = vpop.f32.mrb[0].mxu0
        %9015 = vmatprep.mubr.bf16.mxu0 0
        %9016 = vmatmul.mubr.bf16.gmra.mrb[0].mxu0 %v8798
        %v9017 = vpop.f32.mrb[0].mxu0
        %v9018 = vadd.f32 0.0, %v9017
        %v9019 = vpop.f32.mrb[0].mxu0
        %v9020 = vpop.f32.mrb[0].mxu0
        %v9021 = vadd.f32 0.0, %v9020
        %v9022 = vpop.f32.mrb[0].mxu0
        %9023 = vdwg.mxu0
        %v9024 = vadd.f32 %v8670, %v8898
        %v9025 = vadd.f32 %v8671, %v8901
        %v9026 = vadd.f32 %v8672, %v8906
        %v9027 = vadd.f32 %v8673, %v8909
        %v9028 = vadd.f32 %v8674, %v8914
        %v9029 = vadd.f32 %v8675, %v8917
        %v9030 = vadd.f32 %v8676, %v8922
        %v9031 = vadd.f32 %v8677, %v8925
        %v9032 = vadd.f32 %v8678, %v8930
        %v9033 = vadd.f32 %v8679, %v8933
        %v9034 = vadd.f32 %v8680, %v8938
        %v9035 = vadd.f32 %v8681, %v8941
        %v9036 = vadd.f32 %v8682, %v8946
        %v9037 = vadd.f32 %v8683, %v8949
        %v9038 = vadd.f32 %v8684, %v8954
        %v9039 = vadd.f32 %v8685, %v8957
        %v9040 = vadd.f32 %v8686, %v8962
        %v9041 = vadd.f32 %v8687, %v8965
        %v9042 = vadd.f32 %v8688, %v8970
        %v9043 = vadd.f32 %v8689, %v8973
        %v9044 = vadd.f32 %v8690, %v8978
        %v9045 = vadd.f32 %v8691, %v8981
        %v9046 = vadd.f32 %v8692, %v8986
        %v9047 = vadd.f32 %v8693, %v8989
        %v9048 = vadd.f32 %v8694, %v8994
        %v9049 = vadd.f32 %v8695, %v8997
        %v9050 = vadd.f32 %v8696, %v9002
        %v9051 = vadd.f32 %v8697, %v9005
        %v9052 = vadd.f32 %v8698, %v9010
        %v9053 = vadd.f32 %v8699, %v9013
        %v9054 = vadd.f32 %v8700, %v9018
        %v9055 = vadd.f32 %v8701, %v9021
        %v9056 = vld [vmem:[%s6180 + $0x8] sm:$0xf]
        %v9057 = vld [vmem:[%s6180 + $0xc] sm:$0xf]
        %v9058 = vld [vmem:[%s6180 + $0x10] sm:$0x1]
        %v9059 = vld [vmem:[%s6180 + $0x1c] sm:$0xf]
        %v9060 = vld [vmem:[%s6180 + $0x20] sm:$0xf]
        %v9061 = vld [vmem:[%s6180 + $0x24] sm:$0x1]
        %v9062 = vld [vmem:[%s6180 + $0x30] sm:$0xf]
        %v9063 = vld [vmem:[%s6180 + $0x34] sm:$0xf]
        %v9064 = vld [vmem:[%s6180 + $0x38] sm:$0x1]
        %v9065 = vld [vmem:[%s6180 + $0x44] sm:$0xf]
        %v9066 = vld [vmem:[%s6180 + $0x48] sm:$0xf]
        %v9067 = vld [vmem:[%s6180 + $0x4c] sm:$0x1]
        %v9068 = vld [vmem:[%s6180 + $0x58] sm:$0xf]
        %v9069 = vld [vmem:[%s6180 + $0x5c] sm:$0xf]
        %v9070 = vld [vmem:[%s6180 + $0x60] sm:$0x1]
        %v9071 = vld [vmem:[%s6180 + $0x6c] sm:$0xf]
        %v9072 = vld [vmem:[%s6180 + $0x70] sm:$0xf]
        %v9073 = vld [vmem:[%s6180 + $0x74] sm:$0x1]
        %v9074 = vld [vmem:[%s6180 + $0x80] sm:$0xf]
        %v9075 = vld [vmem:[%s6180 + $0x84] sm:$0xf]
        %v9076 = vld [vmem:[%s6180 + $0x88] sm:$0x1]
        %v9077 = vld [vmem:[%s6180 + $0x94] sm:$0xf]
        %v9078 = vld [vmem:[%s6180 + $0x98] sm:$0xf]
        %v9079 = vld [vmem:[%s6180 + $0x9c] sm:$0x1]
        %v9080 = vld [vmem:[%s6180 + $0xa8] sm:$0xf]
        %v9081 = vld [vmem:[%s6180 + $0xac] sm:$0xf]
        %v9082 = vld [vmem:[%s6180 + $0xb0] sm:$0x1]
        %v9083 = vld [vmem:[%s6180 + $0xbc] sm:$0xf]
        %v9084 = vld [vmem:[%s6180 + $0xc0] sm:$0xf]
        %v9085 = vld [vmem:[%s6180 + $0xc4] sm:$0x1]
        %v9086 = vld [vmem:[%s6180 + $0xd0] sm:$0xf]
        %v9087 = vld [vmem:[%s6180 + $0xd4] sm:$0xf]
        %v9088 = vld [vmem:[%s6180 + $0xd8] sm:$0x1]
        %v9089 = vld [vmem:[%s6180 + $0xe4] sm:$0xf]
        %v9090 = vld [vmem:[%s6180 + $0xe8] sm:$0xf]
        %v9091 = vld [vmem:[%s6180 + $0xec] sm:$0x1]
        %v9092 = vld [vmem:[%s6180 + $0xf8] sm:$0xf]
        %v9093 = vld [vmem:[%s6180 + $0xfc] sm:$0xf]
        %v9094 = vld [vmem:[%s6180 + $0x100] sm:$0x1]
        %v9095 = vld [vmem:[%s6180 + $0x10c] sm:$0xf]
        %v9096 = vld [vmem:[%s6180 + $0x110] sm:$0xf]
        %v9097 = vld [vmem:[%s6180 + $0x114] sm:$0x1]
        %v9098 = vld [vmem:[%s6180 + $0x120] sm:$0xf]
        %v9099 = vld [vmem:[%s6180 + $0x124] sm:$0xf]
        %v9100 = vld [vmem:[%s6180 + $0x128] sm:$0x1]
        %v9101 = vld [vmem:[%s6180 + $0x134] sm:$0xf]
        %v9102 = vld [vmem:[%s6180 + $0x138] sm:$0xf]
        %v9103 = vld [vmem:[%s6180 + $0x13c] sm:$0x1]
        %v9105 = vshrl.u32 %v9056, 16
        %v9107 = vrot.slane %v9105, 4
        %v9108 = vshll.u32 %v9056, 16
        %v9110 = vrot.slane %v9108, 5
        %v9111 = vor.u32 %v9107, %v9110
        %v9112 = vrot.slane %v9111, 4
        %v9114 = vshll.u32 %v9057, 16
        %v9116 = vrot.slane %v9114, 5
        %v9117 = vsel %vm1576, %v9112, %v9116
        %v9118 = vshrl.u32 %v9057, 16
        %v9120 = vrot.slane %v9118, 4
        %v9121 = vor.u32 %v9120, %v9116
        %v9122 = vrot.slane %v9121, 4
        %v9124 = vshll.u32 %v9058, 16
        %v9126 = vrot.slane %v9124, 5
        %v9127 = vsel %vm1576, %v9122, %v9126
        %v9129 = vshrl.u32 %v9059, 16
        %v9131 = vrot.slane %v9129, 4
        %v9132 = vshll.u32 %v9059, 16
        %v9134 = vrot.slane %v9132, 5
        %v9135 = vor.u32 %v9131, %v9134
        %v9136 = vrot.slane %v9135, 4
        %v9138 = vshll.u32 %v9060, 16
        %v9140 = vrot.slane %v9138, 5
        %v9141 = vsel %vm1576, %v9136, %v9140
        %v9142 = vshrl.u32 %v9060, 16
        %v9144 = vrot.slane %v9142, 4
        %v9145 = vor.u32 %v9144, %v9140
        %v9146 = vrot.slane %v9145, 4
        %v9148 = vshll.u32 %v9061, 16
        %v9150 = vrot.slane %v9148, 5
        %v9151 = vsel %vm1576, %v9146, %v9150
        %v9153 = vshrl.u32 %v9062, 16
        %v9155 = vrot.slane %v9153, 4
        %v9156 = vshll.u32 %v9062, 16
        %v9158 = vrot.slane %v9156, 5
        %v9159 = vor.u32 %v9155, %v9158
        %v9160 = vrot.slane %v9159, 4
        %v9162 = vshll.u32 %v9063, 16
        %v9164 = vrot.slane %v9162, 5
        %v9165 = vsel %vm1576, %v9160, %v9164
        %v9166 = vshrl.u32 %v9063, 16
        %v9168 = vrot.slane %v9166, 4
        %v9169 = vor.u32 %v9168, %v9164
        %v9170 = vrot.slane %v9169, 4
        %v9172 = vshll.u32 %v9064, 16
        %v9174 = vrot.slane %v9172, 5
        %v9175 = vsel %vm1576, %v9170, %v9174
        %v9177 = vshrl.u32 %v9065, 16
        %v9179 = vrot.slane %v9177, 4
        %v9180 = vshll.u32 %v9065, 16
        %v9182 = vrot.slane %v9180, 5
        %v9183 = vor.u32 %v9179, %v9182
        %v9184 = vrot.slane %v9183, 4
        %v9186 = vshll.u32 %v9066, 16
        %v9188 = vrot.slane %v9186, 5
        %v9189 = vsel %vm1576, %v9184, %v9188
        %v9190 = vshrl.u32 %v9066, 16
        %v9192 = vrot.slane %v9190, 4
        %v9193 = vor.u32 %v9192, %v9188
        %v9194 = vrot.slane %v9193, 4
        %v9196 = vshll.u32 %v9067, 16
        %v9198 = vrot.slane %v9196, 5
        %v9199 = vsel %vm1576, %v9194, %v9198
        %v9201 = vshrl.u32 %v9068, 16
        %v9203 = vrot.slane %v9201, 4
        %v9204 = vshll.u32 %v9068, 16
        %v9206 = vrot.slane %v9204, 5
        %v9207 = vor.u32 %v9203, %v9206
        %v9208 = vrot.slane %v9207, 4
        %v9210 = vshll.u32 %v9069, 16
        %v9212 = vrot.slane %v9210, 5
        %v9213 = vsel %vm1576, %v9208, %v9212
        %v9214 = vshrl.u32 %v9069, 16
        %v9216 = vrot.slane %v9214, 4
        %v9217 = vor.u32 %v9216, %v9212
        %v9218 = vrot.slane %v9217, 4
        %v9220 = vshll.u32 %v9070, 16
        %v9222 = vrot.slane %v9220, 5
        %v9223 = vsel %vm1576, %v9218, %v9222
        %v9225 = vshrl.u32 %v9071, 16
        %v9227 = vrot.slane %v9225, 4
        %v9228 = vshll.u32 %v9071, 16
        %v9230 = vrot.slane %v9228, 5
        %v9231 = vor.u32 %v9227, %v9230
        %v9232 = vrot.slane %v9231, 4
        %v9234 = vshll.u32 %v9072, 16
        %v9236 = vrot.slane %v9234, 5
        %v9237 = vsel %vm1576, %v9232, %v9236
        %v9238 = vshrl.u32 %v9072, 16
        %v9240 = vrot.slane %v9238, 4
        %v9241 = vor.u32 %v9240, %v9236
        %v9242 = vrot.slane %v9241, 4
        %v9244 = vshll.u32 %v9073, 16
        %v9246 = vrot.slane %v9244, 5
        %v9247 = vsel %vm1576, %v9242, %v9246
        %v9249 = vshrl.u32 %v9074, 16
        %v9251 = vrot.slane %v9249, 4
        %v9252 = vshll.u32 %v9074, 16
        %v9254 = vrot.slane %v9252, 5
        %v9255 = vor.u32 %v9251, %v9254
        %v9256 = vrot.slane %v9255, 4
        %v9258 = vshll.u32 %v9075, 16
        %v9260 = vrot.slane %v9258, 5
        %v9261 = vsel %vm1576, %v9256, %v9260
        %v9262 = vshrl.u32 %v9075, 16
        %v9264 = vrot.slane %v9262, 4
        %v9265 = vor.u32 %v9264, %v9260
        %v9266 = vrot.slane %v9265, 4
        %v9268 = vshll.u32 %v9076, 16
        %v9270 = vrot.slane %v9268, 5
        %v9271 = vsel %vm1576, %v9266, %v9270
        %v9273 = vshrl.u32 %v9077, 16
        %v9275 = vrot.slane %v9273, 4
        %v9276 = vshll.u32 %v9077, 16
        %v9278 = vrot.slane %v9276, 5
        %v9279 = vor.u32 %v9275, %v9278
        %v9280 = vrot.slane %v9279, 4
        %v9282 = vshll.u32 %v9078, 16
        %v9284 = vrot.slane %v9282, 5
        %v9285 = vsel %vm1576, %v9280, %v9284
        %v9286 = vshrl.u32 %v9078, 16
        %v9288 = vrot.slane %v9286, 4
        %v9289 = vor.u32 %v9288, %v9284
        %v9290 = vrot.slane %v9289, 4
        %v9292 = vshll.u32 %v9079, 16
        %v9294 = vrot.slane %v9292, 5
        %v9295 = vsel %vm1576, %v9290, %v9294
        %v9297 = vshrl.u32 %v9080, 16
        %v9299 = vrot.slane %v9297, 4
        %v9300 = vshll.u32 %v9080, 16
        %v9302 = vrot.slane %v9300, 5
        %v9303 = vor.u32 %v9299, %v9302
        %v9304 = vrot.slane %v9303, 4
        %v9306 = vshll.u32 %v9081, 16
        %v9308 = vrot.slane %v9306, 5
        %v9309 = vsel %vm1576, %v9304, %v9308
        %v9310 = vshrl.u32 %v9081, 16
        %v9312 = vrot.slane %v9310, 4
        %v9313 = vor.u32 %v9312, %v9308
        %v9314 = vrot.slane %v9313, 4
        %v9316 = vshll.u32 %v9082, 16
        %v9318 = vrot.slane %v9316, 5
        %v9319 = vsel %vm1576, %v9314, %v9318
        %v9321 = vshrl.u32 %v9083, 16
        %v9323 = vrot.slane %v9321, 4
        %v9324 = vshll.u32 %v9083, 16
        %v9326 = vrot.slane %v9324, 5
        %v9327 = vor.u32 %v9323, %v9326
        %v9328 = vrot.slane %v9327, 4
        %v9330 = vshll.u32 %v9084, 16
        %v9332 = vrot.slane %v9330, 5
        %v9333 = vsel %vm1576, %v9328, %v9332
        %v9334 = vshrl.u32 %v9084, 16
        %v9336 = vrot.slane %v9334, 4
        %v9337 = vor.u32 %v9336, %v9332
        %v9338 = vrot.slane %v9337, 4
        %v9340 = vshll.u32 %v9085, 16
        %v9342 = vrot.slane %v9340, 5
        %v9343 = vsel %vm1576, %v9338, %v9342
        %v9345 = vshrl.u32 %v9086, 16
        %v9347 = vrot.slane %v9345, 4
        %v9348 = vshll.u32 %v9086, 16
        %v9350 = vrot.slane %v9348, 5
        %v9351 = vor.u32 %v9347, %v9350
        %v9352 = vrot.slane %v9351, 4
        %v9354 = vshll.u32 %v9087, 16
        %v9356 = vrot.slane %v9354, 5
        %v9357 = vsel %vm1576, %v9352, %v9356
        %v9358 = vshrl.u32 %v9087, 16
        %v9360 = vrot.slane %v9358, 4
        %v9361 = vor.u32 %v9360, %v9356
        %v9362 = vrot.slane %v9361, 4
        %v9364 = vshll.u32 %v9088, 16
        %v9366 = vrot.slane %v9364, 5
        %v9367 = vsel %vm1576, %v9362, %v9366
        %v9369 = vshrl.u32 %v9089, 16
        %v9371 = vrot.slane %v9369, 4
        %v9372 = vshll.u32 %v9089, 16
        %v9374 = vrot.slane %v9372, 5
        %v9375 = vor.u32 %v9371, %v9374
        %v9376 = vrot.slane %v9375, 4
        %v9378 = vshll.u32 %v9090, 16
        %v9380 = vrot.slane %v9378, 5
        %v9381 = vsel %vm1576, %v9376, %v9380
        %v9382 = vshrl.u32 %v9090, 16
        %v9384 = vrot.slane %v9382, 4
        %v9385 = vor.u32 %v9384, %v9380
        %v9386 = vrot.slane %v9385, 4
        %v9388 = vshll.u32 %v9091, 16
        %v9390 = vrot.slane %v9388, 5
        %v9391 = vsel %vm1576, %v9386, %v9390
        %v9393 = vshrl.u32 %v9092, 16
        %v9395 = vrot.slane %v9393, 4
        %v9396 = vshll.u32 %v9092, 16
        %v9398 = vrot.slane %v9396, 5
        %v9399 = vor.u32 %v9395, %v9398
        %v9400 = vrot.slane %v9399, 4
        %v9402 = vshll.u32 %v9093, 16
        %v9404 = vrot.slane %v9402, 5
        %v9405 = vsel %vm1576, %v9400, %v9404
        %v9406 = vshrl.u32 %v9093, 16
        %v9408 = vrot.slane %v9406, 4
        %v9409 = vor.u32 %v9408, %v9404
        %v9410 = vrot.slane %v9409, 4
        %v9412 = vshll.u32 %v9094, 16
        %v9414 = vrot.slane %v9412, 5
        %v9415 = vsel %vm1576, %v9410, %v9414
        %v9417 = vshrl.u32 %v9095, 16
        %v9419 = vrot.slane %v9417, 4
        %v9420 = vshll.u32 %v9095, 16
        %v9422 = vrot.slane %v9420, 5
        %v9423 = vor.u32 %v9419, %v9422
        %v9424 = vrot.slane %v9423, 4
        %v9426 = vshll.u32 %v9096, 16
        %v9428 = vrot.slane %v9426, 5
        %v9429 = vsel %vm1576, %v9424, %v9428
        %v9430 = vshrl.u32 %v9096, 16
        %v9432 = vrot.slane %v9430, 4
        %v9433 = vor.u32 %v9432, %v9428
        %v9434 = vrot.slane %v9433, 4
        %v9436 = vshll.u32 %v9097, 16
        %v9438 = vrot.slane %v9436, 5
        %v9439 = vsel %vm1576, %v9434, %v9438
        %v9441 = vshrl.u32 %v9098, 16
        %v9443 = vrot.slane %v9441, 4
        %v9444 = vshll.u32 %v9098, 16
        %v9446 = vrot.slane %v9444, 5
        %v9447 = vor.u32 %v9443, %v9446
        %v9448 = vrot.slane %v9447, 4
        %v9450 = vshll.u32 %v9099, 16
        %v9452 = vrot.slane %v9450, 5
        %v9453 = vsel %vm1576, %v9448, %v9452
        %v9454 = vshrl.u32 %v9099, 16
        %v9456 = vrot.slane %v9454, 4
        %v9457 = vor.u32 %v9456, %v9452
        %v9458 = vrot.slane %v9457, 4
        %v9460 = vshll.u32 %v9100, 16
        %v9462 = vrot.slane %v9460, 5
        %v9463 = vsel %vm1576, %v9458, %v9462
        %v9465 = vshrl.u32 %v9101, 16
        %v9467 = vrot.slane %v9465, 4
        %v9468 = vshll.u32 %v9101, 16
        %v9470 = vrot.slane %v9468, 5
        %v9471 = vor.u32 %v9467, %v9470
        %v9472 = vrot.slane %v9471, 4
        %v9474 = vshll.u32 %v9102, 16
        %v9476 = vrot.slane %v9474, 5
        %v9477 = vsel %vm1576, %v9472, %v9476
        %v9478 = vshrl.u32 %v9102, 16
        %v9480 = vrot.slane %v9478, 4
        %v9481 = vor.u32 %v9480, %v9476
        %v9482 = vrot.slane %v9481, 4
        %v9484 = vshll.u32 %v9103, 16
        %v9486 = vrot.slane %v9484, 5
        %v9487 = vsel %vm1576, %v9482, %v9486
        %s9488 = scalar_lea.vmem [#allocation9], 320
        %v9489 = vld [vmem:[%s9488] sm:$0xf]
        %v9490 = vld [vmem:[%s9488 + $0x4] sm:$0xf]
        %v9491 = vld [vmem:[%s9488 + $0x8] sm:$0xf]
        %v9492 = vld [vmem:[%s9488 + $0xc] sm:$0xf]
        %v9493 = vld [vmem:[%s9488 + $0x10] sm:$0xf]
        %v9494 = vld [vmem:[%s9488 + $0x14] sm:$0xf]
        %v9495 = vld [vmem:[%s9488 + $0x18] sm:$0xf]
        %v9496 = vld [vmem:[%s9488 + $0x1c] sm:$0xf]
        %v9497 = vld [vmem:[%s9488 + $0x20] sm:$0xf]
        %v9498 = vld [vmem:[%s9488 + $0x24] sm:$0xf]
        %v9499 = vld [vmem:[%s9488 + $0x28] sm:$0xf]
        %v9500 = vld [vmem:[%s9488 + $0x2c] sm:$0xf]
        %v9501 = vld [vmem:[%s9488 + $0x30] sm:$0xf]
        %v9502 = vld [vmem:[%s9488 + $0x34] sm:$0xf]
        %v9503 = vld [vmem:[%s9488 + $0x38] sm:$0xf]
        %v9504 = vld [vmem:[%s9488 + $0x3c] sm:$0xf]
        %v9505 = vunpack.c.l.b16 %v9117
        %v9506 = vunpack.c.l.b16 %v9127
        %v9507 = vunpack.c.l.b16 %v9141
        %v9508 = vunpack.c.l.b16 %v9151
        %v9509 = vunpack.c.l.b16 %v9165
        %v9510 = vunpack.c.l.b16 %v9175
        %v9511 = vunpack.c.l.b16 %v9189
        %v9512 = vunpack.c.l.b16 %v9199
        %v9513 = vunpack.c.l.b16 %v9213
        %v9514 = vunpack.c.l.b16 %v9223
        %v9515 = vunpack.c.l.b16 %v9237
        %v9516 = vunpack.c.l.b16 %v9247
        %v9517 = vunpack.c.l.b16 %v9261
        %v9518 = vunpack.c.l.b16 %v9271
        %v9519 = vunpack.c.l.b16 %v9285
        %v9520 = vunpack.c.l.b16 %v9295
        %v9521 = vunpack.c.l.b16 %v9309
        %v9522 = vunpack.c.l.b16 %v9319
        %v9523 = vunpack.c.l.b16 %v9333
        %v9524 = vunpack.c.l.b16 %v9343
        %v9525 = vunpack.c.l.b16 %v9357
        %v9526 = vunpack.c.l.b16 %v9367
        %v9527 = vunpack.c.l.b16 %v9381
        %v9528 = vunpack.c.l.b16 %v9391
        %v9529 = vunpack.c.l.b16 %v9405
        %v9530 = vunpack.c.l.b16 %v9415
        %v9531 = vunpack.c.l.b16 %v9429
        %v9532 = vunpack.c.l.b16 %v9439
        %v9533 = vunpack.c.l.b16 %v9453
        %v9534 = vunpack.c.l.b16 %v9463
        %v9535 = vunpack.c.l.b16 %v9477
        %v9536 = vunpack.c.l.b16 %v9487
        %v9537 = vpack.c.b16 %v9506, %v9505
        %v9538 = vpack.c.b16 %v9508, %v9507
        %v9539 = vpack.c.b16 %v9510, %v9509
        %v9540 = vpack.c.b16 %v9512, %v9511
        %v9541 = vpack.c.b16 %v9514, %v9513
        %v9542 = vpack.c.b16 %v9516, %v9515
        %v9543 = vpack.c.b16 %v9518, %v9517
        %v9544 = vpack.c.b16 %v9520, %v9519
        %v9545 = vpack.c.b16 %v9522, %v9521
        %v9546 = vpack.c.b16 %v9524, %v9523
        %v9547 = vpack.c.b16 %v9526, %v9525
        %v9548 = vpack.c.b16 %v9528, %v9527
        %v9549 = vpack.c.b16 %v9530, %v9529
        %v9550 = vpack.c.b16 %v9532, %v9531
        %v9551 = vpack.c.b16 %v9534, %v9533
        %v9552 = vpack.c.b16 %v9536, %v9535
        %v9585 = vunpack.c.l.b16 %v9489
        %v9586 = vunpack.c.l.b16 %v9490
        %v9587 = vunpack.c.l.b16 %v9491
        %v9588 = vunpack.c.l.b16 %v9492
        %v9589 = vunpack.c.l.b16 %v9493
        %v9590 = vunpack.c.l.b16 %v9494
        %v9591 = vunpack.c.l.b16 %v9495
        %v9592 = vunpack.c.l.b16 %v9496
        %v9593 = vunpack.c.l.b16 %v9497
        %v9594 = vunpack.c.l.b16 %v9498
        %v9595 = vunpack.c.l.b16 %v9499
        %v9596 = vunpack.c.l.b16 %v9500
        %v9597 = vunpack.c.l.b16 %v9501
        %v9598 = vunpack.c.l.b16 %v9502
        %v9599 = vunpack.c.l.b16 %v9503
        %v9600 = vunpack.c.l.b16 %v9504
        %v9601 = vpack.c.b16 %v9586, %v9585
        %v9602 = vpack.c.b16 %v9588, %v9587
        %v9603 = vpack.c.b16 %v9590, %v9589
        %v9604 = vpack.c.b16 %v9592, %v9591
        %v9605 = vpack.c.b16 %v9594, %v9593
        %v9606 = vpack.c.b16 %v9596, %v9595
        %v9607 = vpack.c.b16 %v9598, %v9597
        %v9608 = vpack.c.b16 %v9600, %v9599
        %9617 = vmatprep.subr.bf16.mxu0 0
        %9618 = vmatpush1.bf16.msra.mxu0 %v9601
        %9619 = vmatprep.subr.bf16.mxu0 0
        %9620 = vmatpush1.bf16.msra.mxu0 %v9602
        %9621 = vmatprep.subr.bf16.mxu0 0
        %9622 = vmatpush1.bf16.msra.mxu0 %v9603
        %9623 = vmatprep.subr.bf16.mxu0 0
        %9624 = vmatpush1.bf16.msra.mxu0 %v9604
        %9625 = vmatprep.subr.bf16.mxu0 0
        %9626 = vmatpush1.bf16.msra.mxu0 %v9605
        %9627 = vmatprep.subr.bf16.mxu0 0
        %9628 = vmatpush1.bf16.msra.mxu0 %v9606
        %9629 = vmatprep.subr.bf16.mxu0 0
        %9630 = vmatpush1.bf16.msra.mxu0 %v9607
        %9631 = vmatprep.subr.bf16.mxu0 0
        %9632 = vmatpush1.bf16.msra.mxu0 %v9608
        %9633 = vmatprep.subr.bf16.mxu0 0
        %9634 = vmatpush1.bf16.msra.mxu0 0
        %9635 = vmatprep.subr.bf16.mxu0 0
        %9636 = vmatpush1.bf16.msra.mxu0 0
        %9637 = vmatprep.subr.bf16.mxu0 0
        %9638 = vmatpush1.bf16.msra.mxu0 0
        %9639 = vmatprep.subr.bf16.mxu0 0
        %9640 = vmatpush1.bf16.msra.mxu0 0
        %9641 = vmatprep.subr.bf16.mxu0 0
        %9642 = vmatpush1.bf16.msra.mxu0 0
        %9643 = vmatprep.subr.bf16.mxu0 0
        %9644 = vmatpush1.bf16.msra.mxu0 0
        %9645 = vmatprep.subr.bf16.mxu0 0
        %9646 = vmatpush1.bf16.msra.mxu0 0
        %9647 = vmatprep.subr.bf16.mxu0 0
        %9648 = vmatpush1.bf16.msra.mxu0 0
        %9649 = vmatprep.mubr.bf16.mxu0 0
        %9650 = vmatmul.mubr.bf16.gmra.mrb[0].mxu0 %v9537
        %v9651 = vpop.f32.mrb[0].mxu0
        %v9652 = vadd.f32 0.0, %v9651
        %v9653 = vpop.f32.mrb[0].mxu0
        %v9654 = vpop.f32.mrb[0].mxu0
        %v9655 = vadd.f32 0.0, %v9654
        %v9656 = vpop.f32.mrb[0].mxu0
        %9657 = vmatprep.mubr.bf16.mxu0 0
        %9658 = vmatmul.mubr.bf16.gmra.mrb[0].mxu0 %v9538
        %v9659 = vpop.f32.mrb[0].mxu0
        %v9660 = vadd.f32 0.0, %v9659
        %v9661 = vpop.f32.mrb[0].mxu0
        %v9662 = vpop.f32.mrb[0].mxu0
        %v9663 = vadd.f32 0.0, %v9662
        %v9664 = vpop.f32.mrb[0].mxu0
        %9665 = vmatprep.mubr.bf16.mxu0 0
        %9666 = vmatmul.mubr.bf16.gmra.mrb[0].mxu0 %v9539
        %v9667 = vpop.f32.mrb[0].mxu0
        %v9668 = vadd.f32 0.0, %v9667
        %v9669 = vpop.f32.mrb[0].mxu0
        %v9670 = vpop.f32.mrb[0].mxu0
        %v9671 = vadd.f32 0.0, %v9670
        %v9672 = vpop.f32.mrb[0].mxu0
        %9673 = vmatprep.mubr.bf16.mxu0 0
        %9674 = vmatmul.mubr.bf16.gmra.mrb[0].mxu0 %v9540
        %v9675 = vpop.f32.mrb[0].mxu0
        %v9676 = vadd.f32 0.0, %v9675
        %v9677 = vpop.f32.mrb[0].mxu0
        %v9678 = vpop.f32.mrb[0].mxu0
        %v9679 = vadd.f32 0.0, %v9678
        %v9680 = vpop.f32.mrb[0].mxu0
        %9681 = vmatprep.mubr.bf16.mxu0 0
        %9682 = vmatmul.mubr.bf16.gmra.mrb[0].mxu0 %v9541
        %v9683 = vpop.f32.mrb[0].mxu0
        %v9684 = vadd.f32 0.0, %v9683
        %v9685 = vpop.f32.mrb[0].mxu0
        %v9686 = vpop.f32.mrb[0].mxu0
        %v9687 = vadd.f32 0.0, %v9686
        %v9688 = vpop.f32.mrb[0].mxu0
        %9689 = vmatprep.mubr.bf16.mxu0 0
        %9690 = vmatmul.mubr.bf16.gmra.mrb[0].mxu0 %v9542
        %v9691 = vpop.f32.mrb[0].mxu0
        %v9692 = vadd.f32 0.0, %v9691
        %v9693 = vpop.f32.mrb[0].mxu0
        %v9694 = vpop.f32.mrb[0].mxu0
        %v9695 = vadd.f32 0.0, %v9694
        %v9696 = vpop.f32.mrb[0].mxu0
        %9697 = vmatprep.mubr.bf16.mxu0 0
        %9698 = vmatmul.mubr.bf16.gmra.mrb[0].mxu0 %v9543
        %v9699 = vpop.f32.mrb[0].mxu0
        %v9700 = vadd.f32 0.0, %v9699
        %v9701 = vpop.f32.mrb[0].mxu0
        %v9702 = vpop.f32.mrb[0].mxu0
        %v9703 = vadd.f32 0.0, %v9702
        %v9704 = vpop.f32.mrb[0].mxu0
        %9705 = vmatprep.mubr.bf16.mxu0 0
        %9706 = vmatmul.mubr.bf16.gmra.mrb[0].mxu0 %v9544
        %v9707 = vpop.f32.mrb[0].mxu0
        %v9708 = vadd.f32 0.0, %v9707
        %v9709 = vpop.f32.mrb[0].mxu0
        %v9710 = vpop.f32.mrb[0].mxu0
        %v9711 = vadd.f32 0.0, %v9710
        %v9712 = vpop.f32.mrb[0].mxu0
        %9713 = vmatprep.mubr.bf16.mxu0 0
        %9714 = vmatmul.mubr.bf16.gmra.mrb[0].mxu0 %v9545
        %v9715 = vpop.f32.mrb[0].mxu0
        %v9716 = vadd.f32 0.0, %v9715
        %v9717 = vpop.f32.mrb[0].mxu0
        %v9718 = vpop.f32.mrb[0].mxu0
        %v9719 = vadd.f32 0.0, %v9718
        %v9720 = vpop.f32.mrb[0].mxu0
        %9721 = vmatprep.mubr.bf16.mxu0 0
        %9722 = vmatmul.mubr.bf16.gmra.mrb[0].mxu0 %v9546
        %v9723 = vpop.f32.mrb[0].mxu0
        %v9724 = vadd.f32 0.0, %v9723
        %v9725 = vpop.f32.mrb[0].mxu0
        %v9726 = vpop.f32.mrb[0].mxu0
        %v9727 = vadd.f32 0.0, %v9726
        %v9728 = vpop.f32.mrb[0].mxu0
        %9729 = vmatprep.mubr.bf16.mxu0 0
        %9730 = vmatmul.mubr.bf16.gmra.mrb[0].mxu0 %v9547
        %v9731 = vpop.f32.mrb[0].mxu0
        %v9732 = vadd.f32 0.0, %v9731
        %v9733 = vpop.f32.mrb[0].mxu0
        %v9734 = vpop.f32.mrb[0].mxu0
        %v9735 = vadd.f32 0.0, %v9734
        %v9736 = vpop.f32.mrb[0].mxu0
        %9737 = vmatprep.mubr.bf16.mxu0 0
        %9738 = vmatmul.mubr.bf16.gmra.mrb[0].mxu0 %v9548
        %v9739 = vpop.f32.mrb[0].mxu0
        %v9740 = vadd.f32 0.0, %v9739
        %v9741 = vpop.f32.mrb[0].mxu0
        %v9742 = vpop.f32.mrb[0].mxu0
        %v9743 = vadd.f32 0.0, %v9742
        %v9744 = vpop.f32.mrb[0].mxu0
        %9745 = vmatprep.mubr.bf16.mxu0 0
        %9746 = vmatmul.mubr.bf16.gmra.mrb[0].mxu0 %v9549
        %v9747 = vpop.f32.mrb[0].mxu0
        %v9748 = vadd.f32 0.0, %v9747
        %v9749 = vpop.f32.mrb[0].mxu0
        %v9750 = vpop.f32.mrb[0].mxu0
        %v9751 = vadd.f32 0.0, %v9750
        %v9752 = vpop.f32.mrb[0].mxu0
        %9753 = vmatprep.mubr.bf16.mxu0 0
        %9754 = vmatmul.mubr.bf16.gmra.mrb[0].mxu0 %v9550
        %v9755 = vpop.f32.mrb[0].mxu0
        %v9756 = vadd.f32 0.0, %v9755
        %v9757 = vpop.f32.mrb[0].mxu0
        %v9758 = vpop.f32.mrb[0].mxu0
        %v9759 = vadd.f32 0.0, %v9758
        %v9760 = vpop.f32.mrb[0].mxu0
        %9761 = vmatprep.mubr.bf16.mxu0 0
        %9762 = vmatmul.mubr.bf16.gmra.mrb[0].mxu0 %v9551
        %v9763 = vpop.f32.mrb[0].mxu0
        %v9764 = vadd.f32 0.0, %v9763
        %v9765 = vpop.f32.mrb[0].mxu0
        %v9766 = vpop.f32.mrb[0].mxu0
        %v9767 = vadd.f32 0.0, %v9766
        %v9768 = vpop.f32.mrb[0].mxu0
        %9769 = vmatprep.mubr.bf16.mxu0 0
        %9770 = vmatmul.mubr.bf16.gmra.mrb[0].mxu0 %v9552
        %v9771 = vpop.f32.mrb[0].mxu0
        %v9772 = vadd.f32 0.0, %v9771
        %v9773 = vpop.f32.mrb[0].mxu0
        %v9774 = vpop.f32.mrb[0].mxu0
        %v9775 = vadd.f32 0.0, %v9774
        %v9776 = vpop.f32.mrb[0].mxu0
        %9777 = vdwg.mxu0
        %v9778 = vadd.f32 %v9024, %v9652
        %v9779 = vadd.f32 %v9025, %v9655
        %v9780 = vadd.f32 %v9026, %v9660
        %v9781 = vadd.f32 %v9027, %v9663
        %v9782 = vadd.f32 %v9028, %v9668
        %v9783 = vadd.f32 %v9029, %v9671
        %v9784 = vadd.f32 %v9030, %v9676
        %v9785 = vadd.f32 %v9031, %v9679
        %v9786 = vadd.f32 %v9032, %v9684
        %v9787 = vadd.f32 %v9033, %v9687
        %v9788 = vadd.f32 %v9034, %v9692
        %v9789 = vadd.f32 %v9035, %v9695
        %v9790 = vadd.f32 %v9036, %v9700
        %v9791 = vadd.f32 %v9037, %v9703
        %v9792 = vadd.f32 %v9038, %v9708
        %v9793 = vadd.f32 %v9039, %v9711
        %v9794 = vadd.f32 %v9040, %v9716
        %v9795 = vadd.f32 %v9041, %v9719
        %v9796 = vadd.f32 %v9042, %v9724
        %v9797 = vadd.f32 %v9043, %v9727
        %v9798 = vadd.f32 %v9044, %v9732
        %v9799 = vadd.f32 %v9045, %v9735
        %v9800 = vadd.f32 %v9046, %v9740
        %v9801 = vadd.f32 %v9047, %v9743
        %v9802 = vadd.f32 %v9048, %v9748
        %v9803 = vadd.f32 %v9049, %v9751
        %v9804 = vadd.f32 %v9050, %v9756
        %v9805 = vadd.f32 %v9051, %v9759
        %v9806 = vadd.f32 %v9052, %v9764
        %v9807 = vadd.f32 %v9053, %v9767
        %v9808 = vadd.f32 %v9054, %v9772
        %v9809 = vadd.f32 %v9055, %v9775
        %s9810 = scalar_lea.vmem [#allocation3], 40
        %v9811 = vld [vmem:[%s9810 + $0x4] sm:$0x8]
        %v9812 = vld [vmem:[%s9810 + $0x8] sm:$0xf]
        %v9813 = vld [vmem:[%s9810 + $0xc] sm:$0xf]
        %v9814 = vld [vmem:[%s9810 + $0x18] sm:$0x8]
        %v9815 = vld [vmem:[%s9810 + $0x1c] sm:$0xf]
        %v9816 = vld [vmem:[%s9810 + $0x20] sm:$0xf]
        %v9817 = vld [vmem:[%s9810 + $0x2c] sm:$0x8]
        %v9818 = vld [vmem:[%s9810 + $0x30] sm:$0xf]
        %v9819 = vld [vmem:[%s9810 + $0x34] sm:$0xf]
        %v9820 = vld [vmem:[%s9810 + $0x40] sm:$0x8]
        %v9821 = vld [vmem:[%s9810 + $0x44] sm:$0xf]
        %v9822 = vld [vmem:[%s9810 + $0x48] sm:$0xf]
        %v9823 = vld [vmem:[%s9810 + $0x54] sm:$0x8]
        %v9824 = vld [vmem:[%s9810 + $0x58] sm:$0xf]
        %v9825 = vld [vmem:[%s9810 + $0x5c] sm:$0xf]
        %v9826 = vld [vmem:[%s9810 + $0x68] sm:$0x8]
        %v9827 = vld [vmem:[%s9810 + $0x6c] sm:$0xf]
        %v9828 = vld [vmem:[%s9810 + $0x70] sm:$0xf]
        %v9829 = vld [vmem:[%s9810 + $0x7c] sm:$0x8]
        %v9830 = vld [vmem:[%s9810 + $0x80] sm:$0xf]
        %v9831 = vld [vmem:[%s9810 + $0x84] sm:$0xf]
        %v9832 = vld [vmem:[%s9810 + $0x90] sm:$0x8]
        %v9833 = vld [vmem:[%s9810 + $0x94] sm:$0xf]
        %v9834 = vld [vmem:[%s9810 + $0x98] sm:$0xf]
        %v9835 = vld [vmem:[%s9810 + $0xa4] sm:$0x8]
        %v9836 = vld [vmem:[%s9810 + $0xa8] sm:$0xf]
        %v9837 = vld [vmem:[%s9810 + $0xac] sm:$0xf]
        %v9838 = vld [vmem:[%s9810 + $0xb8] sm:$0x8]
        %v9839 = vld [vmem:[%s9810 + $0xbc] sm:$0xf]
        %v9840 = vld [vmem:[%s9810 + $0xc0] sm:$0xf]
        %v9841 = vld [vmem:[%s9810 + $0xcc] sm:$0x8]
        %v9842 = vld [vmem:[%s9810 + $0xd0] sm:$0xf]
        %v9843 = vld [vmem:[%s9810 + $0xd4] sm:$0xf]
        %v9844 = vld [vmem:[%s9810 + $0xe0] sm:$0x8]
        %v9845 = vld [vmem:[%s9810 + $0xe4] sm:$0xf]
        %v9846 = vld [vmem:[%s9810 + $0xe8] sm:$0xf]
        %v9847 = vld [vmem:[%s9810 + $0xf4] sm:$0x8]
        %v9848 = vld [vmem:[%s9810 + $0xf8] sm:$0xf]
        %v9849 = vld [vmem:[%s9810 + $0xfc] sm:$0xf]
        %v9850 = vld [vmem:[%s9810 + $0x108] sm:$0x8]
        %v9851 = vld [vmem:[%s9810 + $0x10c] sm:$0xf]
        %v9852 = vld [vmem:[%s9810 + $0x110] sm:$0xf]
        %v9853 = vld [vmem:[%s9810 + $0x11c] sm:$0x8]
        %v9854 = vld [vmem:[%s9810 + $0x120] sm:$0xf]
        %v9855 = vld [vmem:[%s9810 + $0x124] sm:$0xf]
        %v9856 = vld [vmem:[%s9810 + $0x130] sm:$0x8]
        %v9857 = vld [vmem:[%s9810 + $0x134] sm:$0xf]
        %v9858 = vld [vmem:[%s9810 + $0x138] sm:$0xf]
        %v9860 = vshrl.u32 %v9811, 16
        %v9862 = vrot.slane %v9860, 7
        %v9863 = vrot.slane %v9862, 4
        %v9865 = vshrl.u32 %v9812, 16
        %v9867 = vrot.slane %v9865, 7
        %v9868 = vshll.u32 %v9812, 16
        %v9870 = vor.u32 %v9867, %v9868
        %v9871 = vsel %vm562, %v9863, %v9870
        %v9872 = vrot.slane %v9867, 4
        %v9874 = vshrl.u32 %v9813, 16
        %v9876 = vrot.slane %v9874, 7
        %v9877 = vshll.u32 %v9813, 16
        %v9879 = vor.u32 %v9876, %v9877
        %v9880 = vsel %vm562, %v9872, %v9879
        %v9882 = vshrl.u32 %v9814, 16
        %v9884 = vrot.slane %v9882, 7
        %v9885 = vrot.slane %v9884, 4
        %v9887 = vshrl.u32 %v9815, 16
        %v9889 = vrot.slane %v9887, 7
        %v9890 = vshll.u32 %v9815, 16
        %v9892 = vor.u32 %v9889, %v9890
        %v9893 = vsel %vm562, %v9885, %v9892
        %v9894 = vrot.slane %v9889, 4
        %v9896 = vshrl.u32 %v9816, 16
        %v9898 = vrot.slane %v9896, 7
        %v9899 = vshll.u32 %v9816, 16
        %v9901 = vor.u32 %v9898, %v9899
        %v9902 = vsel %vm562, %v9894, %v9901
        %v9904 = vshrl.u32 %v9817, 16
        %v9906 = vrot.slane %v9904, 7
        %v9907 = vrot.slane %v9906, 4
        %v9909 = vshrl.u32 %v9818, 16
        %v9911 = vrot.slane %v9909, 7
        %v9912 = vshll.u32 %v9818, 16
        %v9914 = vor.u32 %v9911, %v9912
        %v9915 = vsel %vm562, %v9907, %v9914
        %v9916 = vrot.slane %v9911, 4
        %v9918 = vshrl.u32 %v9819, 16
        %v9920 = vrot.slane %v9918, 7
        %v9921 = vshll.u32 %v9819, 16
        %v9923 = vor.u32 %v9920, %v9921
        %v9924 = vsel %vm562, %v9916, %v9923
        %v9926 = vshrl.u32 %v9820, 16
        %v9928 = vrot.slane %v9926, 7
        %v9929 = vrot.slane %v9928, 4
        %v9931 = vshrl.u32 %v9821, 16
        %v9933 = vrot.slane %v9931, 7
        %v9934 = vshll.u32 %v9821, 16
        %v9936 = vor.u32 %v9933, %v9934
        %v9937 = vsel %vm562, %v9929, %v9936
        %v9938 = vrot.slane %v9933, 4
        %v9940 = vshrl.u32 %v9822, 16
        %v9942 = vrot.slane %v9940, 7
        %v9943 = vshll.u32 %v9822, 16
        %v9945 = vor.u32 %v9942, %v9943
        %v9946 = vsel %vm562, %v9938, %v9945
        %v9948 = vshrl.u32 %v9823, 16
        %v9950 = vrot.slane %v9948, 7
        %v9951 = vrot.slane %v9950, 4
        %v9953 = vshrl.u32 %v9824, 16
        %v9955 = vrot.slane %v9953, 7
        %v9956 = vshll.u32 %v9824, 16
        %v9958 = vor.u32 %v9955, %v9956
        %v9959 = vsel %vm562, %v9951, %v9958
        %v9960 = vrot.slane %v9955, 4
        %v9962 = vshrl.u32 %v9825, 16
        %v9964 = vrot.slane %v9962, 7
        %v9965 = vshll.u32 %v9825, 16
        %v9967 = vor.u32 %v9964, %v9965
        %v9968 = vsel %vm562, %v9960, %v9967
        %v9970 = vshrl.u32 %v9826, 16
        %v9972 = vrot.slane %v9970, 7
        %v9973 = vrot.slane %v9972, 4
        %v9975 = vshrl.u32 %v9827, 16
        %v9977 = vrot.slane %v9975, 7
        %v9978 = vshll.u32 %v9827, 16
        %v9980 = vor.u32 %v9977, %v9978
        %v9981 = vsel %vm562, %v9973, %v9980
        %v9982 = vrot.slane %v9977, 4
        %v9984 = vshrl.u32 %v9828, 16
        %v9986 = vrot.slane %v9984, 7
        %v9987 = vshll.u32 %v9828, 16
        %v9989 = vor.u32 %v9986, %v9987
        %v9990 = vsel %vm562, %v9982, %v9989
        %v9992 = vshrl.u32 %v9829, 16
        %v9994 = vrot.slane %v9992, 7
        %v9995 = vrot.slane %v9994, 4
        %v9997 = vshrl.u32 %v9830, 16
        %v9999 = vrot.slane %v9997, 7
        %v10000 = vshll.u32 %v9830, 16
        %v10002 = vor.u32 %v9999, %v10000
        %v10003 = vsel %vm562, %v9995, %v10002
        %v10004 = vrot.slane %v9999, 4
        %v10006 = vshrl.u32 %v9831, 16
        %v10008 = vrot.slane %v10006, 7
        %v10009 = vshll.u32 %v9831, 16
        %v10011 = vor.u32 %v10008, %v10009
        %v10012 = vsel %vm562, %v10004, %v10011
        %v10014 = vshrl.u32 %v9832, 16
        %v10016 = vrot.slane %v10014, 7
        %v10017 = vrot.slane %v10016, 4
        %v10019 = vshrl.u32 %v9833, 16
        %v10021 = vrot.slane %v10019, 7
        %v10022 = vshll.u32 %v9833, 16
        %v10024 = vor.u32 %v10021, %v10022
        %v10025 = vsel %vm562, %v10017, %v10024
        %v10026 = vrot.slane %v10021, 4
        %v10028 = vshrl.u32 %v9834, 16
        %v10030 = vrot.slane %v10028, 7
        %v10031 = vshll.u32 %v9834, 16
        %v10033 = vor.u32 %v10030, %v10031
        %v10034 = vsel %vm562, %v10026, %v10033
        %v10036 = vshrl.u32 %v9835, 16
        %v10038 = vrot.slane %v10036, 7
        %v10039 = vrot.slane %v10038, 4
        %v10041 = vshrl.u32 %v9836, 16
        %v10043 = vrot.slane %v10041, 7
        %v10044 = vshll.u32 %v9836, 16
        %v10046 = vor.u32 %v10043, %v10044
        %v10047 = vsel %vm562, %v10039, %v10046
        %v10048 = vrot.slane %v10043, 4
        %v10050 = vshrl.u32 %v9837, 16
        %v10052 = vrot.slane %v10050, 7
        %v10053 = vshll.u32 %v9837, 16
        %v10055 = vor.u32 %v10052, %v10053
        %v10056 = vsel %vm562, %v10048, %v10055
        %v10058 = vshrl.u32 %v9838, 16
        %v10060 = vrot.slane %v10058, 7
        %v10061 = vrot.slane %v10060, 4
        %v10063 = vshrl.u32 %v9839, 16
        %v10065 = vrot.slane %v10063, 7
        %v10066 = vshll.u32 %v9839, 16
        %v10068 = vor.u32 %v10065, %v10066
        %v10069 = vsel %vm562, %v10061, %v10068
        %v10070 = vrot.slane %v10065, 4
        %v10072 = vshrl.u32 %v9840, 16
        %v10074 = vrot.slane %v10072, 7
        %v10075 = vshll.u32 %v9840, 16
        %v10077 = vor.u32 %v10074, %v10075
        %v10078 = vsel %vm562, %v10070, %v10077
        %v10080 = vshrl.u32 %v9841, 16
        %v10082 = vrot.slane %v10080, 7
        %v10083 = vrot.slane %v10082, 4
        %v10085 = vshrl.u32 %v9842, 16
        %v10087 = vrot.slane %v10085, 7
        %v10088 = vshll.u32 %v9842, 16
        %v10090 = vor.u32 %v10087, %v10088
        %v10091 = vsel %vm562, %v10083, %v10090
        %v10092 = vrot.slane %v10087, 4
        %v10094 = vshrl.u32 %v9843, 16
        %v10096 = vrot.slane %v10094, 7
        %v10097 = vshll.u32 %v9843, 16
        %v10099 = vor.u32 %v10096, %v10097
        %v10100 = vsel %vm562, %v10092, %v10099
        %v10102 = vshrl.u32 %v9844, 16
        %v10104 = vrot.slane %v10102, 7
        %v10105 = vrot.slane %v10104, 4
        %v10107 = vshrl.u32 %v9845, 16
        %v10109 = vrot.slane %v10107, 7
        %v10110 = vshll.u32 %v9845, 16
        %v10112 = vor.u32 %v10109, %v10110
        %v10113 = vsel %vm562, %v10105, %v10112
        %v10114 = vrot.slane %v10109, 4
        %v10116 = vshrl.u32 %v9846, 16
        %v10118 = vrot.slane %v10116, 7
        %v10119 = vshll.u32 %v9846, 16
        %v10121 = vor.u32 %v10118, %v10119
        %v10122 = vsel %vm562, %v10114, %v10121
        %v10124 = vshrl.u32 %v9847, 16
        %v10126 = vrot.slane %v10124, 7
        %v10127 = vrot.slane %v10126, 4
        %v10129 = vshrl.u32 %v9848, 16
        %v10131 = vrot.slane %v10129, 7
        %v10132 = vshll.u32 %v9848, 16
        %v10134 = vor.u32 %v10131, %v10132
        %v10135 = vsel %vm562, %v10127, %v10134
        %v10136 = vrot.slane %v10131, 4
        %v10138 = vshrl.u32 %v9849, 16
        %v10140 = vrot.slane %v10138, 7
        %v10141 = vshll.u32 %v9849, 16
        %v10143 = vor.u32 %v10140, %v10141
        %v10144 = vsel %vm562, %v10136, %v10143
        %v10146 = vshrl.u32 %v9850, 16
        %v10148 = vrot.slane %v10146, 7
        %v10149 = vrot.slane %v10148, 4
        %v10151 = vshrl.u32 %v9851, 16
        %v10153 = vrot.slane %v10151, 7
        %v10154 = vshll.u32 %v9851, 16
        %v10156 = vor.u32 %v10153, %v10154
        %v10157 = vsel %vm562, %v10149, %v10156
        %v10158 = vrot.slane %v10153, 4
        %v10160 = vshrl.u32 %v9852, 16
        %v10162 = vrot.slane %v10160, 7
        %v10163 = vshll.u32 %v9852, 16
        %v10165 = vor.u32 %v10162, %v10163
        %v10166 = vsel %vm562, %v10158, %v10165
        %v10168 = vshrl.u32 %v9853, 16
        %v10170 = vrot.slane %v10168, 7
        %v10171 = vrot.slane %v10170, 4
        %v10173 = vshrl.u32 %v9854, 16
        %v10175 = vrot.slane %v10173, 7
        %v10176 = vshll.u32 %v9854, 16
        %v10178 = vor.u32 %v10175, %v10176
        %v10179 = vsel %vm562, %v10171, %v10178
        %v10180 = vrot.slane %v10175, 4
        %v10182 = vshrl.u32 %v9855, 16
        %v10184 = vrot.slane %v10182, 7
        %v10185 = vshll.u32 %v9855, 16
        %v10187 = vor.u32 %v10184, %v10185
        %v10188 = vsel %vm562, %v10180, %v10187
        %v10190 = vshrl.u32 %v9856, 16
        %v10192 = vrot.slane %v10190, 7
        %v10193 = vrot.slane %v10192, 4
        %v10195 = vshrl.u32 %v9857, 16
        %v10197 = vrot.slane %v10195, 7
        %v10198 = vshll.u32 %v9857, 16
        %v10200 = vor.u32 %v10197, %v10198
        %v10201 = vsel %vm562, %v10193, %v10200
        %v10202 = vrot.slane %v10197, 4
        %v10204 = vshrl.u32 %v9858, 16
        %v10206 = vrot.slane %v10204, 7
        %v10207 = vshll.u32 %v9858, 16
        %v10209 = vor.u32 %v10206, %v10207
        %v10210 = vsel %vm562, %v10202, %v10209
        %s10211 = scalar_lea.vmem [#allocation9], 384
        %v10212 = vld [vmem:[%s10211] sm:$0xf]
        %v10213 = vld [vmem:[%s10211 + $0x4] sm:$0xf]
        %v10214 = vld [vmem:[%s10211 + $0x8] sm:$0xf]
        %v10215 = vld [vmem:[%s10211 + $0xc] sm:$0xf]
        %v10216 = vld [vmem:[%s10211 + $0x10] sm:$0xf]
        %v10217 = vld [vmem:[%s10211 + $0x14] sm:$0xf]
        %v10218 = vld [vmem:[%s10211 + $0x18] sm:$0xf]
        %v10219 = vld [vmem:[%s10211 + $0x1c] sm:$0xf]
        %v10220 = vld [vmem:[%s10211 + $0x20] sm:$0xf]
        %v10221 = vld [vmem:[%s10211 + $0x24] sm:$0xf]
        %v10222 = vld [vmem:[%s10211 + $0x28] sm:$0xf]
        %v10223 = vld [vmem:[%s10211 + $0x2c] sm:$0xf]
        %v10224 = vld [vmem:[%s10211 + $0x30] sm:$0xf]
        %v10225 = vld [vmem:[%s10211 + $0x34] sm:$0xf]
        %v10226 = vld [vmem:[%s10211 + $0x38] sm:$0xf]
        %v10227 = vld [vmem:[%s10211 + $0x3c] sm:$0xf]
        %v10228 = vunpack.c.l.b16 %v9871
        %v10229 = vunpack.c.l.b16 %v9880
        %v10230 = vunpack.c.l.b16 %v9893
        %v10231 = vunpack.c.l.b16 %v9902
        %v10232 = vunpack.c.l.b16 %v9915
        %v10233 = vunpack.c.l.b16 %v9924
        %v10234 = vunpack.c.l.b16 %v9937
        %v10235 = vunpack.c.l.b16 %v9946
        %v10236 = vunpack.c.l.b16 %v9959
        %v10237 = vunpack.c.l.b16 %v9968
        %v10238 = vunpack.c.l.b16 %v9981
        %v10239 = vunpack.c.l.b16 %v9990
        %v10240 = vunpack.c.l.b16 %v10003
        %v10241 = vunpack.c.l.b16 %v10012
        %v10242 = vunpack.c.l.b16 %v10025
        %v10243 = vunpack.c.l.b16 %v10034
        %v10244 = vunpack.c.l.b16 %v10047
        %v10245 = vunpack.c.l.b16 %v10056
        %v10246 = vunpack.c.l.b16 %v10069
        %v10247 = vunpack.c.l.b16 %v10078
        %v10248 = vunpack.c.l.b16 %v10091
        %v10249 = vunpack.c.l.b16 %v10100
        %v10250 = vunpack.c.l.b16 %v10113
        %v10251 = vunpack.c.l.b16 %v10122
        %v10252 = vunpack.c.l.b16 %v10135
        %v10253 = vunpack.c.l.b16 %v10144
        %v10254 = vunpack.c.l.b16 %v10157
        %v10255 = vunpack.c.l.b16 %v10166
        %v10256 = vunpack.c.l.b16 %v10179
        %v10257 = vunpack.c.l.b16 %v10188
        %v10258 = vunpack.c.l.b16 %v10201
        %v10259 = vunpack.c.l.b16 %v10210
        %v10260 = vpack.c.b16 %v10229, %v10228
        %v10261 = vpack.c.b16 %v10231, %v10230
        %v10262 = vpack.c.b16 %v10233, %v10232
        %v10263 = vpack.c.b16 %v10235, %v10234
        %v10264 = vpack.c.b16 %v10237, %v10236
        %v10265 = vpack.c.b16 %v10239, %v10238
        %v10266 = vpack.c.b16 %v10241, %v10240
        %v10267 = vpack.c.b16 %v10243, %v10242
        %v10268 = vpack.c.b16 %v10245, %v10244
        %v10269 = vpack.c.b16 %v10247, %v10246
        %v10270 = vpack.c.b16 %v10249, %v10248
        %v10271 = vpack.c.b16 %v10251, %v10250
        %v10272 = vpack.c.b16 %v10253, %v10252
        %v10273 = vpack.c.b16 %v10255, %v10254
        %v10274 = vpack.c.b16 %v10257, %v10256
        %v10275 = vpack.c.b16 %v10259, %v10258
        %v10308 = vunpack.c.l.b16 %v10212
        %v10309 = vunpack.c.l.b16 %v10213
        %v10310 = vunpack.c.l.b16 %v10214
        %v10311 = vunpack.c.l.b16 %v10215
        %v10312 = vunpack.c.l.b16 %v10216
        %v10313 = vunpack.c.l.b16 %v10217
        %v10314 = vunpack.c.l.b16 %v10218
        %v10315 = vunpack.c.l.b16 %v10219
        %v10316 = vunpack.c.l.b16 %v10220
        %v10317 = vunpack.c.l.b16 %v10221
        %v10318 = vunpack.c.l.b16 %v10222
        %v10319 = vunpack.c.l.b16 %v10223
        %v10320 = vunpack.c.l.b16 %v10224
        %v10321 = vunpack.c.l.b16 %v10225
        %v10322 = vunpack.c.l.b16 %v10226
        %v10323 = vunpack.c.l.b16 %v10227
        %v10324 = vpack.c.b16 %v10309, %v10308
        %v10325 = vpack.c.b16 %v10311, %v10310
        %v10326 = vpack.c.b16 %v10313, %v10312
        %v10327 = vpack.c.b16 %v10315, %v10314
        %v10328 = vpack.c.b16 %v10317, %v10316
        %v10329 = vpack.c.b16 %v10319, %v10318
        %v10330 = vpack.c.b16 %v10321, %v10320
        %v10331 = vpack.c.b16 %v10323, %v10322
        %10340 = vmatprep.subr.bf16.mxu0 0
        %10341 = vmatpush1.bf16.msra.mxu0 %v10324
        %10342 = vmatprep.subr.bf16.mxu0 0
        %10343 = vmatpush1.bf16.msra.mxu0 %v10325
        %10344 = vmatprep.subr.bf16.mxu0 0
        %10345 = vmatpush1.bf16.msra.mxu0 %v10326
        %10346 = vmatprep.subr.bf16.mxu0 0
        %10347 = vmatpush1.bf16.msra.mxu0 %v10327
        %10348 = vmatprep.subr.bf16.mxu0 0
        %10349 = vmatpush1.bf16.msra.mxu0 %v10328
        %10350 = vmatprep.subr.bf16.mxu0 0
        %10351 = vmatpush1.bf16.msra.mxu0 %v10329
        %10352 = vmatprep.subr.bf16.mxu0 0
        %10353 = vmatpush1.bf16.msra.mxu0 %v10330
        %10354 = vmatprep.subr.bf16.mxu0 0
        %10355 = vmatpush1.bf16.msra.mxu0 %v10331
        %10356 = vmatprep.subr.bf16.mxu0 0
        %10357 = vmatpush1.bf16.msra.mxu0 0
        %10358 = vmatprep.subr.bf16.mxu0 0
        %10359 = vmatpush1.bf16.msra.mxu0 0
        %10360 = vmatprep.subr.bf16.mxu0 0
        %10361 = vmatpush1.bf16.msra.mxu0 0
        %10362 = vmatprep.subr.bf16.mxu0 0
        %10363 = vmatpush1.bf16.msra.mxu0 0
        %10364 = vmatprep.subr.bf16.mxu0 0
        %10365 = vmatpush1.bf16.msra.mxu0 0
        %10366 = vmatprep.subr.bf16.mxu0 0
        %10367 = vmatpush1.bf16.msra.mxu0 0
        %10368 = vmatprep.subr.bf16.mxu0 0
        %10369 = vmatpush1.bf16.msra.mxu0 0
        %10370 = vmatprep.subr.bf16.mxu0 0
        %10371 = vmatpush1.bf16.msra.mxu0 0
        %10372 = vmatprep.mubr.bf16.mxu0 0
        %10373 = vmatmul.mubr.bf16.gmra.mrb[0].mxu0 %v10260
        %v10374 = vpop.f32.mrb[0].mxu0
        %v10375 = vadd.f32 0.0, %v10374
        %v10376 = vpop.f32.mrb[0].mxu0
        %v10377 = vpop.f32.mrb[0].mxu0
        %v10378 = vadd.f32 0.0, %v10377
        %v10379 = vpop.f32.mrb[0].mxu0
        %10380 = vmatprep.mubr.bf16.mxu0 0
        %10381 = vmatmul.mubr.bf16.gmra.mrb[0].mxu0 %v10261
        %v10382 = vpop.f32.mrb[0].mxu0
        %v10383 = vadd.f32 0.0, %v10382
        %v10384 = vpop.f32.mrb[0].mxu0
        %v10385 = vpop.f32.mrb[0].mxu0
        %v10386 = vadd.f32 0.0, %v10385
        %v10387 = vpop.f32.mrb[0].mxu0
        %10388 = vmatprep.mubr.bf16.mxu0 0
        %10389 = vmatmul.mubr.bf16.gmra.mrb[0].mxu0 %v10262
        %v10390 = vpop.f32.mrb[0].mxu0
        %v10391 = vadd.f32 0.0, %v10390
        %v10392 = vpop.f32.mrb[0].mxu0
        %v10393 = vpop.f32.mrb[0].mxu0
        %v10394 = vadd.f32 0.0, %v10393
        %v10395 = vpop.f32.mrb[0].mxu0
        %10396 = vmatprep.mubr.bf16.mxu0 0
        %10397 = vmatmul.mubr.bf16.gmra.mrb[0].mxu0 %v10263
        %v10398 = vpop.f32.mrb[0].mxu0
        %v10399 = vadd.f32 0.0, %v10398
        %v10400 = vpop.f32.mrb[0].mxu0
        %v10401 = vpop.f32.mrb[0].mxu0
        %v10402 = vadd.f32 0.0, %v10401
        %v10403 = vpop.f32.mrb[0].mxu0
        %10404 = vmatprep.mubr.bf16.mxu0 0
        %10405 = vmatmul.mubr.bf16.gmra.mrb[0].mxu0 %v10264
        %v10406 = vpop.f32.mrb[0].mxu0
        %v10407 = vadd.f32 0.0, %v10406
        %v10408 = vpop.f32.mrb[0].mxu0
        %v10409 = vpop.f32.mrb[0].mxu0
        %v10410 = vadd.f32 0.0, %v10409
        %v10411 = vpop.f32.mrb[0].mxu0
        %10412 = vmatprep.mubr.bf16.mxu0 0
        %10413 = vmatmul.mubr.bf16.gmra.mrb[0].mxu0 %v10265
        %v10414 = vpop.f32.mrb[0].mxu0
        %v10415 = vadd.f32 0.0, %v10414
        %v10416 = vpop.f32.mrb[0].mxu0
        %v10417 = vpop.f32.mrb[0].mxu0
        %v10418 = vadd.f32 0.0, %v10417
        %v10419 = vpop.f32.mrb[0].mxu0
        %10420 = vmatprep.mubr.bf16.mxu0 0
        %10421 = vmatmul.mubr.bf16.gmra.mrb[0].mxu0 %v10266
        %v10422 = vpop.f32.mrb[0].mxu0
        %v10423 = vadd.f32 0.0, %v10422
        %v10424 = vpop.f32.mrb[0].mxu0
        %v10425 = vpop.f32.mrb[0].mxu0
        %v10426 = vadd.f32 0.0, %v10425
        %v10427 = vpop.f32.mrb[0].mxu0
        %10428 = vmatprep.mubr.bf16.mxu0 0
        %10429 = vmatmul.mubr.bf16.gmra.mrb[0].mxu0 %v10267
        %v10430 = vpop.f32.mrb[0].mxu0
        %v10431 = vadd.f32 0.0, %v10430
        %v10432 = vpop.f32.mrb[0].mxu0
        %v10433 = vpop.f32.mrb[0].mxu0
        %v10434 = vadd.f32 0.0, %v10433
        %v10435 = vpop.f32.mrb[0].mxu0
        %10436 = vmatprep.mubr.bf16.mxu0 0
        %10437 = vmatmul.mubr.bf16.gmra.mrb[0].mxu0 %v10268
        %v10438 = vpop.f32.mrb[0].mxu0
        %v10439 = vadd.f32 0.0, %v10438
        %v10440 = vpop.f32.mrb[0].mxu0
        %v10441 = vpop.f32.mrb[0].mxu0
        %v10442 = vadd.f32 0.0, %v10441
        %v10443 = vpop.f32.mrb[0].mxu0
        %10444 = vmatprep.mubr.bf16.mxu0 0
        %10445 = vmatmul.mubr.bf16.gmra.mrb[0].mxu0 %v10269
        %v10446 = vpop.f32.mrb[0].mxu0
        %v10447 = vadd.f32 0.0, %v10446
        %v10448 = vpop.f32.mrb[0].mxu0
        %v10449 = vpop.f32.mrb[0].mxu0
        %v10450 = vadd.f32 0.0, %v10449
        %v10451 = vpop.f32.mrb[0].mxu0
        %10452 = vmatprep.mubr.bf16.mxu0 0
        %10453 = vmatmul.mubr.bf16.gmra.mrb[0].mxu0 %v10270
        %v10454 = vpop.f32.mrb[0].mxu0
        %v10455 = vadd.f32 0.0, %v10454
        %v10456 = vpop.f32.mrb[0].mxu0
        %v10457 = vpop.f32.mrb[0].mxu0
        %v10458 = vadd.f32 0.0, %v10457
        %v10459 = vpop.f32.mrb[0].mxu0
        %10460 = vmatprep.mubr.bf16.mxu0 0
        %10461 = vmatmul.mubr.bf16.gmra.mrb[0].mxu0 %v10271
        %v10462 = vpop.f32.mrb[0].mxu0
        %v10463 = vadd.f32 0.0, %v10462
        %v10464 = vpop.f32.mrb[0].mxu0
        %v10465 = vpop.f32.mrb[0].mxu0
        %v10466 = vadd.f32 0.0, %v10465
        %v10467 = vpop.f32.mrb[0].mxu0
        %10468 = vmatprep.mubr.bf16.mxu0 0
        %10469 = vmatmul.mubr.bf16.gmra.mrb[0].mxu0 %v10272
        %v10470 = vpop.f32.mrb[0].mxu0
        %v10471 = vadd.f32 0.0, %v10470
        %v10472 = vpop.f32.mrb[0].mxu0
        %v10473 = vpop.f32.mrb[0].mxu0
        %v10474 = vadd.f32 0.0, %v10473
        %v10475 = vpop.f32.mrb[0].mxu0
        %10476 = vmatprep.mubr.bf16.mxu0 0
        %10477 = vmatmul.mubr.bf16.gmra.mrb[0].mxu0 %v10273
        %v10478 = vpop.f32.mrb[0].mxu0
        %v10479 = vadd.f32 0.0, %v10478
        %v10480 = vpop.f32.mrb[0].mxu0
        %v10481 = vpop.f32.mrb[0].mxu0
        %v10482 = vadd.f32 0.0, %v10481
        %v10483 = vpop.f32.mrb[0].mxu0
        %10484 = vmatprep.mubr.bf16.mxu0 0
        %10485 = vmatmul.mubr.bf16.gmra.mrb[0].mxu0 %v10274
        %v10486 = vpop.f32.mrb[0].mxu0
        %v10487 = vadd.f32 0.0, %v10486
        %v10488 = vpop.f32.mrb[0].mxu0
        %v10489 = vpop.f32.mrb[0].mxu0
        %v10490 = vadd.f32 0.0, %v10489
        %v10491 = vpop.f32.mrb[0].mxu0
        %10492 = vmatprep.mubr.bf16.mxu0 0
        %10493 = vmatmul.mubr.bf16.gmra.mrb[0].mxu0 %v10275
        %v10494 = vpop.f32.mrb[0].mxu0
        %v10495 = vadd.f32 0.0, %v10494
        %v10496 = vpop.f32.mrb[0].mxu0
        %v10497 = vpop.f32.mrb[0].mxu0
        %v10498 = vadd.f32 0.0, %v10497
        %v10499 = vpop.f32.mrb[0].mxu0
        %10500 = vdwg.mxu0
        %v10501 = vadd.f32 %v9778, %v10375
        %v10502 = vadd.f32 %v9779, %v10378
        %v10503 = vadd.f32 %v9780, %v10383
        %v10504 = vadd.f32 %v9781, %v10386
        %v10505 = vadd.f32 %v9782, %v10391
        %v10506 = vadd.f32 %v9783, %v10394
        %v10507 = vadd.f32 %v9784, %v10399
        %v10508 = vadd.f32 %v9785, %v10402
        %v10509 = vadd.f32 %v9786, %v10407
        %v10510 = vadd.f32 %v9787, %v10410
        %v10511 = vadd.f32 %v9788, %v10415
        %v10512 = vadd.f32 %v9789, %v10418
        %v10513 = vadd.f32 %v9790, %v10423
        %v10514 = vadd.f32 %v9791, %v10426
        %v10515 = vadd.f32 %v9792, %v10431
        %v10516 = vadd.f32 %v9793, %v10434
        %v10517 = vadd.f32 %v9794, %v10439
        %v10518 = vadd.f32 %v9795, %v10442
        %v10519 = vadd.f32 %v9796, %v10447
        %v10520 = vadd.f32 %v9797, %v10450
        %v10521 = vadd.f32 %v9798, %v10455
        %v10522 = vadd.f32 %v9799, %v10458
        %v10523 = vadd.f32 %v9800, %v10463
        %v10524 = vadd.f32 %v9801, %v10466
        %v10525 = vadd.f32 %v9802, %v10471
        %v10526 = vadd.f32 %v9803, %v10474
        %v10527 = vadd.f32 %v9804, %v10479
        %v10528 = vadd.f32 %v9805, %v10482
        %v10529 = vadd.f32 %v9806, %v10487
        %v10530 = vadd.f32 %v9807, %v10490
        %v10531 = vadd.f32 %v9808, %v10495
        %v10532 = vadd.f32 %v9809, %v10498
        %s10533 = scalar_lea.vmem [#allocation9], 448
        %v10534 = vld [vmem:[%s10533] sm:$0xf]
        %v10535 = vld [vmem:[%s10533 + $0x4] sm:$0xf]
        %v10536 = vld [vmem:[%s10533 + $0x8] sm:$0xf]
        %v10537 = vld [vmem:[%s10533 + $0xc] sm:$0xf]
        %v10538 = vld [vmem:[%s10533 + $0x10] sm:$0xf]
        %v10539 = vld [vmem:[%s10533 + $0x14] sm:$0xf]
        %v10540 = vld [vmem:[%s10533 + $0x18] sm:$0xf]
        %v10541 = vld [vmem:[%s10533 + $0x1c] sm:$0xf]
        %v10542 = vld [vmem:[%s10533 + $0x20] sm:$0xf]
        %v10543 = vld [vmem:[%s10533 + $0x24] sm:$0xf]
        %v10544 = vld [vmem:[%s10533 + $0x28] sm:$0xf]
        %v10545 = vld [vmem:[%s10533 + $0x2c] sm:$0xf]
        %v10546 = vld [vmem:[%s10533 + $0x30] sm:$0xf]
        %v10547 = vld [vmem:[%s10533 + $0x34] sm:$0xf]
        %v10548 = vld [vmem:[%s10533 + $0x38] sm:$0xf]
        %v10549 = vld [vmem:[%s10533 + $0x3c] sm:$0xf]
        %v10582 = vunpack.c.l.b16 %v9812
        %v10583 = vunpack.c.l.b16 %v9813
        %v10584 = vunpack.c.l.b16 %v9815
        %v10585 = vunpack.c.l.b16 %v9816
        %v10586 = vunpack.c.l.b16 %v9818
        %v10587 = vunpack.c.l.b16 %v9819
        %v10588 = vunpack.c.l.b16 %v9821
        %v10589 = vunpack.c.l.b16 %v9822
        %v10590 = vunpack.c.l.b16 %v9824
        %v10591 = vunpack.c.l.b16 %v9825
        %v10592 = vunpack.c.l.b16 %v9827
        %v10593 = vunpack.c.l.b16 %v9828
        %v10594 = vunpack.c.l.b16 %v9830
        %v10595 = vunpack.c.l.b16 %v9831
        %v10596 = vunpack.c.l.b16 %v9833
        %v10597 = vunpack.c.l.b16 %v9834
        %v10598 = vunpack.c.l.b16 %v9836
        %v10599 = vunpack.c.l.b16 %v9837
        %v10600 = vunpack.c.l.b16 %v9839
        %v10601 = vunpack.c.l.b16 %v9840
        %v10602 = vunpack.c.l.b16 %v9842
        %v10603 = vunpack.c.l.b16 %v9843
        %v10604 = vunpack.c.l.b16 %v9845
        %v10605 = vunpack.c.l.b16 %v9846
        %v10606 = vunpack.c.l.b16 %v9848
        %v10607 = vunpack.c.l.b16 %v9849
        %v10608 = vunpack.c.l.b16 %v9851
        %v10609 = vunpack.c.l.b16 %v9852
        %v10610 = vunpack.c.l.b16 %v9854
        %v10611 = vunpack.c.l.b16 %v9855
        %v10612 = vunpack.c.l.b16 %v9857
        %v10613 = vunpack.c.l.b16 %v9858
        %v10614 = vpack.c.b16 %v10583, %v10582
        %v10615 = vpack.c.b16 %v10585, %v10584
        %v10616 = vpack.c.b16 %v10587, %v10586
        %v10617 = vpack.c.b16 %v10589, %v10588
        %v10618 = vpack.c.b16 %v10591, %v10590
        %v10619 = vpack.c.b16 %v10593, %v10592
        %v10620 = vpack.c.b16 %v10595, %v10594
        %v10621 = vpack.c.b16 %v10597, %v10596
        %v10622 = vpack.c.b16 %v10599, %v10598
        %v10623 = vpack.c.b16 %v10601, %v10600
        %v10624 = vpack.c.b16 %v10603, %v10602
        %v10625 = vpack.c.b16 %v10605, %v10604
        %v10626 = vpack.c.b16 %v10607, %v10606
        %v10627 = vpack.c.b16 %v10609, %v10608
        %v10628 = vpack.c.b16 %v10611, %v10610
        %v10629 = vpack.c.b16 %v10613, %v10612
        %v10662 = vunpack.c.l.b16 %v10534
        %v10663 = vunpack.c.l.b16 %v10535
        %v10664 = vunpack.c.l.b16 %v10536
        %v10665 = vunpack.c.l.b16 %v10537
        %v10666 = vunpack.c.l.b16 %v10538
        %v10667 = vunpack.c.l.b16 %v10539
        %v10668 = vunpack.c.l.b16 %v10540
        %v10669 = vunpack.c.l.b16 %v10541
        %v10670 = vunpack.c.l.b16 %v10542
        %v10671 = vunpack.c.l.b16 %v10543
        %v10672 = vunpack.c.l.b16 %v10544
        %v10673 = vunpack.c.l.b16 %v10545
        %v10674 = vunpack.c.l.b16 %v10546
        %v10675 = vunpack.c.l.b16 %v10547
        %v10676 = vunpack.c.l.b16 %v10548
        %v10677 = vunpack.c.l.b16 %v10549
        %v10678 = vpack.c.b16 %v10663, %v10662
        %v10679 = vpack.c.b16 %v10665, %v10664
        %v10680 = vpack.c.b16 %v10667, %v10666
        %v10681 = vpack.c.b16 %v10669, %v10668
        %v10682 = vpack.c.b16 %v10671, %v10670
        %v10683 = vpack.c.b16 %v10673, %v10672
        %v10684 = vpack.c.b16 %v10675, %v10674
        %v10685 = vpack.c.b16 %v10677, %v10676
        %10694 = vmatprep.subr.bf16.mxu0 0
        %10695 = vmatpush1.bf16.msra.mxu0 %v10678
        %10696 = vmatprep.subr.bf16.mxu0 0
        %10697 = vmatpush1.bf16.msra.mxu0 %v10679
        %10698 = vmatprep.subr.bf16.mxu0 0
        %10699 = vmatpush1.bf16.msra.mxu0 %v10680
        %10700 = vmatprep.subr.bf16.mxu0 0
        %10701 = vmatpush1.bf16.msra.mxu0 %v10681
        %10702 = vmatprep.subr.bf16.mxu0 0
        %10703 = vmatpush1.bf16.msra.mxu0 %v10682
        %10704 = vmatprep.subr.bf16.mxu0 0
        %10705 = vmatpush1.bf16.msra.mxu0 %v10683
        %10706 = vmatprep.subr.bf16.mxu0 0
        %10707 = vmatpush1.bf16.msra.mxu0 %v10684
        %10708 = vmatprep.subr.bf16.mxu0 0
        %10709 = vmatpush1.bf16.msra.mxu0 %v10685
        %10710 = vmatprep.subr.bf16.mxu0 0
        %10711 = vmatpush1.bf16.msra.mxu0 0
        %10712 = vmatprep.subr.bf16.mxu0 0
        %10713 = vmatpush1.bf16.msra.mxu0 0
        %10714 = vmatprep.subr.bf16.mxu0 0
        %10715 = vmatpush1.bf16.msra.mxu0 0
        %10716 = vmatprep.subr.bf16.mxu0 0
        %10717 = vmatpush1.bf16.msra.mxu0 0
        %10718 = vmatprep.subr.bf16.mxu0 0
        %10719 = vmatpush1.bf16.msra.mxu0 0
        %10720 = vmatprep.subr.bf16.mxu0 0
        %10721 = vmatpush1.bf16.msra.mxu0 0
        %10722 = vmatprep.subr.bf16.mxu0 0
        %10723 = vmatpush1.bf16.msra.mxu0 0
        %10724 = vmatprep.subr.bf16.mxu0 0
        %10725 = vmatpush1.bf16.msra.mxu0 0
        %10726 = vmatprep.mubr.bf16.mxu0 0
        %10727 = vmatmul.mubr.bf16.gmra.mrb[0].mxu0 %v10614
        %v10728 = vpop.f32.mrb[0].mxu0
        %v10729 = vadd.f32 0.0, %v10728
        %v10730 = vpop.f32.mrb[0].mxu0
        %v10731 = vpop.f32.mrb[0].mxu0
        %v10732 = vadd.f32 0.0, %v10731
        %v10733 = vpop.f32.mrb[0].mxu0
        %10734 = vmatprep.mubr.bf16.mxu0 0
        %10735 = vmatmul.mubr.bf16.gmra.mrb[0].mxu0 %v10615
        %v10736 = vpop.f32.mrb[0].mxu0
        %v10737 = vadd.f32 0.0, %v10736
        %v10738 = vpop.f32.mrb[0].mxu0
        %v10739 = vpop.f32.mrb[0].mxu0
        %v10740 = vadd.f32 0.0, %v10739
        %v10741 = vpop.f32.mrb[0].mxu0
        %10742 = vmatprep.mubr.bf16.mxu0 0
        %10743 = vmatmul.mubr.bf16.gmra.mrb[0].mxu0 %v10616
        %v10744 = vpop.f32.mrb[0].mxu0
        %v10745 = vadd.f32 0.0, %v10744
        %v10746 = vpop.f32.mrb[0].mxu0
        %v10747 = vpop.f32.mrb[0].mxu0
        %v10748 = vadd.f32 0.0, %v10747
        %v10749 = vpop.f32.mrb[0].mxu0
        %10750 = vmatprep.mubr.bf16.mxu0 0
        %10751 = vmatmul.mubr.bf16.gmra.mrb[0].mxu0 %v10617
        %v10752 = vpop.f32.mrb[0].mxu0
        %v10753 = vadd.f32 0.0, %v10752
        %v10754 = vpop.f32.mrb[0].mxu0
        %v10755 = vpop.f32.mrb[0].mxu0
        %v10756 = vadd.f32 0.0, %v10755
        %v10757 = vpop.f32.mrb[0].mxu0
        %10758 = vmatprep.mubr.bf16.mxu0 0
        %10759 = vmatmul.mubr.bf16.gmra.mrb[0].mxu0 %v10618
        %v10760 = vpop.f32.mrb[0].mxu0
        %v10761 = vadd.f32 0.0, %v10760
        %v10762 = vpop.f32.mrb[0].mxu0
        %v10763 = vpop.f32.mrb[0].mxu0
        %v10764 = vadd.f32 0.0, %v10763
        %v10765 = vpop.f32.mrb[0].mxu0
        %10766 = vmatprep.mubr.bf16.mxu0 0
        %10767 = vmatmul.mubr.bf16.gmra.mrb[0].mxu0 %v10619
        %v10768 = vpop.f32.mrb[0].mxu0
        %v10769 = vadd.f32 0.0, %v10768
        %v10770 = vpop.f32.mrb[0].mxu0
        %v10771 = vpop.f32.mrb[0].mxu0
        %v10772 = vadd.f32 0.0, %v10771
        %v10773 = vpop.f32.mrb[0].mxu0
        %10774 = vmatprep.mubr.bf16.mxu0 0
        %10775 = vmatmul.mubr.bf16.gmra.mrb[0].mxu0 %v10620
        %v10776 = vpop.f32.mrb[0].mxu0
        %v10777 = vadd.f32 0.0, %v10776
        %v10778 = vpop.f32.mrb[0].mxu0
        %v10779 = vpop.f32.mrb[0].mxu0
        %v10780 = vadd.f32 0.0, %v10779
        %v10781 = vpop.f32.mrb[0].mxu0
        %10782 = vmatprep.mubr.bf16.mxu0 0
        %10783 = vmatmul.mubr.bf16.gmra.mrb[0].mxu0 %v10621
        %v10784 = vpop.f32.mrb[0].mxu0
        %v10785 = vadd.f32 0.0, %v10784
        %v10786 = vpop.f32.mrb[0].mxu0
        %v10787 = vpop.f32.mrb[0].mxu0
        %v10788 = vadd.f32 0.0, %v10787
        %v10789 = vpop.f32.mrb[0].mxu0
        %10790 = vmatprep.mubr.bf16.mxu0 0
        %10791 = vmatmul.mubr.bf16.gmra.mrb[0].mxu0 %v10622
        %v10792 = vpop.f32.mrb[0].mxu0
        %v10793 = vadd.f32 0.0, %v10792
        %v10794 = vpop.f32.mrb[0].mxu0
        %v10795 = vpop.f32.mrb[0].mxu0
        %v10796 = vadd.f32 0.0, %v10795
        %v10797 = vpop.f32.mrb[0].mxu0
        %10798 = vmatprep.mubr.bf16.mxu0 0
        %10799 = vmatmul.mubr.bf16.gmra.mrb[0].mxu0 %v10623
        %v10800 = vpop.f32.mrb[0].mxu0
        %v10801 = vadd.f32 0.0, %v10800
        %v10802 = vpop.f32.mrb[0].mxu0
        %v10803 = vpop.f32.mrb[0].mxu0
        %v10804 = vadd.f32 0.0, %v10803
        %v10805 = vpop.f32.mrb[0].mxu0
        %10806 = vmatprep.mubr.bf16.mxu0 0
        %10807 = vmatmul.mubr.bf16.gmra.mrb[0].mxu0 %v10624
        %v10808 = vpop.f32.mrb[0].mxu0
        %v10809 = vadd.f32 0.0, %v10808
        %v10810 = vpop.f32.mrb[0].mxu0
        %v10811 = vpop.f32.mrb[0].mxu0
        %v10812 = vadd.f32 0.0, %v10811
        %v10813 = vpop.f32.mrb[0].mxu0
        %10814 = vmatprep.mubr.bf16.mxu0 0
        %10815 = vmatmul.mubr.bf16.gmra.mrb[0].mxu0 %v10625
        %v10816 = vpop.f32.mrb[0].mxu0
        %v10817 = vadd.f32 0.0, %v10816
        %v10818 = vpop.f32.mrb[0].mxu0
        %v10819 = vpop.f32.mrb[0].mxu0
        %v10820 = vadd.f32 0.0, %v10819
        %v10821 = vpop.f32.mrb[0].mxu0
        %10822 = vmatprep.mubr.bf16.mxu0 0
        %10823 = vmatmul.mubr.bf16.gmra.mrb[0].mxu0 %v10626
        %v10824 = vpop.f32.mrb[0].mxu0
        %v10825 = vadd.f32 0.0, %v10824
        %v10826 = vpop.f32.mrb[0].mxu0
        %v10827 = vpop.f32.mrb[0].mxu0
        %v10828 = vadd.f32 0.0, %v10827
        %v10829 = vpop.f32.mrb[0].mxu0
        %10830 = vmatprep.mubr.bf16.mxu0 0
        %10831 = vmatmul.mubr.bf16.gmra.mrb[0].mxu0 %v10627
        %v10832 = vpop.f32.mrb[0].mxu0
        %v10833 = vadd.f32 0.0, %v10832
        %v10834 = vpop.f32.mrb[0].mxu0
        %v10835 = vpop.f32.mrb[0].mxu0
        %v10836 = vadd.f32 0.0, %v10835
        %v10837 = vpop.f32.mrb[0].mxu0
        %10838 = vmatprep.mubr.bf16.mxu0 0
        %10839 = vmatmul.mubr.bf16.gmra.mrb[0].mxu0 %v10628
        %v10840 = vpop.f32.mrb[0].mxu0
        %v10841 = vadd.f32 0.0, %v10840
        %v10842 = vpop.f32.mrb[0].mxu0
        %v10843 = vpop.f32.mrb[0].mxu0
        %v10844 = vadd.f32 0.0, %v10843
        %v10845 = vpop.f32.mrb[0].mxu0
        %10846 = vmatprep.mubr.bf16.mxu0 0
        %10847 = vmatmul.mubr.bf16.gmra.mrb[0].mxu0 %v10629
        %v10848 = vpop.f32.mrb[0].mxu0
        %v10849 = vadd.f32 0.0, %v10848
        %v10850 = vpop.f32.mrb[0].mxu0
        %v10851 = vpop.f32.mrb[0].mxu0
        %v10852 = vadd.f32 0.0, %v10851
        %v10853 = vpop.f32.mrb[0].mxu0
        %10854 = vdwg.mxu0
        %v10855 = vadd.f32 %v10501, %v10729
        %v10856 = vadd.f32 %v10502, %v10732
        %v10857 = vadd.f32 %v10503, %v10737
        %v10858 = vadd.f32 %v10504, %v10740
        %v10859 = vadd.f32 %v10505, %v10745
        %v10860 = vadd.f32 %v10506, %v10748
        %v10861 = vadd.f32 %v10507, %v10753
        %v10862 = vadd.f32 %v10508, %v10756
        %v10863 = vadd.f32 %v10509, %v10761
        %v10864 = vadd.f32 %v10510, %v10764
        %v10865 = vadd.f32 %v10511, %v10769
        %v10866 = vadd.f32 %v10512, %v10772
        %v10867 = vadd.f32 %v10513, %v10777
        %v10868 = vadd.f32 %v10514, %v10780
        %v10869 = vadd.f32 %v10515, %v10785
        %v10870 = vadd.f32 %v10516, %v10788
        %v10871 = vadd.f32 %v10517, %v10793
        %v10872 = vadd.f32 %v10518, %v10796
        %v10873 = vadd.f32 %v10519, %v10801
        %v10874 = vadd.f32 %v10520, %v10804
        %v10875 = vadd.f32 %v10521, %v10809
        %v10876 = vadd.f32 %v10522, %v10812
        %v10877 = vadd.f32 %v10523, %v10817
        %v10878 = vadd.f32 %v10524, %v10820
        %v10879 = vadd.f32 %v10525, %v10825
        %v10880 = vadd.f32 %v10526, %v10828
        %v10881 = vadd.f32 %v10527, %v10833
        %v10882 = vadd.f32 %v10528, %v10836
        %v10883 = vadd.f32 %v10529, %v10841
        %v10884 = vadd.f32 %v10530, %v10844
        %v10885 = vadd.f32 %v10531, %v10849
        %v10886 = vadd.f32 %v10532, %v10852
        %v10887 = vld [vmem:[%s9810 + $0x8] sm:$0xf]
        %v10888 = vld [vmem:[%s9810 + $0xc] sm:$0xf]
        %v10889 = vld [vmem:[%s9810 + $0x10] sm:$0x1]
        %v10890 = vld [vmem:[%s9810 + $0x1c] sm:$0xf]
        %v10891 = vld [vmem:[%s9810 + $0x20] sm:$0xf]
        %v10892 = vld [vmem:[%s9810 + $0x24] sm:$0x1]
        %v10893 = vld [vmem:[%s9810 + $0x30] sm:$0xf]
        %v10894 = vld [vmem:[%s9810 + $0x34] sm:$0xf]
        %v10895 = vld [vmem:[%s9810 + $0x38] sm:$0x1]
        %v10896 = vld [vmem:[%s9810 + $0x44] sm:$0xf]
        %v10897 = vld [vmem:[%s9810 + $0x48] sm:$0xf]
        %v10898 = vld [vmem:[%s9810 + $0x4c] sm:$0x1]
        %v10899 = vld [vmem:[%s9810 + $0x58] sm:$0xf]
        %v10900 = vld [vmem:[%s9810 + $0x5c] sm:$0xf]
        %v10901 = vld [vmem:[%s9810 + $0x60] sm:$0x1]
        %v10902 = vld [vmem:[%s9810 + $0x6c] sm:$0xf]
        %v10903 = vld [vmem:[%s9810 + $0x70] sm:$0xf]
        %v10904 = vld [vmem:[%s9810 + $0x74] sm:$0x1]
        %v10905 = vld [vmem:[%s9810 + $0x80] sm:$0xf]
        %v10906 = vld [vmem:[%s9810 + $0x84] sm:$0xf]
        %v10907 = vld [vmem:[%s9810 + $0x88] sm:$0x1]
        %v10908 = vld [vmem:[%s9810 + $0x94] sm:$0xf]
        %v10909 = vld [vmem:[%s9810 + $0x98] sm:$0xf]
        %v10910 = vld [vmem:[%s9810 + $0x9c] sm:$0x1]
        %v10911 = vld [vmem:[%s9810 + $0xa8] sm:$0xf]
        %v10912 = vld [vmem:[%s9810 + $0xac] sm:$0xf]
        %v10913 = vld [vmem:[%s9810 + $0xb0] sm:$0x1]
        %v10914 = vld [vmem:[%s9810 + $0xbc] sm:$0xf]
        %v10915 = vld [vmem:[%s9810 + $0xc0] sm:$0xf]
        %v10916 = vld [vmem:[%s9810 + $0xc4] sm:$0x1]
        %v10917 = vld [vmem:[%s9810 + $0xd0] sm:$0xf]
        %v10918 = vld [vmem:[%s9810 + $0xd4] sm:$0xf]
        %v10919 = vld [vmem:[%s9810 + $0xd8] sm:$0x1]
        %v10920 = vld [vmem:[%s9810 + $0xe4] sm:$0xf]
        %v10921 = vld [vmem:[%s9810 + $0xe8] sm:$0xf]
        %v10922 = vld [vmem:[%s9810 + $0xec] sm:$0x1]
        %v10923 = vld [vmem:[%s9810 + $0xf8] sm:$0xf]
        %v10924 = vld [vmem:[%s9810 + $0xfc] sm:$0xf]
        %v10925 = vld [vmem:[%s9810 + $0x100] sm:$0x1]
        %v10926 = vld [vmem:[%s9810 + $0x10c] sm:$0xf]
        %v10927 = vld [vmem:[%s9810 + $0x110] sm:$0xf]
        %v10928 = vld [vmem:[%s9810 + $0x114] sm:$0x1]
        %v10929 = vld [vmem:[%s9810 + $0x120] sm:$0xf]
        %v10930 = vld [vmem:[%s9810 + $0x124] sm:$0xf]
        %v10931 = vld [vmem:[%s9810 + $0x128] sm:$0x1]
        %v10932 = vld [vmem:[%s9810 + $0x134] sm:$0xf]
        %v10933 = vld [vmem:[%s9810 + $0x138] sm:$0xf]
        %v10934 = vld [vmem:[%s9810 + $0x13c] sm:$0x1]
        %v10936 = vshrl.u32 %v10887, 16
        %v10938 = vrot.slane %v10936, 4
        %v10939 = vshll.u32 %v10887, 16
        %v10941 = vrot.slane %v10939, 5
        %v10942 = vor.u32 %v10938, %v10941
        %v10943 = vrot.slane %v10942, 4
        %v10945 = vshll.u32 %v10888, 16
        %v10947 = vrot.slane %v10945, 5
        %v10948 = vsel %vm1576, %v10943, %v10947
        %v10949 = vshrl.u32 %v10888, 16
        %v10951 = vrot.slane %v10949, 4
        %v10952 = vor.u32 %v10951, %v10947
        %v10953 = vrot.slane %v10952, 4
        %v10955 = vshll.u32 %v10889, 16
        %v10957 = vrot.slane %v10955, 5
        %v10958 = vsel %vm1576, %v10953, %v10957
        %v10960 = vshrl.u32 %v10890, 16
        %v10962 = vrot.slane %v10960, 4
        %v10963 = vshll.u32 %v10890, 16
        %v10965 = vrot.slane %v10963, 5
        %v10966 = vor.u32 %v10962, %v10965
        %v10967 = vrot.slane %v10966, 4
        %v10969 = vshll.u32 %v10891, 16
        %v10971 = vrot.slane %v10969, 5
        %v10972 = vsel %vm1576, %v10967, %v10971
        %v10973 = vshrl.u32 %v10891, 16
        %v10975 = vrot.slane %v10973, 4
        %v10976 = vor.u32 %v10975, %v10971
        %v10977 = vrot.slane %v10976, 4
        %v10979 = vshll.u32 %v10892, 16
        %v10981 = vrot.slane %v10979, 5
        %v10982 = vsel %vm1576, %v10977, %v10981
        %v10984 = vshrl.u32 %v10893, 16
        %v10986 = vrot.slane %v10984, 4
        %v10987 = vshll.u32 %v10893, 16
        %v10989 = vrot.slane %v10987, 5
        %v10990 = vor.u32 %v10986, %v10989
        %v10991 = vrot.slane %v10990, 4
        %v10993 = vshll.u32 %v10894, 16
        %v10995 = vrot.slane %v10993, 5
        %v10996 = vsel %vm1576, %v10991, %v10995
        %v10997 = vshrl.u32 %v10894, 16
        %v10999 = vrot.slane %v10997, 4
        %v11000 = vor.u32 %v10999, %v10995
        %v11001 = vrot.slane %v11000, 4
        %v11003 = vshll.u32 %v10895, 16
        %v11005 = vrot.slane %v11003, 5
        %v11006 = vsel %vm1576, %v11001, %v11005
        %v11008 = vshrl.u32 %v10896, 16
        %v11010 = vrot.slane %v11008, 4
        %v11011 = vshll.u32 %v10896, 16
        %v11013 = vrot.slane %v11011, 5
        %v11014 = vor.u32 %v11010, %v11013
        %v11015 = vrot.slane %v11014, 4
        %v11017 = vshll.u32 %v10897, 16
        %v11019 = vrot.slane %v11017, 5
        %v11020 = vsel %vm1576, %v11015, %v11019
        %v11021 = vshrl.u32 %v10897, 16
        %v11023 = vrot.slane %v11021, 4
        %v11024 = vor.u32 %v11023, %v11019
        %v11025 = vrot.slane %v11024, 4
        %v11027 = vshll.u32 %v10898, 16
        %v11029 = vrot.slane %v11027, 5
        %v11030 = vsel %vm1576, %v11025, %v11029
        %v11032 = vshrl.u32 %v10899, 16
        %v11034 = vrot.slane %v11032, 4
        %v11035 = vshll.u32 %v10899, 16
        %v11037 = vrot.slane %v11035, 5
        %v11038 = vor.u32 %v11034, %v11037
        %v11039 = vrot.slane %v11038, 4
        %v11041 = vshll.u32 %v10900, 16
        %v11043 = vrot.slane %v11041, 5
        %v11044 = vsel %vm1576, %v11039, %v11043
        %v11045 = vshrl.u32 %v10900, 16
        %v11047 = vrot.slane %v11045, 4
        %v11048 = vor.u32 %v11047, %v11043
        %v11049 = vrot.slane %v11048, 4
        %v11051 = vshll.u32 %v10901, 16
        %v11053 = vrot.slane %v11051, 5
        %v11054 = vsel %vm1576, %v11049, %v11053
        %v11056 = vshrl.u32 %v10902, 16
        %v11058 = vrot.slane %v11056, 4
        %v11059 = vshll.u32 %v10902, 16
        %v11061 = vrot.slane %v11059, 5
        %v11062 = vor.u32 %v11058, %v11061
        %v11063 = vrot.slane %v11062, 4
        %v11065 = vshll.u32 %v10903, 16
        %v11067 = vrot.slane %v11065, 5
        %v11068 = vsel %vm1576, %v11063, %v11067
        %v11069 = vshrl.u32 %v10903, 16
        %v11071 = vrot.slane %v11069, 4
        %v11072 = vor.u32 %v11071, %v11067
        %v11073 = vrot.slane %v11072, 4
        %v11075 = vshll.u32 %v10904, 16
        %v11077 = vrot.slane %v11075, 5
        %v11078 = vsel %vm1576, %v11073, %v11077
        %v11080 = vshrl.u32 %v10905, 16
        %v11082 = vrot.slane %v11080, 4
        %v11083 = vshll.u32 %v10905, 16
        %v11085 = vrot.slane %v11083, 5
        %v11086 = vor.u32 %v11082, %v11085
        %v11087 = vrot.slane %v11086, 4
        %v11089 = vshll.u32 %v10906, 16
        %v11091 = vrot.slane %v11089, 5
        %v11092 = vsel %vm1576, %v11087, %v11091
        %v11093 = vshrl.u32 %v10906, 16
        %v11095 = vrot.slane %v11093, 4
        %v11096 = vor.u32 %v11095, %v11091
        %v11097 = vrot.slane %v11096, 4
        %v11099 = vshll.u32 %v10907, 16
        %v11101 = vrot.slane %v11099, 5
        %v11102 = vsel %vm1576, %v11097, %v11101
        %v11104 = vshrl.u32 %v10908, 16
        %v11106 = vrot.slane %v11104, 4
        %v11107 = vshll.u32 %v10908, 16
        %v11109 = vrot.slane %v11107, 5
        %v11110 = vor.u32 %v11106, %v11109
        %v11111 = vrot.slane %v11110, 4
        %v11113 = vshll.u32 %v10909, 16
        %v11115 = vrot.slane %v11113, 5
        %v11116 = vsel %vm1576, %v11111, %v11115
        %v11117 = vshrl.u32 %v10909, 16
        %v11119 = vrot.slane %v11117, 4
        %v11120 = vor.u32 %v11119, %v11115
        %v11121 = vrot.slane %v11120, 4
        %v11123 = vshll.u32 %v10910, 16
        %v11125 = vrot.slane %v11123, 5
        %v11126 = vsel %vm1576, %v11121, %v11125
        %v11128 = vshrl.u32 %v10911, 16
        %v11130 = vrot.slane %v11128, 4
        %v11131 = vshll.u32 %v10911, 16
        %v11133 = vrot.slane %v11131, 5
        %v11134 = vor.u32 %v11130, %v11133
        %v11135 = vrot.slane %v11134, 4
        %v11137 = vshll.u32 %v10912, 16
        %v11139 = vrot.slane %v11137, 5
        %v11140 = vsel %vm1576, %v11135, %v11139
        %v11141 = vshrl.u32 %v10912, 16
        %v11143 = vrot.slane %v11141, 4
        %v11144 = vor.u32 %v11143, %v11139
        %v11145 = vrot.slane %v11144, 4
        %v11147 = vshll.u32 %v10913, 16
        %v11149 = vrot.slane %v11147, 5
        %v11150 = vsel %vm1576, %v11145, %v11149
        %v11152 = vshrl.u32 %v10914, 16
        %v11154 = vrot.slane %v11152, 4
        %v11155 = vshll.u32 %v10914, 16
        %v11157 = vrot.slane %v11155, 5
        %v11158 = vor.u32 %v11154, %v11157
        %v11159 = vrot.slane %v11158, 4
        %v11161 = vshll.u32 %v10915, 16
        %v11163 = vrot.slane %v11161, 5
        %v11164 = vsel %vm1576, %v11159, %v11163
        %v11165 = vshrl.u32 %v10915, 16
        %v11167 = vrot.slane %v11165, 4
        %v11168 = vor.u32 %v11167, %v11163
        %v11169 = vrot.slane %v11168, 4
        %v11171 = vshll.u32 %v10916, 16
        %v11173 = vrot.slane %v11171, 5
        %v11174 = vsel %vm1576, %v11169, %v11173
        %v11176 = vshrl.u32 %v10917, 16
        %v11178 = vrot.slane %v11176, 4
        %v11179 = vshll.u32 %v10917, 16
        %v11181 = vrot.slane %v11179, 5
        %v11182 = vor.u32 %v11178, %v11181
        %v11183 = vrot.slane %v11182, 4
        %v11185 = vshll.u32 %v10918, 16
        %v11187 = vrot.slane %v11185, 5
        %v11188 = vsel %vm1576, %v11183, %v11187
        %v11189 = vshrl.u32 %v10918, 16
        %v11191 = vrot.slane %v11189, 4
        %v11192 = vor.u32 %v11191, %v11187
        %v11193 = vrot.slane %v11192, 4
        %v11195 = vshll.u32 %v10919, 16
        %v11197 = vrot.slane %v11195, 5
        %v11198 = vsel %vm1576, %v11193, %v11197
        %v11200 = vshrl.u32 %v10920, 16
        %v11202 = vrot.slane %v11200, 4
        %v11203 = vshll.u32 %v10920, 16
        %v11205 = vrot.slane %v11203, 5
        %v11206 = vor.u32 %v11202, %v11205
        %v11207 = vrot.slane %v11206, 4
        %v11209 = vshll.u32 %v10921, 16
        %v11211 = vrot.slane %v11209, 5
        %v11212 = vsel %vm1576, %v11207, %v11211
        %v11213 = vshrl.u32 %v10921, 16
        %v11215 = vrot.slane %v11213, 4
        %v11216 = vor.u32 %v11215, %v11211
        %v11217 = vrot.slane %v11216, 4
        %v11219 = vshll.u32 %v10922, 16
        %v11221 = vrot.slane %v11219, 5
        %v11222 = vsel %vm1576, %v11217, %v11221
        %v11224 = vshrl.u32 %v10923, 16
        %v11226 = vrot.slane %v11224, 4
        %v11227 = vshll.u32 %v10923, 16
        %v11229 = vrot.slane %v11227, 5
        %v11230 = vor.u32 %v11226, %v11229
        %v11231 = vrot.slane %v11230, 4
        %v11233 = vshll.u32 %v10924, 16
        %v11235 = vrot.slane %v11233, 5
        %v11236 = vsel %vm1576, %v11231, %v11235
        %v11237 = vshrl.u32 %v10924, 16
        %v11239 = vrot.slane %v11237, 4
        %v11240 = vor.u32 %v11239, %v11235
        %v11241 = vrot.slane %v11240, 4
        %v11243 = vshll.u32 %v10925, 16
        %v11245 = vrot.slane %v11243, 5
        %v11246 = vsel %vm1576, %v11241, %v11245
        %v11248 = vshrl.u32 %v10926, 16
        %v11250 = vrot.slane %v11248, 4
        %v11251 = vshll.u32 %v10926, 16
        %v11253 = vrot.slane %v11251, 5
        %v11254 = vor.u32 %v11250, %v11253
        %v11255 = vrot.slane %v11254, 4
        %v11257 = vshll.u32 %v10927, 16
        %v11259 = vrot.slane %v11257, 5
        %v11260 = vsel %vm1576, %v11255, %v11259
        %v11261 = vshrl.u32 %v10927, 16
        %v11263 = vrot.slane %v11261, 4
        %v11264 = vor.u32 %v11263, %v11259
        %v11265 = vrot.slane %v11264, 4
        %v11267 = vshll.u32 %v10928, 16
        %v11269 = vrot.slane %v11267, 5
        %v11270 = vsel %vm1576, %v11265, %v11269
        %v11272 = vshrl.u32 %v10929, 16
        %v11274 = vrot.slane %v11272, 4
        %v11275 = vshll.u32 %v10929, 16
        %v11277 = vrot.slane %v11275, 5
        %v11278 = vor.u32 %v11274, %v11277
        %v11279 = vrot.slane %v11278, 4
        %v11281 = vshll.u32 %v10930, 16
        %v11283 = vrot.slane %v11281, 5
        %v11284 = vsel %vm1576, %v11279, %v11283
        %v11285 = vshrl.u32 %v10930, 16
        %v11287 = vrot.slane %v11285, 4
        %v11288 = vor.u32 %v11287, %v11283
        %v11289 = vrot.slane %v11288, 4
        %v11291 = vshll.u32 %v10931, 16
        %v11293 = vrot.slane %v11291, 5
        %v11294 = vsel %vm1576, %v11289, %v11293
        %v11296 = vshrl.u32 %v10932, 16
        %v11298 = vrot.slane %v11296, 4
        %v11299 = vshll.u32 %v10932, 16
        %v11301 = vrot.slane %v11299, 5
        %v11302 = vor.u32 %v11298, %v11301
        %v11303 = vrot.slane %v11302, 4
        %v11305 = vshll.u32 %v10933, 16
        %v11307 = vrot.slane %v11305, 5
        %v11308 = vsel %vm1576, %v11303, %v11307
        %v11309 = vshrl.u32 %v10933, 16
        %v11311 = vrot.slane %v11309, 4
        %v11312 = vor.u32 %v11311, %v11307
        %v11313 = vrot.slane %v11312, 4
        %v11315 = vshll.u32 %v10934, 16
        %v11317 = vrot.slane %v11315, 5
        %v11318 = vsel %vm1576, %v11313, %v11317
        %s11319 = scalar_lea.vmem [#allocation9], 512
        %v11320 = vld [vmem:[%s11319] sm:$0xf]
        %v11321 = vld [vmem:[%s11319 + $0x4] sm:$0xf]
        %v11322 = vld [vmem:[%s11319 + $0x8] sm:$0xf]
        %v11323 = vld [vmem:[%s11319 + $0xc] sm:$0xf]
        %v11324 = vld [vmem:[%s11319 + $0x10] sm:$0xf]
        %v11325 = vld [vmem:[%s11319 + $0x14] sm:$0xf]
        %v11326 = vld [vmem:[%s11319 + $0x18] sm:$0xf]
        %v11327 = vld [vmem:[%s11319 + $0x1c] sm:$0xf]
        %v11328 = vld [vmem:[%s11319 + $0x20] sm:$0xf]
        %v11329 = vld [vmem:[%s11319 + $0x24] sm:$0xf]
        %v11330 = vld [vmem:[%s11319 + $0x28] sm:$0xf]
        %v11331 = vld [vmem:[%s11319 + $0x2c] sm:$0xf]
        %v11332 = vld [vmem:[%s11319 + $0x30] sm:$0xf]
        %v11333 = vld [vmem:[%s11319 + $0x34] sm:$0xf]
        %v11334 = vld [vmem:[%s11319 + $0x38] sm:$0xf]
        %v11335 = vld [vmem:[%s11319 + $0x3c] sm:$0xf]
        %v11336 = vunpack.c.l.b16 %v10948
        %v11337 = vunpack.c.l.b16 %v10958
        %v11338 = vunpack.c.l.b16 %v10972
        %v11339 = vunpack.c.l.b16 %v10982
        %v11340 = vunpack.c.l.b16 %v10996
        %v11341 = vunpack.c.l.b16 %v11006
        %v11342 = vunpack.c.l.b16 %v11020
        %v11343 = vunpack.c.l.b16 %v11030
        %v11344 = vunpack.c.l.b16 %v11044
        %v11345 = vunpack.c.l.b16 %v11054
        %v11346 = vunpack.c.l.b16 %v11068
        %v11347 = vunpack.c.l.b16 %v11078
        %v11348 = vunpack.c.l.b16 %v11092
        %v11349 = vunpack.c.l.b16 %v11102
        %v11350 = vunpack.c.l.b16 %v11116
        %v11351 = vunpack.c.l.b16 %v11126
        %v11352 = vunpack.c.l.b16 %v11140
        %v11353 = vunpack.c.l.b16 %v11150
        %v11354 = vunpack.c.l.b16 %v11164
        %v11355 = vunpack.c.l.b16 %v11174
        %v11356 = vunpack.c.l.b16 %v11188
        %v11357 = vunpack.c.l.b16 %v11198
        %v11358 = vunpack.c.l.b16 %v11212
        %v11359 = vunpack.c.l.b16 %v11222
        %v11360 = vunpack.c.l.b16 %v11236
        %v11361 = vunpack.c.l.b16 %v11246
        %v11362 = vunpack.c.l.b16 %v11260
        %v11363 = vunpack.c.l.b16 %v11270
        %v11364 = vunpack.c.l.b16 %v11284
        %v11365 = vunpack.c.l.b16 %v11294
        %v11366 = vunpack.c.l.b16 %v11308
        %v11367 = vunpack.c.l.b16 %v11318
        %v11368 = vpack.c.b16 %v11337, %v11336
        %v11369 = vpack.c.b16 %v11339, %v11338
        %v11370 = vpack.c.b16 %v11341, %v11340
        %v11371 = vpack.c.b16 %v11343, %v11342
        %v11372 = vpack.c.b16 %v11345, %v11344
        %v11373 = vpack.c.b16 %v11347, %v11346
        %v11374 = vpack.c.b16 %v11349, %v11348
        %v11375 = vpack.c.b16 %v11351, %v11350
        %v11376 = vpack.c.b16 %v11353, %v11352
        %v11377 = vpack.c.b16 %v11355, %v11354
        %v11378 = vpack.c.b16 %v11357, %v11356
        %v11379 = vpack.c.b16 %v11359, %v11358
        %v11380 = vpack.c.b16 %v11361, %v11360
        %v11381 = vpack.c.b16 %v11363, %v11362
        %v11382 = vpack.c.b16 %v11365, %v11364
        %v11383 = vpack.c.b16 %v11367, %v11366
        %v11416 = vunpack.c.l.b16 %v11320
        %v11417 = vunpack.c.l.b16 %v11321
        %v11418 = vunpack.c.l.b16 %v11322
        %v11419 = vunpack.c.l.b16 %v11323
        %v11420 = vunpack.c.l.b16 %v11324
        %v11421 = vunpack.c.l.b16 %v11325
        %v11422 = vunpack.c.l.b16 %v11326
        %v11423 = vunpack.c.l.b16 %v11327
        %v11424 = vunpack.c.l.b16 %v11328
        %v11425 = vunpack.c.l.b16 %v11329
        %v11426 = vunpack.c.l.b16 %v11330
        %v11427 = vunpack.c.l.b16 %v11331
        %v11428 = vunpack.c.l.b16 %v11332
        %v11429 = vunpack.c.l.b16 %v11333
        %v11430 = vunpack.c.l.b16 %v11334
        %v11431 = vunpack.c.l.b16 %v11335
        %v11432 = vpack.c.b16 %v11417, %v11416
        %v11433 = vpack.c.b16 %v11419, %v11418
        %v11434 = vpack.c.b16 %v11421, %v11420
        %v11435 = vpack.c.b16 %v11423, %v11422
        %v11436 = vpack.c.b16 %v11425, %v11424
        %v11437 = vpack.c.b16 %v11427, %v11426
        %v11438 = vpack.c.b16 %v11429, %v11428
        %v11439 = vpack.c.b16 %v11431, %v11430
        %11448 = vmatprep.subr.bf16.mxu0 0
        %11449 = vmatpush1.bf16.msra.mxu0 %v11432
        %11450 = vmatprep.subr.bf16.mxu0 0
        %11451 = vmatpush1.bf16.msra.mxu0 %v11433
        %11452 = vmatprep.subr.bf16.mxu0 0
        %11453 = vmatpush1.bf16.msra.mxu0 %v11434
        %11454 = vmatprep.subr.bf16.mxu0 0
        %11455 = vmatpush1.bf16.msra.mxu0 %v11435
        %11456 = vmatprep.subr.bf16.mxu0 0
        %11457 = vmatpush1.bf16.msra.mxu0 %v11436
        %11458 = vmatprep.subr.bf16.mxu0 0
        %11459 = vmatpush1.bf16.msra.mxu0 %v11437
        %11460 = vmatprep.subr.bf16.mxu0 0
        %11461 = vmatpush1.bf16.msra.mxu0 %v11438
        %11462 = vmatprep.subr.bf16.mxu0 0
        %11463 = vmatpush1.bf16.msra.mxu0 %v11439
        %11464 = vmatprep.subr.bf16.mxu0 0
        %11465 = vmatpush1.bf16.msra.mxu0 0
        %11466 = vmatprep.subr.bf16.mxu0 0
        %11467 = vmatpush1.bf16.msra.mxu0 0
        %11468 = vmatprep.subr.bf16.mxu0 0
        %11469 = vmatpush1.bf16.msra.mxu0 0
        %11470 = vmatprep.subr.bf16.mxu0 0
        %11471 = vmatpush1.bf16.msra.mxu0 0
        %11472 = vmatprep.subr.bf16.mxu0 0
        %11473 = vmatpush1.bf16.msra.mxu0 0
        %11474 = vmatprep.subr.bf16.mxu0 0
        %11475 = vmatpush1.bf16.msra.mxu0 0
        %11476 = vmatprep.subr.bf16.mxu0 0
        %11477 = vmatpush1.bf16.msra.mxu0 0
        %11478 = vmatprep.subr.bf16.mxu0 0
        %11479 = vmatpush1.bf16.msra.mxu0 0
        %11480 = vmatprep.mubr.bf16.mxu0 0
        %11481 = vmatmul.mubr.bf16.gmra.mrb[0].mxu0 %v11368
        %v11482 = vpop.f32.mrb[0].mxu0
        %v11483 = vadd.f32 0.0, %v11482
        %v11484 = vpop.f32.mrb[0].mxu0
        %v11485 = vpop.f32.mrb[0].mxu0
        %v11486 = vadd.f32 0.0, %v11485
        %v11487 = vpop.f32.mrb[0].mxu0
        %11488 = vmatprep.mubr.bf16.mxu0 0
        %11489 = vmatmul.mubr.bf16.gmra.mrb[0].mxu0 %v11369
        %v11490 = vpop.f32.mrb[0].mxu0
        %v11491 = vadd.f32 0.0, %v11490
        %v11492 = vpop.f32.mrb[0].mxu0
        %v11493 = vpop.f32.mrb[0].mxu0
        %v11494 = vadd.f32 0.0, %v11493
        %v11495 = vpop.f32.mrb[0].mxu0
        %11496 = vmatprep.mubr.bf16.mxu0 0
        %11497 = vmatmul.mubr.bf16.gmra.mrb[0].mxu0 %v11370
        %v11498 = vpop.f32.mrb[0].mxu0
        %v11499 = vadd.f32 0.0, %v11498
        %v11500 = vpop.f32.mrb[0].mxu0
        %v11501 = vpop.f32.mrb[0].mxu0
        %v11502 = vadd.f32 0.0, %v11501
        %v11503 = vpop.f32.mrb[0].mxu0
        %11504 = vmatprep.mubr.bf16.mxu0 0
        %11505 = vmatmul.mubr.bf16.gmra.mrb[0].mxu0 %v11371
        %v11506 = vpop.f32.mrb[0].mxu0
        %v11507 = vadd.f32 0.0, %v11506
        %v11508 = vpop.f32.mrb[0].mxu0
        %v11509 = vpop.f32.mrb[0].mxu0
        %v11510 = vadd.f32 0.0, %v11509
        %v11511 = vpop.f32.mrb[0].mxu0
        %11512 = vmatprep.mubr.bf16.mxu0 0
        %11513 = vmatmul.mubr.bf16.gmra.mrb[0].mxu0 %v11372
        %v11514 = vpop.f32.mrb[0].mxu0
        %v11515 = vadd.f32 0.0, %v11514
        %v11516 = vpop.f32.mrb[0].mxu0
        %v11517 = vpop.f32.mrb[0].mxu0
        %v11518 = vadd.f32 0.0, %v11517
        %v11519 = vpop.f32.mrb[0].mxu0
        %11520 = vmatprep.mubr.bf16.mxu0 0
        %11521 = vmatmul.mubr.bf16.gmra.mrb[0].mxu0 %v11373
        %v11522 = vpop.f32.mrb[0].mxu0
        %v11523 = vadd.f32 0.0, %v11522
        %v11524 = vpop.f32.mrb[0].mxu0
        %v11525 = vpop.f32.mrb[0].mxu0
        %v11526 = vadd.f32 0.0, %v11525
        %v11527 = vpop.f32.mrb[0].mxu0
        %11528 = vmatprep.mubr.bf16.mxu0 0
        %11529 = vmatmul.mubr.bf16.gmra.mrb[0].mxu0 %v11374
        %v11530 = vpop.f32.mrb[0].mxu0
        %v11531 = vadd.f32 0.0, %v11530
        %v11532 = vpop.f32.mrb[0].mxu0
        %v11533 = vpop.f32.mrb[0].mxu0
        %v11534 = vadd.f32 0.0, %v11533
        %v11535 = vpop.f32.mrb[0].mxu0
        %11536 = vmatprep.mubr.bf16.mxu0 0
        %11537 = vmatmul.mubr.bf16.gmra.mrb[0].mxu0 %v11375
        %v11538 = vpop.f32.mrb[0].mxu0
        %v11539 = vadd.f32 0.0, %v11538
        %v11540 = vpop.f32.mrb[0].mxu0
        %v11541 = vpop.f32.mrb[0].mxu0
        %v11542 = vadd.f32 0.0, %v11541
        %v11543 = vpop.f32.mrb[0].mxu0
        %11544 = vmatprep.mubr.bf16.mxu0 0
        %11545 = vmatmul.mubr.bf16.gmra.mrb[0].mxu0 %v11376
        %v11546 = vpop.f32.mrb[0].mxu0
        %v11547 = vadd.f32 0.0, %v11546
        %v11548 = vpop.f32.mrb[0].mxu0
        %v11549 = vpop.f32.mrb[0].mxu0
        %v11550 = vadd.f32 0.0, %v11549
        %v11551 = vpop.f32.mrb[0].mxu0
        %11552 = vmatprep.mubr.bf16.mxu0 0
        %11553 = vmatmul.mubr.bf16.gmra.mrb[0].mxu0 %v11377
        %v11554 = vpop.f32.mrb[0].mxu0
        %v11555 = vadd.f32 0.0, %v11554
        %v11556 = vpop.f32.mrb[0].mxu0
        %v11557 = vpop.f32.mrb[0].mxu0
        %v11558 = vadd.f32 0.0, %v11557
        %v11559 = vpop.f32.mrb[0].mxu0
        %11560 = vmatprep.mubr.bf16.mxu0 0
        %11561 = vmatmul.mubr.bf16.gmra.mrb[0].mxu0 %v11378
        %v11562 = vpop.f32.mrb[0].mxu0
        %v11563 = vadd.f32 0.0, %v11562
        %v11564 = vpop.f32.mrb[0].mxu0
        %v11565 = vpop.f32.mrb[0].mxu0
        %v11566 = vadd.f32 0.0, %v11565
        %v11567 = vpop.f32.mrb[0].mxu0
        %11568 = vmatprep.mubr.bf16.mxu0 0
        %11569 = vmatmul.mubr.bf16.gmra.mrb[0].mxu0 %v11379
        %v11570 = vpop.f32.mrb[0].mxu0
        %v11571 = vadd.f32 0.0, %v11570
        %v11572 = vpop.f32.mrb[0].mxu0
        %v11573 = vpop.f32.mrb[0].mxu0
        %v11574 = vadd.f32 0.0, %v11573
        %v11575 = vpop.f32.mrb[0].mxu0
        %11576 = vmatprep.mubr.bf16.mxu0 0
        %11577 = vmatmul.mubr.bf16.gmra.mrb[0].mxu0 %v11380
        %v11578 = vpop.f32.mrb[0].mxu0
        %v11579 = vadd.f32 0.0, %v11578
        %v11580 = vpop.f32.mrb[0].mxu0
        %v11581 = vpop.f32.mrb[0].mxu0
        %v11582 = vadd.f32 0.0, %v11581
        %v11583 = vpop.f32.mrb[0].mxu0
        %11584 = vmatprep.mubr.bf16.mxu0 0
        %11585 = vmatmul.mubr.bf16.gmra.mrb[0].mxu0 %v11381
        %v11586 = vpop.f32.mrb[0].mxu0
        %v11587 = vadd.f32 0.0, %v11586
        %v11588 = vpop.f32.mrb[0].mxu0
        %v11589 = vpop.f32.mrb[0].mxu0
        %v11590 = vadd.f32 0.0, %v11589
        %v11591 = vpop.f32.mrb[0].mxu0
        %11592 = vmatprep.mubr.bf16.mxu0 0
        %11593 = vmatmul.mubr.bf16.gmra.mrb[0].mxu0 %v11382
        %v11594 = vpop.f32.mrb[0].mxu0
        %v11595 = vadd.f32 0.0, %v11594
        %v11596 = vpop.f32.mrb[0].mxu0
        %v11597 = vpop.f32.mrb[0].mxu0
        %v11598 = vadd.f32 0.0, %v11597
        %v11599 = vpop.f32.mrb[0].mxu0
        %11600 = vmatprep.mubr.bf16.mxu0 0
        %11601 = vmatmul.mubr.bf16.gmra.mrb[0].mxu0 %v11383
        %v11602 = vpop.f32.mrb[0].mxu0
        %v11603 = vadd.f32 0.0, %v11602
        %v11604 = vpop.f32.mrb[0].mxu0
        %v11605 = vpop.f32.mrb[0].mxu0
        %v11606 = vadd.f32 0.0, %v11605
        %v11607 = vpop.f32.mrb[0].mxu0
        %11608 = vdwg.mxu0
        %v11609 = vadd.f32 %v10855, %v11483
        %v11610 = vadd.f32 %v10856, %v11486
        %v11611 = vadd.f32 %v10857, %v11491
        %v11612 = vadd.f32 %v10858, %v11494
        %v11613 = vadd.f32 %v10859, %v11499
        %v11614 = vadd.f32 %v10860, %v11502
        %v11615 = vadd.f32 %v10861, %v11507
        %v11616 = vadd.f32 %v10862, %v11510
        %v11617 = vadd.f32 %v10863, %v11515
        %v11618 = vadd.f32 %v10864, %v11518
        %v11619 = vadd.f32 %v10865, %v11523
        %v11620 = vadd.f32 %v10866, %v11526
        %v11621 = vadd.f32 %v10867, %v11531
        %v11622 = vadd.f32 %v10868, %v11534
        %v11623 = vadd.f32 %v10869, %v11539
        %v11624 = vadd.f32 %v10870, %v11542
        %v11625 = vadd.f32 %v10871, %v11547
        %v11626 = vadd.f32 %v10872, %v11550
        %v11627 = vadd.f32 %v10873, %v11555
        %v11628 = vadd.f32 %v10874, %v11558
        %v11629 = vadd.f32 %v10875, %v11563
        %v11630 = vadd.f32 %v10876, %v11566
        %v11631 = vadd.f32 %v10877, %v11571
        %v11632 = vadd.f32 %v10878, %v11574
        %v11633 = vadd.f32 %v10879, %v11579
        %v11634 = vadd.f32 %v10880, %v11582
        %v11635 = vadd.f32 %v10881, %v11587
        %v11636 = vadd.f32 %v10882, %v11590
        %v11637 = vadd.f32 %v10883, %v11595
        %v11638 = vadd.f32 %v10884, %v11598
        %v11639 = vadd.f32 %v10885, %v11603
        %v11640 = vadd.f32 %v10886, %v11606
        %v11642 = vlaneseq
        %v11643 = vshrl.u32 %v11642, 7
        %v11644 = vsub.s32 0, %v11643
        %v11645 = vrot.slane %v6213, %v11644
        %v11647 = vmul.f32 %v11609, %v11645
        %v11648 = vmul.f32 %v11610, %v11645
        %v11649 = vmul.f32 %v11611, %v11645
        %v11650 = vmul.f32 %v11612, %v11645
        %v11651 = vmul.f32 %v11613, %v11645
        %v11652 = vmul.f32 %v11614, %v11645
        %v11653 = vmul.f32 %v11615, %v11645
        %v11654 = vmul.f32 %v11616, %v11645
        %v11655 = vmul.f32 %v11617, %v11645
        %v11656 = vmul.f32 %v11618, %v11645
        %v11657 = vmul.f32 %v11619, %v11645
        %v11658 = vmul.f32 %v11620, %v11645
        %v11659 = vmul.f32 %v11621, %v11645
        %v11660 = vmul.f32 %v11622, %v11645
        %v11661 = vmul.f32 %v11623, %v11645
        %v11662 = vmul.f32 %v11624, %v11645
        %v11663 = vmul.f32 %v11625, %v11645
        %v11664 = vmul.f32 %v11626, %v11645
        %v11665 = vmul.f32 %v11627, %v11645
        %v11666 = vmul.f32 %v11628, %v11645
        %v11667 = vmul.f32 %v11629, %v11645
        %v11668 = vmul.f32 %v11630, %v11645
        %v11669 = vmul.f32 %v11631, %v11645
        %v11670 = vmul.f32 %v11632, %v11645
        %v11671 = vmul.f32 %v11633, %v11645
        %v11672 = vmul.f32 %v11634, %v11645
        %v11673 = vmul.f32 %v11635, %v11645
        %v11674 = vmul.f32 %v11636, %v11645
        %v11675 = vmul.f32 %v11637, %v11645
        %v11676 = vmul.f32 %v11638, %v11645
        %v11677 = vmul.f32 %v11639, %v11645
        %v11678 = vmul.f32 %v11640, %v11645
        %v11680 = vlaneseq
        %v11681 = vshrl.u32 %v11680, 7
        %v11682 = vsub.s32 0, %v11681
        %v11683 = vrot.slane %v6214, %v11682
        %v11685 = vadd.f32 %v11647, %v11683
        %v11686 = vadd.f32 %v11648, %v11683
        %v11687 = vadd.f32 %v11649, %v11683
        %v11688 = vadd.f32 %v11650, %v11683
        %v11689 = vadd.f32 %v11651, %v11683
        %v11690 = vadd.f32 %v11652, %v11683
        %v11691 = vadd.f32 %v11653, %v11683
        %v11692 = vadd.f32 %v11654, %v11683
        %v11693 = vadd.f32 %v11655, %v11683
        %v11694 = vadd.f32 %v11656, %v11683
        %v11695 = vadd.f32 %v11657, %v11683
        %v11696 = vadd.f32 %v11658, %v11683
        %v11697 = vadd.f32 %v11659, %v11683
        %v11698 = vadd.f32 %v11660, %v11683
        %v11699 = vadd.f32 %v11661, %v11683
        %v11700 = vadd.f32 %v11662, %v11683
        %v11701 = vadd.f32 %v11663, %v11683
        %v11702 = vadd.f32 %v11664, %v11683
        %v11703 = vadd.f32 %v11665, %v11683
        %v11704 = vadd.f32 %v11666, %v11683
        %v11705 = vadd.f32 %v11667, %v11683
        %v11706 = vadd.f32 %v11668, %v11683
        %v11707 = vadd.f32 %v11669, %v11683
        %v11708 = vadd.f32 %v11670, %v11683
        %v11709 = vadd.f32 %v11671, %v11683
        %v11710 = vadd.f32 %v11672, %v11683
        %v11711 = vadd.f32 %v11673, %v11683
        %v11712 = vadd.f32 %v11674, %v11683
        %v11713 = vadd.f32 %v11675, %v11683
        %v11714 = vadd.f32 %v11676, %v11683
        %v11715 = vadd.f32 %v11677, %v11683
        %v11716 = vadd.f32 %v11678, %v11683
        %v11717 = vmax.f32 %v11685, 0.0
        %v11718 = vmax.f32 %v11686, 0.0
        %v11719 = vmax.f32 %v11687, 0.0
        %v11720 = vmax.f32 %v11688, 0.0
        %v11721 = vmax.f32 %v11689, 0.0
        %v11722 = vmax.f32 %v11690, 0.0
        %v11723 = vmax.f32 %v11691, 0.0
        %v11724 = vmax.f32 %v11692, 0.0
        %v11725 = vmax.f32 %v11693, 0.0
        %v11726 = vmax.f32 %v11694, 0.0
        %v11727 = vmax.f32 %v11695, 0.0
        %v11728 = vmax.f32 %v11696, 0.0
        %v11729 = vmax.f32 %v11697, 0.0
        %v11730 = vmax.f32 %v11698, 0.0
        %v11731 = vmax.f32 %v11699, 0.0
        %v11732 = vmax.f32 %v11700, 0.0
        %v11733 = vmax.f32 %v11701, 0.0
        %v11734 = vmax.f32 %v11702, 0.0
        %v11735 = vmax.f32 %v11703, 0.0
        %v11736 = vmax.f32 %v11704, 0.0
        %v11737 = vmax.f32 %v11705, 0.0
        %v11738 = vmax.f32 %v11706, 0.0
        %v11739 = vmax.f32 %v11707, 0.0
        %v11740 = vmax.f32 %v11708, 0.0
        %v11741 = vmax.f32 %v11709, 0.0
        %v11742 = vmax.f32 %v11710, 0.0
        %v11743 = vmax.f32 %v11711, 0.0
        %v11744 = vmax.f32 %v11712, 0.0
        %v11745 = vmax.f32 %v11713, 0.0
        %v11746 = vmax.f32 %v11714, 0.0
        %v11747 = vmax.f32 %v11715, 0.0
        %v11748 = vmax.f32 %v11716, 0.0
        %11749 = vst [vmem:[%s325] sm:$0xff] %v11717
        %11750 = vst [vmem:[%s325 + $0x8] sm:$0xff] %v11718
        %11751 = vst [vmem:[%s325 + $0x10] sm:$0xff] %v11719
        %11752 = vst [vmem:[%s325 + $0x18] sm:$0xff] %v11720
        %11753 = vst [vmem:[%s325 + $0x20] sm:$0xff] %v11721
        %11754 = vst [vmem:[%s325 + $0x28] sm:$0xff] %v11722
        %11755 = vst [vmem:[%s325 + $0x30] sm:$0xff] %v11723
        %11756 = vst [vmem:[%s325 + $0x38] sm:$0xff] %v11724
        %11757 = vst [vmem:[%s325 + $0x40] sm:$0xff] %v11725
        %11758 = vst [vmem:[%s325 + $0x48] sm:$0xff] %v11726
        %11759 = vst [vmem:[%s325 + $0x50] sm:$0xff] %v11727
        %11760 = vst [vmem:[%s325 + $0x58] sm:$0xff] %v11728
        %11761 = vst [vmem:[%s325 + $0x60] sm:$0xff] %v11729
        %11762 = vst [vmem:[%s325 + $0x68] sm:$0xff] %v11730
        %11763 = vst [vmem:[%s325 + $0x70] sm:$0xff] %v11731
        %11764 = vst [vmem:[%s325 + $0x78] sm:$0xff] %v11732
        %11765 = vst [vmem:[%s325 + $0x80] sm:$0xff] %v11733
        %11766 = vst [vmem:[%s325 + $0x88] sm:$0xff] %v11734
        %11767 = vst [vmem:[%s325 + $0x90] sm:$0xff] %v11735
        %11768 = vst [vmem:[%s325 + $0x98] sm:$0xff] %v11736
        %11769 = vst [vmem:[%s325 + $0xa0] sm:$0xff] %v11737
        %11770 = vst [vmem:[%s325 + $0xa8] sm:$0xff] %v11738
        %11771 = vst [vmem:[%s325 + $0xb0] sm:$0xff] %v11739
        %11772 = vst [vmem:[%s325 + $0xb8] sm:$0xff] %v11740
        %11773 = vst [vmem:[%s325 + $0xc0] sm:$0xff] %v11741
        %11774 = vst [vmem:[%s325 + $0xc8] sm:$0xff] %v11742
        %11775 = vst [vmem:[%s325 + $0xd0] sm:$0xff] %v11743
        %11776 = vst [vmem:[%s325 + $0xd8] sm:$0xff] %v11744
        %11777 = vst [vmem:[%s325 + $0xe0] sm:$0xff] %v11745
        %11778 = vst [vmem:[%s325 + $0xe8] sm:$0xff] %v11746
        %11779 = vst [vmem:[%s325 + $0xf0] sm:$0xff] %v11747
        %11780 = vst [vmem:[%s325 + $0xf8] sm:$0xff] %v11748
        %s11781 = sand.u32 %s185, 1
        %s11782 = scalar_lea.sflag [#allocation6], %s11781
        %s11783 = sand.u32 %s185, 1
        %s11784 = smul.addr %s11783, 256
        %s11785 = scalar_lea.vmem [#allocation10], %s11784
        // Predicated region
        $region61: #{tpu_custom_call.1} parent=47 // pred_check
          %p11786 = pneg %p195
        $region62: #{tpu_custom_call.1} parent=47 // pred_check_branch
          %11788 = sbr.rel (%p11786) target = $region64
        $region63: #{tpu_custom_call.1} parent=47 // pred_region
          %s11790 = ssub.s32 4096, 4096
          %11791 = vsyncadd %s11782, %s11790
          %s11792 = smul.addr %s25, 32
          %s11793 = smul.addr %s11792, 128
          %s11794 = scalar_lea.hbm %s7, %s11793
          %s11795 = sshll.u32 %s11785, 4
          %s11796 = int_to_ptr.vmem [resolvable:$true] %s11795
          %11801 = dma.vmem_to_hbm [thread:$0]  %s11796, 4096, %s11794, %s11782, 128, 128, 8
        $region64: #{tpu_custom_call.1} parent=47 // pred_fallthru
          _
      $region48: #{tpu_custom_call.1} parent=5 // pred_fallthru
        _
      %p11802 = scmp.le.s32.totalorder 2, %s20
      // Predicated region
      $region65: #{tpu_custom_call.1} parent=5 // pred_check
        %p11803 = pneg %p11802
      $region66: #{tpu_custom_call.1} parent=5 // pred_check_branch
        %11805 = sbr.rel (%p11803) target = $region68
      $region67: #{tpu_custom_call.1} parent=5 // pred_region
        %s11806 = ssub.s32 %s20, 2
        // Predicated region
        $region69: #{tpu_custom_call.1} parent=67 // pred_check
          %p11807 = pneg %p201
        $region70: #{tpu_custom_call.1} parent=67 // pred_check_branch
          %11809 = sbr.rel (%p11807) target = $region72
        $region71: #{tpu_custom_call.1} parent=67 // pred_region
          %s11810 = sand.u32 %s186, 1
          %s11811 = scalar_lea.sflag [#allocation6], %s11810
          %s11812 = sand.u32 %s186, 1
          %s11813 = smul.addr %s11812, 256
          %s11814 = scalar_lea.vmem [#allocation10], %s11813
          %11815 = dma.done %s11811, 4096
        $region72: #{tpu_custom_call.1} parent=67 // pred_fallthru
          _
      $region68: #{tpu_custom_call.1} parent=5 // pred_fallthru
        _
    $region6: #{tpu_custom_call.1} parent=1 // loop_footer
      %s24 = sadd.s32 1, %s20
    $region7: #{tpu_custom_call.1} parent=1 // loop_footer_branch
      %19 = sbr.rel target = $region3
    $region8: #{tpu_custom_call.1} parent=1 // loop_exit
      _
    %11816 = vsyncpa [#allocation5], 1
    %s11817 = scalar_lea.sflag [#allocation5], 1
    %11818 = vsyncpa %s11817, 1
    %11819 = vsyncpa [#allocation8], 1
    %11820 = vsyncpa [#allocation6], 1
    %s11821 = scalar_lea.sflag [#allocation6], 1
    %11822 = vsyncpa %s11821, 1

</llo_original>
